<compile_context>
chip_gen: v6e
topology: v6e:2x2x1
jax: 0.10.0
libtpu: 0.0.40
codegen_flags: <defaults>
</compile_context>

<pallas_src>
import functools
import math

import jax
import jax.numpy as jnp
from jax.experimental import pallas as pl
from jax.experimental.pallas import tpu as pltpu  # noqa: F401  (TPU backend)

LN_EPS = 1e-5
NUM_HEADS = 8
NUM_MI = 5          # mi_d_n, mi_e_d, mi_e_n, mi_edep_d, mi_edep_enondep
MI_HIDDEN = 128


# ----------------------------- in-kernel helper -----------------------------

def _ln(x, g, b, eps=LN_EPS):
    mu = jnp.mean(x, axis=-1, keepdims=True)
    var = jnp.mean((x - mu) ** 2, axis=-1, keepdims=True)
    return (x - mu) * jax.lax.rsqrt(var + eps) * g + b


# ----------------------------- the fused kernel -----------------------------

def _hfs_kernel(fd_ref, fe_ref, fn_ref, perm_ref, mask_ref, inln_ref,
                sep_w0_ref, sep_w3_ref, sep_b3_ref, sep_vec_ref,
                mi_pw_ref, mi_w0_ref, mi_vec_ref, mi_b3_ref,
                attn_wq_ref, attn_wkv_ref, attn_wo_ref, attn_vec_ref,
                cross_ref, nondep_ref, scal_ref,
                *, nh, eps, log_b):
    B, S, D = fd_ref.shape
    E = D
    dh = E // nh
    scale = 1.0 / math.sqrt(dh)

    # ---------- input LayerNorm (shared params) + per-stream seq means ----------
    inln = inln_ref[...]                                   # (2, 1, D)
    g_in, b_in = inln[0], inln[1]
    fdn = _ln(fd_ref[...], g_in, b_in, eps)                # (B, S, D)
    fen = _ln(fe_ref[...], g_in, b_in, eps)
    fnn = _ln(fn_ref[...], g_in, b_in, eps)
    mean_d = jnp.mean(fdn, axis=1)                         # (B, D)
    mean_e = jnp.mean(fen, axis=1)
    mean_n = jnp.mean(fnn, axis=1)

    # ---------- entropy of softmax(mean_over_seq(F_e_norm)) ----------
    emax = jnp.max(mean_e, axis=-1, keepdims=True)
    pe = jnp.exp(mean_e - emax)
    pe = pe / jnp.sum(pe, axis=-1, keepdims=True)
    ent_rows = -jnp.sum(pe * jnp.log(pe + 1e-8), axis=-1, keepdims=True)   # (B, 1)
    ent = jnp.sum(ent_rows, axis=0, keepdims=True) / B                      # (1, 1)

    # ---------- separator MLP (dep / nondep split folded into the last weight) ---
    sep_vec = sep_vec_ref[...]                             # (3, 1, 2D): b0, ln_g, ln_b
    h = (jnp.dot(fen.reshape(B * S, D), sep_w0_ref[...],
                 preferred_element_type=jnp.float32) + sep_vec[0])
    h = _ln(h, sep_vec[1], sep_vec[2], eps)
    h = h * jax.nn.sigmoid(h)                              # SiLU
    sep_w3 = sep_w3_ref[...]                               # (2, 2D, D)
    sep_b3 = sep_b3_ref[...]                               # (2, 1, D)
    f_edep = jnp.dot(h, sep_w3[0], preferred_element_type=jnp.float32) + sep_b3[0]
    f_enondep = jnp.dot(h, sep_w3[1], preferred_element_type=jnp.float32) + sep_b3[1]
    nondep_ref[...] = f_enondep                            # (B*S, D)

    mean_edep = jnp.mean(f_edep.reshape(B, S, D), axis=1)        # (B, D)
    mean_enondep = jnp.mean(f_enondep.reshape(B, S, D), axis=1)

    # ---------- all five MI estimators, batched on a leading G axis ----------
    # order: (x, y) = (F_d,F_n), (F_e,F_d), (F_e,F_n), (F_eDep,F_d), (F_eDep,F_eNonDep)
    x_means = jnp.stack([mean_d, mean_e, mean_e, mean_edep, mean_edep], axis=0)
    y_means = jnp.stack([mean_n, mean_d, mean_n, mean_d, mean_enondep], axis=0)

    mivec = mi_vec_ref[...]                                # (8, G, 1, H)
    pxb, pyb = mivec[0], mivec[1]
    ng, nb = mivec[2], mivec[3]
    b0 = mivec[4]
    lg, lb = mivec[5], mivec[6]
    w3t = mivec[7]
    pw = mi_pw_ref[...]                                    # (2, G, D, H)
    w0 = mi_w0_ref[...]                                    # (2, G, H, H)
    b3 = mi_b3_ref[...]                                    # (G, 1, 1)

    xp = _ln(jnp.einsum('gbd,gdh->gbh', x_means, pw[0],
                        preferred_element_type=jnp.float32) + pxb, ng, nb, eps)
    yj = _ln(jnp.einsum('gbd,gdh->gbh', y_means, pw[1],
                        preferred_element_type=jnp.float32) + pyb, ng, nb, eps)
    # row permutation of y_proj == one-hot permutation matmul (equals y_proj[idx])
    ym = jnp.einsum('gij,gjh->gih', perm_ref[...], yj,
                    preferred_element_type=jnp.float32)

    # joint + marginal scored in a single shared-weight pass (stacked on batch axis);
    # concat([x, y]) @ W0 == x @ W0x + y @ W0y, so no in-kernel feature concat.
    xw = jnp.einsum('gbh,ghk->gbk', xp, w0[0], preferred_element_type=jnp.float32)
    yw = jnp.einsum('gbh,ghk->gbk', jnp.concatenate([yj, ym], axis=1), w0[1],
                    preferred_element_type=jnp.float32)
    hh = jnp.concatenate([xw, xw], axis=1) + yw + b0       # (G, 2B, H)
    hh = _ln(hh, lg, lb, eps)
    hh = hh * jax.nn.sigmoid(hh)                           # SiLU
    scores = jnp.sum(hh * w3t, axis=-1, keepdims=True) + b3          # (G, 2B, 1)
    js = scores[:, :B]                                     # joint scores
    ms = scores[:, B:]                                     # marginal scores
    j_mean = jnp.mean(js, axis=1)                          # (G, 1)
    m_max = jnp.max(ms, axis=1, keepdims=True)             # (G, 1, 1)
    lse = jnp.squeeze(m_max, axis=1) + jnp.log(jnp.sum(jnp.exp(ms - m_max), axis=1))
    mi = j_mean - lse + log_b                              # (G, 1) MI estimates

    # ---------- fused multi-head attention (heads batched into the M dimension) --
    head_mask = mask_ref[...]                              # (1, nh, 1, E) one-hot lanes
    attn_wq = attn_wq_ref[...]
    attn_wkv = attn_wkv_ref[...]
    attn_wo = attn_wo_ref[...]
    attn_vec = attn_vec_ref[...]

    def attn_block(idx, xq2, xkv2):
        wq, wkv, wo = attn_wq[idx], attn_wkv[idx], attn_wo[idx]
        vec = attn_vec[idx]                                # (6, 1, E): bq,bk,bv,bo,g,b
        bq, bk, bv, bo, g, b = vec[0], vec[1], vec[2], vec[3], vec[4], vec[5]
        q2 = jnp.dot(xq2, wq, preferred_element_type=jnp.float32) + bq   # (BS, E)
        kv = jnp.dot(xkv2, wkv, preferred_element_type=jnp.float32)      # (BS, 2E)
        k3 = (kv[:, :E] + bk).reshape(B, S, E)
        v3 = (kv[:, E:] + bv).reshape(B, S, E)
        # all heads stacked into M: one score matmul, one softmax, one value matmul
        qm = (q2.reshape(B, 1, S, E) * head_mask).reshape(B, nh * S, E)
        s = jnp.einsum('bmd,bkd->bmk', qm, k3,
                       preferred_element_type=jnp.float32) * scale       # (B, nh*S, S)
        smax = jnp.max(s, axis=-1, keepdims=True)
        p = jnp.exp(s - smax)
        p = p * pl.reciprocal(jnp.sum(p, axis=-1, keepdims=True), approx=True)
        oh = jnp.einsum('bmk,bkd->bmd', p, v3,
                        preferred_element_type=jnp.float32)              # (B, nh*S, E)
        o = jnp.sum(oh.reshape(B, nh, S, E) * head_mask, axis=1)         # (B, S, E)
        o2 = jnp.dot(o.reshape(B * S, E), wo,
                     preferred_element_type=jnp.float32) + bo
        return _ln(o2 + xq2, g, b, eps)                    # residual == query input

    enhanced = attn_block(0, f_edep, f_edep)               # self-attention block
    cross = attn_block(1, enhanced, fdn.reshape(B * S, E)) # cross-modal attention
    cross_ref[...] = cross

    # ---------- lane-dense scalar slab: rows = [mi x5, entropy, 0, 0] ----------
    slab = jnp.concatenate(
        [jnp.broadcast_to(mi, (NUM_MI, 128)),
         jnp.broadcast_to(ent, (1, 128)),
         jnp.zeros((2, 128), jnp.float32)], axis=0)
    scal_ref[...] = slab


# ----------------------------- forward pass -----------------------------

def hfs_forward(params, F_d, F_e, F_n, key):
    B, S, D = F_d.shape

    # torch.randperm per estimator -> one vmapped permutation, as one-hot matrices
    keys = jax.random.split(key, NUM_MI)
    perm_idx = jax.vmap(lambda k: jax.random.permutation(k, B))(keys)    # (5, B)
    perm_mats = jax.nn.one_hot(perm_idx, B, dtype=jnp.float32)           # (5, B, B)

    kern = functools.partial(_hfs_kernel, nh=NUM_HEADS, eps=LN_EPS, log_b=math.log(B))
    cross2, nondep2, slab = pl.pallas_call(
        kern,
        out_shape=(jax.ShapeDtypeStruct((B * S, D), jnp.float32),   # F_eDep_cross
                   jax.ShapeDtypeStruct((B * S, D), jnp.float32),   # F_eNonDep
                   jax.ShapeDtypeStruct((8, 128), jnp.float32)),    # mi x5 + entropy
    )(F_d, F_e, F_n, perm_mats, params["head_mask"], params["inln"],
      params["sep_w0"], params["sep_w3"], params["sep_b3"], params["sep_vec"],
      params["mi_pw"], params["mi_w0"], params["mi_vec"], params["mi_b3"],
      params["attn_wq"], params["attn_wkv"], params["attn_wo"], params["attn_vec"])

    F_eDep_cross = cross2.reshape(B, S, D)
    F_eNonDep = nondep2.reshape(B, S, D)
    mi_d_n, mi_e_d, mi_e_n = slab[0, 0], slab[1, 0], slab[2, 0]
    mi_edep_d, mi_edep_enondep = slab[3, 0], slab[4, 0]
    entropy_e = slab[5, 0]

    lam0 = lam1 = lam2 = 1.0
    lam3 = 0.1
    alpha = 1.0
    L_MI1 = -lam0 * mi_d_n - lam1 * mi_e_d - lam2 * mi_e_n + lam3 * entropy_e
    L_MI2 = mi_edep_d - mi_edep_enondep
    L_cls = jnp.float32(0.0)
    L_total = -L_MI1 + alpha * L_MI2
    # TODO(synk): classifier / SequentialLightweightClassifier branch only runs when
    # labels are provided; the reference forward is exercised with labels=None.
    losses = {"L_MI1": -L_MI1, "L_MI2": L_MI2, "L_cls": L_cls, "L_total": L_total}
    return F_eDep_cross, F_eNonDep, losses


# ----------------------------- parameter init -----------------------------

def init_params(key, D, H=MI_HIDDEN):
    E = D
    G = NUM_MI
    nh = NUM_HEADS
    dh = E // nh

    def lin(k, din, dout, lead=None):
        kw, kb = jax.random.split(k)
        wshape = (din, dout) if lead is None else (lead, din, dout)
        bshape = (1, dout) if lead is None else (lead, 1, dout)
        return (jax.random.normal(kw, wshape, jnp.float32) / jnp.sqrt(jnp.float32(din)),
                0.01 * jax.random.normal(kb, bshape, jnp.float32))

    ones = lambda s: jnp.ones(s, jnp.float32)
    zeros = lambda s: jnp.zeros(s, jnp.float32)

    ks = jax.random.split(key, 5)

    # separator: Linear(D,2D) -> LN(2D) -> SiLU -> Linear(2D,2D); last layer split
    # into dep / nondep halves so the kernel emits both streams without lane slices.
    sw0, sb0 = lin(ks[0], D, 2 * D)
    sw3, sb3 = lin(ks[1], 2 * D, 2 * D)
    sep = dict(
        sep_w0=sw0,
        sep_w3=jnp.stack([sw3[:, :D], sw3[:, D:]], axis=0),     # (2, 2D, D)
        sep_b3=jnp.stack([sb3[:, :D], sb3[:, D:]], axis=0),     # (2, 1, D)
        sep_vec=jnp.stack([sb0, ones((1, 2 * D)), zeros((1, 2 * D))], axis=0))

    # attention blocks (0 = self, 1 = cross): fused K/V weight, packed biases + LN
    def attn(k):
        k0, k1, k2, k3 = jax.random.split(k, 4)
        wq, bq = lin(k0, E, E)
        wk, bk = lin(k1, E, E)
        wv, bv = lin(k2, E, E)
        wo, bo = lin(k3, E, E)
        wkv = jnp.concatenate([wk, wv], axis=1)                  # (E, 2E)
        vec = jnp.stack([bq, bk, bv, bo, ones((1, E)), zeros((1, E))], axis=0)
        return wq, wkv, wo, vec

    sa, ca = attn(ks[2]), attn(ks[3])
    attn_p = dict(
        attn_wq=jnp.stack([sa[0], ca[0]], axis=0),               # (2, E, E)
        attn_wkv=jnp.stack([sa[1], ca[1]], axis=0),              # (2, E, 2E)
        attn_wo=jnp.stack([sa[2], ca[2]], axis=0),               # (2, E, E)
        attn_vec=jnp.stack([sa[3], ca[3]], axis=0))              # (2, 6, 1, E)

    # MI estimator bank (order: mi_d_n, mi_e_d, mi_e_n, mi_edep_d, mi_edep_enondep)
    km = jax.random.split(ks[4], 6)
    pxw, pxb = lin(km[0], D, H, lead=G)
    pyw, pyb = lin(km[1], D, H, lead=G)
    w0x, _ = lin(km[2], H, H, lead=G)      # rows 0:H   of net[0] weight
    w0y, b0 = lin(km[3], H, H, lead=G)     # rows H:2H of net[0] weight
    w3t = jax.random.normal(km[4], (G, 1, H), jnp.float32) / jnp.sqrt(jnp.float32(H))
    b3 = 0.01 * jax.random.normal(km[5], (G, 1, 1), jnp.float32)
    mi_p = dict(
        mi_pw=jnp.stack([pxw, pyw], axis=0),                     # (2, G, D, H)
        mi_w0=jnp.stack([w0x, w0y], axis=0),                     # (2, G, H, H)
        mi_vec=jnp.stack([pxb, pyb, ones((G, 1, H)), zeros((G, 1, H)),
                          b0, ones((G, 1, H)), zeros((G, 1, H)), w3t], axis=0),
        mi_b3=b3)                                                # (G, 1, 1)

    # static one-hot head-lane mask used to batch all heads into one matmul
    lane = jnp.arange(E)[None, None, None, :]
    hid = jnp.arange(nh)[None, :, None, None]
    head_mask = ((lane >= hid * dh) & (lane < (hid + 1) * dh)).astype(jnp.float32)

    return {"inln": jnp.stack([ones((1, D)), zeros((1, D))], axis=0),  # (2, 1, D)
            "head_mask": head_mask, **sep, **attn_p, **mi_p}


# ----------------------------- main -----------------------------

if __name__ == "__main__":
    key = jax.random.PRNGKey(0)
    kd, ke, kn, kp, kf = jax.random.split(key, 5)
    B, S, D = 2, 8, 32  # feature_dim=32 (divisible by num_heads=8)
    F_d = jax.random.normal(kd, (B, S, D), jnp.float32)
    F_e = jax.random.normal(ke, (B, S, D), jnp.float32)
    F_n = jax.random.normal(kn, (B, S, D), jnp.float32)

    params = init_params(kp, D)
    fwd = jax.jit(hfs_forward)
    F_eDep_cross, F_eNonDep, losses = fwd(params, F_d, F_e, F_n, kf)
    jax.block_until_ready((F_eDep_cross, F_eNonDep, losses))

    assert F_eDep_cross.shape == (B, S, D)
    assert F_eNonDep.shape == (B, S, D)
    assert all(bool(jnp.isfinite(v)) for v in losses.values())
    print("KERNEL_OK")
</pallas_src>

<mosaic_0001>
module attributes {stable_mosaic.version = 11 : i64} {
  func.func @_hfs_kernel(%arg0: memref<2x8x32xf32, #tpu.memory_space<vmem>>, %arg1: memref<2x8x32xf32, #tpu.memory_space<vmem>>, %arg2: memref<2x8x32xf32, #tpu.memory_space<vmem>>, %arg3: memref<5x2x2xf32, #tpu.memory_space<vmem>>, %arg4: memref<1x8x1x32xf32, #tpu.memory_space<vmem>>, %arg5: memref<2x1x32xf32, #tpu.memory_space<vmem>>, %arg6: memref<32x64xf32, #tpu.memory_space<vmem>>, %arg7: memref<2x64x32xf32, #tpu.memory_space<vmem>>, %arg8: memref<2x1x32xf32, #tpu.memory_space<vmem>>, %arg9: memref<3x1x64xf32, #tpu.memory_space<vmem>>, %arg10: memref<2x5x32x128xf32, #tpu.memory_space<vmem>>, %arg11: memref<2x5x128x128xf32, #tpu.memory_space<vmem>>, %arg12: memref<8x5x1x128xf32, #tpu.memory_space<vmem>>, %arg13: memref<5x1x1xf32, #tpu.memory_space<vmem>>, %arg14: memref<2x32x32xf32, #tpu.memory_space<vmem>>, %arg15: memref<2x32x64xf32, #tpu.memory_space<vmem>>, %arg16: memref<2x32x32xf32, #tpu.memory_space<vmem>>, %arg17: memref<2x6x1x32xf32, #tpu.memory_space<vmem>>, %arg18: memref<16x32xf32, #tpu.memory_space<vmem>>, %arg19: memref<16x32xf32, #tpu.memory_space<vmem>>, %arg20: memref<8x128xf32, #tpu.memory_space<vmem>>) attributes {dimension_semantics = [], scalar_prefetch = 0 : i64, scratch_operands = 0 : i64, tpu.core_type = #tpu.core_type<tc>} {
    %c0 = arith.constant 0 : index
    %c0_0 = arith.constant 0 : index
    %c0_1 = arith.constant 0 : index
    %0 = vector.load %arg5[%c0, %c0_0, %c0_1] : memref<2x1x32xf32, #tpu.memory_space<vmem>>, vector<2x1x32xf32>
    %1 = vector.extract_strided_slice %0 {offsets = [0, 0, 0], sizes = [1, 1, 32], strides = [1, 1, 1]} : vector<2x1x32xf32> to vector<1x1x32xf32>
    %2 = vector.shape_cast %1 : vector<1x1x32xf32> to vector<1x32xf32>
    %3 = vector.extract_strided_slice %0 {offsets = [1, 0, 0], sizes = [1, 1, 32], strides = [1, 1, 1]} : vector<2x1x32xf32> to vector<1x1x32xf32>
    %4 = vector.shape_cast %3 : vector<1x1x32xf32> to vector<1x32xf32>
    %c0_2 = arith.constant 0 : index
    %c0_3 = arith.constant 0 : index
    %c0_4 = arith.constant 0 : index
    %5 = vector.load %arg0[%c0_2, %c0_3, %c0_4] : memref<2x8x32xf32, #tpu.memory_space<vmem>>, vector<2x8x32xf32>
    %cst = arith.constant dense<0.000000e+00> : vector<2x8xf32>
    %6 = vector.multi_reduction <add>, %5, %cst [2] : vector<2x8x32xf32> to vector<2x8xf32>
    %7 = vector.shape_cast %6 : vector<2x8xf32> to vector<2x8x1xf32>
    %cst_5 = arith.constant 3.200000e+01 : f32
    %8 = vector.broadcast %cst_5 : f32 to vector<2x8x1xf32>
    %9 = arith.divf %7, %8 : vector<2x8x1xf32>
    %10 = vector.broadcast %9 : vector<2x8x1xf32> to vector<2x8x32xf32>
    %11 = arith.subf %5, %10 : vector<2x8x32xf32>
    %12 = arith.mulf %11, %11 : vector<2x8x32xf32>
    %cst_6 = arith.constant dense<0.000000e+00> : vector<2x8xf32>
    %13 = vector.multi_reduction <add>, %12, %cst_6 [2] : vector<2x8x32xf32> to vector<2x8xf32>
    %14 = vector.shape_cast %13 : vector<2x8xf32> to vector<2x8x1xf32>
    %cst_7 = arith.constant 3.200000e+01 : f32
    %15 = vector.broadcast %cst_7 : f32 to vector<2x8x1xf32>
    %16 = arith.divf %14, %15 : vector<2x8x1xf32>
    %17 = vector.broadcast %9 : vector<2x8x1xf32> to vector<2x8x32xf32>
    %18 = arith.subf %5, %17 : vector<2x8x32xf32>
    %cst_8 = arith.constant 9.99999974E-6 : f32
    %19 = vector.broadcast %cst_8 : f32 to vector<2x8x1xf32>
    %20 = arith.addf %16, %19 : vector<2x8x1xf32>
    %21 = math.rsqrt %20 : vector<2x8x1xf32>
    %22 = vector.broadcast %21 : vector<2x8x1xf32> to vector<2x8x32xf32>
    %23 = arith.mulf %18, %22 : vector<2x8x32xf32>
    %24 = vector.shape_cast %2 : vector<1x32xf32> to vector<1x1x32xf32>
    %25 = vector.broadcast %24 : vector<1x1x32xf32> to vector<2x8x32xf32>
    %26 = arith.mulf %23, %25 : vector<2x8x32xf32>
    %27 = vector.shape_cast %4 : vector<1x32xf32> to vector<1x1x32xf32>
    %28 = vector.broadcast %27 : vector<1x1x32xf32> to vector<2x8x32xf32>
    %29 = arith.addf %26, %28 : vector<2x8x32xf32>
    %c0_9 = arith.constant 0 : index
    %c0_10 = arith.constant 0 : index
    %c0_11 = arith.constant 0 : index
    %30 = vector.load %arg1[%c0_9, %c0_10, %c0_11] : memref<2x8x32xf32, #tpu.memory_space<vmem>>, vector<2x8x32xf32>
    %cst_12 = arith.constant dense<0.000000e+00> : vector<2x8xf32>
    %31 = vector.multi_reduction <add>, %30, %cst_12 [2] : vector<2x8x32xf32> to vector<2x8xf32>
    %32 = vector.shape_cast %31 : vector<2x8xf32> to vector<2x8x1xf32>
    %cst_13 = arith.constant 3.200000e+01 : f32
    %33 = vector.broadcast %cst_13 : f32 to vector<2x8x1xf32>
    %34 = arith.divf %32, %33 : vector<2x8x1xf32>
    %35 = vector.broadcast %34 : vector<2x8x1xf32> to vector<2x8x32xf32>
    %36 = arith.subf %30, %35 : vector<2x8x32xf32>
    %37 = arith.mulf %36, %36 : vector<2x8x32xf32>
    %cst_14 = arith.constant dense<0.000000e+00> : vector<2x8xf32>
    %38 = vector.multi_reduction <add>, %37, %cst_14 [2] : vector<2x8x32xf32> to vector<2x8xf32>
    %39 = vector.shape_cast %38 : vector<2x8xf32> to vector<2x8x1xf32>
    %cst_15 = arith.constant 3.200000e+01 : f32
    %40 = vector.broadcast %cst_15 : f32 to vector<2x8x1xf32>
    %41 = arith.divf %39, %40 : vector<2x8x1xf32>
    %42 = vector.broadcast %34 : vector<2x8x1xf32> to vector<2x8x32xf32>
    %43 = arith.subf %30, %42 : vector<2x8x32xf32>
    %cst_16 = arith.constant 9.99999974E-6 : f32
    %44 = vector.broadcast %cst_16 : f32 to vector<2x8x1xf32>
    %45 = arith.addf %41, %44 : vector<2x8x1xf32>
    %46 = math.rsqrt %45 : vector<2x8x1xf32>
    %47 = vector.broadcast %46 : vector<2x8x1xf32> to vector<2x8x32xf32>
    %48 = arith.mulf %43, %47 : vector<2x8x32xf32>
    %49 = vector.shape_cast %2 : vector<1x32xf32> to vector<1x1x32xf32>
    %50 = vector.broadcast %49 : vector<1x1x32xf32> to vector<2x8x32xf32>
    %51 = arith.mulf %48, %50 : vector<2x8x32xf32>
    %52 = vector.shape_cast %4 : vector<1x32xf32> to vector<1x1x32xf32>
    %53 = vector.broadcast %52 : vector<1x1x32xf32> to vector<2x8x32xf32>
    %54 = arith.addf %51, %53 : vector<2x8x32xf32>
    %c0_17 = arith.constant 0 : index
    %c0_18 = arith.constant 0 : index
    %c0_19 = arith.constant 0 : index
    %55 = vector.load %arg2[%c0_17, %c0_18, %c0_19] : memref<2x8x32xf32, #tpu.memory_space<vmem>>, vector<2x8x32xf32>
    %cst_20 = arith.constant dense<0.000000e+00> : vector<2x8xf32>
    %56 = vector.multi_reduction <add>, %55, %cst_20 [2] : vector<2x8x32xf32> to vector<2x8xf32>
    %57 = vector.shape_cast %56 : vector<2x8xf32> to vector<2x8x1xf32>
    %cst_21 = arith.constant 3.200000e+01 : f32
    %58 = vector.broadcast %cst_21 : f32 to vector<2x8x1xf32>
    %59 = arith.divf %57, %58 : vector<2x8x1xf32>
    %60 = vector.broadcast %59 : vector<2x8x1xf32> to vector<2x8x32xf32>
    %61 = arith.subf %55, %60 : vector<2x8x32xf32>
    %62 = arith.mulf %61, %61 : vector<2x8x32xf32>
    %cst_22 = arith.constant dense<0.000000e+00> : vector<2x8xf32>
    %63 = vector.multi_reduction <add>, %62, %cst_22 [2] : vector<2x8x32xf32> to vector<2x8xf32>
    %64 = vector.shape_cast %63 : vector<2x8xf32> to vector<2x8x1xf32>
    %cst_23 = arith.constant 3.200000e+01 : f32
    %65 = vector.broadcast %cst_23 : f32 to vector<2x8x1xf32>
    %66 = arith.divf %64, %65 : vector<2x8x1xf32>
    %67 = vector.broadcast %59 : vector<2x8x1xf32> to vector<2x8x32xf32>
    %68 = arith.subf %55, %67 : vector<2x8x32xf32>
    %cst_24 = arith.constant 9.99999974E-6 : f32
    %69 = vector.broadcast %cst_24 : f32 to vector<2x8x1xf32>
    %70 = arith.addf %66, %69 : vector<2x8x1xf32>
    %71 = math.rsqrt %70 : vector<2x8x1xf32>
    %72 = vector.broadcast %71 : vector<2x8x1xf32> to vector<2x8x32xf32>
    %73 = arith.mulf %68, %72 : vector<2x8x32xf32>
    %74 = vector.shape_cast %2 : vector<1x32xf32> to vector<1x1x32xf32>
    %75 = vector.broadcast %74 : vector<1x1x32xf32> to vector<2x8x32xf32>
    %76 = arith.mulf %73, %75 : vector<2x8x32xf32>
    %77 = vector.shape_cast %4 : vector<1x32xf32> to vector<1x1x32xf32>
    %78 = vector.broadcast %77 : vector<1x1x32xf32> to vector<2x8x32xf32>
    %79 = arith.addf %76, %78 : vector<2x8x32xf32>
    %cst_25 = arith.constant dense<0.000000e+00> : vector<2x32xf32>
    %80 = vector.multi_reduction <add>, %29, %cst_25 [1] : vector<2x8x32xf32> to vector<2x32xf32>
    %cst_26 = arith.constant 8.000000e+00 : f32
    %81 = vector.broadcast %cst_26 : f32 to vector<2x32xf32>
    %82 = arith.divf %80, %81 : vector<2x32xf32>
    %cst_27 = arith.constant dense<0.000000e+00> : vector<2x32xf32>
    %83 = vector.multi_reduction <add>, %54, %cst_27 [1] : vector<2x8x32xf32> to vector<2x32xf32>
    %cst_28 = arith.constant 8.000000e+00 : f32
    %84 = vector.broadcast %cst_28 : f32 to vector<2x32xf32>
    %85 = arith.divf %83, %84 : vector<2x32xf32>
    %cst_29 = arith.constant dense<0.000000e+00> : vector<2x32xf32>
    %86 = vector.multi_reduction <add>, %79, %cst_29 [1] : vector<2x8x32xf32> to vector<2x32xf32>
    %cst_30 = arith.constant 8.000000e+00 : f32
    %87 = vector.broadcast %cst_30 : f32 to vector<2x32xf32>
    %88 = arith.divf %86, %87 : vector<2x32xf32>
    %cst_31 = arith.constant dense<0xFF800000> : vector<2xf32>
    %89 = vector.multi_reduction <maximumf>, %85, %cst_31 [1] : vector<2x32xf32> to vector<2xf32>
    %90 = vector.shape_cast %89 : vector<2xf32> to vector<2x1xf32>
    %91 = vector.broadcast %90 : vector<2x1xf32> to vector<2x32xf32>
    %92 = arith.subf %85, %91 : vector<2x32xf32>
    %93 = math.exp %92 : vector<2x32xf32>
    %cst_32 = arith.constant dense<0.000000e+00> : vector<2xf32>
    %94 = vector.multi_reduction <add>, %93, %cst_32 [1] : vector<2x32xf32> to vector<2xf32>
    %95 = vector.shape_cast %94 : vector<2xf32> to vector<2x1xf32>
    %96 = vector.broadcast %95 : vector<2x1xf32> to vector<2x32xf32>
    %97 = arith.divf %93, %96 : vector<2x32xf32>
    %cst_33 = arith.constant 9.99999993E-9 : f32
    %98 = vector.broadcast %cst_33 : f32 to vector<2x32xf32>
    %99 = arith.addf %97, %98 : vector<2x32xf32>
    %100 = math.log %99 : vector<2x32xf32>
    %101 = arith.mulf %97, %100 : vector<2x32xf32>
    %cst_34 = arith.constant dense<0.000000e+00> : vector<2xf32>
    %102 = vector.multi_reduction <add>, %101, %cst_34 [1] : vector<2x32xf32> to vector<2xf32>
    %103 = vector.shape_cast %102 : vector<2xf32> to vector<2x1xf32>
    %cst_35 = arith.constant 0.000000e+00 : f32
    %104 = vector.broadcast %cst_35 : f32 to vector<2x1xf32>
    %105 = arith.subf %104, %103 : vector<2x1xf32>
    %cst_36 = arith.constant dense<0.000000e+00> : vector<1xf32>
    %106 = vector.multi_reduction <add>, %105, %cst_36 [0] : vector<2x1xf32> to vector<1xf32>
    %107 = vector.shape_cast %106 : vector<1xf32> to vector<1x1xf32>
    %cst_37 = arith.constant 2.000000e+00 : f32
    %108 = vector.broadcast %cst_37 : f32 to vector<1x1xf32>
    %109 = arith.divf %107, %108 : vector<1x1xf32>
    %c0_38 = arith.constant 0 : index
    %c0_39 = arith.constant 0 : index
    %c0_40 = arith.constant 0 : index
    %110 = vector.load %arg9[%c0_38, %c0_39, %c0_40] : memref<3x1x64xf32, #tpu.memory_space<vmem>>, vector<3x1x64xf32>
    %111 = vector.shape_cast %54 : vector<2x8x32xf32> to vector<16x32xf32>
    %c0_41 = arith.constant 0 : index
    %c0_42 = arith.constant 0 : index
    %112 = vector.load %arg6[%c0_41, %c0_42] : memref<32x64xf32, #tpu.memory_space<vmem>>, vector<32x64xf32>
    %cst_43 = arith.constant dense<0.000000e+00> : vector<16x64xf32>
    %113 = tpu.matmul %111, %112, %cst_43 {dimension_numbers = #tpu.dot_dimension_numbers<[1], [0], [0], [1], [0, 0, 1, 1], [], []>} : vector<16x32xf32>, vector<32x64xf32>, vector<16x64xf32> -> vector<16x64xf32>
    %114 = vector.extract_strided_slice %110 {offsets = [0, 0, 0], sizes = [1, 1, 64], strides = [1, 1, 1]} : vector<3x1x64xf32> to vector<1x1x64xf32>
    %115 = vector.shape_cast %114 : vector<1x1x64xf32> to vector<1x64xf32>
    %116 = vector.broadcast %115 : vector<1x64xf32> to vector<16x64xf32>
    %117 = arith.addf %113, %116 : vector<16x64xf32>
    %118 = vector.extract_strided_slice %110 {offsets = [1, 0, 0], sizes = [1, 1, 64], strides = [1, 1, 1]} : vector<3x1x64xf32> to vector<1x1x64xf32>
    %119 = vector.shape_cast %118 : vector<1x1x64xf32> to vector<1x64xf32>
    %120 = vector.extract_strided_slice %110 {offsets = [2, 0, 0], sizes = [1, 1, 64], strides = [1, 1, 1]} : vector<3x1x64xf32> to vector<1x1x64xf32>
    %121 = vector.shape_cast %120 : vector<1x1x64xf32> to vector<1x64xf32>
    %cst_44 = arith.constant dense<0.000000e+00> : vector<16xf32>
    %122 = vector.multi_reduction <add>, %117, %cst_44 [1] : vector<16x64xf32> to vector<16xf32>
    %123 = vector.shape_cast %122 : vector<16xf32> to vector<16x1xf32>
    %cst_45 = arith.constant 6.400000e+01 : f32
    %124 = vector.broadcast %cst_45 : f32 to vector<16x1xf32>
    %125 = arith.divf %123, %124 : vector<16x1xf32>
    %126 = vector.broadcast %125 : vector<16x1xf32> to vector<16x64xf32>
    %127 = arith.subf %117, %126 : vector<16x64xf32>
    %128 = arith.mulf %127, %127 : vector<16x64xf32>
    %cst_46 = arith.constant dense<0.000000e+00> : vector<16xf32>
    %129 = vector.multi_reduction <add>, %128, %cst_46 [1] : vector<16x64xf32> to vector<16xf32>
    %130 = vector.shape_cast %129 : vector<16xf32> to vector<16x1xf32>
    %cst_47 = arith.constant 6.400000e+01 : f32
    %131 = vector.broadcast %cst_47 : f32 to vector<16x1xf32>
    %132 = arith.divf %130, %131 : vector<16x1xf32>
    %133 = vector.broadcast %125 : vector<16x1xf32> to vector<16x64xf32>
    %134 = arith.subf %117, %133 : vector<16x64xf32>
    %cst_48 = arith.constant 9.99999974E-6 : f32
    %135 = vector.broadcast %cst_48 : f32 to vector<16x1xf32>
    %136 = arith.addf %132, %135 : vector<16x1xf32>
    %137 = math.rsqrt %136 : vector<16x1xf32>
    %138 = vector.broadcast %137 : vector<16x1xf32> to vector<16x64xf32>
    %139 = arith.mulf %134, %138 : vector<16x64xf32>
    %140 = vector.broadcast %119 : vector<1x64xf32> to vector<16x64xf32>
    %141 = arith.mulf %139, %140 : vector<16x64xf32>
    %142 = vector.broadcast %121 : vector<1x64xf32> to vector<16x64xf32>
    %143 = arith.addf %141, %142 : vector<16x64xf32>
    %144 = arith.negf %143 : vector<16x64xf32>
    %145 = math.exp %144 : vector<16x64xf32>
    %cst_49 = arith.constant 1.000000e+00 : f32
    %146 = vector.broadcast %cst_49 : f32 to vector<16x64xf32>
    %147 = arith.addf %146, %145 : vector<16x64xf32>
    %148 = arith.divf %146, %147 : vector<16x64xf32>
    %149 = arith.mulf %143, %148 : vector<16x64xf32>
    %c0_50 = arith.constant 0 : index
    %c0_51 = arith.constant 0 : index
    %c0_52 = arith.constant 0 : index
    %150 = vector.load %arg7[%c0_50, %c0_51, %c0_52] : memref<2x64x32xf32, #tpu.memory_space<vmem>>, vector<2x64x32xf32>
    %c0_53 = arith.constant 0 : index
    %c0_54 = arith.constant 0 : index
    %c0_55 = arith.constant 0 : index
    %151 = vector.load %arg8[%c0_53, %c0_54, %c0_55] : memref<2x1x32xf32, #tpu.memory_space<vmem>>, vector<2x1x32xf32>
    %152 = vector.extract_strided_slice %150 {offsets = [0, 0, 0], sizes = [1, 64, 32], strides = [1, 1, 1]} : vector<2x64x32xf32> to vector<1x64x32xf32>
    %153 = vector.shape_cast %152 : vector<1x64x32xf32> to vector<64x32xf32>
    %cst_56 = arith.constant dense<0.000000e+00> : vector<16x32xf32>
    %154 = tpu.matmul %149, %153, %cst_56 {dimension_numbers = #tpu.dot_dimension_numbers<[1], [0], [0], [1], [0, 0, 1, 1], [], []>} : vector<16x64xf32>, vector<64x32xf32>, vector<16x32xf32> -> vector<16x32xf32>
    %155 = vector.extract_strided_slice %151 {offsets = [0, 0, 0], sizes = [1, 1, 32], strides = [1, 1, 1]} : vector<2x1x32xf32> to vector<1x1x32xf32>
    %156 = vector.shape_cast %155 : vector<1x1x32xf32> to vector<1x32xf32>
    %157 = vector.broadcast %156 : vector<1x32xf32> to vector<16x32xf32>
    %158 = arith.addf %154, %157 : vector<16x32xf32>
    %159 = vector.extract_strided_slice %150 {offsets = [1, 0, 0], sizes = [1, 64, 32], strides = [1, 1, 1]} : vector<2x64x32xf32> to vector<1x64x32xf32>
    %160 = vector.shape_cast %159 : vector<1x64x32xf32> to vector<64x32xf32>
    %cst_57 = arith.constant dense<0.000000e+00> : vector<16x32xf32>
    %161 = tpu.matmul %149, %160, %cst_57 {dimension_numbers = #tpu.dot_dimension_numbers<[1], [0], [0], [1], [0, 0, 1, 1], [], []>} : vector<16x64xf32>, vector<64x32xf32>, vector<16x32xf32> -> vector<16x32xf32>
    %162 = vector.extract_strided_slice %151 {offsets = [1, 0, 0], sizes = [1, 1, 32], strides = [1, 1, 1]} : vector<2x1x32xf32> to vector<1x1x32xf32>
    %163 = vector.shape_cast %162 : vector<1x1x32xf32> to vector<1x32xf32>
    %164 = vector.broadcast %163 : vector<1x32xf32> to vector<16x32xf32>
    %165 = arith.addf %161, %164 : vector<16x32xf32>
    %c0_58 = arith.constant 0 : index
    %c0_59 = arith.constant 0 : index
    %166 = vector.load %arg19[%c0_58, %c0_59] : memref<16x32xf32, #tpu.memory_space<vmem>>, vector<16x32xf32>
    tpu.vector_store %arg19[%c0_58, %c0_59], %165 {strides = array<i32>} : memref<16x32xf32, #tpu.memory_space<vmem>>, vector<16x32xf32>,
    %167 = vector.shape_cast %158 : vector<16x32xf32> to vector<2x8x32xf32>
    %cst_60 = arith.constant dense<0.000000e+00> : vector<2x32xf32>
    %168 = vector.multi_reduction <add>, %167, %cst_60 [1] : vector<2x8x32xf32> to vector<2x32xf32>
    %cst_61 = arith.constant 8.000000e+00 : f32
    %169 = vector.broadcast %cst_61 : f32 to vector<2x32xf32>
    %170 = arith.divf %168, %169 : vector<2x32xf32>
    %171 = vector.shape_cast %165 : vector<16x32xf32> to vector<2x8x32xf32>
    %cst_62 = arith.constant dense<0.000000e+00> : vector<2x32xf32>
    %172 = vector.multi_reduction <add>, %171, %cst_62 [1] : vector<2x8x32xf32> to vector<2x32xf32>
    %cst_63 = arith.constant 8.000000e+00 : f32
    %173 = vector.broadcast %cst_63 : f32 to vector<2x32xf32>
    %174 = arith.divf %172, %173 : vector<2x32xf32>
    %175 = vector.shape_cast %82 : vector<2x32xf32> to vector<1x2x32xf32>
    %176 = vector.shape_cast %85 : vector<2x32xf32> to vector<1x2x32xf32>
    %177 = vector.shape_cast %85 : vector<2x32xf32> to vector<1x2x32xf32>
    %178 = vector.shape_cast %170 : vector<2x32xf32> to vector<1x2x32xf32>
    %179 = vector.shape_cast %170 : vector<2x32xf32> to vector<1x2x32xf32>
    %180 = tpu.concatenate %175, %176, %177, %178, %179 in 0 : vector<1x2x32xf32>, vector<1x2x32xf32>, vector<1x2x32xf32>, vector<1x2x32xf32>, vector<1x2x32xf32> -> vector<5x2x32xf32>
    %181 = vector.shape_cast %88 : vector<2x32xf32> to vector<1x2x32xf32>
    %182 = vector.shape_cast %82 : vector<2x32xf32> to vector<1x2x32xf32>
    %183 = vector.shape_cast %88 : vector<2x32xf32> to vector<1x2x32xf32>
    %184 = vector.shape_cast %82 : vector<2x32xf32> to vector<1x2x32xf32>
    %185 = vector.shape_cast %174 : vector<2x32xf32> to vector<1x2x32xf32>
    %186 = tpu.concatenate %181, %182, %183, %184, %185 in 0 : vector<1x2x32xf32>, vector<1x2x32xf32>, vector<1x2x32xf32>, vector<1x2x32xf32>, vector<1x2x32xf32> -> vector<5x2x32xf32>
    %c0_64 = arith.constant 0 : index
    %c0_65 = arith.constant 0 : index
    %c0_66 = arith.constant 0 : index
    %c0_67 = arith.constant 0 : index
    %187 = vector.load %arg12[%c0_64, %c0_65, %c0_66, %c0_67] : memref<8x5x1x128xf32, #tpu.memory_space<vmem>>, vector<8x5x1x128xf32>
    %188 = vector.extract_strided_slice %187 {offsets = [0, 0, 0, 0], sizes = [1, 5, 1, 128], strides = [1, 1, 1, 1]} : vector<8x5x1x128xf32> to vector<1x5x1x128xf32>
    %189 = vector.shape_cast %188 : vector<1x5x1x128xf32> to vector<5x1x128xf32>
    %190 = vector.extract_strided_slice %187 {offsets = [1, 0, 0, 0], sizes = [1, 5, 1, 128], strides = [1, 1, 1, 1]} : vector<8x5x1x128xf32> to vector<1x5x1x128xf32>
    %191 = vector.shape_cast %190 : vector<1x5x1x128xf32> to vector<5x1x128xf32>
    %192 = vector.extract_strided_slice %187 {offsets = [2, 0, 0, 0], sizes = [1, 5, 1, 128], strides = [1, 1, 1, 1]} : vector<8x5x1x128xf32> to vector<1x5x1x128xf32>
    %193 = vector.shape_cast %192 : vector<1x5x1x128xf32> to vector<5x1x128xf32>
    %194 = vector.extract_strided_slice %187 {offsets = [3, 0, 0, 0], sizes = [1, 5, 1, 128], strides = [1, 1, 1, 1]} : vector<8x5x1x128xf32> to vector<1x5x1x128xf32>
    %195 = vector.shape_cast %194 : vector<1x5x1x128xf32> to vector<5x1x128xf32>
    %196 = vector.extract_strided_slice %187 {offsets = [4, 0, 0, 0], sizes = [1, 5, 1, 128], strides = [1, 1, 1, 1]} : vector<8x5x1x128xf32> to vector<1x5x1x128xf32>
    %197 = vector.shape_cast %196 : vector<1x5x1x128xf32> to vector<5x1x128xf32>
    %198 = vector.extract_strided_slice %187 {offsets = [5, 0, 0, 0], sizes = [1, 5, 1, 128], strides = [1, 1, 1, 1]} : vector<8x5x1x128xf32> to vector<1x5x1x128xf32>
    %199 = vector.shape_cast %198 : vector<1x5x1x128xf32> to vector<5x1x128xf32>
    %200 = vector.extract_strided_slice %187 {offsets = [6, 0, 0, 0], sizes = [1, 5, 1, 128], strides = [1, 1, 1, 1]} : vector<8x5x1x128xf32> to vector<1x5x1x128xf32>
    %201 = vector.shape_cast %200 : vector<1x5x1x128xf32> to vector<5x1x128xf32>
    %202 = vector.extract_strided_slice %187 {offsets = [7, 0, 0, 0], sizes = [1, 5, 1, 128], strides = [1, 1, 1, 1]} : vector<8x5x1x128xf32> to vector<1x5x1x128xf32>
    %203 = vector.shape_cast %202 : vector<1x5x1x128xf32> to vector<5x1x128xf32>
    %c0_68 = arith.constant 0 : index
    %c0_69 = arith.constant 0 : index
    %c0_70 = arith.constant 0 : index
    %c0_71 = arith.constant 0 : index
    %204 = vector.load %arg10[%c0_68, %c0_69, %c0_70, %c0_71] : memref<2x5x32x128xf32, #tpu.memory_space<vmem>>, vector<2x5x32x128xf32>
    %c0_72 = arith.constant 0 : index
    %c0_73 = arith.constant 0 : index
    %c0_74 = arith.constant 0 : index
    %c0_75 = arith.constant 0 : index
    %205 = vector.load %arg11[%c0_72, %c0_73, %c0_74, %c0_75] : memref<2x5x128x128xf32, #tpu.memory_space<vmem>>, vector<2x5x128x128xf32>
    %c0_76 = arith.constant 0 : index
    %c0_77 = arith.constant 0 : index
    %c0_78 = arith.constant 0 : index
    %206 = vector.load %arg13[%c0_76, %c0_77, %c0_78] : memref<5x1x1xf32, #tpu.memory_space<vmem>>, vector<5x1x1xf32>
    %207 = vector.extract_strided_slice %204 {offsets = [0, 0, 0, 0], sizes = [1, 5, 32, 128], strides = [1, 1, 1, 1]} : vector<2x5x32x128xf32> to vector<1x5x32x128xf32>
    %208 = vector.shape_cast %207 : vector<1x5x32x128xf32> to vector<5x32x128xf32>
    "tpu.trace_start"() <{level = 10 : i32, message = "gbd,gdh->gbh"}> : () -> ()
    %cst_79 = arith.constant dense<0.000000e+00> : vector<5x2x128xf32>
    %209 = tpu.matmul %180, %208, %cst_79 {dimension_numbers = #tpu.dot_dimension_numbers<[2], [1], [1], [2], [0, 0, 0, 1, 1, 2], [0], [0]>} : vector<5x2x32xf32>, vector<5x32x128xf32>, vector<5x2x128xf32> -> vector<5x2x128xf32>
    "tpu.trace_stop"() : () -> ()
    %210 = vector.broadcast %189 : vector<5x1x128xf32> to vector<5x2x128xf32>
    %211 = arith.addf %209, %210 : vector<5x2x128xf32>
    %cst_80 = arith.constant dense<0.000000e+00> : vector<5x2xf32>
    %212 = vector.multi_reduction <add>, %211, %cst_80 [2] : vector<5x2x128xf32> to vector<5x2xf32>
    %213 = vector.shape_cast %212 : vector<5x2xf32> to vector<5x2x1xf32>
    %cst_81 = arith.constant 1.280000e+02 : f32
    %214 = vector.broadcast %cst_81 : f32 to vector<5x2x1xf32>
    %215 = arith.divf %213, %214 : vector<5x2x1xf32>
    %216 = vector.broadcast %215 : vector<5x2x1xf32> to vector<5x2x128xf32>
    %217 = arith.subf %211, %216 : vector<5x2x128xf32>
    %218 = arith.mulf %217, %217 : vector<5x2x128xf32>
    %cst_82 = arith.constant dense<0.000000e+00> : vector<5x2xf32>
    %219 = vector.multi_reduction <add>, %218, %cst_82 [2] : vector<5x2x128xf32> to vector<5x2xf32>
    %220 = vector.shape_cast %219 : vector<5x2xf32> to vector<5x2x1xf32>
    %cst_83 = arith.constant 1.280000e+02 : f32
    %221 = vector.broadcast %cst_83 : f32 to vector<5x2x1xf32>
    %222 = arith.divf %220, %221 : vector<5x2x1xf32>
    %223 = vector.broadcast %215 : vector<5x2x1xf32> to vector<5x2x128xf32>
    %224 = arith.subf %211, %223 : vector<5x2x128xf32>
    %cst_84 = arith.constant 9.99999974E-6 : f32
    %225 = vector.broadcast %cst_84 : f32 to vector<5x2x1xf32>
    %226 = arith.addf %222, %225 : vector<5x2x1xf32>
    %227 = math.rsqrt %226 : vector<5x2x1xf32>
    %228 = vector.broadcast %227 : vector<5x2x1xf32> to vector<5x2x128xf32>
    %229 = arith.mulf %224, %228 : vector<5x2x128xf32>
    %230 = vector.broadcast %193 : vector<5x1x128xf32> to vector<5x2x128xf32>
    %231 = arith.mulf %229, %230 : vector<5x2x128xf32>
    %232 = vector.broadcast %195 : vector<5x1x128xf32> to vector<5x2x128xf32>
    %233 = arith.addf %231, %232 : vector<5x2x128xf32>
    %234 = vector.extract_strided_slice %204 {offsets = [1, 0, 0, 0], sizes = [1, 5, 32, 128], strides = [1, 1, 1, 1]} : vector<2x5x32x128xf32> to vector<1x5x32x128xf32>
    %235 = vector.shape_cast %234 : vector<1x5x32x128xf32> to vector<5x32x128xf32>
    "tpu.trace_start"() <{level = 10 : i32, message = "gbd,gdh->gbh"}> : () -> ()
    %cst_85 = arith.constant dense<0.000000e+00> : vector<5x2x128xf32>
    %236 = tpu.matmul %186, %235, %cst_85 {dimension_numbers = #tpu.dot_dimension_numbers<[2], [1], [1], [2], [0, 0, 0, 1, 1, 2], [0], [0]>} : vector<5x2x32xf32>, vector<5x32x128xf32>, vector<5x2x128xf32> -> vector<5x2x128xf32>
    "tpu.trace_stop"() : () -> ()
    %237 = vector.broadcast %191 : vector<5x1x128xf32> to vector<5x2x128xf32>
    %238 = arith.addf %236, %237 : vector<5x2x128xf32>
    %cst_86 = arith.constant dense<0.000000e+00> : vector<5x2xf32>
    %239 = vector.multi_reduction <add>, %238, %cst_86 [2] : vector<5x2x128xf32> to vector<5x2xf32>
    %240 = vector.shape_cast %239 : vector<5x2xf32> to vector<5x2x1xf32>
    %cst_87 = arith.constant 1.280000e+02 : f32
    %241 = vector.broadcast %cst_87 : f32 to vector<5x2x1xf32>
    %242 = arith.divf %240, %241 : vector<5x2x1xf32>
    %243 = vector.broadcast %242 : vector<5x2x1xf32> to vector<5x2x128xf32>
    %244 = arith.subf %238, %243 : vector<5x2x128xf32>
    %245 = arith.mulf %244, %244 : vector<5x2x128xf32>
    %cst_88 = arith.constant dense<0.000000e+00> : vector<5x2xf32>
    %246 = vector.multi_reduction <add>, %245, %cst_88 [2] : vector<5x2x128xf32> to vector<5x2xf32>
    %247 = vector.shape_cast %246 : vector<5x2xf32> to vector<5x2x1xf32>
    %cst_89 = arith.constant 1.280000e+02 : f32
    %248 = vector.broadcast %cst_89 : f32 to vector<5x2x1xf32>
    %249 = arith.divf %247, %248 : vector<5x2x1xf32>
    %250 = vector.broadcast %242 : vector<5x2x1xf32> to vector<5x2x128xf32>
    %251 = arith.subf %238, %250 : vector<5x2x128xf32>
    %cst_90 = arith.constant 9.99999974E-6 : f32
    %252 = vector.broadcast %cst_90 : f32 to vector<5x2x1xf32>
    %253 = arith.addf %249, %252 : vector<5x2x1xf32>
    %254 = math.rsqrt %253 : vector<5x2x1xf32>
    %255 = vector.broadcast %254 : vector<5x2x1xf32> to vector<5x2x128xf32>
    %256 = arith.mulf %251, %255 : vector<5x2x128xf32>
    %257 = vector.broadcast %193 : vector<5x1x128xf32> to vector<5x2x128xf32>
    %258 = arith.mulf %256, %257 : vector<5x2x128xf32>
    %259 = vector.broadcast %195 : vector<5x1x128xf32> to vector<5x2x128xf32>
    %260 = arith.addf %258, %259 : vector<5x2x128xf32>
    %c0_91 = arith.constant 0 : index
    %c0_92 = arith.constant 0 : index
    %c0_93 = arith.constant 0 : index
    %261 = vector.load %arg3[%c0_91, %c0_92, %c0_93] : memref<5x2x2xf32, #tpu.memory_space<vmem>>, vector<5x2x2xf32>
    "tpu.trace_start"() <{level = 10 : i32, message = "gij,gjh->gih"}> : () -> ()
    %cst_94 = arith.constant dense<0.000000e+00> : vector<5x2x128xf32>
    %262 = tpu.matmul %261, %260, %cst_94 {dimension_numbers = #tpu.dot_dimension_numbers<[2], [1], [1], [2], [0, 0, 0, 1, 1, 2], [0], [0]>} : vector<5x2x2xf32>, vector<5x2x128xf32>, vector<5x2x128xf32> -> vector<5x2x128xf32>
    "tpu.trace_stop"() : () -> ()
    %263 = vector.extract_strided_slice %205 {offsets = [0, 0, 0, 0], sizes = [1, 5, 128, 128], strides = [1, 1, 1, 1]} : vector<2x5x128x128xf32> to vector<1x5x128x128xf32>
    %264 = vector.shape_cast %263 : vector<1x5x128x128xf32> to vector<5x128x128xf32>
    "tpu.trace_start"() <{level = 10 : i32, message = "gbh,ghk->gbk"}> : () -> ()
    %cst_95 = arith.constant dense<0.000000e+00> : vector<5x2x128xf32>
    %265 = tpu.matmul %233, %264, %cst_95 {dimension_numbers = #tpu.dot_dimension_numbers<[2], [1], [1], [2], [0, 0, 0, 1, 1, 2], [0], [0]>} : vector<5x2x128xf32>, vector<5x128x128xf32>, vector<5x2x128xf32> -> vector<5x2x128xf32>
    "tpu.trace_stop"() : () -> ()
    %266 = tpu.concatenate %260, %262 in 1 : vector<5x2x128xf32>, vector<5x2x128xf32> -> vector<5x4x128xf32>
    %267 = vector.extract_strided_slice %205 {offsets = [1, 0, 0, 0], sizes = [1, 5, 128, 128], strides = [1, 1, 1, 1]} : vector<2x5x128x128xf32> to vector<1x5x128x128xf32>
    %268 = vector.shape_cast %267 : vector<1x5x128x128xf32> to vector<5x128x128xf32>
    "tpu.trace_start"() <{level = 10 : i32, message = "gbh,ghk->gbk"}> : () -> ()
    %cst_96 = arith.constant dense<0.000000e+00> : vector<5x4x128xf32>
    %269 = tpu.matmul %266, %268, %cst_96 {dimension_numbers = #tpu.dot_dimension_numbers<[2], [1], [1], [2], [0, 0, 0, 1, 1, 2], [0], [0]>} : vector<5x4x128xf32>, vector<5x128x128xf32>, vector<5x4x128xf32> -> vector<5x4x128xf32>
    "tpu.trace_stop"() : () -> ()
    %270 = tpu.concatenate %265, %265 in 1 : vector<5x2x128xf32>, vector<5x2x128xf32> -> vector<5x4x128xf32>
    %271 = arith.addf %270, %269 : vector<5x4x128xf32>
    %272 = vector.broadcast %197 : vector<5x1x128xf32> to vector<5x4x128xf32>
    %273 = arith.addf %271, %272 : vector<5x4x128xf32>
    %cst_97 = arith.constant dense<0.000000e+00> : vector<5x4xf32>
    %274 = vector.multi_reduction <add>, %273, %cst_97 [2] : vector<5x4x128xf32> to vector<5x4xf32>
    %275 = vector.shape_cast %274 : vector<5x4xf32> to vector<5x4x1xf32>
    %cst_98 = arith.constant 1.280000e+02 : f32
    %276 = vector.broadcast %cst_98 : f32 to vector<5x4x1xf32>
    %277 = arith.divf %275, %276 : vector<5x4x1xf32>
    %278 = vector.broadcast %277 : vector<5x4x1xf32> to vector<5x4x128xf32>
    %279 = arith.subf %273, %278 : vector<5x4x128xf32>
    %280 = arith.mulf %279, %279 : vector<5x4x128xf32>
    %cst_99 = arith.constant dense<0.000000e+00> : vector<5x4xf32>
    %281 = vector.multi_reduction <add>, %280, %cst_99 [2] : vector<5x4x128xf32> to vector<5x4xf32>
    %282 = vector.shape_cast %281 : vector<5x4xf32> to vector<5x4x1xf32>
    %cst_100 = arith.constant 1.280000e+02 : f32
    %283 = vector.broadcast %cst_100 : f32 to vector<5x4x1xf32>
    %284 = arith.divf %282, %283 : vector<5x4x1xf32>
    %285 = vector.broadcast %277 : vector<5x4x1xf32> to vector<5x4x128xf32>
    %286 = arith.subf %273, %285 : vector<5x4x128xf32>
    %cst_101 = arith.constant 9.99999974E-6 : f32
    %287 = vector.broadcast %cst_101 : f32 to vector<5x4x1xf32>
    %288 = arith.addf %284, %287 : vector<5x4x1xf32>
    %289 = math.rsqrt %288 : vector<5x4x1xf32>
    %290 = vector.broadcast %289 : vector<5x4x1xf32> to vector<5x4x128xf32>
    %291 = arith.mulf %286, %290 : vector<5x4x128xf32>
    %292 = vector.broadcast %199 : vector<5x1x128xf32> to vector<5x4x128xf32>
    %293 = arith.mulf %291, %292 : vector<5x4x128xf32>
    %294 = vector.broadcast %201 : vector<5x1x128xf32> to vector<5x4x128xf32>
    %295 = arith.addf %293, %294 : vector<5x4x128xf32>
    %296 = arith.negf %295 : vector<5x4x128xf32>
    %297 = math.exp %296 : vector<5x4x128xf32>
    %cst_102 = arith.constant 1.000000e+00 : f32
    %298 = vector.broadcast %cst_102 : f32 to vector<5x4x128xf32>
    %299 = arith.addf %298, %297 : vector<5x4x128xf32>
    %300 = arith.divf %298, %299 : vector<5x4x128xf32>
    %301 = arith.mulf %295, %300 : vector<5x4x128xf32>
    %302 = vector.broadcast %203 : vector<5x1x128xf32> to vector<5x4x128xf32>
    %303 = arith.mulf %301, %302 : vector<5x4x128xf32>
    %cst_103 = arith.constant dense<0.000000e+00> : vector<5x4xf32>
    %304 = vector.multi_reduction <add>, %303, %cst_103 [2] : vector<5x4x128xf32> to vector<5x4xf32>
    %305 = vector.shape_cast %304 : vector<5x4xf32> to vector<5x4x1xf32>
    %306 = vector.broadcast %206 : vector<5x1x1xf32> to vector<5x4x1xf32>
    %307 = arith.addf %305, %306 : vector<5x4x1xf32>
    %308 = vector.extract_strided_slice %307 {offsets = [0, 0, 0], sizes = [5, 2, 1], strides = [1, 1, 1]} : vector<5x4x1xf32> to vector<5x2x1xf32>
    %309 = vector.extract_strided_slice %307 {offsets = [0, 2, 0], sizes = [5, 2, 1], strides = [1, 1, 1]} : vector<5x4x1xf32> to vector<5x2x1xf32>
    %cst_104 = arith.constant dense<0.000000e+00> : vector<5x1xf32>
    %310 = vector.multi_reduction <add>, %308, %cst_104 [1] : vector<5x2x1xf32> to vector<5x1xf32>
    %cst_105 = arith.constant 2.000000e+00 : f32
    %311 = vector.broadcast %cst_105 : f32 to vector<5x1xf32>
    %312 = arith.divf %310, %311 : vector<5x1xf32>
    %cst_106 = arith.constant dense<0xFF800000> : vector<5x1xf32>
    %313 = vector.multi_reduction <maximumf>, %309, %cst_106 [1] : vector<5x2x1xf32> to vector<5x1xf32>
    %314 = vector.shape_cast %313 : vector<5x1xf32> to vector<5x1x1xf32>
    %315 = vector.shape_cast %314 : vector<5x1x1xf32> to vector<5x1xf32>
    %316 = vector.broadcast %314 : vector<5x1x1xf32> to vector<5x2x1xf32>
    %317 = arith.subf %309, %316 : vector<5x2x1xf32>
    %318 = math.exp %317 : vector<5x2x1xf32>
    %cst_107 = arith.constant dense<0.000000e+00> : vector<5x1xf32>
    %319 = vector.multi_reduction <add>, %318, %cst_107 [1] : vector<5x2x1xf32> to vector<5x1xf32>
    %320 = math.log %319 : vector<5x1xf32>
    %321 = arith.addf %315, %320 : vector<5x1xf32>
    %322 = arith.subf %312, %321 : vector<5x1xf32>
    %cst_108 = arith.constant 0.693147182 : f32
    %323 = vector.broadcast %cst_108 : f32 to vector<5x1xf32>
    %324 = arith.addf %322, %323 : vector<5x1xf32>
    %c0_109 = arith.constant 0 : index
    %c0_110 = arith.constant 0 : index
    %c0_111 = arith.constant 0 : index
    %c0_112 = arith.constant 0 : index
    %325 = vector.load %arg4[%c0_109, %c0_110, %c0_111, %c0_112] : memref<1x8x1x32xf32, #tpu.memory_space<vmem>>, vector<1x8x1x32xf32>
    %c0_113 = arith.constant 0 : index
    %c0_114 = arith.constant 0 : index
    %c0_115 = arith.constant 0 : index
    %326 = vector.load %arg14[%c0_113, %c0_114, %c0_115] : memref<2x32x32xf32, #tpu.memory_space<vmem>>, vector<2x32x32xf32>
    %c0_116 = arith.constant 0 : index
    %c0_117 = arith.constant 0 : index
    %c0_118 = arith.constant 0 : index
    %327 = vector.load %arg15[%c0_116, %c0_117, %c0_118] : memref<2x32x64xf32, #tpu.memory_space<vmem>>, vector<2x32x64xf32>
    %c0_119 = arith.constant 0 : index
    %c0_120 = arith.constant 0 : index
    %c0_121 = arith.constant 0 : index
    %328 = vector.load %arg16[%c0_119, %c0_120, %c0_121] : memref<2x32x32xf32, #tpu.memory_space<vmem>>, vector<2x32x32xf32>
    %c0_122 = arith.constant 0 : index
    %c0_123 = arith.constant 0 : index
    %c0_124 = arith.constant 0 : index
    %c0_125 = arith.constant 0 : index
    %329 = vector.load %arg17[%c0_122, %c0_123, %c0_124, %c0_125] : memref<2x6x1x32xf32, #tpu.memory_space<vmem>>, vector<2x6x1x32xf32>
    %330 = vector.extract_strided_slice %326 {offsets = [0, 0, 0], sizes = [1, 32, 32], strides = [1, 1, 1]} : vector<2x32x32xf32> to vector<1x32x32xf32>
    %331 = vector.shape_cast %330 : vector<1x32x32xf32> to vector<32x32xf32>
    %332 = vector.extract_strided_slice %327 {offsets = [0, 0, 0], sizes = [1, 32, 64], strides = [1, 1, 1]} : vector<2x32x64xf32> to vector<1x32x64xf32>
    %333 = vector.shape_cast %332 : vector<1x32x64xf32> to vector<32x64xf32>
    %334 = vector.extract_strided_slice %328 {offsets = [0, 0, 0], sizes = [1, 32, 32], strides = [1, 1, 1]} : vector<2x32x32xf32> to vector<1x32x32xf32>
    %335 = vector.shape_cast %334 : vector<1x32x32xf32> to vector<32x32xf32>
    %336 = vector.extract_strided_slice %329 {offsets = [0, 0, 0, 0], sizes = [1, 6, 1, 32], strides = [1, 1, 1, 1]} : vector<2x6x1x32xf32> to vector<1x6x1x32xf32>
    %337 = vector.shape_cast %336 : vector<1x6x1x32xf32> to vector<6x1x32xf32>
    %338 = vector.extract_strided_slice %337 {offsets = [0, 0, 0], sizes = [1, 1, 32], strides = [1, 1, 1]} : vector<6x1x32xf32> to vector<1x1x32xf32>
    %339 = vector.shape_cast %338 : vector<1x1x32xf32> to vector<1x32xf32>
    %340 = vector.extract_strided_slice %337 {offsets = [1, 0, 0], sizes = [1, 1, 32], strides = [1, 1, 1]} : vector<6x1x32xf32> to vector<1x1x32xf32>
    %341 = vector.shape_cast %340 : vector<1x1x32xf32> to vector<1x32xf32>
    %342 = vector.extract_strided_slice %337 {offsets = [2, 0, 0], sizes = [1, 1, 32], strides = [1, 1, 1]} : vector<6x1x32xf32> to vector<1x1x32xf32>
    %343 = vector.shape_cast %342 : vector<1x1x32xf32> to vector<1x32xf32>
    %344 = vector.extract_strided_slice %337 {offsets = [3, 0, 0], sizes = [1, 1, 32], strides = [1, 1, 1]} : vector<6x1x32xf32> to vector<1x1x32xf32>
    %345 = vector.shape_cast %344 : vector<1x1x32xf32> to vector<1x32xf32>
    %346 = vector.extract_strided_slice %337 {offsets = [4, 0, 0], sizes = [1, 1, 32], strides = [1, 1, 1]} : vector<6x1x32xf32> to vector<1x1x32xf32>
    %347 = vector.shape_cast %346 : vector<1x1x32xf32> to vector<1x32xf32>
    %348 = vector.extract_strided_slice %337 {offsets = [5, 0, 0], sizes = [1, 1, 32], strides = [1, 1, 1]} : vector<6x1x32xf32> to vector<1x1x32xf32>
    %349 = vector.shape_cast %348 : vector<1x1x32xf32> to vector<1x32xf32>
    %cst_126 = arith.constant dense<0.000000e+00> : vector<16x32xf32>
    %350 = tpu.matmul %158, %331, %cst_126 {dimension_numbers = #tpu.dot_dimension_numbers<[1], [0], [0], [1], [0, 0, 1, 1], [], []>} : vector<16x32xf32>, vector<32x32xf32>, vector<16x32xf32> -> vector<16x32xf32>
    %351 = vector.broadcast %339 : vector<1x32xf32> to vector<16x32xf32>
    %352 = arith.addf %350, %351 : vector<16x32xf32>
    %cst_127 = arith.constant dense<0.000000e+00> : vector<16x64xf32>
    %353 = tpu.matmul %158, %333, %cst_127 {dimension_numbers = #tpu.dot_dimension_numbers<[1], [0], [0], [1], [0, 0, 1, 1], [], []>} : vector<16x32xf32>, vector<32x64xf32>, vector<16x64xf32> -> vector<16x64xf32>
    %354 = vector.extract_strided_slice %353 {offsets = [0, 0], sizes = [16, 32], strides = [1, 1]} : vector<16x64xf32> to vector<16x32xf32>
    %355 = vector.broadcast %341 : vector<1x32xf32> to vector<16x32xf32>
    %356 = arith.addf %354, %355 : vector<16x32xf32>
    %357 = vector.shape_cast %356 : vector<16x32xf32> to vector<2x8x32xf32>
    %358 = vector.extract_strided_slice %353 {offsets = [0, 32], sizes = [16, 32], strides = [1, 1]} : vector<16x64xf32> to vector<16x32xf32>
    %359 = vector.broadcast %343 : vector<1x32xf32> to vector<16x32xf32>
    %360 = arith.addf %358, %359 : vector<16x32xf32>
    %361 = vector.shape_cast %360 : vector<16x32xf32> to vector<2x8x32xf32>
    %362 = vector.shape_cast %352 : vector<16x32xf32> to vector<2x1x8x32xf32>
    %363 = vector.broadcast %362 : vector<2x1x8x32xf32> to vector<2x8x8x32xf32>
    %364 = vector.broadcast %325 : vector<1x8x1x32xf32> to vector<2x8x8x32xf32>
    %365 = arith.mulf %363, %364 : vector<2x8x8x32xf32>
    %366 = vector.shape_cast %365 : vector<2x8x8x32xf32> to vector<2x64x32xf32>
    "tpu.trace_start"() <{level = 10 : i32, message = "bmd,bkd->bmk"}> : () -> ()
    %cst_128 = arith.constant dense<0.000000e+00> : vector<2x64x8xf32>
    %367 = tpu.matmul %366, %357, %cst_128 {dimension_numbers = #tpu.dot_dimension_numbers<[2], [2], [1], [1], [0, 0, 0, 1, 1, 1], [0], [0]>} : vector<2x64x32xf32>, vector<2x8x32xf32>, vector<2x64x8xf32> -> vector<2x64x8xf32>
    "tpu.trace_stop"() : () -> ()
    %cst_129 = arith.constant 5.000000e-01 : f32
    %368 = vector.broadcast %cst_129 : f32 to vector<2x64x8xf32>
    %369 = arith.mulf %367, %368 : vector<2x64x8xf32>
    %cst_130 = arith.constant dense<0xFF800000> : vector<2x64xf32>
    %370 = vector.multi_reduction <maximumf>, %369, %cst_130 [2] : vector<2x64x8xf32> to vector<2x64xf32>
    %371 = vector.shape_cast %370 : vector<2x64xf32> to vector<2x64x1xf32>
    %372 = vector.broadcast %371 : vector<2x64x1xf32> to vector<2x64x8xf32>
    %373 = arith.subf %369, %372 : vector<2x64x8xf32>
    %374 = math.exp %373 : vector<2x64x8xf32>
    %cst_131 = arith.constant dense<0.000000e+00> : vector<2x64xf32>
    %375 = vector.multi_reduction <add>, %374, %cst_131 [2] : vector<2x64x8xf32> to vector<2x64xf32>
    %376 = vector.shape_cast %375 : vector<2x64xf32> to vector<2x64x1xf32>
    %377 = tpu.reciprocal %376 {approx = true} : vector<2x64x1xf32> -> vector<2x64x1xf32>
    %378 = vector.broadcast %377 : vector<2x64x1xf32> to vector<2x64x8xf32>
    %379 = arith.mulf %374, %378 : vector<2x64x8xf32>
    "tpu.trace_start"() <{level = 10 : i32, message = "bmk,bkd->bmd"}> : () -> ()
    %cst_132 = arith.constant dense<0.000000e+00> : vector<2x64x32xf32>
    %380 = tpu.matmul %379, %361, %cst_132 {dimension_numbers = #tpu.dot_dimension_numbers<[2], [1], [1], [2], [0, 0, 0, 1, 1, 2], [0], [0]>} : vector<2x64x8xf32>, vector<2x8x32xf32>, vector<2x64x32xf32> -> vector<2x64x32xf32>
    "tpu.trace_stop"() : () -> ()
    %381 = vector.shape_cast %380 : vector<2x64x32xf32> to vector<2x8x8x32xf32>
    %382 = vector.broadcast %325 : vector<1x8x1x32xf32> to vector<2x8x8x32xf32>
    %383 = arith.mulf %381, %382 : vector<2x8x8x32xf32>
    %cst_133 = arith.constant dense<0.000000e+00> : vector<2x8x32xf32>
    %384 = vector.multi_reduction <add>, %383, %cst_133 [1] : vector<2x8x8x32xf32> to vector<2x8x32xf32>
    %385 = vector.shape_cast %384 : vector<2x8x32xf32> to vector<16x32xf32>
    %cst_134 = arith.constant dense<0.000000e+00> : vector<16x32xf32>
    %386 = tpu.matmul %385, %335, %cst_134 {dimension_numbers = #tpu.dot_dimension_numbers<[1], [0], [0], [1], [0, 0, 1, 1], [], []>} : vector<16x32xf32>, vector<32x32xf32>, vector<16x32xf32> -> vector<16x32xf32>
    %387 = vector.broadcast %345 : vector<1x32xf32> to vector<16x32xf32>
    %388 = arith.addf %386, %387 : vector<16x32xf32>
    %389 = arith.addf %388, %158 : vector<16x32xf32>
    %cst_135 = arith.constant dense<0.000000e+00> : vector<16xf32>
    %390 = vector.multi_reduction <add>, %389, %cst_135 [1] : vector<16x32xf32> to vector<16xf32>
    %391 = vector.shape_cast %390 : vector<16xf32> to vector<16x1xf32>
    %cst_136 = arith.constant 3.200000e+01 : f32
    %392 = vector.broadcast %cst_136 : f32 to vector<16x1xf32>
    %393 = arith.divf %391, %392 : vector<16x1xf32>
    %394 = vector.broadcast %393 : vector<16x1xf32> to vector<16x32xf32>
    %395 = arith.subf %389, %394 : vector<16x32xf32>
    %396 = arith.mulf %395, %395 : vector<16x32xf32>
    %cst_137 = arith.constant dense<0.000000e+00> : vector<16xf32>
    %397 = vector.multi_reduction <add>, %396, %cst_137 [1] : vector<16x32xf32> to vector<16xf32>
    %398 = vector.shape_cast %397 : vector<16xf32> to vector<16x1xf32>
    %cst_138 = arith.constant 3.200000e+01 : f32
    %399 = vector.broadcast %cst_138 : f32 to vector<16x1xf32>
    %400 = arith.divf %398, %399 : vector<16x1xf32>
    %401 = vector.broadcast %393 : vector<16x1xf32> to vector<16x32xf32>
    %402 = arith.subf %389, %401 : vector<16x32xf32>
    %cst_139 = arith.constant 9.99999974E-6 : f32
    %403 = vector.broadcast %cst_139 : f32 to vector<16x1xf32>
    %404 = arith.addf %400, %403 : vector<16x1xf32>
    %405 = math.rsqrt %404 : vector<16x1xf32>
    %406 = vector.broadcast %405 : vector<16x1xf32> to vector<16x32xf32>
    %407 = arith.mulf %402, %406 : vector<16x32xf32>
    %408 = vector.broadcast %347 : vector<1x32xf32> to vector<16x32xf32>
    %409 = arith.mulf %407, %408 : vector<16x32xf32>
    %410 = vector.broadcast %349 : vector<1x32xf32> to vector<16x32xf32>
    %411 = arith.addf %409, %410 : vector<16x32xf32>
    %412 = vector.shape_cast %29 : vector<2x8x32xf32> to vector<16x32xf32>
    %413 = vector.extract_strided_slice %326 {offsets = [1, 0, 0], sizes = [1, 32, 32], strides = [1, 1, 1]} : vector<2x32x32xf32> to vector<1x32x32xf32>
    %414 = vector.shape_cast %413 : vector<1x32x32xf32> to vector<32x32xf32>
    %415 = vector.extract_strided_slice %327 {offsets = [1, 0, 0], sizes = [1, 32, 64], strides = [1, 1, 1]} : vector<2x32x64xf32> to vector<1x32x64xf32>
    %416 = vector.shape_cast %415 : vector<1x32x64xf32> to vector<32x64xf32>
    %417 = vector.extract_strided_slice %328 {offsets = [1, 0, 0], sizes = [1, 32, 32], strides = [1, 1, 1]} : vector<2x32x32xf32> to vector<1x32x32xf32>
    %418 = vector.shape_cast %417 : vector<1x32x32xf32> to vector<32x32xf32>
    %419 = vector.extract_strided_slice %329 {offsets = [1, 0, 0, 0], sizes = [1, 6, 1, 32], strides = [1, 1, 1, 1]} : vector<2x6x1x32xf32> to vector<1x6x1x32xf32>
    %420 = vector.shape_cast %419 : vector<1x6x1x32xf32> to vector<6x1x32xf32>
    %421 = vector.extract_strided_slice %420 {offsets = [0, 0, 0], sizes = [1, 1, 32], strides = [1, 1, 1]} : vector<6x1x32xf32> to vector<1x1x32xf32>
    %422 = vector.shape_cast %421 : vector<1x1x32xf32> to vector<1x32xf32>
    %423 = vector.extract_strided_slice %420 {offsets = [1, 0, 0], sizes = [1, 1, 32], strides = [1, 1, 1]} : vector<6x1x32xf32> to vector<1x1x32xf32>
    %424 = vector.shape_cast %423 : vector<1x1x32xf32> to vector<1x32xf32>
    %425 = vector.extract_strided_slice %420 {offsets = [2, 0, 0], sizes = [1, 1, 32], strides = [1, 1, 1]} : vector<6x1x32xf32> to vector<1x1x32xf32>
    %426 = vector.shape_cast %425 : vector<1x1x32xf32> to vector<1x32xf32>
    %427 = vector.extract_strided_slice %420 {offsets = [3, 0, 0], sizes = [1, 1, 32], strides = [1, 1, 1]} : vector<6x1x32xf32> to vector<1x1x32xf32>
    %428 = vector.shape_cast %427 : vector<1x1x32xf32> to vector<1x32xf32>
    %429 = vector.extract_strided_slice %420 {offsets = [4, 0, 0], sizes = [1, 1, 32], strides = [1, 1, 1]} : vector<6x1x32xf32> to vector<1x1x32xf32>
    %430 = vector.shape_cast %429 : vector<1x1x32xf32> to vector<1x32xf32>
    %431 = vector.extract_strided_slice %420 {offsets = [5, 0, 0], sizes = [1, 1, 32], strides = [1, 1, 1]} : vector<6x1x32xf32> to vector<1x1x32xf32>
    %432 = vector.shape_cast %431 : vector<1x1x32xf32> to vector<1x32xf32>
    %cst_140 = arith.constant dense<0.000000e+00> : vector<16x32xf32>
    %433 = tpu.matmul %411, %414, %cst_140 {dimension_numbers = #tpu.dot_dimension_numbers<[1], [0], [0], [1], [0, 0, 1, 1], [], []>} : vector<16x32xf32>, vector<32x32xf32>, vector<16x32xf32> -> vector<16x32xf32>
    %434 = vector.broadcast %422 : vector<1x32xf32> to vector<16x32xf32>
    %435 = arith.addf %433, %434 : vector<16x32xf32>
    %cst_141 = arith.constant dense<0.000000e+00> : vector<16x64xf32>
    %436 = tpu.matmul %412, %416, %cst_141 {dimension_numbers = #tpu.dot_dimension_numbers<[1], [0], [0], [1], [0, 0, 1, 1], [], []>} : vector<16x32xf32>, vector<32x64xf32>, vector<16x64xf32> -> vector<16x64xf32>
    %437 = vector.extract_strided_slice %436 {offsets = [0, 0], sizes = [16, 32], strides = [1, 1]} : vector<16x64xf32> to vector<16x32xf32>
    %438 = vector.broadcast %424 : vector<1x32xf32> to vector<16x32xf32>
    %439 = arith.addf %437, %438 : vector<16x32xf32>
    %440 = vector.shape_cast %439 : vector<16x32xf32> to vector<2x8x32xf32>
    %441 = vector.extract_strided_slice %436 {offsets = [0, 32], sizes = [16, 32], strides = [1, 1]} : vector<16x64xf32> to vector<16x32xf32>
    %442 = vector.broadcast %426 : vector<1x32xf32> to vector<16x32xf32>
    %443 = arith.addf %441, %442 : vector<16x32xf32>
    %444 = vector.shape_cast %443 : vector<16x32xf32> to vector<2x8x32xf32>
    %445 = vector.shape_cast %435 : vector<16x32xf32> to vector<2x1x8x32xf32>
    %446 = vector.broadcast %445 : vector<2x1x8x32xf32> to vector<2x8x8x32xf32>
    %447 = vector.broadcast %325 : vector<1x8x1x32xf32> to vector<2x8x8x32xf32>
    %448 = arith.mulf %446, %447 : vector<2x8x8x32xf32>
    %449 = vector.shape_cast %448 : vector<2x8x8x32xf32> to vector<2x64x32xf32>
    "tpu.trace_start"() <{level = 10 : i32, message = "bmd,bkd->bmk"}> : () -> ()
    %cst_142 = arith.constant dense<0.000000e+00> : vector<2x64x8xf32>
    %450 = tpu.matmul %449, %440, %cst_142 {dimension_numbers = #tpu.dot_dimension_numbers<[2], [2], [1], [1], [0, 0, 0, 1, 1, 1], [0], [0]>} : vector<2x64x32xf32>, vector<2x8x32xf32>, vector<2x64x8xf32> -> vector<2x64x8xf32>
    "tpu.trace_stop"() : () -> ()
    %cst_143 = arith.constant 5.000000e-01 : f32
    %451 = vector.broadcast %cst_143 : f32 to vector<2x64x8xf32>
    %452 = arith.mulf %450, %451 : vector<2x64x8xf32>
    %cst_144 = arith.constant dense<0xFF800000> : vector<2x64xf32>
    %453 = vector.multi_reduction <maximumf>, %452, %cst_144 [2] : vector<2x64x8xf32> to vector<2x64xf32>
    %454 = vector.shape_cast %453 : vector<2x64xf32> to vector<2x64x1xf32>
    %455 = vector.broadcast %454 : vector<2x64x1xf32> to vector<2x64x8xf32>
    %456 = arith.subf %452, %455 : vector<2x64x8xf32>
    %457 = math.exp %456 : vector<2x64x8xf32>
    %cst_145 = arith.constant dense<0.000000e+00> : vector<2x64xf32>
    %458 = vector.multi_reduction <add>, %457, %cst_145 [2] : vector<2x64x8xf32> to vector<2x64xf32>
    %459 = vector.shape_cast %458 : vector<2x64xf32> to vector<2x64x1xf32>
    %460 = tpu.reciprocal %459 {approx = true} : vector<2x64x1xf32> -> vector<2x64x1xf32>
    %461 = vector.broadcast %460 : vector<2x64x1xf32> to vector<2x64x8xf32>
    %462 = arith.mulf %457, %461 : vector<2x64x8xf32>
    "tpu.trace_start"() <{level = 10 : i32, message = "bmk,bkd->bmd"}> : () -> ()
    %cst_146 = arith.constant dense<0.000000e+00> : vector<2x64x32xf32>
    %463 = tpu.matmul %462, %444, %cst_146 {dimension_numbers = #tpu.dot_dimension_numbers<[2], [1], [1], [2], [0, 0, 0, 1, 1, 2], [0], [0]>} : vector<2x64x8xf32>, vector<2x8x32xf32>, vector<2x64x32xf32> -> vector<2x64x32xf32>
    "tpu.trace_stop"() : () -> ()
    %464 = vector.shape_cast %463 : vector<2x64x32xf32> to vector<2x8x8x32xf32>
    %465 = vector.broadcast %325 : vector<1x8x1x32xf32> to vector<2x8x8x32xf32>
    %466 = arith.mulf %464, %465 : vector<2x8x8x32xf32>
    %cst_147 = arith.constant dense<0.000000e+00> : vector<2x8x32xf32>
    %467 = vector.multi_reduction <add>, %466, %cst_147 [1] : vector<2x8x8x32xf32> to vector<2x8x32xf32>
    %468 = vector.shape_cast %467 : vector<2x8x32xf32> to vector<16x32xf32>
    %cst_148 = arith.constant dense<0.000000e+00> : vector<16x32xf32>
    %469 = tpu.matmul %468, %418, %cst_148 {dimension_numbers = #tpu.dot_dimension_numbers<[1], [0], [0], [1], [0, 0, 1, 1], [], []>} : vector<16x32xf32>, vector<32x32xf32>, vector<16x32xf32> -> vector<16x32xf32>
    %470 = vector.broadcast %428 : vector<1x32xf32> to vector<16x32xf32>
    %471 = arith.addf %469, %470 : vector<16x32xf32>
    %472 = arith.addf %471, %411 : vector<16x32xf32>
    %cst_149 = arith.constant dense<0.000000e+00> : vector<16xf32>
    %473 = vector.multi_reduction <add>, %472, %cst_149 [1] : vector<16x32xf32> to vector<16xf32>
    %474 = vector.shape_cast %473 : vector<16xf32> to vector<16x1xf32>
    %cst_150 = arith.constant 3.200000e+01 : f32
    %475 = vector.broadcast %cst_150 : f32 to vector<16x1xf32>
    %476 = arith.divf %474, %475 : vector<16x1xf32>
    %477 = vector.broadcast %476 : vector<16x1xf32> to vector<16x32xf32>
    %478 = arith.subf %472, %477 : vector<16x32xf32>
    %479 = arith.mulf %478, %478 : vector<16x32xf32>
    %cst_151 = arith.constant dense<0.000000e+00> : vector<16xf32>
    %480 = vector.multi_reduction <add>, %479, %cst_151 [1] : vector<16x32xf32> to vector<16xf32>
    %481 = vector.shape_cast %480 : vector<16xf32> to vector<16x1xf32>
    %cst_152 = arith.constant 3.200000e+01 : f32
    %482 = vector.broadcast %cst_152 : f32 to vector<16x1xf32>
    %483 = arith.divf %481, %482 : vector<16x1xf32>
    %484 = vector.broadcast %476 : vector<16x1xf32> to vector<16x32xf32>
    %485 = arith.subf %472, %484 : vector<16x32xf32>
    %cst_153 = arith.constant 9.99999974E-6 : f32
    %486 = vector.broadcast %cst_153 : f32 to vector<16x1xf32>
    %487 = arith.addf %483, %486 : vector<16x1xf32>
    %488 = math.rsqrt %487 : vector<16x1xf32>
    %489 = vector.broadcast %488 : vector<16x1xf32> to vector<16x32xf32>
    %490 = arith.mulf %485, %489 : vector<16x32xf32>
    %491 = vector.broadcast %430 : vector<1x32xf32> to vector<16x32xf32>
    %492 = arith.mulf %490, %491 : vector<16x32xf32>
    %493 = vector.broadcast %432 : vector<1x32xf32> to vector<16x32xf32>
    %494 = arith.addf %492, %493 : vector<16x32xf32>
    %c0_154 = arith.constant 0 : index
    %c0_155 = arith.constant 0 : index
    %495 = vector.load %arg18[%c0_154, %c0_155] : memref<16x32xf32, #tpu.memory_space<vmem>>, vector<16x32xf32>
    tpu.vector_store %arg18[%c0_154, %c0_155], %494 {strides = array<i32>} : memref<16x32xf32, #tpu.memory_space<vmem>>, vector<16x32xf32>,
    %496 = vector.shape_cast %324 : vector<5x1xf32> to vector<5x1xf32>
    %497 = vector.broadcast %496 : vector<5x1xf32> to vector<5x128xf32>
    %498 = vector.shape_cast %109 : vector<1x1xf32> to vector<1x1xf32>
    %499 = vector.broadcast %498 : vector<1x1xf32> to vector<1x128xf32>
    %cst_156 = arith.constant 0.000000e+00 : f32
    %500 = vector.broadcast %cst_156 : f32 to vector<2x128xf32>
    %501 = tpu.concatenate %497, %499, %500 in 0 : vector<5x128xf32>, vector<1x128xf32>, vector<2x128xf32> -> vector<8x128xf32>
    %c0_157 = arith.constant 0 : index
    %c0_158 = arith.constant 0 : index
    %502 = vector.load %arg20[%c0_157, %c0_158] : memref<8x128xf32, #tpu.memory_space<vmem>>, vector<8x128xf32>
    tpu.vector_store %arg20[%c0_157, %c0_158], %501 {strides = array<i32>} : memref<8x128xf32, #tpu.memory_space<vmem>>, vector<8x128xf32>,
    return
  }
}

</mosaic_0001>

<llo_original>
// kernel: hfs_forward.3
$region0: #{hfs_forward.3}
  #allocation0 [shape = 'u32[]', space=smem, size = 0x4, offset = 0x4, fixed_abs, tag = 'smem constant byte address 0x4 - core index']
  #allocation1 [shape = 'u32[144,128]{1,0:T(1,128)}', space=vmem, size = 0x12000, scoped, tag = 'internal scratch']
  %s0 = inlined_call_operand.vmem [shape: f32[2,8,32], index: 0, kind: input, shape index: {}]
  %s1 = inlined_call_operand.hbm [shape: f32[2,8,32], index: 1, kind: input, shape index: {}]
  %s2 = inlined_call_operand.hbm [shape: f32[2,8,32], index: 2, kind: input, shape index: {}]
  %s3 = inlined_call_operand.vmem [shape: f32[5,2,2], index: 3, kind: input, shape index: {}]
  %s4 = inlined_call_operand.hbm [shape: f32[1,8,1,32], index: 4, kind: input, shape index: {}]
  %s5 = inlined_call_operand.hbm [shape: f32[2,1,32], index: 5, kind: input, shape index: {}]
  %s6 = inlined_call_operand.hbm [shape: f32[32,64], index: 6, kind: input, shape index: {}]
  %s7 = inlined_call_operand.vmem [shape: f32[2,64,32], index: 7, kind: input, shape index: {}]
  %s8 = inlined_call_operand.hbm [shape: f32[2,1,32], index: 8, kind: input, shape index: {}]
  %s9 = inlined_call_operand.hbm [shape: f32[3,1,64], index: 9, kind: input, shape index: {}]
  %s10 = inlined_call_operand.hbm [shape: f32[2,5,32,128], index: 10, kind: input, shape index: {}]
  %s11 = inlined_call_operand.hbm [shape: f32[2,5,128,128], index: 11, kind: input, shape index: {}]
  %s12 = inlined_call_operand.vmem [shape: f32[8,5,1,128], index: 12, kind: input, shape index: {}]
  %s13 = inlined_call_operand.vmem [shape: f32[5,1,1], index: 13, kind: input, shape index: {}]
  %s14 = inlined_call_operand.vmem [shape: f32[2,32,32], index: 14, kind: input, shape index: {}]
  %s15 = inlined_call_operand.vmem [shape: f32[2,32,64], index: 15, kind: input, shape index: {}]
  %s16 = inlined_call_operand.vmem [shape: f32[2,32,32], index: 16, kind: input, shape index: {}]
  %s17 = inlined_call_operand.vmem [shape: f32[2,6,1,32], index: 17, kind: input, shape index: {}]
  %s18 = inlined_call_operand.hbm [shape: f32[16,32], index: 18, kind: output, shape index: {0}]
  %s19 = inlined_call_operand.hbm [shape: f32[16,32], index: 19, kind: output, shape index: {1}]
  %s20 = inlined_call_operand.vmem [shape: f32[8,128], index: 20, kind: output, shape index: {2}]
  %21 = xla_tuple %s18, %s19, %s20
  %s22 = sld [smem:[#allocation0]]
  $region134: #{hfs_forward.3} parent=0
    _
  %s24 = ssub.s32 1, %s22
  %s25 = scalar_select 0, %s24, %s22
  $region1: #{hfs_forward.3} parent=0
    #allocation2 [shape = 'u8[8192]{0}', space=vmem, size = 0x2000, scoped, tag = 'input window, operand 1, single buffered']
    #allocation3 [shape = 's32[1]{0}', space=sflag, size = 0x4, scoped, tag = 'scoped memory for hfs_forward.3']
    #allocation4 [shape = 's32[1]{0}', space=sflag, size = 0x4, scoped, tag = 'scoped memory for hfs_forward.3']
    #allocation5 [shape = 'u8[8192]{0}', space=vmem, size = 0x2000, scoped, tag = 'input window, operand 2, single buffered']
    #allocation6 [shape = 's32[1]{0}', space=sflag, size = 0x4, scoped, tag = 'scoped memory for hfs_forward.3']
    #allocation7 [shape = 'u8[4096]{0}', space=vmem, size = 0x1000, scoped, tag = 'input window, operand 4, single buffered']
    #allocation8 [shape = 'u8[1024]{0}', space=vmem, size = 0x400, scoped, tag = 'input window, operand 5, single buffered']
    #allocation9 [shape = 's32[1]{0}', space=sflag, size = 0x4, scoped, tag = 'scoped memory for hfs_forward.3']
    #allocation10 [shape = 'u8[16384]{0}', space=vmem, size = 0x4000, scoped, tag = 'input window, operand 6, single buffered']
    #allocation11 [shape = 'u8[1024]{0}', space=vmem, size = 0x400, scoped, tag = 'input window, operand 8, single buffered']
    #allocation12 [shape = 's32[1]{0}', space=sflag, size = 0x4, scoped, tag = 'scoped memory for hfs_forward.3']
    #allocation13 [shape = 'u8[1536]{0}', space=vmem, size = 0x800, scoped, tag = 'input window, operand 9, single buffered']
    #allocation14 [shape = 'u8[163840]{0}', space=vmem, size = 0x28000, scoped, tag = 'input window, operand 10, single buffered']
    #allocation15 [shape = 's32[1]{0}', space=sflag, size = 0x4, scoped, tag = 'scoped memory for hfs_forward.3']
    #allocation16 [shape = 'u8[655360]{0}', space=vmem, size = 0xa0000, scoped, tag = 'input window, operand 11, single buffered']
    #allocation17 [shape = 'u8[8192]{0}', space=vmem, size = 0x2000, scoped, tag = 'output window, operand 0, single buffered']
    #allocation18 [shape = 'u8[8192]{0}', space=vmem, size = 0x2000, scoped, tag = 'output window, operand 1, single buffered']
    #allocation19 [shape = 's32[1]{0}', space=sflag, size = 0x4, scoped, tag = 'scoped memory for hfs_forward.3']
    %26 = vsyncpa [#allocation3], 0
    %27 = vsyncpa [#allocation6], 0
    %28 = vsyncpa [#allocation9], 0
    %29 = vsyncpa [#allocation12], 0
    %30 = vsyncpa [#allocation15], 0
    %31 = vsyncpa [#allocation4], 0
    %32 = vsyncpa [#allocation19], 0
    // Predicated region
    $region2: #{hfs_forward.3} parent=1 // pred_check
      _
    $region3: #{hfs_forward.3} parent=1 // pred_check_branch
      %34 = sbr.rel (0) target = $region5
    $region4: #{hfs_forward.3} parent=1 // pred_region
      _
    $region5: #{hfs_forward.3} parent=1 // pred_fallthru
      _
    // Predicated region
    $region6: #{hfs_forward.3} parent=1 // pred_check
      _
    $region7: #{hfs_forward.3} parent=1 // pred_check_branch
      %36 = sbr.rel (0) target = $region9
    $region8: #{hfs_forward.3} parent=1 // pred_region
      %s38 = ssub.s32 256, 256
      %39 = vsyncadd [#allocation3], %s38
      %s40 = sshll.u32 [#allocation2], 4
      %s41 = int_to_ptr.vmem [resolvable:$true] %s40
      %46 = dma.hbm_to_vmem [thread:$0]  %s1, 256, %s41, [#allocation3], 128, 128, 8
    $region9: #{hfs_forward.3} parent=1 // pred_fallthru
      _
    // Predicated region
    $region10: #{hfs_forward.3} parent=1 // pred_check
      _
    $region11: #{hfs_forward.3} parent=1 // pred_check_branch
      %48 = sbr.rel (0) target = $region13
    $region12: #{hfs_forward.3} parent=1 // pred_region
      %s50 = ssub.s32 256, 256
      %51 = vsyncadd [#allocation6], %s50
      %s52 = sshll.u32 [#allocation5], 4
      %s53 = int_to_ptr.vmem [resolvable:$true] %s52
      %58 = dma.hbm_to_vmem [thread:$0]  %s2, 256, %s53, [#allocation6], 128, 128, 8
    $region13: #{hfs_forward.3} parent=1 // pred_fallthru
      _
    // Predicated region
    $region14: #{hfs_forward.3} parent=1 // pred_check
      _
    $region15: #{hfs_forward.3} parent=1 // pred_check_branch
      %60 = sbr.rel (0) target = $region17
    $region16: #{hfs_forward.3} parent=1 // pred_region
      _
    $region17: #{hfs_forward.3} parent=1 // pred_fallthru
      _
    // Predicated region
    $region18: #{hfs_forward.3} parent=1 // pred_check
      _
    $region19: #{hfs_forward.3} parent=1 // pred_check_branch
      %62 = sbr.rel (0) target = $region21
    $region20: #{hfs_forward.3} parent=1 // pred_region
      %s64 = ssub.s32 128, 128
      %65 = vsyncadd [#allocation6], %s64
      %s66 = sshll.u32 [#allocation7], 4
      %s67 = int_to_ptr.vmem [resolvable:$true] %s66
      %72 = dma.hbm_to_vmem [thread:$0]  %s4, 128, %s67, [#allocation6], 16, 16, 1
    $region21: #{hfs_forward.3} parent=1 // pred_fallthru
      _
    // Predicated region
    $region22: #{hfs_forward.3} parent=1 // pred_check
      _
    $region23: #{hfs_forward.3} parent=1 // pred_check_branch
      %74 = sbr.rel (0) target = $region25
    $region24: #{hfs_forward.3} parent=1 // pred_region
      %s76 = ssub.s32 32, 32
      %77 = vsyncadd [#allocation9], %s76
      %s78 = sshll.u32 [#allocation8], 4
      %s79 = int_to_ptr.vmem [resolvable:$true] %s78
      %84 = dma.hbm_to_vmem [thread:$0]  %s5, 32, %s79, [#allocation9], 16, 16, 1
    $region25: #{hfs_forward.3} parent=1 // pred_fallthru
      _
    // Predicated region
    $region26: #{hfs_forward.3} parent=1 // pred_check
      _
    $region27: #{hfs_forward.3} parent=1 // pred_check_branch
      %86 = sbr.rel (0) target = $region29
    $region28: #{hfs_forward.3} parent=1 // pred_region
      %s88 = ssub.s32 512, 512
      %89 = vsyncadd [#allocation9], %s88
      %s90 = sshll.u32 [#allocation10], 4
      %s91 = int_to_ptr.vmem [resolvable:$true] %s90
      %96 = dma.hbm_to_vmem [thread:$0]  %s6, 512, %s91, [#allocation9], 128, 128, 8
    $region29: #{hfs_forward.3} parent=1 // pred_fallthru
      _
    // Predicated region
    $region30: #{hfs_forward.3} parent=1 // pred_check
      _
    $region31: #{hfs_forward.3} parent=1 // pred_check_branch
      %98 = sbr.rel (0) target = $region33
    $region32: #{hfs_forward.3} parent=1 // pred_region
      _
    $region33: #{hfs_forward.3} parent=1 // pred_fallthru
      _
    // Predicated region
    $region34: #{hfs_forward.3} parent=1 // pred_check
      _
    $region35: #{hfs_forward.3} parent=1 // pred_check_branch
      %100 = sbr.rel (0) target = $region37
    $region36: #{hfs_forward.3} parent=1 // pred_region
      %s102 = ssub.s32 32, 32
      %103 = vsyncadd [#allocation12], %s102
      %s104 = sshll.u32 [#allocation11], 4
      %s105 = int_to_ptr.vmem [resolvable:$true] %s104
      %110 = dma.hbm_to_vmem [thread:$0]  %s8, 32, %s105, [#allocation12], 16, 16, 1
    $region37: #{hfs_forward.3} parent=1 // pred_fallthru
      _
    // Predicated region
    $region38: #{hfs_forward.3} parent=1 // pred_check
      _
    $region39: #{hfs_forward.3} parent=1 // pred_check_branch
      %112 = sbr.rel (0) target = $region41
    $region40: #{hfs_forward.3} parent=1 // pred_region
      %s114 = ssub.s32 48, 48
      %115 = vsyncadd [#allocation12], %s114
      %s116 = sshll.u32 [#allocation13], 4
      %s117 = int_to_ptr.vmem [resolvable:$true] %s116
      %122 = dma.hbm_to_vmem [thread:$0]  %s9, 48, %s117, [#allocation12], 16, 16, 1
    $region41: #{hfs_forward.3} parent=1 // pred_fallthru
      _
    // Predicated region
    $region42: #{hfs_forward.3} parent=1 // pred_check
      _
    $region43: #{hfs_forward.3} parent=1 // pred_check_branch
      %124 = sbr.rel (0) target = $region45
    $region44: #{hfs_forward.3} parent=1 // pred_region
      %s126 = ssub.s32 5120, 5120
      %127 = vsyncadd [#allocation15], %s126
      %s128 = sshll.u32 [#allocation14], 4
      %s129 = int_to_ptr.vmem [resolvable:$true] %s128
      %134 = dma.hbm_to_vmem [thread:$0]  %s10, 5120, %s129, [#allocation15], 128, 128, 8
    $region45: #{hfs_forward.3} parent=1 // pred_fallthru
      _
    // Predicated region
    $region46: #{hfs_forward.3} parent=1 // pred_check
      _
    $region47: #{hfs_forward.3} parent=1 // pred_check_branch
      %136 = sbr.rel (0) target = $region49
    $region48: #{hfs_forward.3} parent=1 // pred_region
      %s138 = ssub.s32 20480, 20480
      %139 = vsyncadd [#allocation15], %s138
      %s140 = sshll.u32 [#allocation16], 4
      %s141 = int_to_ptr.vmem [resolvable:$true] %s140
      %146 = dma.hbm_to_vmem [thread:$0]  %s11, 20480, %s141, [#allocation15], 128, 128, 8
    $region49: #{hfs_forward.3} parent=1 // pred_fallthru
      _
    // Predicated region
    $region50: #{hfs_forward.3} parent=1 // pred_check
      _
    $region51: #{hfs_forward.3} parent=1 // pred_check_branch
      %148 = sbr.rel (0) target = $region53
    $region52: #{hfs_forward.3} parent=1 // pred_region
      _
    $region53: #{hfs_forward.3} parent=1 // pred_fallthru
      _
    // Predicated region
    $region54: #{hfs_forward.3} parent=1 // pred_check
      _
    $region55: #{hfs_forward.3} parent=1 // pred_check_branch
      %150 = sbr.rel (0) target = $region57
    $region56: #{hfs_forward.3} parent=1 // pred_region
      _
    $region57: #{hfs_forward.3} parent=1 // pred_fallthru
      _
    // Predicated region
    $region58: #{hfs_forward.3} parent=1 // pred_check
      _
    $region59: #{hfs_forward.3} parent=1 // pred_check_branch
      %152 = sbr.rel (0) target = $region61
    $region60: #{hfs_forward.3} parent=1 // pred_region
      _
    $region61: #{hfs_forward.3} parent=1 // pred_fallthru
      _
    // Predicated region
    $region62: #{hfs_forward.3} parent=1 // pred_check
      _
    $region63: #{hfs_forward.3} parent=1 // pred_check_branch
      %154 = sbr.rel (0) target = $region65
    $region64: #{hfs_forward.3} parent=1 // pred_region
      _
    $region65: #{hfs_forward.3} parent=1 // pred_fallthru
      _
    // Predicated region
    $region66: #{hfs_forward.3} parent=1 // pred_check
      _
    $region67: #{hfs_forward.3} parent=1 // pred_check_branch
      %156 = sbr.rel (0) target = $region69
    $region68: #{hfs_forward.3} parent=1 // pred_region
      _
    $region69: #{hfs_forward.3} parent=1 // pred_fallthru
      _
    // Predicated region
    $region70: #{hfs_forward.3} parent=1 // pred_check
      _
    $region71: #{hfs_forward.3} parent=1 // pred_check_branch
      %158 = sbr.rel (0) target = $region73
    $region72: #{hfs_forward.3} parent=1 // pred_region
      _
    $region73: #{hfs_forward.3} parent=1 // pred_fallthru
      _
    // Predicated region
    $region74: #{hfs_forward.3} parent=1 // pred_check
      _
    $region75: #{hfs_forward.3} parent=1 // pred_check_branch
      %160 = sbr.rel (0) target = $region77
    $region76: #{hfs_forward.3} parent=1 // pred_region
      %161 = dma.done [#allocation3], 256
    $region77: #{hfs_forward.3} parent=1 // pred_fallthru
      _
    // Predicated region
    $region78: #{hfs_forward.3} parent=1 // pred_check
      _
    $region79: #{hfs_forward.3} parent=1 // pred_check_branch
      %163 = sbr.rel (0) target = $region81
    $region80: #{hfs_forward.3} parent=1 // pred_region
      %164 = dma.done [#allocation6], 256
    $region81: #{hfs_forward.3} parent=1 // pred_fallthru
      _
    // Predicated region
    $region82: #{hfs_forward.3} parent=1 // pred_check
      _
    $region83: #{hfs_forward.3} parent=1 // pred_check_branch
      %166 = sbr.rel (0) target = $region85
    $region84: #{hfs_forward.3} parent=1 // pred_region
      %167 = dma.done [#allocation6], 128
    $region85: #{hfs_forward.3} parent=1 // pred_fallthru
      _
    // Predicated region
    $region86: #{hfs_forward.3} parent=1 // pred_check
      _
    $region87: #{hfs_forward.3} parent=1 // pred_check_branch
      %169 = sbr.rel (0) target = $region89
    $region88: #{hfs_forward.3} parent=1 // pred_region
      %170 = dma.done [#allocation9], 32
    $region89: #{hfs_forward.3} parent=1 // pred_fallthru
      _
    // Predicated region
    $region90: #{hfs_forward.3} parent=1 // pred_check
      _
    $region91: #{hfs_forward.3} parent=1 // pred_check_branch
      %172 = sbr.rel (0) target = $region93
    $region92: #{hfs_forward.3} parent=1 // pred_region
      %173 = dma.done [#allocation9], 512
    $region93: #{hfs_forward.3} parent=1 // pred_fallthru
      _
    // Predicated region
    $region94: #{hfs_forward.3} parent=1 // pred_check
      _
    $region95: #{hfs_forward.3} parent=1 // pred_check_branch
      %175 = sbr.rel (0) target = $region97
    $region96: #{hfs_forward.3} parent=1 // pred_region
      %176 = dma.done [#allocation12], 32
    $region97: #{hfs_forward.3} parent=1 // pred_fallthru
      _
    // Predicated region
    $region98: #{hfs_forward.3} parent=1 // pred_check
      _
    $region99: #{hfs_forward.3} parent=1 // pred_check_branch
      %178 = sbr.rel (0) target = $region101
    $region100: #{hfs_forward.3} parent=1 // pred_region
      %179 = dma.done [#allocation12], 48
    $region101: #{hfs_forward.3} parent=1 // pred_fallthru
      _
    // Predicated region
    $region102: #{hfs_forward.3} parent=1 // pred_check
      _
    $region103: #{hfs_forward.3} parent=1 // pred_check_branch
      %181 = sbr.rel (0) target = $region105
    $region104: #{hfs_forward.3} parent=1 // pred_region
      %182 = dma.done [#allocation15], 5120
    $region105: #{hfs_forward.3} parent=1 // pred_fallthru
      _
    // Predicated region
    $region106: #{hfs_forward.3} parent=1 // pred_check
      _
    $region107: #{hfs_forward.3} parent=1 // pred_check_branch
      %184 = sbr.rel (0) target = $region109
    $region108: #{hfs_forward.3} parent=1 // pred_region
      %185 = dma.done [#allocation15], 20480
    $region109: #{hfs_forward.3} parent=1 // pred_fallthru
      _
    %v186 = vld [vmem:[#allocation8] sm:$0x1]
    %v187 = vld [vmem:[#allocation8 + $0x1] sm:$0x1]
    %v188 = vld [vmem:[%s0] sm:$0xff]
    %v189 = vld [vmem:[%s0 + $0x8] sm:$0xff]
    %vm190 = vcmask 261120
    %v191 = vsel %vm190, %v188, 0.0
    %192 = vadd.xlane.f32.xlu0 %v191
    %v193 = vpop.xlane.xlu0 %192
    %v194 = vsel %vm190, %v189, 0.0
    %195 = vadd.xlane.f32.xlu0 %v194
    %v196 = vpop.xlane.xlu0 %195
    %v197 = vrcp.pop 32.0
    %v198 = vmul.f32 %v193, %v197
    %v199 = vmul.f32 %v196, %v197
    %v200 = vsub.f32 %v188, %v198
    %v201 = vsub.f32 %v189, %v199
    %v202 = vmul.f32 %v200, %v200
    %v203 = vmul.f32 %v201, %v201
    %v204 = vsel %vm190, %v202, 0.0
    %205 = vadd.xlane.f32.xlu0 %v204
    %v206 = vpop.xlane.xlu0 %205
    %v207 = vsel %vm190, %v203, 0.0
    %208 = vadd.xlane.f32.xlu0 %v207
    %v209 = vpop.xlane.xlu0 %208
    %v210 = vmul.f32 %v206, %v197
    %v211 = vmul.f32 %v209, %v197
    %v212 = vadd.f32 %v210, 1e-05
    %v213 = vadd.f32 %v211, 1e-05
    %v214 = vrsqrt.pop %v212
    %v215 = vrsqrt.pop %v213
    %v216 = vmul.f32 %v200, %v214
    %v217 = vmul.f32 %v201, %v215
    %v219 = vlaneseq
    %v220 = vshrl.u32 %v219, 7
    %v221 = vsub.s32 0, %v220
    %v222 = vrot.slane %v186, %v221
    %v224 = vmul.f32 %v216, %v222
    %v225 = vmul.f32 %v217, %v222
    %v227 = vlaneseq
    %v228 = vshrl.u32 %v227, 7
    %v229 = vsub.s32 0, %v228
    %v230 = vrot.slane %v187, %v229
    %v232 = vadd.f32 %v224, %v230
    %v233 = vadd.f32 %v225, %v230
    %v234 = vld [vmem:[#allocation2] sm:$0xff]
    %v235 = vld [vmem:[#allocation2 + $0x8] sm:$0xff]
    %v236 = vsel %vm190, %v234, 0.0
    %237 = vadd.xlane.f32.xlu0 %v236
    %v238 = vpop.xlane.xlu0 %237
    %v239 = vsel %vm190, %v235, 0.0
    %240 = vadd.xlane.f32.xlu0 %v239
    %v241 = vpop.xlane.xlu0 %240
    %v242 = vmul.f32 %v238, %v197
    %v243 = vmul.f32 %v241, %v197
    %v244 = vsub.f32 %v234, %v242
    %v245 = vsub.f32 %v235, %v243
    %v246 = vmul.f32 %v244, %v244
    %v247 = vmul.f32 %v245, %v245
    %v248 = vsel %vm190, %v246, 0.0
    %249 = vadd.xlane.f32.xlu0 %v248
    %v250 = vpop.xlane.xlu0 %249
    %v251 = vsel %vm190, %v247, 0.0
    %252 = vadd.xlane.f32.xlu0 %v251
    %v253 = vpop.xlane.xlu0 %252
    %v254 = vmul.f32 %v250, %v197
    %v255 = vmul.f32 %v253, %v197
    %v256 = vadd.f32 %v254, 1e-05
    %v257 = vadd.f32 %v255, 1e-05
    %v258 = vrsqrt.pop %v256
    %v259 = vrsqrt.pop %v257
    %v260 = vmul.f32 %v244, %v258
    %v261 = vmul.f32 %v245, %v259
    %v262 = vmul.f32 %v260, %v222
    %v263 = vmul.f32 %v261, %v222
    %v264 = vadd.f32 %v262, %v230
    %v265 = vadd.f32 %v263, %v230
    %v266 = vld [vmem:[#allocation5] sm:$0xff]
    %v267 = vld [vmem:[#allocation5 + $0x8] sm:$0xff]
    %v268 = vsel %vm190, %v266, 0.0
    %269 = vadd.xlane.f32.xlu0 %v268
    %v270 = vpop.xlane.xlu0 %269
    %v271 = vsel %vm190, %v267, 0.0
    %272 = vadd.xlane.f32.xlu0 %v271
    %v273 = vpop.xlane.xlu0 %272
    %v274 = vmul.f32 %v270, %v197
    %v275 = vmul.f32 %v273, %v197
    %v276 = vsub.f32 %v266, %v274
    %v277 = vsub.f32 %v267, %v275
    %v278 = vmul.f32 %v276, %v276
    %v279 = vmul.f32 %v277, %v277
    %v280 = vsel %vm190, %v278, 0.0
    %281 = vadd.xlane.f32.xlu0 %v280
    %v282 = vpop.xlane.xlu0 %281
    %v283 = vsel %vm190, %v279, 0.0
    %284 = vadd.xlane.f32.xlu0 %v283
    %v285 = vpop.xlane.xlu0 %284
    %v286 = vmul.f32 %v282, %v197
    %v287 = vmul.f32 %v285, %v197
    %v288 = vadd.f32 %v286, 1e-05
    %v289 = vadd.f32 %v287, 1e-05
    %v290 = vrsqrt.pop %v288
    %v291 = vrsqrt.pop %v289
    %v292 = vmul.f32 %v276, %v290
    %v293 = vmul.f32 %v277, %v291
    %v294 = vmul.f32 %v292, %v222
    %v295 = vmul.f32 %v293, %v222
    %v296 = vadd.f32 %v294, %v230
    %v297 = vadd.f32 %v295, %v230
    %v298 = vsel %vm190, %v232, 0.0
    %v299 = vrot.slane %v298, 4
    %v300 = vadd.f32 %v298, %v299
    %v301 = vrot.slane %v300, 2
    %v302 = vadd.f32 %v300, %v301
    %v303 = vrot.slane %v302, 1
    %v304 = vadd.f32 %v302, %v303
    %v305 = vsel %vm190, %v233, 0.0
    %v306 = vrot.slane %v305, 4
    %v307 = vadd.f32 %v305, %v306
    %v308 = vrot.slane %v307, 2
    %v309 = vadd.f32 %v307, %v308
    %v310 = vrot.slane %v309, 1
    %v311 = vadd.f32 %v309, %v310
    %v312 = vrcp.pop 8.0
    %v313 = vmul.f32 %v304, %v312
    %v314 = vmul.f32 %v311, %v312
    %v315 = vsel %vm190, %v264, 0.0
    %v316 = vrot.slane %v315, 4
    %v317 = vadd.f32 %v315, %v316
    %v318 = vrot.slane %v317, 2
    %v319 = vadd.f32 %v317, %v318
    %v320 = vrot.slane %v319, 1
    %v321 = vadd.f32 %v319, %v320
    %v322 = vsel %vm190, %v265, 0.0
    %v323 = vrot.slane %v322, 4
    %v324 = vadd.f32 %v322, %v323
    %v325 = vrot.slane %v324, 2
    %v326 = vadd.f32 %v324, %v325
    %v327 = vrot.slane %v326, 1
    %v328 = vadd.f32 %v326, %v327
    %v329 = vmul.f32 %v321, %v312
    %v330 = vmul.f32 %v328, %v312
    %v331 = vsel %vm190, %v296, 0.0
    %v332 = vrot.slane %v331, 4
    %v333 = vadd.f32 %v331, %v332
    %v334 = vrot.slane %v333, 2
    %v335 = vadd.f32 %v333, %v334
    %v336 = vrot.slane %v335, 1
    %v337 = vadd.f32 %v335, %v336
    %v338 = vsel %vm190, %v297, 0.0
    %v339 = vrot.slane %v338, 4
    %v340 = vadd.f32 %v338, %v339
    %v341 = vrot.slane %v340, 2
    %v342 = vadd.f32 %v340, %v341
    %v343 = vrot.slane %v342, 1
    %v344 = vadd.f32 %v342, %v343
    %v345 = vmul.f32 %v337, %v312
    %v346 = vmul.f32 %v344, %v312
    %vm349 = vcmask 1041409
    %v350 = vsel %vm349, %v330, %v329
    %vm352 = vcmask 254976
    %v353 = vsel %vm352, %v350, -inf
    %354 = vmax.xlane.f32.xlu0 %v353
    %v355 = vpop.xlane.xlu0 %354
    %v357 = vrot.slane %v355, 1
    %v360 = vsub.f32 %v329, %v355
    %v361 = vsub.f32 %v330, %v357
    %v362 = vmul.f32 %v360, 1.442695
    %v363 = vpow.pop %v362
    %v364 = vmul.f32 %v361, 1.442695
    %v365 = vpow.pop %v364
    %v368 = vrot.slane %v365, 7
    %v369 = vsel %vm349, %v368, %v363
    %v371 = vsel %vm352, %v369, 0.0
    %372 = vadd.xlane.f32.xlu0 %v371
    %v373 = vpop.xlane.xlu0 %372
    %v375 = vrot.slane %v373, 1
    %v378 = vrcp.pop %v373
    %v379 = vmul.f32 %v363, %v378
    %v380 = vrcp.pop %v375
    %v381 = vmul.f32 %v365, %v380
    %v382 = vadd.f32 %v379, 1e-08
    %v383 = vadd.f32 %v381, 1e-08
    %v384 = vlog2.pop %v382
    %v385 = vmul.f32 %v384, 0.6931472
    %v386 = vlog2.pop %v383
    %v387 = vmul.f32 %v386, 0.6931472
    %v388 = vmul.f32 %v379, %v385
    %v389 = vmul.f32 %v381, %v387
    %v392 = vrot.slane %v389, 7
    %v393 = vsel %vm349, %v392, %v388
    %v395 = vsel %vm352, %v393, 0.0
    %396 = vadd.xlane.f32.xlu0 %v395
    %v397 = vpop.xlane.xlu0 %396
    %v398 = vsub.f32 0.0, %v397
    %vm399 = vcmask 1041408
    %v400 = vsel %vm399, %v398, 0.0
    %v401 = vrot.slane %v400, 4
    %v402 = vadd.f32 %v400, %v401
    %v403 = vrot.slane %v402, 2
    %v404 = vadd.f32 %v402, %v403
    %v405 = vrot.slane %v404, 1
    %v406 = vadd.f32 %v404, %v405
    %v407 = vrcp.pop 2.0
    %v408 = vmul.f32 %v406, %v407
    %v409 = vld [vmem:[#allocation13] sm:$0x1]
    %v410 = vld [vmem:[#allocation13 + $0x1] sm:$0x1]
    %v411 = vld [vmem:[#allocation13 + $0x2] sm:$0x1]
    %v412 = vld [vmem:[#allocation10] sm:$0xff]
    %v413 = vld [vmem:[#allocation10 + $0x8] sm:$0xff]
    %v414 = vld [vmem:[#allocation10 + $0x10] sm:$0xff]
    %v415 = vld [vmem:[#allocation10 + $0x18] sm:$0xff]
    %v417 = vlaneseq
    %v418 = vshrl.u32 %v417, 7
    %v419 = vsub.s32 0, %v418
    %v420 = vrot.slane %v409, %v419
    %v423 = vsel %vm190, %v264, 0
    %v426 = vsel %vm190, %v265, 0
    %428 = vmatprep.subr.mxu0 0.0
    %429 = vmatpush1.msra.mxu0 0.0
    %430 = vmatprep.subr.mxu0 0.0
    %431 = vmatpush1.msra.mxu0 0.0
    %432 = vmatprep.subr.mxu0 0.0
    %433 = vmatpush1.msra.mxu0 0.0
    %434 = vmatprep.subr.mxu0 0.0
    %435 = vmatpush1.msra.mxu0 0.0
    %436 = vmatprep.subr.mxu0 0.0
    %437 = vmatpush1.msra.mxu0 0.0
    %438 = vmatprep.subr.mxu0 0.0
    %439 = vmatpush1.msra.mxu0 0.0
    %440 = vmatprep.subr.mxu0 0.0
    %441 = vmatpush1.msra.mxu0 0.0
    %442 = vmatprep.subr.mxu0 0.0
    %443 = vmatpush1.msra.mxu0 0.0
    %444 = vmatprep.subr.mxu0 0.0
    %445 = vmatpush1.msra.mxu0 0.0
    %446 = vmatprep.subr.mxu0 0.0
    %447 = vmatpush1.msra.mxu0 0.0
    %448 = vmatprep.subr.mxu0 0.0
    %449 = vmatpush1.msra.mxu0 0.0
    %450 = vmatprep.subr.mxu0 0.0
    %451 = vmatpush1.msra.mxu0 0.0
    %452 = vmatprep.subr.mxu0 0.0
    %453 = vmatpush1.msra.mxu0 %v415
    %454 = vmatprep.subr.mxu0 0.0
    %455 = vmatpush1.msra.mxu0 %v414
    %456 = vmatprep.subr.mxu0 0.0
    %457 = vmatpush1.msra.mxu0 %v413
    %458 = vmatprep.subr.mxu0 0.0
    %459 = vmatpush1.msra.mxu0 %v412
    %460 = vmatprep.subr.mxu0 0.0
    %461 = vmatpush2.msra.mxu0 0.0
    %462 = vmatprep.subr.mxu0 0.0
    %463 = vmatpush2.msra.mxu0 0.0
    %464 = vmatprep.subr.mxu0 0.0
    %465 = vmatpush2.msra.mxu0 0.0
    %466 = vmatprep.subr.mxu0 0.0
    %467 = vmatpush2.msra.mxu0 0.0
    %468 = vmatprep.subr.mxu0 0.0
    %469 = vmatpush2.msra.mxu0 0.0
    %470 = vmatprep.subr.mxu0 0.0
    %471 = vmatpush2.msra.mxu0 0.0
    %472 = vmatprep.subr.mxu0 0.0
    %473 = vmatpush2.msra.mxu0 0.0
    %474 = vmatprep.subr.mxu0 0.0
    %475 = vmatpush2.msra.mxu0 0.0
    %476 = vmatprep.subr.mxu0 0.0
    %477 = vmatpush2.msra.mxu0 0.0
    %478 = vmatprep.subr.mxu0 0.0
    %479 = vmatpush2.msra.mxu0 0.0
    %480 = vmatprep.subr.mxu0 0.0
    %481 = vmatpush2.msra.mxu0 0.0
    %482 = vmatprep.subr.mxu0 0.0
    %483 = vmatpush2.msra.mxu0 0.0
    %484 = vmatprep.subr.mxu0 0.0
    %485 = vmatpush2.msra.mxu0 0.0
    %486 = vmatprep.subr.mxu0 0.0
    %487 = vmatpush2.msra.mxu0 0.0
    %488 = vmatprep.subr.mxu0 0.0
    %489 = vmatpush2.msra.mxu0 0.0
    %490 = vmatprep.subr.mxu0 0.0
    %491 = vmatpush2.msra.mxu0 0.0
    %492 = vmatprep.mubr.f32.mxu0 0.0
    %493 = vmatmul.mubr.f32.gmra.mxu0 %v423
    %v494 = vpop.f32.mrf.mxu0
    %v495 = vadd.f32 %v420, %v494
    %v496 = vpop.f32.mrf.mxu0
    %497 = vmatprep.mubr.f32.mxu0 0.0
    %498 = vmatmul.mubr.f32.gmra.mxu0 %v426
    %v499 = vpop.f32.mrf.mxu0
    %v500 = vadd.f32 %v420, %v499
    %v501 = vpop.f32.mrf.mxu0
    %502 = vdwg.mxu0
    %vm503 = vcmask 523264
    %v504 = vsel %vm503, %v495, 0.0
    %505 = vadd.xlane.f32.xlu0 %v504
    %v506 = vpop.xlane.xlu0 %505
    %v507 = vsel %vm503, %v500, 0.0
    %508 = vadd.xlane.f32.xlu0 %v507
    %v509 = vpop.xlane.xlu0 %508
    %v510 = vrcp.pop 64.0
    %v511 = vmul.f32 %v506, %v510
    %v512 = vmul.f32 %v509, %v510
    %v513 = vsub.f32 %v495, %v511
    %v514 = vsub.f32 %v500, %v512
    %v515 = vmul.f32 %v513, %v513
    %v516 = vmul.f32 %v514, %v514
    %v517 = vsel %vm503, %v515, 0.0
    %518 = vadd.xlane.f32.xlu0 %v517
    %v519 = vpop.xlane.xlu0 %518
    %v520 = vsel %vm503, %v516, 0.0
    %521 = vadd.xlane.f32.xlu0 %v520
    %v522 = vpop.xlane.xlu0 %521
    %v523 = vmul.f32 %v519, %v510
    %v524 = vmul.f32 %v522, %v510
    %v525 = vadd.f32 %v523, 1e-05
    %v526 = vadd.f32 %v524, 1e-05
    %v527 = vrsqrt.pop %v525
    %v528 = vrsqrt.pop %v526
    %v529 = vmul.f32 %v513, %v527
    %v530 = vmul.f32 %v514, %v528
    %v532 = vlaneseq
    %v533 = vshrl.u32 %v532, 7
    %v534 = vsub.s32 0, %v533
    %v535 = vrot.slane %v410, %v534
    %v537 = vmul.f32 %v529, %v535
    %v538 = vmul.f32 %v530, %v535
    %v540 = vlaneseq
    %v541 = vshrl.u32 %v540, 7
    %v542 = vsub.s32 0, %v541
    %v543 = vrot.slane %v411, %v542
    %v545 = vadd.f32 %v537, %v543
    %v546 = vadd.f32 %v538, %v543
    %v547 = vxor.u32 %v545, 2147483648
    %v548 = vxor.u32 %v546, 2147483648
    %v549 = vmul.f32 %v547, 1.442695
    %v550 = vpow.pop %v549
    %v551 = vmul.f32 %v548, 1.442695
    %v552 = vpow.pop %v551
    %v553 = vadd.f32 %v550, 1.0
    %v554 = vadd.f32 %v552, 1.0
    %v555 = vrcp.pop %v553
    %v556 = vmul.f32 1.0, %v555
    %v557 = vrcp.pop %v554
    %v558 = vmul.f32 1.0, %v557
    %v559 = vmul.f32 %v545, %v556
    %v560 = vmul.f32 %v546, %v558
    %v561 = vld [vmem:[%s7] sm:$0xff]
    %v562 = vld [vmem:[%s7 + $0x8] sm:$0xff]
    %v563 = vld [vmem:[%s7 + $0x10] sm:$0xff]
    %v564 = vld [vmem:[%s7 + $0x18] sm:$0xff]
    %v565 = vld [vmem:[%s7 + $0x20] sm:$0xff]
    %v566 = vld [vmem:[%s7 + $0x28] sm:$0xff]
    %v567 = vld [vmem:[%s7 + $0x30] sm:$0xff]
    %v568 = vld [vmem:[%s7 + $0x38] sm:$0xff]
    %v569 = vld [vmem:[%s7 + $0x40] sm:$0xff]
    %v570 = vld [vmem:[%s7 + $0x48] sm:$0xff]
    %v571 = vld [vmem:[%s7 + $0x50] sm:$0xff]
    %v572 = vld [vmem:[%s7 + $0x58] sm:$0xff]
    %v573 = vld [vmem:[%s7 + $0x60] sm:$0xff]
    %v574 = vld [vmem:[%s7 + $0x68] sm:$0xff]
    %v575 = vld [vmem:[%s7 + $0x70] sm:$0xff]
    %v576 = vld [vmem:[%s7 + $0x78] sm:$0xff]
    %v577 = vld [vmem:[#allocation11] sm:$0x1]
    %v578 = vld [vmem:[#allocation11 + $0x1] sm:$0x1]
    %v580 = vlaneseq
    %v581 = vshrl.u32 %v580, 7
    %v582 = vsub.s32 0, %v581
    %v583 = vrot.slane %v577, %v582
    %v586 = vsel %vm503, %v559, 0
    %v589 = vsel %vm503, %v560, 0
    %591 = vmatprep.subr.mxu0 0.0
    %592 = vmatpush1.msra.mxu0 0.0
    %593 = vmatprep.subr.mxu0 0.0
    %594 = vmatpush1.msra.mxu0 0.0
    %595 = vmatprep.subr.mxu0 0.0
    %596 = vmatpush1.msra.mxu0 0.0
    %597 = vmatprep.subr.mxu0 0.0
    %598 = vmatpush1.msra.mxu0 0.0
    %599 = vmatprep.subr.mxu0 0.0
    %600 = vmatpush1.msra.mxu0 0.0
    %601 = vmatprep.subr.mxu0 0.0
    %602 = vmatpush1.msra.mxu0 0.0
    %603 = vmatprep.subr.mxu0 0.0
    %604 = vmatpush1.msra.mxu0 0.0
    %605 = vmatprep.subr.mxu0 0.0
    %606 = vmatpush1.msra.mxu0 0.0
    %607 = vmatprep.subr.mxu0 0.0
    %608 = vmatpush1.msra.mxu0 %v568
    %609 = vmatprep.subr.mxu0 0.0
    %610 = vmatpush1.msra.mxu0 %v567
    %611 = vmatprep.subr.mxu0 0.0
    %612 = vmatpush1.msra.mxu0 %v566
    %613 = vmatprep.subr.mxu0 0.0
    %614 = vmatpush1.msra.mxu0 %v565
    %615 = vmatprep.subr.mxu0 0.0
    %616 = vmatpush1.msra.mxu0 %v564
    %617 = vmatprep.subr.mxu0 0.0
    %618 = vmatpush1.msra.mxu0 %v563
    %619 = vmatprep.subr.mxu0 0.0
    %620 = vmatpush1.msra.mxu0 %v562
    %621 = vmatprep.subr.mxu0 0.0
    %622 = vmatpush1.msra.mxu0 %v561
    %623 = vmatprep.subr.mxu0 0.0
    %624 = vmatpush2.msra.mxu0 0.0
    %625 = vmatprep.subr.mxu0 0.0
    %626 = vmatpush2.msra.mxu0 0.0
    %627 = vmatprep.subr.mxu0 0.0
    %628 = vmatpush2.msra.mxu0 0.0
    %629 = vmatprep.subr.mxu0 0.0
    %630 = vmatpush2.msra.mxu0 0.0
    %631 = vmatprep.subr.mxu0 0.0
    %632 = vmatpush2.msra.mxu0 0.0
    %633 = vmatprep.subr.mxu0 0.0
    %634 = vmatpush2.msra.mxu0 0.0
    %635 = vmatprep.subr.mxu0 0.0
    %636 = vmatpush2.msra.mxu0 0.0
    %637 = vmatprep.subr.mxu0 0.0
    %638 = vmatpush2.msra.mxu0 0.0
    %639 = vmatprep.subr.mxu0 0.0
    %640 = vmatpush2.msra.mxu0 0.0
    %641 = vmatprep.subr.mxu0 0.0
    %642 = vmatpush2.msra.mxu0 0.0
    %643 = vmatprep.subr.mxu0 0.0
    %644 = vmatpush2.msra.mxu0 0.0
    %645 = vmatprep.subr.mxu0 0.0
    %646 = vmatpush2.msra.mxu0 0.0
    %647 = vmatprep.subr.mxu0 0.0
    %648 = vmatpush2.msra.mxu0 0.0
    %649 = vmatprep.subr.mxu0 0.0
    %650 = vmatpush2.msra.mxu0 0.0
    %651 = vmatprep.subr.mxu0 0.0
    %652 = vmatpush2.msra.mxu0 0.0
    %653 = vmatprep.subr.mxu0 0.0
    %654 = vmatpush2.msra.mxu0 0.0
    %655 = vmatprep.mubr.f32.mxu0 0.0
    %656 = vmatmul.mubr.f32.gmra.mxu0 %v586
    %v657 = vpop.f32.mrf.mxu0
    %v658 = vadd.f32 %v583, %v657
    %v659 = vpop.f32.mrf.mxu0
    %660 = vmatprep.mubr.f32.mxu0 0.0
    %661 = vmatmul.mubr.f32.gmra.mxu0 %v589
    %v662 = vpop.f32.mrf.mxu0
    %v663 = vadd.f32 %v583, %v662
    %v664 = vpop.f32.mrf.mxu0
    %665 = vdwg.mxu0
    %v667 = vlaneseq
    %v668 = vshrl.u32 %v667, 7
    %v669 = vsub.s32 0, %v668
    %v670 = vrot.slane %v578, %v669
    %672 = vmatprep.subr.mxu0 0.0
    %673 = vmatpush1.msra.mxu0 0.0
    %674 = vmatprep.subr.mxu0 0.0
    %675 = vmatpush1.msra.mxu0 0.0
    %676 = vmatprep.subr.mxu0 0.0
    %677 = vmatpush1.msra.mxu0 0.0
    %678 = vmatprep.subr.mxu0 0.0
    %679 = vmatpush1.msra.mxu0 0.0
    %680 = vmatprep.subr.mxu0 0.0
    %681 = vmatpush1.msra.mxu0 0.0
    %682 = vmatprep.subr.mxu0 0.0
    %683 = vmatpush1.msra.mxu0 0.0
    %684 = vmatprep.subr.mxu0 0.0
    %685 = vmatpush1.msra.mxu0 0.0
    %686 = vmatprep.subr.mxu0 0.0
    %687 = vmatpush1.msra.mxu0 0.0
    %688 = vmatprep.subr.mxu0 0.0
    %689 = vmatpush1.msra.mxu0 %v576
    %690 = vmatprep.subr.mxu0 0.0
    %691 = vmatpush1.msra.mxu0 %v575
    %692 = vmatprep.subr.mxu0 0.0
    %693 = vmatpush1.msra.mxu0 %v574
    %694 = vmatprep.subr.mxu0 0.0
    %695 = vmatpush1.msra.mxu0 %v573
    %696 = vmatprep.subr.mxu0 0.0
    %697 = vmatpush1.msra.mxu0 %v572
    %698 = vmatprep.subr.mxu0 0.0
    %699 = vmatpush1.msra.mxu0 %v571
    %700 = vmatprep.subr.mxu0 0.0
    %701 = vmatpush1.msra.mxu0 %v570
    %702 = vmatprep.subr.mxu0 0.0
    %703 = vmatpush1.msra.mxu0 %v569
    %704 = vmatprep.subr.mxu0 0.0
    %705 = vmatpush2.msra.mxu0 0.0
    %706 = vmatprep.subr.mxu0 0.0
    %707 = vmatpush2.msra.mxu0 0.0
    %708 = vmatprep.subr.mxu0 0.0
    %709 = vmatpush2.msra.mxu0 0.0
    %710 = vmatprep.subr.mxu0 0.0
    %711 = vmatpush2.msra.mxu0 0.0
    %712 = vmatprep.subr.mxu0 0.0
    %713 = vmatpush2.msra.mxu0 0.0
    %714 = vmatprep.subr.mxu0 0.0
    %715 = vmatpush2.msra.mxu0 0.0
    %716 = vmatprep.subr.mxu0 0.0
    %717 = vmatpush2.msra.mxu0 0.0
    %718 = vmatprep.subr.mxu0 0.0
    %719 = vmatpush2.msra.mxu0 0.0
    %720 = vmatprep.subr.mxu0 0.0
    %721 = vmatpush2.msra.mxu0 0.0
    %722 = vmatprep.subr.mxu0 0.0
    %723 = vmatpush2.msra.mxu0 0.0
    %724 = vmatprep.subr.mxu0 0.0
    %725 = vmatpush2.msra.mxu0 0.0
    %726 = vmatprep.subr.mxu0 0.0
    %727 = vmatpush2.msra.mxu0 0.0
    %728 = vmatprep.subr.mxu0 0.0
    %729 = vmatpush2.msra.mxu0 0.0
    %730 = vmatprep.subr.mxu0 0.0
    %731 = vmatpush2.msra.mxu0 0.0
    %732 = vmatprep.subr.mxu0 0.0
    %733 = vmatpush2.msra.mxu0 0.0
    %734 = vmatprep.subr.mxu0 0.0
    %735 = vmatpush2.msra.mxu0 0.0
    %736 = vmatprep.mubr.f32.mxu0 0.0
    %737 = vmatmul.mubr.f32.gmra.mxu0 %v586
    %v738 = vpop.f32.mrf.mxu0
    %v739 = vadd.f32 %v670, %v738
    %v740 = vpop.f32.mrf.mxu0
    %741 = vmatprep.mubr.f32.mxu0 0.0
    %742 = vmatmul.mubr.f32.gmra.mxu0 %v589
    %v743 = vpop.f32.mrf.mxu0
    %v744 = vadd.f32 %v670, %v743
    %v745 = vpop.f32.mrf.mxu0
    %746 = vdwg.mxu0
    %747 = vst.msk [vmem:[#allocation18] sm:$0xff] %vm190, %v739
    %748 = vst.msk [vmem:[#allocation18 + $0x8] sm:$0xff] %vm190, %v744
    %v749 = vsel %vm190, %v658, 0.0
    %v750 = vrot.slane %v749, 4
    %v751 = vadd.f32 %v749, %v750
    %v752 = vrot.slane %v751, 2
    %v753 = vadd.f32 %v751, %v752
    %v754 = vrot.slane %v753, 1
    %v755 = vadd.f32 %v753, %v754
    %v756 = vsel %vm190, %v663, 0.0
    %v757 = vrot.slane %v756, 4
    %v758 = vadd.f32 %v756, %v757
    %v759 = vrot.slane %v758, 2
    %v760 = vadd.f32 %v758, %v759
    %v761 = vrot.slane %v760, 1
    %v762 = vadd.f32 %v760, %v761
    %v763 = vmul.f32 %v755, %v312
    %v764 = vmul.f32 %v762, %v312
    %v765 = vsel %vm190, %v739, 0.0
    %v766 = vrot.slane %v765, 4
    %v767 = vadd.f32 %v765, %v766
    %v768 = vrot.slane %v767, 2
    %v769 = vadd.f32 %v767, %v768
    %v770 = vrot.slane %v769, 1
    %v771 = vadd.f32 %v769, %v770
    %v772 = vsel %vm190, %v744, 0.0
    %v773 = vrot.slane %v772, 4
    %v774 = vadd.f32 %v772, %v773
    %v775 = vrot.slane %v774, 2
    %v776 = vadd.f32 %v774, %v775
    %v777 = vrot.slane %v776, 1
    %v778 = vadd.f32 %v776, %v777
    %v779 = vmul.f32 %v771, %v312
    %v780 = vmul.f32 %v778, %v312
    %v781 = vld [vmem:[%s12] sm:$0x1]
    %v782 = vld [vmem:[%s12 + $0x1] sm:$0x1]
    %v783 = vld [vmem:[%s12 + $0x2] sm:$0x1]
    %v784 = vld [vmem:[%s12 + $0x3] sm:$0x1]
    %v785 = vld [vmem:[%s12 + $0x4] sm:$0x1]
    %v786 = vld [vmem:[%s12 + $0x5] sm:$0x1]
    %v787 = vld [vmem:[%s12 + $0x6] sm:$0x1]
    %v788 = vld [vmem:[%s12 + $0x7] sm:$0x1]
    %v789 = vld [vmem:[%s12 + $0x8] sm:$0x1]
    %v790 = vld [vmem:[%s12 + $0x9] sm:$0x1]
    %v791 = vld [vmem:[%s12 + $0xa] sm:$0x1]
    %v792 = vld [vmem:[%s12 + $0xb] sm:$0x1]
    %v793 = vld [vmem:[%s12 + $0xc] sm:$0x1]
    %v794 = vld [vmem:[%s12 + $0xd] sm:$0x1]
    %v795 = vld [vmem:[%s12 + $0xe] sm:$0x1]
    %v796 = vld [vmem:[%s12 + $0xf] sm:$0x1]
    %v797 = vld [vmem:[%s12 + $0x10] sm:$0x1]
    %v798 = vld [vmem:[%s12 + $0x11] sm:$0x1]
    %v799 = vld [vmem:[%s12 + $0x12] sm:$0x1]
    %v800 = vld [vmem:[%s12 + $0x13] sm:$0x1]
    %v801 = vld [vmem:[%s12 + $0x14] sm:$0x1]
    %v802 = vld [vmem:[%s12 + $0x15] sm:$0x1]
    %v803 = vld [vmem:[%s12 + $0x16] sm:$0x1]
    %v804 = vld [vmem:[%s12 + $0x17] sm:$0x1]
    %v805 = vld [vmem:[%s12 + $0x18] sm:$0x1]
    %v806 = vld [vmem:[%s12 + $0x19] sm:$0x1]
    %v807 = vld [vmem:[%s12 + $0x1a] sm:$0x1]
    %v808 = vld [vmem:[%s12 + $0x1b] sm:$0x1]
    %v809 = vld [vmem:[%s12 + $0x1c] sm:$0x1]
    %v810 = vld [vmem:[%s12 + $0x1d] sm:$0x1]
    %v811 = vld [vmem:[%s12 + $0x1e] sm:$0x1]
    %v812 = vld [vmem:[%s12 + $0x1f] sm:$0x1]
    %v813 = vld [vmem:[%s12 + $0x20] sm:$0x1]
    %v814 = vld [vmem:[%s12 + $0x21] sm:$0x1]
    %v815 = vld [vmem:[%s12 + $0x22] sm:$0x1]
    %v816 = vld [vmem:[%s12 + $0x23] sm:$0x1]
    %v817 = vld [vmem:[%s12 + $0x24] sm:$0x1]
    %v818 = vld [vmem:[%s12 + $0x25] sm:$0x1]
    %v819 = vld [vmem:[%s12 + $0x26] sm:$0x1]
    %v820 = vld [vmem:[%s12 + $0x27] sm:$0x1]
    %v821 = vld [vmem:[#allocation14] sm:$0xff]
    %v822 = vld [vmem:[#allocation14 + $0x8] sm:$0xff]
    %v823 = vld [vmem:[#allocation14 + $0x10] sm:$0xff]
    %v824 = vld [vmem:[#allocation14 + $0x18] sm:$0xff]
    %v825 = vld [vmem:[#allocation14 + $0x20] sm:$0xff]
    %v826 = vld [vmem:[#allocation14 + $0x28] sm:$0xff]
    %v827 = vld [vmem:[#allocation14 + $0x30] sm:$0xff]
    %v828 = vld [vmem:[#allocation14 + $0x38] sm:$0xff]
    %v829 = vld [vmem:[#allocation14 + $0x40] sm:$0xff]
    %v830 = vld [vmem:[#allocation14 + $0x48] sm:$0xff]
    %v831 = vld [vmem:[#allocation14 + $0x50] sm:$0xff]
    %v832 = vld [vmem:[#allocation14 + $0x58] sm:$0xff]
    %v833 = vld [vmem:[#allocation14 + $0x60] sm:$0xff]
    %v834 = vld [vmem:[#allocation14 + $0x68] sm:$0xff]
    %v835 = vld [vmem:[#allocation14 + $0x70] sm:$0xff]
    %v836 = vld [vmem:[#allocation14 + $0x78] sm:$0xff]
    %v837 = vld [vmem:[#allocation14 + $0x80] sm:$0xff]
    %v838 = vld [vmem:[#allocation14 + $0x88] sm:$0xff]
    %v839 = vld [vmem:[#allocation14 + $0x90] sm:$0xff]
    %v840 = vld [vmem:[#allocation14 + $0x98] sm:$0xff]
    %v841 = vld [vmem:[#allocation14 + $0xa0] sm:$0xff]
    %v842 = vld [vmem:[#allocation14 + $0xa8] sm:$0xff]
    %v843 = vld [vmem:[#allocation14 + $0xb0] sm:$0xff]
    %v844 = vld [vmem:[#allocation14 + $0xb8] sm:$0xff]
    %v845 = vld [vmem:[#allocation14 + $0xc0] sm:$0xff]
    %v846 = vld [vmem:[#allocation14 + $0xc8] sm:$0xff]
    %v847 = vld [vmem:[#allocation14 + $0xd0] sm:$0xff]
    %v848 = vld [vmem:[#allocation14 + $0xd8] sm:$0xff]
    %v849 = vld [vmem:[#allocation14 + $0xe0] sm:$0xff]
    %v850 = vld [vmem:[#allocation14 + $0xe8] sm:$0xff]
    %v851 = vld [vmem:[#allocation14 + $0xf0] sm:$0xff]
    %v852 = vld [vmem:[#allocation14 + $0xf8] sm:$0xff]
    %v853 = vld [vmem:[#allocation14 + $0x100] sm:$0xff]
    %v854 = vld [vmem:[#allocation14 + $0x108] sm:$0xff]
    %v855 = vld [vmem:[#allocation14 + $0x110] sm:$0xff]
    %v856 = vld [vmem:[#allocation14 + $0x118] sm:$0xff]
    %v857 = vld [vmem:[#allocation14 + $0x120] sm:$0xff]
    %v858 = vld [vmem:[#allocation14 + $0x128] sm:$0xff]
    %v859 = vld [vmem:[#allocation14 + $0x130] sm:$0xff]
    %v860 = vld [vmem:[#allocation14 + $0x138] sm:$0xff]
    %v861 = vld [vmem:[#allocation16] sm:$0xff]
    %v862 = vld [vmem:[#allocation16 + $0x8] sm:$0xff]
    %v863 = vld [vmem:[#allocation16 + $0x10] sm:$0xff]
    %v864 = vld [vmem:[#allocation16 + $0x18] sm:$0xff]
    %v865 = vld [vmem:[#allocation16 + $0x20] sm:$0xff]
    %v866 = vld [vmem:[#allocation16 + $0x28] sm:$0xff]
    %v867 = vld [vmem:[#allocation16 + $0x30] sm:$0xff]
    %v868 = vld [vmem:[#allocation16 + $0x38] sm:$0xff]
    %v869 = vld [vmem:[#allocation16 + $0x40] sm:$0xff]
    %v870 = vld [vmem:[#allocation16 + $0x48] sm:$0xff]
    %v871 = vld [vmem:[#allocation16 + $0x50] sm:$0xff]
    %v872 = vld [vmem:[#allocation16 + $0x58] sm:$0xff]
    %v873 = vld [vmem:[#allocation16 + $0x60] sm:$0xff]
    %v874 = vld [vmem:[#allocation16 + $0x68] sm:$0xff]
    %v875 = vld [vmem:[#allocation16 + $0x70] sm:$0xff]
    %v876 = vld [vmem:[#allocation16 + $0x78] sm:$0xff]
    %v877 = vld [vmem:[#allocation16 + $0x80] sm:$0xff]
    %v878 = vld [vmem:[#allocation16 + $0x88] sm:$0xff]
    %v879 = vld [vmem:[#allocation16 + $0x90] sm:$0xff]
    %v880 = vld [vmem:[#allocation16 + $0x98] sm:$0xff]
    %v881 = vld [vmem:[#allocation16 + $0xa0] sm:$0xff]
    %v882 = vld [vmem:[#allocation16 + $0xa8] sm:$0xff]
    %v883 = vld [vmem:[#allocation16 + $0xb0] sm:$0xff]
    %v884 = vld [vmem:[#allocation16 + $0xb8] sm:$0xff]
    %v885 = vld [vmem:[#allocation16 + $0xc0] sm:$0xff]
    %v886 = vld [vmem:[#allocation16 + $0xc8] sm:$0xff]
    %v887 = vld [vmem:[#allocation16 + $0xd0] sm:$0xff]
    %v888 = vld [vmem:[#allocation16 + $0xd8] sm:$0xff]
    %v889 = vld [vmem:[#allocation16 + $0xe0] sm:$0xff]
    %v890 = vld [vmem:[#allocation16 + $0xe8] sm:$0xff]
    %v891 = vld [vmem:[#allocation16 + $0xf0] sm:$0xff]
    %v892 = vld [vmem:[#allocation16 + $0xf8] sm:$0xff]
    %v893 = vld [vmem:[#allocation16 + $0x100] sm:$0xff]
    %v894 = vld [vmem:[#allocation16 + $0x108] sm:$0xff]
    %v895 = vld [vmem:[#allocation16 + $0x110] sm:$0xff]
    %v896 = vld [vmem:[#allocation16 + $0x118] sm:$0xff]
    %v897 = vld [vmem:[#allocation16 + $0x120] sm:$0xff]
    %v898 = vld [vmem:[#allocation16 + $0x128] sm:$0xff]
    %v899 = vld [vmem:[#allocation16 + $0x130] sm:$0xff]
    %v900 = vld [vmem:[#allocation16 + $0x138] sm:$0xff]
    %v901 = vld [vmem:[#allocation16 + $0x140] sm:$0xff]
    %v902 = vld [vmem:[#allocation16 + $0x148] sm:$0xff]
    %v903 = vld [vmem:[#allocation16 + $0x150] sm:$0xff]
    %v904 = vld [vmem:[#allocation16 + $0x158] sm:$0xff]
    %v905 = vld [vmem:[#allocation16 + $0x160] sm:$0xff]
    %v906 = vld [vmem:[#allocation16 + $0x168] sm:$0xff]
    %v907 = vld [vmem:[#allocation16 + $0x170] sm:$0xff]
    %v908 = vld [vmem:[#allocation16 + $0x178] sm:$0xff]
    %v909 = vld [vmem:[#allocation16 + $0x180] sm:$0xff]
    %v910 = vld [vmem:[#allocation16 + $0x188] sm:$0xff]
    %v911 = vld [vmem:[#allocation16 + $0x190] sm:$0xff]
    %v912 = vld [vmem:[#allocation16 + $0x198] sm:$0xff]
    %v913 = vld [vmem:[#allocation16 + $0x1a0] sm:$0xff]
    %v914 = vld [vmem:[#allocation16 + $0x1a8] sm:$0xff]
    %v915 = vld [vmem:[#allocation16 + $0x1b0] sm:$0xff]
    %v916 = vld [vmem:[#allocation16 + $0x1b8] sm:$0xff]
    %v917 = vld [vmem:[#allocation16 + $0x1c0] sm:$0xff]
    %v918 = vld [vmem:[#allocation16 + $0x1c8] sm:$0xff]
    %v919 = vld [vmem:[#allocation16 + $0x1d0] sm:$0xff]
    %v920 = vld [vmem:[#allocation16 + $0x1d8] sm:$0xff]
    %v921 = vld [vmem:[#allocation16 + $0x1e0] sm:$0xff]
    %v922 = vld [vmem:[#allocation16 + $0x1e8] sm:$0xff]
    %v923 = vld [vmem:[#allocation16 + $0x1f0] sm:$0xff]
    %v924 = vld [vmem:[#allocation16 + $0x1f8] sm:$0xff]
    %v925 = vld [vmem:[#allocation16 + $0x200] sm:$0xff]
    %v926 = vld [vmem:[#allocation16 + $0x208] sm:$0xff]
    %v927 = vld [vmem:[#allocation16 + $0x210] sm:$0xff]
    %v928 = vld [vmem:[#allocation16 + $0x218] sm:$0xff]
    %v929 = vld [vmem:[#allocation16 + $0x220] sm:$0xff]
    %v930 = vld [vmem:[#allocation16 + $0x228] sm:$0xff]
    %v931 = vld [vmem:[#allocation16 + $0x230] sm:$0xff]
    %v932 = vld [vmem:[#allocation16 + $0x238] sm:$0xff]
    %v933 = vld [vmem:[#allocation16 + $0x240] sm:$0xff]
    %v934 = vld [vmem:[#allocation16 + $0x248] sm:$0xff]
    %v935 = vld [vmem:[#allocation16 + $0x250] sm:$0xff]
    %v936 = vld [vmem:[#allocation16 + $0x258] sm:$0xff]
    %v937 = vld [vmem:[#allocation16 + $0x260] sm:$0xff]
    %v938 = vld [vmem:[#allocation16 + $0x268] sm:$0xff]
    %v939 = vld [vmem:[#allocation16 + $0x270] sm:$0xff]
    %v940 = vld [vmem:[#allocation16 + $0x278] sm:$0xff]
    %v941 = vld [vmem:[#allocation16 + $0x280] sm:$0xff]
    %v942 = vld [vmem:[#allocation16 + $0x288] sm:$0xff]
    %v943 = vld [vmem:[#allocation16 + $0x290] sm:$0xff]
    %v944 = vld [vmem:[#allocation16 + $0x298] sm:$0xff]
    %v945 = vld [vmem:[#allocation16 + $0x2a0] sm:$0xff]
    %v946 = vld [vmem:[#allocation16 + $0x2a8] sm:$0xff]
    %v947 = vld [vmem:[#allocation16 + $0x2b0] sm:$0xff]
    %v948 = vld [vmem:[#allocation16 + $0x2b8] sm:$0xff]
    %v949 = vld [vmem:[#allocation16 + $0x2c0] sm:$0xff]
    %v950 = vld [vmem:[#allocation16 + $0x2c8] sm:$0xff]
    %v951 = vld [vmem:[#allocation16 + $0x2d0] sm:$0xff]
    %v952 = vld [vmem:[#allocation16 + $0x2d8] sm:$0xff]
    %v953 = vld [vmem:[#allocation16 + $0x2e0] sm:$0xff]
    %v954 = vld [vmem:[#allocation16 + $0x2e8] sm:$0xff]
    %v955 = vld [vmem:[#allocation16 + $0x2f0] sm:$0xff]
    %v956 = vld [vmem:[#allocation16 + $0x2f8] sm:$0xff]
    %v957 = vld [vmem:[#allocation16 + $0x300] sm:$0xff]
    %v958 = vld [vmem:[#allocation16 + $0x308] sm:$0xff]
    %v959 = vld [vmem:[#allocation16 + $0x310] sm:$0xff]
    %v960 = vld [vmem:[#allocation16 + $0x318] sm:$0xff]
    %v961 = vld [vmem:[#allocation16 + $0x320] sm:$0xff]
    %v962 = vld [vmem:[#allocation16 + $0x328] sm:$0xff]
    %v963 = vld [vmem:[#allocation16 + $0x330] sm:$0xff]
    %v964 = vld [vmem:[#allocation16 + $0x338] sm:$0xff]
    %v965 = vld [vmem:[#allocation16 + $0x340] sm:$0xff]
    %v966 = vld [vmem:[#allocation16 + $0x348] sm:$0xff]
    %v967 = vld [vmem:[#allocation16 + $0x350] sm:$0xff]
    %v968 = vld [vmem:[#allocation16 + $0x358] sm:$0xff]
    %v969 = vld [vmem:[#allocation16 + $0x360] sm:$0xff]
    %v970 = vld [vmem:[#allocation16 + $0x368] sm:$0xff]
    %v971 = vld [vmem:[#allocation16 + $0x370] sm:$0xff]
    %v972 = vld [vmem:[#allocation16 + $0x378] sm:$0xff]
    %v973 = vld [vmem:[#allocation16 + $0x380] sm:$0xff]
    %v974 = vld [vmem:[#allocation16 + $0x388] sm:$0xff]
    %v975 = vld [vmem:[#allocation16 + $0x390] sm:$0xff]
    %v976 = vld [vmem:[#allocation16 + $0x398] sm:$0xff]
    %v977 = vld [vmem:[#allocation16 + $0x3a0] sm:$0xff]
    %v978 = vld [vmem:[#allocation16 + $0x3a8] sm:$0xff]
    %v979 = vld [vmem:[#allocation16 + $0x3b0] sm:$0xff]
    %v980 = vld [vmem:[#allocation16 + $0x3b8] sm:$0xff]
    %v981 = vld [vmem:[#allocation16 + $0x3c0] sm:$0xff]
    %v982 = vld [vmem:[#allocation16 + $0x3c8] sm:$0xff]
    %v983 = vld [vmem:[#allocation16 + $0x3d0] sm:$0xff]
    %v984 = vld [vmem:[#allocation16 + $0x3d8] sm:$0xff]
    %v985 = vld [vmem:[#allocation16 + $0x3e0] sm:$0xff]
    %v986 = vld [vmem:[#allocation16 + $0x3e8] sm:$0xff]
    %v987 = vld [vmem:[#allocation16 + $0x3f0] sm:$0xff]
    %v988 = vld [vmem:[#allocation16 + $0x3f8] sm:$0xff]
    %v989 = vld [vmem:[#allocation16 + $0x400] sm:$0xff]
    %v990 = vld [vmem:[#allocation16 + $0x408] sm:$0xff]
    %v991 = vld [vmem:[#allocation16 + $0x410] sm:$0xff]
    %v992 = vld [vmem:[#allocation16 + $0x418] sm:$0xff]
    %v993 = vld [vmem:[#allocation16 + $0x420] sm:$0xff]
    %v994 = vld [vmem:[#allocation16 + $0x428] sm:$0xff]
    %v995 = vld [vmem:[#allocation16 + $0x430] sm:$0xff]
    %v996 = vld [vmem:[#allocation16 + $0x438] sm:$0xff]
    %v997 = vld [vmem:[#allocation16 + $0x440] sm:$0xff]
    %v998 = vld [vmem:[#allocation16 + $0x448] sm:$0xff]
    %v999 = vld [vmem:[#allocation16 + $0x450] sm:$0xff]
    %v1000 = vld [vmem:[#allocation16 + $0x458] sm:$0xff]
    %v1001 = vld [vmem:[#allocation16 + $0x460] sm:$0xff]
    %v1002 = vld [vmem:[#allocation16 + $0x468] sm:$0xff]
    %v1003 = vld [vmem:[#allocation16 + $0x470] sm:$0xff]
    %v1004 = vld [vmem:[#allocation16 + $0x478] sm:$0xff]
    %v1005 = vld [vmem:[#allocation16 + $0x480] sm:$0xff]
    %v1006 = vld [vmem:[#allocation16 + $0x488] sm:$0xff]
    %v1007 = vld [vmem:[#allocation16 + $0x490] sm:$0xff]
    %v1008 = vld [vmem:[#allocation16 + $0x498] sm:$0xff]
    %v1009 = vld [vmem:[#allocation16 + $0x4a0] sm:$0xff]
    %v1010 = vld [vmem:[#allocation16 + $0x4a8] sm:$0xff]
    %v1011 = vld [vmem:[#allocation16 + $0x4b0] sm:$0xff]
    %v1012 = vld [vmem:[#allocation16 + $0x4b8] sm:$0xff]
    %v1013 = vld [vmem:[#allocation16 + $0x4c0] sm:$0xff]
    %v1014 = vld [vmem:[#allocation16 + $0x4c8] sm:$0xff]
    %v1015 = vld [vmem:[#allocation16 + $0x4d0] sm:$0xff]
    %v1016 = vld [vmem:[#allocation16 + $0x4d8] sm:$0xff]
    %v1017 = vld [vmem:[#allocation16 + $0x4e0] sm:$0xff]
    %v1018 = vld [vmem:[#allocation16 + $0x4e8] sm:$0xff]
    %v1019 = vld [vmem:[#allocation16 + $0x4f0] sm:$0xff]
    %v1020 = vld [vmem:[#allocation16 + $0x4f8] sm:$0xff]
    %v1021 = vld [vmem:[%s13] sm:$0x1]
    %v1022 = vld [vmem:[%s13 + $0x1] sm:$0x1]
    %v1023 = vld [vmem:[%s13 + $0x2] sm:$0x1]
    %v1024 = vld [vmem:[%s13 + $0x3] sm:$0x1]
    %v1025 = vld [vmem:[%s13 + $0x4] sm:$0x1]
    %v1031 = vlaneseq
    %v1032 = vshrl.u32 %v1031, 7
    %v1033 = vsub.s32 0, %v1032
    %v1034 = vrot.slane %v781, %v1033
    %v1035 = vlaneseq
    %v1036 = vshrl.u32 %v1035, 7
    %v1037 = vsub.s32 0, %v1036
    %v1038 = vrot.slane %v782, %v1037
    %v1039 = vlaneseq
    %v1040 = vshrl.u32 %v1039, 7
    %v1041 = vsub.s32 0, %v1040
    %v1042 = vrot.slane %v783, %v1041
    %v1043 = vlaneseq
    %v1044 = vshrl.u32 %v1043, 7
    %v1045 = vsub.s32 0, %v1044
    %v1046 = vrot.slane %v784, %v1045
    %v1047 = vlaneseq
    %v1048 = vshrl.u32 %v1047, 7
    %v1049 = vsub.s32 0, %v1048
    %v1050 = vrot.slane %v785, %v1049
    %v1058 = vrot.slane %v314, 7
    %v1059 = vsel %vm349, %v1058, %v313
    %v1060 = vsel %vm190, %v1059, 0
    %1062 = vmatprep.subr.mxu0 0.0
    %1063 = vmatpush1.msra.mxu0 0.0
    %1064 = vmatprep.subr.mxu0 0.0
    %1065 = vmatpush1.msra.mxu0 0.0
    %1066 = vmatprep.subr.mxu0 0.0
    %1067 = vmatpush1.msra.mxu0 0.0
    %1068 = vmatprep.subr.mxu0 0.0
    %1069 = vmatpush1.msra.mxu0 0.0
    %1070 = vmatprep.subr.mxu0 0.0
    %1071 = vmatpush1.msra.mxu0 0.0
    %1072 = vmatprep.subr.mxu0 0.0
    %1073 = vmatpush1.msra.mxu0 0.0
    %1074 = vmatprep.subr.mxu0 0.0
    %1075 = vmatpush1.msra.mxu0 0.0
    %1076 = vmatprep.subr.mxu0 0.0
    %1077 = vmatpush1.msra.mxu0 0.0
    %1078 = vmatprep.subr.mxu0 0.0
    %1079 = vmatpush1.msra.mxu0 0.0
    %1080 = vmatprep.subr.mxu0 0.0
    %1081 = vmatpush1.msra.mxu0 0.0
    %1082 = vmatprep.subr.mxu0 0.0
    %1083 = vmatpush1.msra.mxu0 0.0
    %1084 = vmatprep.subr.mxu0 0.0
    %1085 = vmatpush1.msra.mxu0 0.0
    %1086 = vmatprep.subr.mxu0 0.0
    %1087 = vmatpush1.msra.mxu0 %v824
    %1088 = vmatprep.subr.mxu0 0.0
    %1089 = vmatpush1.msra.mxu0 %v823
    %1090 = vmatprep.subr.mxu0 0.0
    %1091 = vmatpush1.msra.mxu0 %v822
    %1092 = vmatprep.subr.mxu0 0.0
    %1093 = vmatpush1.msra.mxu0 %v821
    %1094 = vmatprep.subr.mxu0 0.0
    %1095 = vmatpush2.msra.mxu0 0.0
    %1096 = vmatprep.subr.mxu0 0.0
    %1097 = vmatpush2.msra.mxu0 0.0
    %1098 = vmatprep.subr.mxu0 0.0
    %1099 = vmatpush2.msra.mxu0 0.0
    %1100 = vmatprep.subr.mxu0 0.0
    %1101 = vmatpush2.msra.mxu0 0.0
    %1102 = vmatprep.subr.mxu0 0.0
    %1103 = vmatpush2.msra.mxu0 0.0
    %1104 = vmatprep.subr.mxu0 0.0
    %1105 = vmatpush2.msra.mxu0 0.0
    %1106 = vmatprep.subr.mxu0 0.0
    %1107 = vmatpush2.msra.mxu0 0.0
    %1108 = vmatprep.subr.mxu0 0.0
    %1109 = vmatpush2.msra.mxu0 0.0
    %1110 = vmatprep.subr.mxu0 0.0
    %1111 = vmatpush2.msra.mxu0 0.0
    %1112 = vmatprep.subr.mxu0 0.0
    %1113 = vmatpush2.msra.mxu0 0.0
    %1114 = vmatprep.subr.mxu0 0.0
    %1115 = vmatpush2.msra.mxu0 0.0
    %1116 = vmatprep.subr.mxu0 0.0
    %1117 = vmatpush2.msra.mxu0 0.0
    %1118 = vmatprep.subr.mxu0 0.0
    %1119 = vmatpush2.msra.mxu0 0.0
    %1120 = vmatprep.subr.mxu0 0.0
    %1121 = vmatpush2.msra.mxu0 0.0
    %1122 = vmatprep.subr.mxu0 0.0
    %1123 = vmatpush2.msra.mxu0 0.0
    %1124 = vmatprep.subr.mxu0 0.0
    %1125 = vmatpush2.msra.mxu0 0.0
    %1126 = vmatprep.mubr.f32.mxu0 0.0
    %1127 = vmatmul.mubr.f32.gmra.mxu0 %v1060
    %v1128 = vpop.f32.mrf.mxu0
    %v1129 = vadd.f32 %v1034, %v1128
    %v1130 = vpop.f32.mrf.mxu0
    %1131 = vdwg.mxu0
    %v1132 = vrot.slane %v330, 7
    %v1133 = vsel %vm349, %v1132, %v329
    %v1134 = vsel %vm190, %v1133, 0
    %1136 = vmatprep.subr.mxu0 0.0
    %1137 = vmatpush1.msra.mxu0 0.0
    %1138 = vmatprep.subr.mxu0 0.0
    %1139 = vmatpush1.msra.mxu0 0.0
    %1140 = vmatprep.subr.mxu0 0.0
    %1141 = vmatpush1.msra.mxu0 0.0
    %1142 = vmatprep.subr.mxu0 0.0
    %1143 = vmatpush1.msra.mxu0 0.0
    %1144 = vmatprep.subr.mxu0 0.0
    %1145 = vmatpush1.msra.mxu0 0.0
    %1146 = vmatprep.subr.mxu0 0.0
    %1147 = vmatpush1.msra.mxu0 0.0
    %1148 = vmatprep.subr.mxu0 0.0
    %1149 = vmatpush1.msra.mxu0 0.0
    %1150 = vmatprep.subr.mxu0 0.0
    %1151 = vmatpush1.msra.mxu0 0.0
    %1152 = vmatprep.subr.mxu0 0.0
    %1153 = vmatpush1.msra.mxu0 0.0
    %1154 = vmatprep.subr.mxu0 0.0
    %1155 = vmatpush1.msra.mxu0 0.0
    %1156 = vmatprep.subr.mxu0 0.0
    %1157 = vmatpush1.msra.mxu0 0.0
    %1158 = vmatprep.subr.mxu0 0.0
    %1159 = vmatpush1.msra.mxu0 0.0
    %1160 = vmatprep.subr.mxu0 0.0
    %1161 = vmatpush1.msra.mxu0 %v828
    %1162 = vmatprep.subr.mxu0 0.0
    %1163 = vmatpush1.msra.mxu0 %v827
    %1164 = vmatprep.subr.mxu0 0.0
    %1165 = vmatpush1.msra.mxu0 %v826
    %1166 = vmatprep.subr.mxu0 0.0
    %1167 = vmatpush1.msra.mxu0 %v825
    %1168 = vmatprep.subr.mxu0 0.0
    %1169 = vmatpush2.msra.mxu0 0.0
    %1170 = vmatprep.subr.mxu0 0.0
    %1171 = vmatpush2.msra.mxu0 0.0
    %1172 = vmatprep.subr.mxu0 0.0
    %1173 = vmatpush2.msra.mxu0 0.0
    %1174 = vmatprep.subr.mxu0 0.0
    %1175 = vmatpush2.msra.mxu0 0.0
    %1176 = vmatprep.subr.mxu0 0.0
    %1177 = vmatpush2.msra.mxu0 0.0
    %1178 = vmatprep.subr.mxu0 0.0
    %1179 = vmatpush2.msra.mxu0 0.0
    %1180 = vmatprep.subr.mxu0 0.0
    %1181 = vmatpush2.msra.mxu0 0.0
    %1182 = vmatprep.subr.mxu0 0.0
    %1183 = vmatpush2.msra.mxu0 0.0
    %1184 = vmatprep.subr.mxu0 0.0
    %1185 = vmatpush2.msra.mxu0 0.0
    %1186 = vmatprep.subr.mxu0 0.0
    %1187 = vmatpush2.msra.mxu0 0.0
    %1188 = vmatprep.subr.mxu0 0.0
    %1189 = vmatpush2.msra.mxu0 0.0
    %1190 = vmatprep.subr.mxu0 0.0
    %1191 = vmatpush2.msra.mxu0 0.0
    %1192 = vmatprep.subr.mxu0 0.0
    %1193 = vmatpush2.msra.mxu0 0.0
    %1194 = vmatprep.subr.mxu0 0.0
    %1195 = vmatpush2.msra.mxu0 0.0
    %1196 = vmatprep.subr.mxu0 0.0
    %1197 = vmatpush2.msra.mxu0 0.0
    %1198 = vmatprep.subr.mxu0 0.0
    %1199 = vmatpush2.msra.mxu0 0.0
    %1200 = vmatprep.mubr.f32.mxu0 0.0
    %1201 = vmatmul.mubr.f32.gmra.mxu0 %v1134
    %v1202 = vpop.f32.mrf.mxu0
    %v1203 = vadd.f32 %v1038, %v1202
    %v1204 = vpop.f32.mrf.mxu0
    %1205 = vdwg.mxu0
    %1206 = vmatprep.subr.mxu0 0.0
    %1207 = vmatpush1.msra.mxu0 0.0
    %1208 = vmatprep.subr.mxu0 0.0
    %1209 = vmatpush1.msra.mxu0 0.0
    %1210 = vmatprep.subr.mxu0 0.0
    %1211 = vmatpush1.msra.mxu0 0.0
    %1212 = vmatprep.subr.mxu0 0.0
    %1213 = vmatpush1.msra.mxu0 0.0
    %1214 = vmatprep.subr.mxu0 0.0
    %1215 = vmatpush1.msra.mxu0 0.0
    %1216 = vmatprep.subr.mxu0 0.0
    %1217 = vmatpush1.msra.mxu0 0.0
    %1218 = vmatprep.subr.mxu0 0.0
    %1219 = vmatpush1.msra.mxu0 0.0
    %1220 = vmatprep.subr.mxu0 0.0
    %1221 = vmatpush1.msra.mxu0 0.0
    %1222 = vmatprep.subr.mxu0 0.0
    %1223 = vmatpush1.msra.mxu0 0.0
    %1224 = vmatprep.subr.mxu0 0.0
    %1225 = vmatpush1.msra.mxu0 0.0
    %1226 = vmatprep.subr.mxu0 0.0
    %1227 = vmatpush1.msra.mxu0 0.0
    %1228 = vmatprep.subr.mxu0 0.0
    %1229 = vmatpush1.msra.mxu0 0.0
    %1230 = vmatprep.subr.mxu0 0.0
    %1231 = vmatpush1.msra.mxu0 %v832
    %1232 = vmatprep.subr.mxu0 0.0
    %1233 = vmatpush1.msra.mxu0 %v831
    %1234 = vmatprep.subr.mxu0 0.0
    %1235 = vmatpush1.msra.mxu0 %v830
    %1236 = vmatprep.subr.mxu0 0.0
    %1237 = vmatpush1.msra.mxu0 %v829
    %1238 = vmatprep.subr.mxu0 0.0
    %1239 = vmatpush2.msra.mxu0 0.0
    %1240 = vmatprep.subr.mxu0 0.0
    %1241 = vmatpush2.msra.mxu0 0.0
    %1242 = vmatprep.subr.mxu0 0.0
    %1243 = vmatpush2.msra.mxu0 0.0
    %1244 = vmatprep.subr.mxu0 0.0
    %1245 = vmatpush2.msra.mxu0 0.0
    %1246 = vmatprep.subr.mxu0 0.0
    %1247 = vmatpush2.msra.mxu0 0.0
    %1248 = vmatprep.subr.mxu0 0.0
    %1249 = vmatpush2.msra.mxu0 0.0
    %1250 = vmatprep.subr.mxu0 0.0
    %1251 = vmatpush2.msra.mxu0 0.0
    %1252 = vmatprep.subr.mxu0 0.0
    %1253 = vmatpush2.msra.mxu0 0.0
    %1254 = vmatprep.subr.mxu0 0.0
    %1255 = vmatpush2.msra.mxu0 0.0
    %1256 = vmatprep.subr.mxu0 0.0
    %1257 = vmatpush2.msra.mxu0 0.0
    %1258 = vmatprep.subr.mxu0 0.0
    %1259 = vmatpush2.msra.mxu0 0.0
    %1260 = vmatprep.subr.mxu0 0.0
    %1261 = vmatpush2.msra.mxu0 0.0
    %1262 = vmatprep.subr.mxu0 0.0
    %1263 = vmatpush2.msra.mxu0 0.0
    %1264 = vmatprep.subr.mxu0 0.0
    %1265 = vmatpush2.msra.mxu0 0.0
    %1266 = vmatprep.subr.mxu0 0.0
    %1267 = vmatpush2.msra.mxu0 0.0
    %1268 = vmatprep.subr.mxu0 0.0
    %1269 = vmatpush2.msra.mxu0 0.0
    %1270 = vmatprep.mubr.f32.mxu0 0.0
    %1271 = vmatmul.mubr.f32.gmra.mxu0 %v1134
    %v1272 = vpop.f32.mrf.mxu0
    %v1273 = vadd.f32 %v1042, %v1272
    %v1274 = vpop.f32.mrf.mxu0
    %1275 = vdwg.mxu0
    %v1278 = vrot.slane %v764, 7
    %v1279 = vsel %vm349, %v1278, %v763
    %v1280 = vsel %vm190, %v1279, 0
    %1282 = vmatprep.subr.mxu0 0.0
    %1283 = vmatpush1.msra.mxu0 0.0
    %1284 = vmatprep.subr.mxu0 0.0
    %1285 = vmatpush1.msra.mxu0 0.0
    %1286 = vmatprep.subr.mxu0 0.0
    %1287 = vmatpush1.msra.mxu0 0.0
    %1288 = vmatprep.subr.mxu0 0.0
    %1289 = vmatpush1.msra.mxu0 0.0
    %1290 = vmatprep.subr.mxu0 0.0
    %1291 = vmatpush1.msra.mxu0 0.0
    %1292 = vmatprep.subr.mxu0 0.0
    %1293 = vmatpush1.msra.mxu0 0.0
    %1294 = vmatprep.subr.mxu0 0.0
    %1295 = vmatpush1.msra.mxu0 0.0
    %1296 = vmatprep.subr.mxu0 0.0
    %1297 = vmatpush1.msra.mxu0 0.0
    %1298 = vmatprep.subr.mxu0 0.0
    %1299 = vmatpush1.msra.mxu0 0.0
    %1300 = vmatprep.subr.mxu0 0.0
    %1301 = vmatpush1.msra.mxu0 0.0
    %1302 = vmatprep.subr.mxu0 0.0
    %1303 = vmatpush1.msra.mxu0 0.0
    %1304 = vmatprep.subr.mxu0 0.0
    %1305 = vmatpush1.msra.mxu0 0.0
    %1306 = vmatprep.subr.mxu0 0.0
    %1307 = vmatpush1.msra.mxu0 %v836
    %1308 = vmatprep.subr.mxu0 0.0
    %1309 = vmatpush1.msra.mxu0 %v835
    %1310 = vmatprep.subr.mxu0 0.0
    %1311 = vmatpush1.msra.mxu0 %v834
    %1312 = vmatprep.subr.mxu0 0.0
    %1313 = vmatpush1.msra.mxu0 %v833
    %1314 = vmatprep.subr.mxu0 0.0
    %1315 = vmatpush2.msra.mxu0 0.0
    %1316 = vmatprep.subr.mxu0 0.0
    %1317 = vmatpush2.msra.mxu0 0.0
    %1318 = vmatprep.subr.mxu0 0.0
    %1319 = vmatpush2.msra.mxu0 0.0
    %1320 = vmatprep.subr.mxu0 0.0
    %1321 = vmatpush2.msra.mxu0 0.0
    %1322 = vmatprep.subr.mxu0 0.0
    %1323 = vmatpush2.msra.mxu0 0.0
    %1324 = vmatprep.subr.mxu0 0.0
    %1325 = vmatpush2.msra.mxu0 0.0
    %1326 = vmatprep.subr.mxu0 0.0
    %1327 = vmatpush2.msra.mxu0 0.0
    %1328 = vmatprep.subr.mxu0 0.0
    %1329 = vmatpush2.msra.mxu0 0.0
    %1330 = vmatprep.subr.mxu0 0.0
    %1331 = vmatpush2.msra.mxu0 0.0
    %1332 = vmatprep.subr.mxu0 0.0
    %1333 = vmatpush2.msra.mxu0 0.0
    %1334 = vmatprep.subr.mxu0 0.0
    %1335 = vmatpush2.msra.mxu0 0.0
    %1336 = vmatprep.subr.mxu0 0.0
    %1337 = vmatpush2.msra.mxu0 0.0
    %1338 = vmatprep.subr.mxu0 0.0
    %1339 = vmatpush2.msra.mxu0 0.0
    %1340 = vmatprep.subr.mxu0 0.0
    %1341 = vmatpush2.msra.mxu0 0.0
    %1342 = vmatprep.subr.mxu0 0.0
    %1343 = vmatpush2.msra.mxu0 0.0
    %1344 = vmatprep.subr.mxu0 0.0
    %1345 = vmatpush2.msra.mxu0 0.0
    %1346 = vmatprep.mubr.f32.mxu0 0.0
    %1347 = vmatmul.mubr.f32.gmra.mxu0 %v1280
    %v1348 = vpop.f32.mrf.mxu0
    %v1349 = vadd.f32 %v1046, %v1348
    %v1350 = vpop.f32.mrf.mxu0
    %1351 = vdwg.mxu0
    %1352 = vmatprep.subr.mxu0 0.0
    %1353 = vmatpush1.msra.mxu0 0.0
    %1354 = vmatprep.subr.mxu0 0.0
    %1355 = vmatpush1.msra.mxu0 0.0
    %1356 = vmatprep.subr.mxu0 0.0
    %1357 = vmatpush1.msra.mxu0 0.0
    %1358 = vmatprep.subr.mxu0 0.0
    %1359 = vmatpush1.msra.mxu0 0.0
    %1360 = vmatprep.subr.mxu0 0.0
    %1361 = vmatpush1.msra.mxu0 0.0
    %1362 = vmatprep.subr.mxu0 0.0
    %1363 = vmatpush1.msra.mxu0 0.0
    %1364 = vmatprep.subr.mxu0 0.0
    %1365 = vmatpush1.msra.mxu0 0.0
    %1366 = vmatprep.subr.mxu0 0.0
    %1367 = vmatpush1.msra.mxu0 0.0
    %1368 = vmatprep.subr.mxu0 0.0
    %1369 = vmatpush1.msra.mxu0 0.0
    %1370 = vmatprep.subr.mxu0 0.0
    %1371 = vmatpush1.msra.mxu0 0.0
    %1372 = vmatprep.subr.mxu0 0.0
    %1373 = vmatpush1.msra.mxu0 0.0
    %1374 = vmatprep.subr.mxu0 0.0
    %1375 = vmatpush1.msra.mxu0 0.0
    %1376 = vmatprep.subr.mxu0 0.0
    %1377 = vmatpush1.msra.mxu0 %v840
    %1378 = vmatprep.subr.mxu0 0.0
    %1379 = vmatpush1.msra.mxu0 %v839
    %1380 = vmatprep.subr.mxu0 0.0
    %1381 = vmatpush1.msra.mxu0 %v838
    %1382 = vmatprep.subr.mxu0 0.0
    %1383 = vmatpush1.msra.mxu0 %v837
    %1384 = vmatprep.subr.mxu0 0.0
    %1385 = vmatpush2.msra.mxu0 0.0
    %1386 = vmatprep.subr.mxu0 0.0
    %1387 = vmatpush2.msra.mxu0 0.0
    %1388 = vmatprep.subr.mxu0 0.0
    %1389 = vmatpush2.msra.mxu0 0.0
    %1390 = vmatprep.subr.mxu0 0.0
    %1391 = vmatpush2.msra.mxu0 0.0
    %1392 = vmatprep.subr.mxu0 0.0
    %1393 = vmatpush2.msra.mxu0 0.0
    %1394 = vmatprep.subr.mxu0 0.0
    %1395 = vmatpush2.msra.mxu0 0.0
    %1396 = vmatprep.subr.mxu0 0.0
    %1397 = vmatpush2.msra.mxu0 0.0
    %1398 = vmatprep.subr.mxu0 0.0
    %1399 = vmatpush2.msra.mxu0 0.0
    %1400 = vmatprep.subr.mxu0 0.0
    %1401 = vmatpush2.msra.mxu0 0.0
    %1402 = vmatprep.subr.mxu0 0.0
    %1403 = vmatpush2.msra.mxu0 0.0
    %1404 = vmatprep.subr.mxu0 0.0
    %1405 = vmatpush2.msra.mxu0 0.0
    %1406 = vmatprep.subr.mxu0 0.0
    %1407 = vmatpush2.msra.mxu0 0.0
    %1408 = vmatprep.subr.mxu0 0.0
    %1409 = vmatpush2.msra.mxu0 0.0
    %1410 = vmatprep.subr.mxu0 0.0
    %1411 = vmatpush2.msra.mxu0 0.0
    %1412 = vmatprep.subr.mxu0 0.0
    %1413 = vmatpush2.msra.mxu0 0.0
    %1414 = vmatprep.subr.mxu0 0.0
    %1415 = vmatpush2.msra.mxu0 0.0
    %1416 = vmatprep.mubr.f32.mxu0 0.0
    %1417 = vmatmul.mubr.f32.gmra.mxu0 %v1280
    %v1418 = vpop.f32.mrf.mxu0
    %v1419 = vadd.f32 %v1050, %v1418
    %v1420 = vpop.f32.mrf.mxu0
    %1421 = vdwg.mxu0
    %v1422 = vsel %vm399, %v1129, 0.0
    %1423 = vadd.xlane.f32.xlu0 %v1422
    %v1424 = vpop.xlane.xlu0 %1423
    %v1425 = vsel %vm399, %v1203, 0.0
    %1426 = vadd.xlane.f32.xlu0 %v1425
    %v1427 = vpop.xlane.xlu0 %1426
    %v1428 = vsel %vm399, %v1273, 0.0
    %1429 = vadd.xlane.f32.xlu0 %v1428
    %v1430 = vpop.xlane.xlu0 %1429
    %v1431 = vsel %vm399, %v1349, 0.0
    %1432 = vadd.xlane.f32.xlu0 %v1431
    %v1433 = vpop.xlane.xlu0 %1432
    %v1434 = vsel %vm399, %v1419, 0.0
    %1435 = vadd.xlane.f32.xlu0 %v1434
    %v1436 = vpop.xlane.xlu0 %1435
    %v1437 = vrcp.pop 128.0
    %v1438 = vmul.f32 %v1424, %v1437
    %v1439 = vmul.f32 %v1427, %v1437
    %v1440 = vmul.f32 %v1430, %v1437
    %v1441 = vmul.f32 %v1433, %v1437
    %v1442 = vmul.f32 %v1436, %v1437
    %v1443 = vsub.f32 %v1129, %v1438
    %v1444 = vsub.f32 %v1203, %v1439
    %v1445 = vsub.f32 %v1273, %v1440
    %v1446 = vsub.f32 %v1349, %v1441
    %v1447 = vsub.f32 %v1419, %v1442
    %v1448 = vmul.f32 %v1443, %v1443
    %v1449 = vmul.f32 %v1444, %v1444
    %v1450 = vmul.f32 %v1445, %v1445
    %v1451 = vmul.f32 %v1446, %v1446
    %v1452 = vmul.f32 %v1447, %v1447
    %v1453 = vsel %vm399, %v1448, 0.0
    %1454 = vadd.xlane.f32.xlu0 %v1453
    %v1455 = vpop.xlane.xlu0 %1454
    %v1456 = vsel %vm399, %v1449, 0.0
    %1457 = vadd.xlane.f32.xlu0 %v1456
    %v1458 = vpop.xlane.xlu0 %1457
    %v1459 = vsel %vm399, %v1450, 0.0
    %1460 = vadd.xlane.f32.xlu0 %v1459
    %v1461 = vpop.xlane.xlu0 %1460
    %v1462 = vsel %vm399, %v1451, 0.0
    %1463 = vadd.xlane.f32.xlu0 %v1462
    %v1464 = vpop.xlane.xlu0 %1463
    %v1465 = vsel %vm399, %v1452, 0.0
    %1466 = vadd.xlane.f32.xlu0 %v1465
    %v1467 = vpop.xlane.xlu0 %1466
    %v1468 = vmul.f32 %v1455, %v1437
    %v1469 = vmul.f32 %v1458, %v1437
    %v1470 = vmul.f32 %v1461, %v1437
    %v1471 = vmul.f32 %v1464, %v1437
    %v1472 = vmul.f32 %v1467, %v1437
    %v1473 = vadd.f32 %v1468, 1e-05
    %v1474 = vadd.f32 %v1469, 1e-05
    %v1475 = vadd.f32 %v1470, 1e-05
    %v1476 = vadd.f32 %v1471, 1e-05
    %v1477 = vadd.f32 %v1472, 1e-05
    %v1478 = vrsqrt.pop %v1473
    %v1479 = vrsqrt.pop %v1474
    %v1480 = vrsqrt.pop %v1475
    %v1481 = vrsqrt.pop %v1476
    %v1482 = vrsqrt.pop %v1477
    %v1483 = vmul.f32 %v1443, %v1478
    %v1484 = vmul.f32 %v1444, %v1479
    %v1485 = vmul.f32 %v1445, %v1480
    %v1486 = vmul.f32 %v1446, %v1481
    %v1487 = vmul.f32 %v1447, %v1482
    %v1493 = vlaneseq
    %v1494 = vshrl.u32 %v1493, 7
    %v1495 = vsub.s32 0, %v1494
    %v1496 = vrot.slane %v791, %v1495
    %v1497 = vlaneseq
    %v1498 = vshrl.u32 %v1497, 7
    %v1499 = vsub.s32 0, %v1498
    %v1500 = vrot.slane %v792, %v1499
    %v1501 = vlaneseq
    %v1502 = vshrl.u32 %v1501, 7
    %v1503 = vsub.s32 0, %v1502
    %v1504 = vrot.slane %v793, %v1503
    %v1505 = vlaneseq
    %v1506 = vshrl.u32 %v1505, 7
    %v1507 = vsub.s32 0, %v1506
    %v1508 = vrot.slane %v794, %v1507
    %v1509 = vlaneseq
    %v1510 = vshrl.u32 %v1509, 7
    %v1511 = vsub.s32 0, %v1510
    %v1512 = vrot.slane %v795, %v1511
    %v1518 = vmul.f32 %v1483, %v1496
    %v1519 = vmul.f32 %v1484, %v1500
    %v1520 = vmul.f32 %v1485, %v1504
    %v1521 = vmul.f32 %v1486, %v1508
    %v1522 = vmul.f32 %v1487, %v1512
    %v1528 = vlaneseq
    %v1529 = vshrl.u32 %v1528, 7
    %v1530 = vsub.s32 0, %v1529
    %v1531 = vrot.slane %v796, %v1530
    %v1532 = vlaneseq
    %v1533 = vshrl.u32 %v1532, 7
    %v1534 = vsub.s32 0, %v1533
    %v1535 = vrot.slane %v797, %v1534
    %v1536 = vlaneseq
    %v1537 = vshrl.u32 %v1536, 7
    %v1538 = vsub.s32 0, %v1537
    %v1539 = vrot.slane %v798, %v1538
    %v1540 = vlaneseq
    %v1541 = vshrl.u32 %v1540, 7
    %v1542 = vsub.s32 0, %v1541
    %v1543 = vrot.slane %v799, %v1542
    %v1544 = vlaneseq
    %v1545 = vshrl.u32 %v1544, 7
    %v1546 = vsub.s32 0, %v1545
    %v1547 = vrot.slane %v800, %v1546
    %v1553 = vadd.f32 %v1518, %v1531
    %v1554 = vadd.f32 %v1519, %v1535
    %v1555 = vadd.f32 %v1520, %v1539
    %v1556 = vadd.f32 %v1521, %v1543
    %v1557 = vadd.f32 %v1522, %v1547
    %v1563 = vlaneseq
    %v1564 = vshrl.u32 %v1563, 7
    %v1565 = vsub.s32 0, %v1564
    %v1566 = vrot.slane %v786, %v1565
    %v1567 = vlaneseq
    %v1568 = vshrl.u32 %v1567, 7
    %v1569 = vsub.s32 0, %v1568
    %v1570 = vrot.slane %v787, %v1569
    %v1571 = vlaneseq
    %v1572 = vshrl.u32 %v1571, 7
    %v1573 = vsub.s32 0, %v1572
    %v1574 = vrot.slane %v788, %v1573
    %v1575 = vlaneseq
    %v1576 = vshrl.u32 %v1575, 7
    %v1577 = vsub.s32 0, %v1576
    %v1578 = vrot.slane %v789, %v1577
    %v1579 = vlaneseq
    %v1580 = vshrl.u32 %v1579, 7
    %v1581 = vsub.s32 0, %v1580
    %v1582 = vrot.slane %v790, %v1581
    %v1590 = vrot.slane %v346, 7
    %v1591 = vsel %vm349, %v1590, %v345
    %v1592 = vsel %vm190, %v1591, 0
    %1594 = vmatprep.subr.mxu0 0.0
    %1595 = vmatpush1.msra.mxu0 0.0
    %1596 = vmatprep.subr.mxu0 0.0
    %1597 = vmatpush1.msra.mxu0 0.0
    %1598 = vmatprep.subr.mxu0 0.0
    %1599 = vmatpush1.msra.mxu0 0.0
    %1600 = vmatprep.subr.mxu0 0.0
    %1601 = vmatpush1.msra.mxu0 0.0
    %1602 = vmatprep.subr.mxu0 0.0
    %1603 = vmatpush1.msra.mxu0 0.0
    %1604 = vmatprep.subr.mxu0 0.0
    %1605 = vmatpush1.msra.mxu0 0.0
    %1606 = vmatprep.subr.mxu0 0.0
    %1607 = vmatpush1.msra.mxu0 0.0
    %1608 = vmatprep.subr.mxu0 0.0
    %1609 = vmatpush1.msra.mxu0 0.0
    %1610 = vmatprep.subr.mxu0 0.0
    %1611 = vmatpush1.msra.mxu0 0.0
    %1612 = vmatprep.subr.mxu0 0.0
    %1613 = vmatpush1.msra.mxu0 0.0
    %1614 = vmatprep.subr.mxu0 0.0
    %1615 = vmatpush1.msra.mxu0 0.0
    %1616 = vmatprep.subr.mxu0 0.0
    %1617 = vmatpush1.msra.mxu0 0.0
    %1618 = vmatprep.subr.mxu0 0.0
    %1619 = vmatpush1.msra.mxu0 %v844
    %1620 = vmatprep.subr.mxu0 0.0
    %1621 = vmatpush1.msra.mxu0 %v843
    %1622 = vmatprep.subr.mxu0 0.0
    %1623 = vmatpush1.msra.mxu0 %v842
    %1624 = vmatprep.subr.mxu0 0.0
    %1625 = vmatpush1.msra.mxu0 %v841
    %1626 = vmatprep.subr.mxu0 0.0
    %1627 = vmatpush2.msra.mxu0 0.0
    %1628 = vmatprep.subr.mxu0 0.0
    %1629 = vmatpush2.msra.mxu0 0.0
    %1630 = vmatprep.subr.mxu0 0.0
    %1631 = vmatpush2.msra.mxu0 0.0
    %1632 = vmatprep.subr.mxu0 0.0
    %1633 = vmatpush2.msra.mxu0 0.0
    %1634 = vmatprep.subr.mxu0 0.0
    %1635 = vmatpush2.msra.mxu0 0.0
    %1636 = vmatprep.subr.mxu0 0.0
    %1637 = vmatpush2.msra.mxu0 0.0
    %1638 = vmatprep.subr.mxu0 0.0
    %1639 = vmatpush2.msra.mxu0 0.0
    %1640 = vmatprep.subr.mxu0 0.0
    %1641 = vmatpush2.msra.mxu0 0.0
    %1642 = vmatprep.subr.mxu0 0.0
    %1643 = vmatpush2.msra.mxu0 0.0
    %1644 = vmatprep.subr.mxu0 0.0
    %1645 = vmatpush2.msra.mxu0 0.0
    %1646 = vmatprep.subr.mxu0 0.0
    %1647 = vmatpush2.msra.mxu0 0.0
    %1648 = vmatprep.subr.mxu0 0.0
    %1649 = vmatpush2.msra.mxu0 0.0
    %1650 = vmatprep.subr.mxu0 0.0
    %1651 = vmatpush2.msra.mxu0 0.0
    %1652 = vmatprep.subr.mxu0 0.0
    %1653 = vmatpush2.msra.mxu0 0.0
    %1654 = vmatprep.subr.mxu0 0.0
    %1655 = vmatpush2.msra.mxu0 0.0
    %1656 = vmatprep.subr.mxu0 0.0
    %1657 = vmatpush2.msra.mxu0 0.0
    %1658 = vmatprep.mubr.f32.mxu0 0.0
    %1659 = vmatmul.mubr.f32.gmra.mxu0 %v1592
    %v1660 = vpop.f32.mrf.mxu0
    %v1661 = vadd.f32 %v1566, %v1660
    %v1662 = vpop.f32.mrf.mxu0
    %1663 = vdwg.mxu0
    %1664 = vmatprep.subr.mxu0 0.0
    %1665 = vmatpush1.msra.mxu0 0.0
    %1666 = vmatprep.subr.mxu0 0.0
    %1667 = vmatpush1.msra.mxu0 0.0
    %1668 = vmatprep.subr.mxu0 0.0
    %1669 = vmatpush1.msra.mxu0 0.0
    %1670 = vmatprep.subr.mxu0 0.0
    %1671 = vmatpush1.msra.mxu0 0.0
    %1672 = vmatprep.subr.mxu0 0.0
    %1673 = vmatpush1.msra.mxu0 0.0
    %1674 = vmatprep.subr.mxu0 0.0
    %1675 = vmatpush1.msra.mxu0 0.0
    %1676 = vmatprep.subr.mxu0 0.0
    %1677 = vmatpush1.msra.mxu0 0.0
    %1678 = vmatprep.subr.mxu0 0.0
    %1679 = vmatpush1.msra.mxu0 0.0
    %1680 = vmatprep.subr.mxu0 0.0
    %1681 = vmatpush1.msra.mxu0 0.0
    %1682 = vmatprep.subr.mxu0 0.0
    %1683 = vmatpush1.msra.mxu0 0.0
    %1684 = vmatprep.subr.mxu0 0.0
    %1685 = vmatpush1.msra.mxu0 0.0
    %1686 = vmatprep.subr.mxu0 0.0
    %1687 = vmatpush1.msra.mxu0 0.0
    %1688 = vmatprep.subr.mxu0 0.0
    %1689 = vmatpush1.msra.mxu0 %v848
    %1690 = vmatprep.subr.mxu0 0.0
    %1691 = vmatpush1.msra.mxu0 %v847
    %1692 = vmatprep.subr.mxu0 0.0
    %1693 = vmatpush1.msra.mxu0 %v846
    %1694 = vmatprep.subr.mxu0 0.0
    %1695 = vmatpush1.msra.mxu0 %v845
    %1696 = vmatprep.subr.mxu0 0.0
    %1697 = vmatpush2.msra.mxu0 0.0
    %1698 = vmatprep.subr.mxu0 0.0
    %1699 = vmatpush2.msra.mxu0 0.0
    %1700 = vmatprep.subr.mxu0 0.0
    %1701 = vmatpush2.msra.mxu0 0.0
    %1702 = vmatprep.subr.mxu0 0.0
    %1703 = vmatpush2.msra.mxu0 0.0
    %1704 = vmatprep.subr.mxu0 0.0
    %1705 = vmatpush2.msra.mxu0 0.0
    %1706 = vmatprep.subr.mxu0 0.0
    %1707 = vmatpush2.msra.mxu0 0.0
    %1708 = vmatprep.subr.mxu0 0.0
    %1709 = vmatpush2.msra.mxu0 0.0
    %1710 = vmatprep.subr.mxu0 0.0
    %1711 = vmatpush2.msra.mxu0 0.0
    %1712 = vmatprep.subr.mxu0 0.0
    %1713 = vmatpush2.msra.mxu0 0.0
    %1714 = vmatprep.subr.mxu0 0.0
    %1715 = vmatpush2.msra.mxu0 0.0
    %1716 = vmatprep.subr.mxu0 0.0
    %1717 = vmatpush2.msra.mxu0 0.0
    %1718 = vmatprep.subr.mxu0 0.0
    %1719 = vmatpush2.msra.mxu0 0.0
    %1720 = vmatprep.subr.mxu0 0.0
    %1721 = vmatpush2.msra.mxu0 0.0
    %1722 = vmatprep.subr.mxu0 0.0
    %1723 = vmatpush2.msra.mxu0 0.0
    %1724 = vmatprep.subr.mxu0 0.0
    %1725 = vmatpush2.msra.mxu0 0.0
    %1726 = vmatprep.subr.mxu0 0.0
    %1727 = vmatpush2.msra.mxu0 0.0
    %1728 = vmatprep.mubr.f32.mxu0 0.0
    %1729 = vmatmul.mubr.f32.gmra.mxu0 %v1060
    %v1730 = vpop.f32.mrf.mxu0
    %v1731 = vadd.f32 %v1570, %v1730
    %v1732 = vpop.f32.mrf.mxu0
    %1733 = vdwg.mxu0
    %1734 = vmatprep.subr.mxu0 0.0
    %1735 = vmatpush1.msra.mxu0 0.0
    %1736 = vmatprep.subr.mxu0 0.0
    %1737 = vmatpush1.msra.mxu0 0.0
    %1738 = vmatprep.subr.mxu0 0.0
    %1739 = vmatpush1.msra.mxu0 0.0
    %1740 = vmatprep.subr.mxu0 0.0
    %1741 = vmatpush1.msra.mxu0 0.0
    %1742 = vmatprep.subr.mxu0 0.0
    %1743 = vmatpush1.msra.mxu0 0.0
    %1744 = vmatprep.subr.mxu0 0.0
    %1745 = vmatpush1.msra.mxu0 0.0
    %1746 = vmatprep.subr.mxu0 0.0
    %1747 = vmatpush1.msra.mxu0 0.0
    %1748 = vmatprep.subr.mxu0 0.0
    %1749 = vmatpush1.msra.mxu0 0.0
    %1750 = vmatprep.subr.mxu0 0.0
    %1751 = vmatpush1.msra.mxu0 0.0
    %1752 = vmatprep.subr.mxu0 0.0
    %1753 = vmatpush1.msra.mxu0 0.0
    %1754 = vmatprep.subr.mxu0 0.0
    %1755 = vmatpush1.msra.mxu0 0.0
    %1756 = vmatprep.subr.mxu0 0.0
    %1757 = vmatpush1.msra.mxu0 0.0
    %1758 = vmatprep.subr.mxu0 0.0
    %1759 = vmatpush1.msra.mxu0 %v852
    %1760 = vmatprep.subr.mxu0 0.0
    %1761 = vmatpush1.msra.mxu0 %v851
    %1762 = vmatprep.subr.mxu0 0.0
    %1763 = vmatpush1.msra.mxu0 %v850
    %1764 = vmatprep.subr.mxu0 0.0
    %1765 = vmatpush1.msra.mxu0 %v849
    %1766 = vmatprep.subr.mxu0 0.0
    %1767 = vmatpush2.msra.mxu0 0.0
    %1768 = vmatprep.subr.mxu0 0.0
    %1769 = vmatpush2.msra.mxu0 0.0
    %1770 = vmatprep.subr.mxu0 0.0
    %1771 = vmatpush2.msra.mxu0 0.0
    %1772 = vmatprep.subr.mxu0 0.0
    %1773 = vmatpush2.msra.mxu0 0.0
    %1774 = vmatprep.subr.mxu0 0.0
    %1775 = vmatpush2.msra.mxu0 0.0
    %1776 = vmatprep.subr.mxu0 0.0
    %1777 = vmatpush2.msra.mxu0 0.0
    %1778 = vmatprep.subr.mxu0 0.0
    %1779 = vmatpush2.msra.mxu0 0.0
    %1780 = vmatprep.subr.mxu0 0.0
    %1781 = vmatpush2.msra.mxu0 0.0
    %1782 = vmatprep.subr.mxu0 0.0
    %1783 = vmatpush2.msra.mxu0 0.0
    %1784 = vmatprep.subr.mxu0 0.0
    %1785 = vmatpush2.msra.mxu0 0.0
    %1786 = vmatprep.subr.mxu0 0.0
    %1787 = vmatpush2.msra.mxu0 0.0
    %1788 = vmatprep.subr.mxu0 0.0
    %1789 = vmatpush2.msra.mxu0 0.0
    %1790 = vmatprep.subr.mxu0 0.0
    %1791 = vmatpush2.msra.mxu0 0.0
    %1792 = vmatprep.subr.mxu0 0.0
    %1793 = vmatpush2.msra.mxu0 0.0
    %1794 = vmatprep.subr.mxu0 0.0
    %1795 = vmatpush2.msra.mxu0 0.0
    %1796 = vmatprep.subr.mxu0 0.0
    %1797 = vmatpush2.msra.mxu0 0.0
    %1798 = vmatprep.mubr.f32.mxu0 0.0
    %1799 = vmatmul.mubr.f32.gmra.mxu0 %v1592
    %v1800 = vpop.f32.mrf.mxu0
    %v1801 = vadd.f32 %v1574, %v1800
    %v1802 = vpop.f32.mrf.mxu0
    %1803 = vdwg.mxu0
    %1804 = vmatprep.subr.mxu0 0.0
    %1805 = vmatpush1.msra.mxu0 0.0
    %1806 = vmatprep.subr.mxu0 0.0
    %1807 = vmatpush1.msra.mxu0 0.0
    %1808 = vmatprep.subr.mxu0 0.0
    %1809 = vmatpush1.msra.mxu0 0.0
    %1810 = vmatprep.subr.mxu0 0.0
    %1811 = vmatpush1.msra.mxu0 0.0
    %1812 = vmatprep.subr.mxu0 0.0
    %1813 = vmatpush1.msra.mxu0 0.0
    %1814 = vmatprep.subr.mxu0 0.0
    %1815 = vmatpush1.msra.mxu0 0.0
    %1816 = vmatprep.subr.mxu0 0.0
    %1817 = vmatpush1.msra.mxu0 0.0
    %1818 = vmatprep.subr.mxu0 0.0
    %1819 = vmatpush1.msra.mxu0 0.0
    %1820 = vmatprep.subr.mxu0 0.0
    %1821 = vmatpush1.msra.mxu0 0.0
    %1822 = vmatprep.subr.mxu0 0.0
    %1823 = vmatpush1.msra.mxu0 0.0
    %1824 = vmatprep.subr.mxu0 0.0
    %1825 = vmatpush1.msra.mxu0 0.0
    %1826 = vmatprep.subr.mxu0 0.0
    %1827 = vmatpush1.msra.mxu0 0.0
    %1828 = vmatprep.subr.mxu0 0.0
    %1829 = vmatpush1.msra.mxu0 %v856
    %1830 = vmatprep.subr.mxu0 0.0
    %1831 = vmatpush1.msra.mxu0 %v855
    %1832 = vmatprep.subr.mxu0 0.0
    %1833 = vmatpush1.msra.mxu0 %v854
    %1834 = vmatprep.subr.mxu0 0.0
    %1835 = vmatpush1.msra.mxu0 %v853
    %1836 = vmatprep.subr.mxu0 0.0
    %1837 = vmatpush2.msra.mxu0 0.0
    %1838 = vmatprep.subr.mxu0 0.0
    %1839 = vmatpush2.msra.mxu0 0.0
    %1840 = vmatprep.subr.mxu0 0.0
    %1841 = vmatpush2.msra.mxu0 0.0
    %1842 = vmatprep.subr.mxu0 0.0
    %1843 = vmatpush2.msra.mxu0 0.0
    %1844 = vmatprep.subr.mxu0 0.0
    %1845 = vmatpush2.msra.mxu0 0.0
    %1846 = vmatprep.subr.mxu0 0.0
    %1847 = vmatpush2.msra.mxu0 0.0
    %1848 = vmatprep.subr.mxu0 0.0
    %1849 = vmatpush2.msra.mxu0 0.0
    %1850 = vmatprep.subr.mxu0 0.0
    %1851 = vmatpush2.msra.mxu0 0.0
    %1852 = vmatprep.subr.mxu0 0.0
    %1853 = vmatpush2.msra.mxu0 0.0
    %1854 = vmatprep.subr.mxu0 0.0
    %1855 = vmatpush2.msra.mxu0 0.0
    %1856 = vmatprep.subr.mxu0 0.0
    %1857 = vmatpush2.msra.mxu0 0.0
    %1858 = vmatprep.subr.mxu0 0.0
    %1859 = vmatpush2.msra.mxu0 0.0
    %1860 = vmatprep.subr.mxu0 0.0
    %1861 = vmatpush2.msra.mxu0 0.0
    %1862 = vmatprep.subr.mxu0 0.0
    %1863 = vmatpush2.msra.mxu0 0.0
    %1864 = vmatprep.subr.mxu0 0.0
    %1865 = vmatpush2.msra.mxu0 0.0
    %1866 = vmatprep.subr.mxu0 0.0
    %1867 = vmatpush2.msra.mxu0 0.0
    %1868 = vmatprep.mubr.f32.mxu0 0.0
    %1869 = vmatmul.mubr.f32.gmra.mxu0 %v1060
    %v1870 = vpop.f32.mrf.mxu0
    %v1871 = vadd.f32 %v1578, %v1870
    %v1872 = vpop.f32.mrf.mxu0
    %1873 = vdwg.mxu0
    %v1876 = vrot.slane %v780, 7
    %v1877 = vsel %vm349, %v1876, %v779
    %v1878 = vsel %vm190, %v1877, 0
    %1880 = vmatprep.subr.mxu0 0.0
    %1881 = vmatpush1.msra.mxu0 0.0
    %1882 = vmatprep.subr.mxu0 0.0
    %1883 = vmatpush1.msra.mxu0 0.0
    %1884 = vmatprep.subr.mxu0 0.0
    %1885 = vmatpush1.msra.mxu0 0.0
    %1886 = vmatprep.subr.mxu0 0.0
    %1887 = vmatpush1.msra.mxu0 0.0
    %1888 = vmatprep.subr.mxu0 0.0
    %1889 = vmatpush1.msra.mxu0 0.0
    %1890 = vmatprep.subr.mxu0 0.0
    %1891 = vmatpush1.msra.mxu0 0.0
    %1892 = vmatprep.subr.mxu0 0.0
    %1893 = vmatpush1.msra.mxu0 0.0
    %1894 = vmatprep.subr.mxu0 0.0
    %1895 = vmatpush1.msra.mxu0 0.0
    %1896 = vmatprep.subr.mxu0 0.0
    %1897 = vmatpush1.msra.mxu0 0.0
    %1898 = vmatprep.subr.mxu0 0.0
    %1899 = vmatpush1.msra.mxu0 0.0
    %1900 = vmatprep.subr.mxu0 0.0
    %1901 = vmatpush1.msra.mxu0 0.0
    %1902 = vmatprep.subr.mxu0 0.0
    %1903 = vmatpush1.msra.mxu0 0.0
    %1904 = vmatprep.subr.mxu0 0.0
    %1905 = vmatpush1.msra.mxu0 %v860
    %1906 = vmatprep.subr.mxu0 0.0
    %1907 = vmatpush1.msra.mxu0 %v859
    %1908 = vmatprep.subr.mxu0 0.0
    %1909 = vmatpush1.msra.mxu0 %v858
    %1910 = vmatprep.subr.mxu0 0.0
    %1911 = vmatpush1.msra.mxu0 %v857
    %1912 = vmatprep.subr.mxu0 0.0
    %1913 = vmatpush2.msra.mxu0 0.0
    %1914 = vmatprep.subr.mxu0 0.0
    %1915 = vmatpush2.msra.mxu0 0.0
    %1916 = vmatprep.subr.mxu0 0.0
    %1917 = vmatpush2.msra.mxu0 0.0
    %1918 = vmatprep.subr.mxu0 0.0
    %1919 = vmatpush2.msra.mxu0 0.0
    %1920 = vmatprep.subr.mxu0 0.0
    %1921 = vmatpush2.msra.mxu0 0.0
    %1922 = vmatprep.subr.mxu0 0.0
    %1923 = vmatpush2.msra.mxu0 0.0
    %1924 = vmatprep.subr.mxu0 0.0
    %1925 = vmatpush2.msra.mxu0 0.0
    %1926 = vmatprep.subr.mxu0 0.0
    %1927 = vmatpush2.msra.mxu0 0.0
    %1928 = vmatprep.subr.mxu0 0.0
    %1929 = vmatpush2.msra.mxu0 0.0
    %1930 = vmatprep.subr.mxu0 0.0
    %1931 = vmatpush2.msra.mxu0 0.0
    %1932 = vmatprep.subr.mxu0 0.0
    %1933 = vmatpush2.msra.mxu0 0.0
    %1934 = vmatprep.subr.mxu0 0.0
    %1935 = vmatpush2.msra.mxu0 0.0
    %1936 = vmatprep.subr.mxu0 0.0
    %1937 = vmatpush2.msra.mxu0 0.0
    %1938 = vmatprep.subr.mxu0 0.0
    %1939 = vmatpush2.msra.mxu0 0.0
    %1940 = vmatprep.subr.mxu0 0.0
    %1941 = vmatpush2.msra.mxu0 0.0
    %1942 = vmatprep.subr.mxu0 0.0
    %1943 = vmatpush2.msra.mxu0 0.0
    %1944 = vmatprep.mubr.f32.mxu0 0.0
    %1945 = vmatmul.mubr.f32.gmra.mxu0 %v1878
    %v1946 = vpop.f32.mrf.mxu0
    %v1947 = vadd.f32 %v1582, %v1946
    %v1948 = vpop.f32.mrf.mxu0
    %1949 = vdwg.mxu0
    %v1950 = vsel %vm399, %v1661, 0.0
    %1951 = vadd.xlane.f32.xlu0 %v1950
    %v1952 = vpop.xlane.xlu0 %1951
    %v1953 = vsel %vm399, %v1731, 0.0
    %1954 = vadd.xlane.f32.xlu0 %v1953
    %v1955 = vpop.xlane.xlu0 %1954
    %v1956 = vsel %vm399, %v1801, 0.0
    %1957 = vadd.xlane.f32.xlu0 %v1956
    %v1958 = vpop.xlane.xlu0 %1957
    %v1959 = vsel %vm399, %v1871, 0.0
    %1960 = vadd.xlane.f32.xlu0 %v1959
    %v1961 = vpop.xlane.xlu0 %1960
    %v1962 = vsel %vm399, %v1947, 0.0
    %1963 = vadd.xlane.f32.xlu0 %v1962
    %v1964 = vpop.xlane.xlu0 %1963
    %v1965 = vmul.f32 %v1952, %v1437
    %v1966 = vmul.f32 %v1955, %v1437
    %v1967 = vmul.f32 %v1958, %v1437
    %v1968 = vmul.f32 %v1961, %v1437
    %v1969 = vmul.f32 %v1964, %v1437
    %v1970 = vsub.f32 %v1661, %v1965
    %v1971 = vsub.f32 %v1731, %v1966
    %v1972 = vsub.f32 %v1801, %v1967
    %v1973 = vsub.f32 %v1871, %v1968
    %v1974 = vsub.f32 %v1947, %v1969
    %v1975 = vmul.f32 %v1970, %v1970
    %v1976 = vmul.f32 %v1971, %v1971
    %v1977 = vmul.f32 %v1972, %v1972
    %v1978 = vmul.f32 %v1973, %v1973
    %v1979 = vmul.f32 %v1974, %v1974
    %v1980 = vsel %vm399, %v1975, 0.0
    %1981 = vadd.xlane.f32.xlu0 %v1980
    %v1982 = vpop.xlane.xlu0 %1981
    %v1983 = vsel %vm399, %v1976, 0.0
    %1984 = vadd.xlane.f32.xlu0 %v1983
    %v1985 = vpop.xlane.xlu0 %1984
    %v1986 = vsel %vm399, %v1977, 0.0
    %1987 = vadd.xlane.f32.xlu0 %v1986
    %v1988 = vpop.xlane.xlu0 %1987
    %v1989 = vsel %vm399, %v1978, 0.0
    %1990 = vadd.xlane.f32.xlu0 %v1989
    %v1991 = vpop.xlane.xlu0 %1990
    %v1992 = vsel %vm399, %v1979, 0.0
    %1993 = vadd.xlane.f32.xlu0 %v1992
    %v1994 = vpop.xlane.xlu0 %1993
    %v1995 = vmul.f32 %v1982, %v1437
    %v1996 = vmul.f32 %v1985, %v1437
    %v1997 = vmul.f32 %v1988, %v1437
    %v1998 = vmul.f32 %v1991, %v1437
    %v1999 = vmul.f32 %v1994, %v1437
    %v2000 = vadd.f32 %v1995, 1e-05
    %v2001 = vadd.f32 %v1996, 1e-05
    %v2002 = vadd.f32 %v1997, 1e-05
    %v2003 = vadd.f32 %v1998, 1e-05
    %v2004 = vadd.f32 %v1999, 1e-05
    %v2005 = vrsqrt.pop %v2000
    %v2006 = vrsqrt.pop %v2001
    %v2007 = vrsqrt.pop %v2002
    %v2008 = vrsqrt.pop %v2003
    %v2009 = vrsqrt.pop %v2004
    %v2010 = vmul.f32 %v1970, %v2005
    %v2011 = vmul.f32 %v1971, %v2006
    %v2012 = vmul.f32 %v1972, %v2007
    %v2013 = vmul.f32 %v1973, %v2008
    %v2014 = vmul.f32 %v1974, %v2009
    %v2015 = vmul.f32 %v2010, %v1496
    %v2016 = vmul.f32 %v2011, %v1500
    %v2017 = vmul.f32 %v2012, %v1504
    %v2018 = vmul.f32 %v2013, %v1508
    %v2019 = vmul.f32 %v2014, %v1512
    %v2020 = vadd.f32 %v2015, %v1531
    %v2021 = vadd.f32 %v2016, %v1535
    %v2022 = vadd.f32 %v2017, %v1539
    %v2023 = vadd.f32 %v2018, %v1543
    %v2024 = vadd.f32 %v2019, %v1547
    %v2025 = vld [vmem:[%s3] sm:$0x3]
    %v2026 = vld [vmem:[%s3 + $0x2] sm:$0x3]
    %v2027 = vld [vmem:[%s3 + $0x4] sm:$0x3]
    %v2028 = vld [vmem:[%s3 + $0x6] sm:$0x3]
    %v2029 = vld [vmem:[%s3 + $0x8] sm:$0x3]
    %vm2030 = vcmask 15360
    %v2032 = vsel %vm2030, %v2025, 0
    %v2035 = vsel %vm399, %v2020, 0
    %2037 = vmatprep.subr.mxu0 0.0
    %2038 = vmatpush1.msra.mxu0 0.0
    %2039 = vmatprep.subr.mxu0 0.0
    %2040 = vmatpush1.msra.mxu0 0.0
    %2041 = vmatprep.subr.mxu0 0.0
    %2042 = vmatpush1.msra.mxu0 0.0
    %2043 = vmatprep.subr.mxu0 0.0
    %2044 = vmatpush1.msra.mxu0 0.0
    %2045 = vmatprep.subr.mxu0 0.0
    %2046 = vmatpush1.msra.mxu0 0.0
    %2047 = vmatprep.subr.mxu0 0.0
    %2048 = vmatpush1.msra.mxu0 0.0
    %2049 = vmatprep.subr.mxu0 0.0
    %2050 = vmatpush1.msra.mxu0 0.0
    %2051 = vmatprep.subr.mxu0 0.0
    %2052 = vmatpush1.msra.mxu0 0.0
    %2053 = vmatprep.subr.mxu0 0.0
    %2054 = vmatpush1.msra.mxu0 0.0
    %2055 = vmatprep.subr.mxu0 0.0
    %2056 = vmatpush1.msra.mxu0 0.0
    %2057 = vmatprep.subr.mxu0 0.0
    %2058 = vmatpush1.msra.mxu0 0.0
    %2059 = vmatprep.subr.mxu0 0.0
    %2060 = vmatpush1.msra.mxu0 0.0
    %2061 = vmatprep.subr.mxu0 0.0
    %2062 = vmatpush1.msra.mxu0 0.0
    %2063 = vmatprep.subr.mxu0 0.0
    %2064 = vmatpush1.msra.mxu0 0.0
    %2065 = vmatprep.subr.mxu0 0.0
    %2066 = vmatpush1.msra.mxu0 0.0
    %2067 = vmatprep.subr.mxu0 0.0
    %2068 = vmatpush1.msra.mxu0 %v2035
    %2069 = vmatprep.subr.mxu0 0.0
    %2070 = vmatpush2.msra.mxu0 0.0
    %2071 = vmatprep.subr.mxu0 0.0
    %2072 = vmatpush2.msra.mxu0 0.0
    %2073 = vmatprep.subr.mxu0 0.0
    %2074 = vmatpush2.msra.mxu0 0.0
    %2075 = vmatprep.subr.mxu0 0.0
    %2076 = vmatpush2.msra.mxu0 0.0
    %2077 = vmatprep.subr.mxu0 0.0
    %2078 = vmatpush2.msra.mxu0 0.0
    %2079 = vmatprep.subr.mxu0 0.0
    %2080 = vmatpush2.msra.mxu0 0.0
    %2081 = vmatprep.subr.mxu0 0.0
    %2082 = vmatpush2.msra.mxu0 0.0
    %2083 = vmatprep.subr.mxu0 0.0
    %2084 = vmatpush2.msra.mxu0 0.0
    %2085 = vmatprep.subr.mxu0 0.0
    %2086 = vmatpush2.msra.mxu0 0.0
    %2087 = vmatprep.subr.mxu0 0.0
    %2088 = vmatpush2.msra.mxu0 0.0
    %2089 = vmatprep.subr.mxu0 0.0
    %2090 = vmatpush2.msra.mxu0 0.0
    %2091 = vmatprep.subr.mxu0 0.0
    %2092 = vmatpush2.msra.mxu0 0.0
    %2093 = vmatprep.subr.mxu0 0.0
    %2094 = vmatpush2.msra.mxu0 0.0
    %2095 = vmatprep.subr.mxu0 0.0
    %2096 = vmatpush2.msra.mxu0 0.0
    %2097 = vmatprep.subr.mxu0 0.0
    %2098 = vmatpush2.msra.mxu0 0.0
    %2099 = vmatprep.subr.mxu0 0.0
    %2100 = vmatpush2.msra.mxu0 0.0
    %2101 = vmatprep.mubr.f32.mxu0 0.0
    %2102 = vmatmul.mubr.f32.gmra.mxu0 %v2032
    %v2103 = vpop.f32.mrf.mxu0
    %v2104 = vadd.f32 0.0, %v2103
    %v2105 = vpop.f32.mrf.mxu0
    %2106 = vdwg.mxu0
    %v2108 = vsel %vm2030, %v2026, 0
    %v2111 = vsel %vm399, %v2021, 0
    %2113 = vmatprep.subr.mxu0 0.0
    %2114 = vmatpush1.msra.mxu0 0.0
    %2115 = vmatprep.subr.mxu0 0.0
    %2116 = vmatpush1.msra.mxu0 0.0
    %2117 = vmatprep.subr.mxu0 0.0
    %2118 = vmatpush1.msra.mxu0 0.0
    %2119 = vmatprep.subr.mxu0 0.0
    %2120 = vmatpush1.msra.mxu0 0.0
    %2121 = vmatprep.subr.mxu0 0.0
    %2122 = vmatpush1.msra.mxu0 0.0
    %2123 = vmatprep.subr.mxu0 0.0
    %2124 = vmatpush1.msra.mxu0 0.0
    %2125 = vmatprep.subr.mxu0 0.0
    %2126 = vmatpush1.msra.mxu0 0.0
    %2127 = vmatprep.subr.mxu0 0.0
    %2128 = vmatpush1.msra.mxu0 0.0
    %2129 = vmatprep.subr.mxu0 0.0
    %2130 = vmatpush1.msra.mxu0 0.0
    %2131 = vmatprep.subr.mxu0 0.0
    %2132 = vmatpush1.msra.mxu0 0.0
    %2133 = vmatprep.subr.mxu0 0.0
    %2134 = vmatpush1.msra.mxu0 0.0
    %2135 = vmatprep.subr.mxu0 0.0
    %2136 = vmatpush1.msra.mxu0 0.0
    %2137 = vmatprep.subr.mxu0 0.0
    %2138 = vmatpush1.msra.mxu0 0.0
    %2139 = vmatprep.subr.mxu0 0.0
    %2140 = vmatpush1.msra.mxu0 0.0
    %2141 = vmatprep.subr.mxu0 0.0
    %2142 = vmatpush1.msra.mxu0 0.0
    %2143 = vmatprep.subr.mxu0 0.0
    %2144 = vmatpush1.msra.mxu0 %v2111
    %2145 = vmatprep.subr.mxu0 0.0
    %2146 = vmatpush2.msra.mxu0 0.0
    %2147 = vmatprep.subr.mxu0 0.0
    %2148 = vmatpush2.msra.mxu0 0.0
    %2149 = vmatprep.subr.mxu0 0.0
    %2150 = vmatpush2.msra.mxu0 0.0
    %2151 = vmatprep.subr.mxu0 0.0
    %2152 = vmatpush2.msra.mxu0 0.0
    %2153 = vmatprep.subr.mxu0 0.0
    %2154 = vmatpush2.msra.mxu0 0.0
    %2155 = vmatprep.subr.mxu0 0.0
    %2156 = vmatpush2.msra.mxu0 0.0
    %2157 = vmatprep.subr.mxu0 0.0
    %2158 = vmatpush2.msra.mxu0 0.0
    %2159 = vmatprep.subr.mxu0 0.0
    %2160 = vmatpush2.msra.mxu0 0.0
    %2161 = vmatprep.subr.mxu0 0.0
    %2162 = vmatpush2.msra.mxu0 0.0
    %2163 = vmatprep.subr.mxu0 0.0
    %2164 = vmatpush2.msra.mxu0 0.0
    %2165 = vmatprep.subr.mxu0 0.0
    %2166 = vmatpush2.msra.mxu0 0.0
    %2167 = vmatprep.subr.mxu0 0.0
    %2168 = vmatpush2.msra.mxu0 0.0
    %2169 = vmatprep.subr.mxu0 0.0
    %2170 = vmatpush2.msra.mxu0 0.0
    %2171 = vmatprep.subr.mxu0 0.0
    %2172 = vmatpush2.msra.mxu0 0.0
    %2173 = vmatprep.subr.mxu0 0.0
    %2174 = vmatpush2.msra.mxu0 0.0
    %2175 = vmatprep.subr.mxu0 0.0
    %2176 = vmatpush2.msra.mxu0 0.0
    %2177 = vmatprep.mubr.f32.mxu0 0.0
    %2178 = vmatmul.mubr.f32.gmra.mxu0 %v2108
    %v2179 = vpop.f32.mrf.mxu0
    %v2180 = vadd.f32 0.0, %v2179
    %v2181 = vpop.f32.mrf.mxu0
    %2182 = vdwg.mxu0
    %v2184 = vsel %vm2030, %v2027, 0
    %v2187 = vsel %vm399, %v2022, 0
    %2189 = vmatprep.subr.mxu0 0.0
    %2190 = vmatpush1.msra.mxu0 0.0
    %2191 = vmatprep.subr.mxu0 0.0
    %2192 = vmatpush1.msra.mxu0 0.0
    %2193 = vmatprep.subr.mxu0 0.0
    %2194 = vmatpush1.msra.mxu0 0.0
    %2195 = vmatprep.subr.mxu0 0.0
    %2196 = vmatpush1.msra.mxu0 0.0
    %2197 = vmatprep.subr.mxu0 0.0
    %2198 = vmatpush1.msra.mxu0 0.0
    %2199 = vmatprep.subr.mxu0 0.0
    %2200 = vmatpush1.msra.mxu0 0.0
    %2201 = vmatprep.subr.mxu0 0.0
    %2202 = vmatpush1.msra.mxu0 0.0
    %2203 = vmatprep.subr.mxu0 0.0
    %2204 = vmatpush1.msra.mxu0 0.0
    %2205 = vmatprep.subr.mxu0 0.0
    %2206 = vmatpush1.msra.mxu0 0.0
    %2207 = vmatprep.subr.mxu0 0.0
    %2208 = vmatpush1.msra.mxu0 0.0
    %2209 = vmatprep.subr.mxu0 0.0
    %2210 = vmatpush1.msra.mxu0 0.0
    %2211 = vmatprep.subr.mxu0 0.0
    %2212 = vmatpush1.msra.mxu0 0.0
    %2213 = vmatprep.subr.mxu0 0.0
    %2214 = vmatpush1.msra.mxu0 0.0
    %2215 = vmatprep.subr.mxu0 0.0
    %2216 = vmatpush1.msra.mxu0 0.0
    %2217 = vmatprep.subr.mxu0 0.0
    %2218 = vmatpush1.msra.mxu0 0.0
    %2219 = vmatprep.subr.mxu0 0.0
    %2220 = vmatpush1.msra.mxu0 %v2187
    %2221 = vmatprep.subr.mxu0 0.0
    %2222 = vmatpush2.msra.mxu0 0.0
    %2223 = vmatprep.subr.mxu0 0.0
    %2224 = vmatpush2.msra.mxu0 0.0
    %2225 = vmatprep.subr.mxu0 0.0
    %2226 = vmatpush2.msra.mxu0 0.0
    %2227 = vmatprep.subr.mxu0 0.0
    %2228 = vmatpush2.msra.mxu0 0.0
    %2229 = vmatprep.subr.mxu0 0.0
    %2230 = vmatpush2.msra.mxu0 0.0
    %2231 = vmatprep.subr.mxu0 0.0
    %2232 = vmatpush2.msra.mxu0 0.0
    %2233 = vmatprep.subr.mxu0 0.0
    %2234 = vmatpush2.msra.mxu0 0.0
    %2235 = vmatprep.subr.mxu0 0.0
    %2236 = vmatpush2.msra.mxu0 0.0
    %2237 = vmatprep.subr.mxu0 0.0
    %2238 = vmatpush2.msra.mxu0 0.0
    %2239 = vmatprep.subr.mxu0 0.0
    %2240 = vmatpush2.msra.mxu0 0.0
    %2241 = vmatprep.subr.mxu0 0.0
    %2242 = vmatpush2.msra.mxu0 0.0
    %2243 = vmatprep.subr.mxu0 0.0
    %2244 = vmatpush2.msra.mxu0 0.0
    %2245 = vmatprep.subr.mxu0 0.0
    %2246 = vmatpush2.msra.mxu0 0.0
    %2247 = vmatprep.subr.mxu0 0.0
    %2248 = vmatpush2.msra.mxu0 0.0
    %2249 = vmatprep.subr.mxu0 0.0
    %2250 = vmatpush2.msra.mxu0 0.0
    %2251 = vmatprep.subr.mxu0 0.0
    %2252 = vmatpush2.msra.mxu0 0.0
    %2253 = vmatprep.mubr.f32.mxu0 0.0
    %2254 = vmatmul.mubr.f32.gmra.mxu0 %v2184
    %v2255 = vpop.f32.mrf.mxu0
    %v2256 = vadd.f32 0.0, %v2255
    %v2257 = vpop.f32.mrf.mxu0
    %2258 = vdwg.mxu0
    %v2260 = vsel %vm2030, %v2028, 0
    %v2263 = vsel %vm399, %v2023, 0
    %2265 = vmatprep.subr.mxu0 0.0
    %2266 = vmatpush1.msra.mxu0 0.0
    %2267 = vmatprep.subr.mxu0 0.0
    %2268 = vmatpush1.msra.mxu0 0.0
    %2269 = vmatprep.subr.mxu0 0.0
    %2270 = vmatpush1.msra.mxu0 0.0
    %2271 = vmatprep.subr.mxu0 0.0
    %2272 = vmatpush1.msra.mxu0 0.0
    %2273 = vmatprep.subr.mxu0 0.0
    %2274 = vmatpush1.msra.mxu0 0.0
    %2275 = vmatprep.subr.mxu0 0.0
    %2276 = vmatpush1.msra.mxu0 0.0
    %2277 = vmatprep.subr.mxu0 0.0
    %2278 = vmatpush1.msra.mxu0 0.0
    %2279 = vmatprep.subr.mxu0 0.0
    %2280 = vmatpush1.msra.mxu0 0.0
    %2281 = vmatprep.subr.mxu0 0.0
    %2282 = vmatpush1.msra.mxu0 0.0
    %2283 = vmatprep.subr.mxu0 0.0
    %2284 = vmatpush1.msra.mxu0 0.0
    %2285 = vmatprep.subr.mxu0 0.0
    %2286 = vmatpush1.msra.mxu0 0.0
    %2287 = vmatprep.subr.mxu0 0.0
    %2288 = vmatpush1.msra.mxu0 0.0
    %2289 = vmatprep.subr.mxu0 0.0
    %2290 = vmatpush1.msra.mxu0 0.0
    %2291 = vmatprep.subr.mxu0 0.0
    %2292 = vmatpush1.msra.mxu0 0.0
    %2293 = vmatprep.subr.mxu0 0.0
    %2294 = vmatpush1.msra.mxu0 0.0
    %2295 = vmatprep.subr.mxu0 0.0
    %2296 = vmatpush1.msra.mxu0 %v2263
    %2297 = vmatprep.subr.mxu0 0.0
    %2298 = vmatpush2.msra.mxu0 0.0
    %2299 = vmatprep.subr.mxu0 0.0
    %2300 = vmatpush2.msra.mxu0 0.0
    %2301 = vmatprep.subr.mxu0 0.0
    %2302 = vmatpush2.msra.mxu0 0.0
    %2303 = vmatprep.subr.mxu0 0.0
    %2304 = vmatpush2.msra.mxu0 0.0
    %2305 = vmatprep.subr.mxu0 0.0
    %2306 = vmatpush2.msra.mxu0 0.0
    %2307 = vmatprep.subr.mxu0 0.0
    %2308 = vmatpush2.msra.mxu0 0.0
    %2309 = vmatprep.subr.mxu0 0.0
    %2310 = vmatpush2.msra.mxu0 0.0
    %2311 = vmatprep.subr.mxu0 0.0
    %2312 = vmatpush2.msra.mxu0 0.0
    %2313 = vmatprep.subr.mxu0 0.0
    %2314 = vmatpush2.msra.mxu0 0.0
    %2315 = vmatprep.subr.mxu0 0.0
    %2316 = vmatpush2.msra.mxu0 0.0
    %2317 = vmatprep.subr.mxu0 0.0
    %2318 = vmatpush2.msra.mxu0 0.0
    %2319 = vmatprep.subr.mxu0 0.0
    %2320 = vmatpush2.msra.mxu0 0.0
    %2321 = vmatprep.subr.mxu0 0.0
    %2322 = vmatpush2.msra.mxu0 0.0
    %2323 = vmatprep.subr.mxu0 0.0
    %2324 = vmatpush2.msra.mxu0 0.0
    %2325 = vmatprep.subr.mxu0 0.0
    %2326 = vmatpush2.msra.mxu0 0.0
    %2327 = vmatprep.subr.mxu0 0.0
    %2328 = vmatpush2.msra.mxu0 0.0
    %2329 = vmatprep.mubr.f32.mxu0 0.0
    %2330 = vmatmul.mubr.f32.gmra.mxu0 %v2260
    %v2331 = vpop.f32.mrf.mxu0
    %v2332 = vadd.f32 0.0, %v2331
    %v2333 = vpop.f32.mrf.mxu0
    %2334 = vdwg.mxu0
    %v2336 = vsel %vm2030, %v2029, 0
    %v2339 = vsel %vm399, %v2024, 0
    %2341 = vmatprep.subr.mxu0 0.0
    %2342 = vmatpush1.msra.mxu0 0.0
    %2343 = vmatprep.subr.mxu0 0.0
    %2344 = vmatpush1.msra.mxu0 0.0
    %2345 = vmatprep.subr.mxu0 0.0
    %2346 = vmatpush1.msra.mxu0 0.0
    %2347 = vmatprep.subr.mxu0 0.0
    %2348 = vmatpush1.msra.mxu0 0.0
    %2349 = vmatprep.subr.mxu0 0.0
    %2350 = vmatpush1.msra.mxu0 0.0
    %2351 = vmatprep.subr.mxu0 0.0
    %2352 = vmatpush1.msra.mxu0 0.0
    %2353 = vmatprep.subr.mxu0 0.0
    %2354 = vmatpush1.msra.mxu0 0.0
    %2355 = vmatprep.subr.mxu0 0.0
    %2356 = vmatpush1.msra.mxu0 0.0
    %2357 = vmatprep.subr.mxu0 0.0
    %2358 = vmatpush1.msra.mxu0 0.0
    %2359 = vmatprep.subr.mxu0 0.0
    %2360 = vmatpush1.msra.mxu0 0.0
    %2361 = vmatprep.subr.mxu0 0.0
    %2362 = vmatpush1.msra.mxu0 0.0
    %2363 = vmatprep.subr.mxu0 0.0
    %2364 = vmatpush1.msra.mxu0 0.0
    %2365 = vmatprep.subr.mxu0 0.0
    %2366 = vmatpush1.msra.mxu0 0.0
    %2367 = vmatprep.subr.mxu0 0.0
    %2368 = vmatpush1.msra.mxu0 0.0
    %2369 = vmatprep.subr.mxu0 0.0
    %2370 = vmatpush1.msra.mxu0 0.0
    %2371 = vmatprep.subr.mxu0 0.0
    %2372 = vmatpush1.msra.mxu0 %v2339
    %2373 = vmatprep.subr.mxu0 0.0
    %2374 = vmatpush2.msra.mxu0 0.0
    %2375 = vmatprep.subr.mxu0 0.0
    %2376 = vmatpush2.msra.mxu0 0.0
    %2377 = vmatprep.subr.mxu0 0.0
    %2378 = vmatpush2.msra.mxu0 0.0
    %2379 = vmatprep.subr.mxu0 0.0
    %2380 = vmatpush2.msra.mxu0 0.0
    %2381 = vmatprep.subr.mxu0 0.0
    %2382 = vmatpush2.msra.mxu0 0.0
    %2383 = vmatprep.subr.mxu0 0.0
    %2384 = vmatpush2.msra.mxu0 0.0
    %2385 = vmatprep.subr.mxu0 0.0
    %2386 = vmatpush2.msra.mxu0 0.0
    %2387 = vmatprep.subr.mxu0 0.0
    %2388 = vmatpush2.msra.mxu0 0.0
    %2389 = vmatprep.subr.mxu0 0.0
    %2390 = vmatpush2.msra.mxu0 0.0
    %2391 = vmatprep.subr.mxu0 0.0
    %2392 = vmatpush2.msra.mxu0 0.0
    %2393 = vmatprep.subr.mxu0 0.0
    %2394 = vmatpush2.msra.mxu0 0.0
    %2395 = vmatprep.subr.mxu0 0.0
    %2396 = vmatpush2.msra.mxu0 0.0
    %2397 = vmatprep.subr.mxu0 0.0
    %2398 = vmatpush2.msra.mxu0 0.0
    %2399 = vmatprep.subr.mxu0 0.0
    %2400 = vmatpush2.msra.mxu0 0.0
    %2401 = vmatprep.subr.mxu0 0.0
    %2402 = vmatpush2.msra.mxu0 0.0
    %2403 = vmatprep.subr.mxu0 0.0
    %2404 = vmatpush2.msra.mxu0 0.0
    %2405 = vmatprep.mubr.f32.mxu0 0.0
    %2406 = vmatmul.mubr.f32.gmra.mxu0 %v2336
    %v2407 = vpop.f32.mrf.mxu0
    %v2408 = vadd.f32 0.0, %v2407
    %v2409 = vpop.f32.mrf.mxu0
    %2410 = vdwg.mxu0
    %2411 = vmatprep.subr.mxu0 0.0
    %2412 = vmatpush1.msra.mxu0 %v876
    %2413 = vmatprep.subr.mxu0 0.0
    %2414 = vmatpush1.msra.mxu0 %v875
    %2415 = vmatprep.subr.mxu0 0.0
    %2416 = vmatpush1.msra.mxu0 %v874
    %2417 = vmatprep.subr.mxu0 0.0
    %2418 = vmatpush1.msra.mxu0 %v873
    %2419 = vmatprep.subr.mxu0 0.0
    %2420 = vmatpush1.msra.mxu0 %v872
    %2421 = vmatprep.subr.mxu0 0.0
    %2422 = vmatpush1.msra.mxu0 %v871
    %2423 = vmatprep.subr.mxu0 0.0
    %2424 = vmatpush1.msra.mxu0 %v870
    %2425 = vmatprep.subr.mxu0 0.0
    %2426 = vmatpush1.msra.mxu0 %v869
    %2427 = vmatprep.subr.mxu0 0.0
    %2428 = vmatpush1.msra.mxu0 %v868
    %2429 = vmatprep.subr.mxu0 0.0
    %2430 = vmatpush1.msra.mxu0 %v867
    %2431 = vmatprep.subr.mxu0 0.0
    %2432 = vmatpush1.msra.mxu0 %v866
    %2433 = vmatprep.subr.mxu0 0.0
    %2434 = vmatpush1.msra.mxu0 %v865
    %2435 = vmatprep.subr.mxu0 0.0
    %2436 = vmatpush1.msra.mxu0 %v864
    %2437 = vmatprep.subr.mxu0 0.0
    %2438 = vmatpush1.msra.mxu0 %v863
    %2439 = vmatprep.subr.mxu0 0.0
    %2440 = vmatpush1.msra.mxu0 %v862
    %2441 = vmatprep.subr.mxu0 0.0
    %2442 = vmatpush1.msra.mxu0 %v861
    %2443 = vmatprep.subr.mxu0 0.0
    %2444 = vmatpush2.msra.mxu0 0.0
    %2445 = vmatprep.subr.mxu0 0.0
    %2446 = vmatpush2.msra.mxu0 0.0
    %2447 = vmatprep.subr.mxu0 0.0
    %2448 = vmatpush2.msra.mxu0 0.0
    %2449 = vmatprep.subr.mxu0 0.0
    %2450 = vmatpush2.msra.mxu0 0.0
    %2451 = vmatprep.subr.mxu0 0.0
    %2452 = vmatpush2.msra.mxu0 0.0
    %2453 = vmatprep.subr.mxu0 0.0
    %2454 = vmatpush2.msra.mxu0 0.0
    %2455 = vmatprep.subr.mxu0 0.0
    %2456 = vmatpush2.msra.mxu0 0.0
    %2457 = vmatprep.subr.mxu0 0.0
    %2458 = vmatpush2.msra.mxu0 0.0
    %2459 = vmatprep.subr.mxu0 0.0
    %2460 = vmatpush2.msra.mxu0 0.0
    %2461 = vmatprep.subr.mxu0 0.0
    %2462 = vmatpush2.msra.mxu0 0.0
    %2463 = vmatprep.subr.mxu0 0.0
    %2464 = vmatpush2.msra.mxu0 0.0
    %2465 = vmatprep.subr.mxu0 0.0
    %2466 = vmatpush2.msra.mxu0 0.0
    %2467 = vmatprep.subr.mxu0 0.0
    %2468 = vmatpush2.msra.mxu0 0.0
    %2469 = vmatprep.subr.mxu0 0.0
    %2470 = vmatpush2.msra.mxu0 0.0
    %2471 = vmatprep.subr.mxu0 0.0
    %2472 = vmatpush2.msra.mxu0 0.0
    %2473 = vmatprep.subr.mxu0 0.0
    %2474 = vmatpush2.msra.mxu0 0.0
    %2475 = vmatprep.mubr.f32.mxu0 0.0
    %2476 = vmatmul.mubr.f32.gmra.mxu0 %v1553
    %v2477 = vpop.f32.mrf.mxu0
    %v2478 = vadd.f32 0.0, %v2477
    %v2479 = vpop.f32.mrf.mxu0
    %2480 = vdwg.mxu0
    %2481 = vmatprep.subr.mxu0 0.0
    %2482 = vmatpush1.msra.mxu0 %v892
    %2483 = vmatprep.subr.mxu0 0.0
    %2484 = vmatpush1.msra.mxu0 %v891
    %2485 = vmatprep.subr.mxu0 0.0
    %2486 = vmatpush1.msra.mxu0 %v890
    %2487 = vmatprep.subr.mxu0 0.0
    %2488 = vmatpush1.msra.mxu0 %v889
    %2489 = vmatprep.subr.mxu0 0.0
    %2490 = vmatpush1.msra.mxu0 %v888
    %2491 = vmatprep.subr.mxu0 0.0
    %2492 = vmatpush1.msra.mxu0 %v887
    %2493 = vmatprep.subr.mxu0 0.0
    %2494 = vmatpush1.msra.mxu0 %v886
    %2495 = vmatprep.subr.mxu0 0.0
    %2496 = vmatpush1.msra.mxu0 %v885
    %2497 = vmatprep.subr.mxu0 0.0
    %2498 = vmatpush1.msra.mxu0 %v884
    %2499 = vmatprep.subr.mxu0 0.0
    %2500 = vmatpush1.msra.mxu0 %v883
    %2501 = vmatprep.subr.mxu0 0.0
    %2502 = vmatpush1.msra.mxu0 %v882
    %2503 = vmatprep.subr.mxu0 0.0
    %2504 = vmatpush1.msra.mxu0 %v881
    %2505 = vmatprep.subr.mxu0 0.0
    %2506 = vmatpush1.msra.mxu0 %v880
    %2507 = vmatprep.subr.mxu0 0.0
    %2508 = vmatpush1.msra.mxu0 %v879
    %2509 = vmatprep.subr.mxu0 0.0
    %2510 = vmatpush1.msra.mxu0 %v878
    %2511 = vmatprep.subr.mxu0 0.0
    %2512 = vmatpush1.msra.mxu0 %v877
    %2513 = vmatprep.subr.mxu0 0.0
    %2514 = vmatpush2.msra.mxu0 0.0
    %2515 = vmatprep.subr.mxu0 0.0
    %2516 = vmatpush2.msra.mxu0 0.0
    %2517 = vmatprep.subr.mxu0 0.0
    %2518 = vmatpush2.msra.mxu0 0.0
    %2519 = vmatprep.subr.mxu0 0.0
    %2520 = vmatpush2.msra.mxu0 0.0
    %2521 = vmatprep.subr.mxu0 0.0
    %2522 = vmatpush2.msra.mxu0 0.0
    %2523 = vmatprep.subr.mxu0 0.0
    %2524 = vmatpush2.msra.mxu0 0.0
    %2525 = vmatprep.subr.mxu0 0.0
    %2526 = vmatpush2.msra.mxu0 0.0
    %2527 = vmatprep.subr.mxu0 0.0
    %2528 = vmatpush2.msra.mxu0 0.0
    %2529 = vmatprep.subr.mxu0 0.0
    %2530 = vmatpush2.msra.mxu0 0.0
    %2531 = vmatprep.subr.mxu0 0.0
    %2532 = vmatpush2.msra.mxu0 0.0
    %2533 = vmatprep.subr.mxu0 0.0
    %2534 = vmatpush2.msra.mxu0 0.0
    %2535 = vmatprep.subr.mxu0 0.0
    %2536 = vmatpush2.msra.mxu0 0.0
    %2537 = vmatprep.subr.mxu0 0.0
    %2538 = vmatpush2.msra.mxu0 0.0
    %2539 = vmatprep.subr.mxu0 0.0
    %2540 = vmatpush2.msra.mxu0 0.0
    %2541 = vmatprep.subr.mxu0 0.0
    %2542 = vmatpush2.msra.mxu0 0.0
    %2543 = vmatprep.subr.mxu0 0.0
    %2544 = vmatpush2.msra.mxu0 0.0
    %2545 = vmatprep.mubr.f32.mxu0 0.0
    %2546 = vmatmul.mubr.f32.gmra.mxu0 %v1554
    %v2547 = vpop.f32.mrf.mxu0
    %v2548 = vadd.f32 0.0, %v2547
    %v2549 = vpop.f32.mrf.mxu0
    %2550 = vdwg.mxu0
    %2551 = vmatprep.subr.mxu0 0.0
    %2552 = vmatpush1.msra.mxu0 %v908
    %2553 = vmatprep.subr.mxu0 0.0
    %2554 = vmatpush1.msra.mxu0 %v907
    %2555 = vmatprep.subr.mxu0 0.0
    %2556 = vmatpush1.msra.mxu0 %v906
    %2557 = vmatprep.subr.mxu0 0.0
    %2558 = vmatpush1.msra.mxu0 %v905
    %2559 = vmatprep.subr.mxu0 0.0
    %2560 = vmatpush1.msra.mxu0 %v904
    %2561 = vmatprep.subr.mxu0 0.0
    %2562 = vmatpush1.msra.mxu0 %v903
    %2563 = vmatprep.subr.mxu0 0.0
    %2564 = vmatpush1.msra.mxu0 %v902
    %2565 = vmatprep.subr.mxu0 0.0
    %2566 = vmatpush1.msra.mxu0 %v901
    %2567 = vmatprep.subr.mxu0 0.0
    %2568 = vmatpush1.msra.mxu0 %v900
    %2569 = vmatprep.subr.mxu0 0.0
    %2570 = vmatpush1.msra.mxu0 %v899
    %2571 = vmatprep.subr.mxu0 0.0
    %2572 = vmatpush1.msra.mxu0 %v898
    %2573 = vmatprep.subr.mxu0 0.0
    %2574 = vmatpush1.msra.mxu0 %v897
    %2575 = vmatprep.subr.mxu0 0.0
    %2576 = vmatpush1.msra.mxu0 %v896
    %2577 = vmatprep.subr.mxu0 0.0
    %2578 = vmatpush1.msra.mxu0 %v895
    %2579 = vmatprep.subr.mxu0 0.0
    %2580 = vmatpush1.msra.mxu0 %v894
    %2581 = vmatprep.subr.mxu0 0.0
    %2582 = vmatpush1.msra.mxu0 %v893
    %2583 = vmatprep.subr.mxu0 0.0
    %2584 = vmatpush2.msra.mxu0 0.0
    %2585 = vmatprep.subr.mxu0 0.0
    %2586 = vmatpush2.msra.mxu0 0.0
    %2587 = vmatprep.subr.mxu0 0.0
    %2588 = vmatpush2.msra.mxu0 0.0
    %2589 = vmatprep.subr.mxu0 0.0
    %2590 = vmatpush2.msra.mxu0 0.0
    %2591 = vmatprep.subr.mxu0 0.0
    %2592 = vmatpush2.msra.mxu0 0.0
    %2593 = vmatprep.subr.mxu0 0.0
    %2594 = vmatpush2.msra.mxu0 0.0
    %2595 = vmatprep.subr.mxu0 0.0
    %2596 = vmatpush2.msra.mxu0 0.0
    %2597 = vmatprep.subr.mxu0 0.0
    %2598 = vmatpush2.msra.mxu0 0.0
    %2599 = vmatprep.subr.mxu0 0.0
    %2600 = vmatpush2.msra.mxu0 0.0
    %2601 = vmatprep.subr.mxu0 0.0
    %2602 = vmatpush2.msra.mxu0 0.0
    %2603 = vmatprep.subr.mxu0 0.0
    %2604 = vmatpush2.msra.mxu0 0.0
    %2605 = vmatprep.subr.mxu0 0.0
    %2606 = vmatpush2.msra.mxu0 0.0
    %2607 = vmatprep.subr.mxu0 0.0
    %2608 = vmatpush2.msra.mxu0 0.0
    %2609 = vmatprep.subr.mxu0 0.0
    %2610 = vmatpush2.msra.mxu0 0.0
    %2611 = vmatprep.subr.mxu0 0.0
    %2612 = vmatpush2.msra.mxu0 0.0
    %2613 = vmatprep.subr.mxu0 0.0
    %2614 = vmatpush2.msra.mxu0 0.0
    %2615 = vmatprep.mubr.f32.mxu0 0.0
    %2616 = vmatmul.mubr.f32.gmra.mxu0 %v1555
    %v2617 = vpop.f32.mrf.mxu0
    %v2618 = vadd.f32 0.0, %v2617
    %v2619 = vpop.f32.mrf.mxu0
    %2620 = vdwg.mxu0
    %2621 = vmatprep.subr.mxu0 0.0
    %2622 = vmatpush1.msra.mxu0 %v924
    %2623 = vmatprep.subr.mxu0 0.0
    %2624 = vmatpush1.msra.mxu0 %v923
    %2625 = vmatprep.subr.mxu0 0.0
    %2626 = vmatpush1.msra.mxu0 %v922
    %2627 = vmatprep.subr.mxu0 0.0
    %2628 = vmatpush1.msra.mxu0 %v921
    %2629 = vmatprep.subr.mxu0 0.0
    %2630 = vmatpush1.msra.mxu0 %v920
    %2631 = vmatprep.subr.mxu0 0.0
    %2632 = vmatpush1.msra.mxu0 %v919
    %2633 = vmatprep.subr.mxu0 0.0
    %2634 = vmatpush1.msra.mxu0 %v918
    %2635 = vmatprep.subr.mxu0 0.0
    %2636 = vmatpush1.msra.mxu0 %v917
    %2637 = vmatprep.subr.mxu0 0.0
    %2638 = vmatpush1.msra.mxu0 %v916
    %2639 = vmatprep.subr.mxu0 0.0
    %2640 = vmatpush1.msra.mxu0 %v915
    %2641 = vmatprep.subr.mxu0 0.0
    %2642 = vmatpush1.msra.mxu0 %v914
    %2643 = vmatprep.subr.mxu0 0.0
    %2644 = vmatpush1.msra.mxu0 %v913
    %2645 = vmatprep.subr.mxu0 0.0
    %2646 = vmatpush1.msra.mxu0 %v912
    %2647 = vmatprep.subr.mxu0 0.0
    %2648 = vmatpush1.msra.mxu0 %v911
    %2649 = vmatprep.subr.mxu0 0.0
    %2650 = vmatpush1.msra.mxu0 %v910
    %2651 = vmatprep.subr.mxu0 0.0
    %2652 = vmatpush1.msra.mxu0 %v909
    %2653 = vmatprep.subr.mxu0 0.0
    %2654 = vmatpush2.msra.mxu0 0.0
    %2655 = vmatprep.subr.mxu0 0.0
    %2656 = vmatpush2.msra.mxu0 0.0
    %2657 = vmatprep.subr.mxu0 0.0
    %2658 = vmatpush2.msra.mxu0 0.0
    %2659 = vmatprep.subr.mxu0 0.0
    %2660 = vmatpush2.msra.mxu0 0.0
    %2661 = vmatprep.subr.mxu0 0.0
    %2662 = vmatpush2.msra.mxu0 0.0
    %2663 = vmatprep.subr.mxu0 0.0
    %2664 = vmatpush2.msra.mxu0 0.0
    %2665 = vmatprep.subr.mxu0 0.0
    %2666 = vmatpush2.msra.mxu0 0.0
    %2667 = vmatprep.subr.mxu0 0.0
    %2668 = vmatpush2.msra.mxu0 0.0
    %2669 = vmatprep.subr.mxu0 0.0
    %2670 = vmatpush2.msra.mxu0 0.0
    %2671 = vmatprep.subr.mxu0 0.0
    %2672 = vmatpush2.msra.mxu0 0.0
    %2673 = vmatprep.subr.mxu0 0.0
    %2674 = vmatpush2.msra.mxu0 0.0
    %2675 = vmatprep.subr.mxu0 0.0
    %2676 = vmatpush2.msra.mxu0 0.0
    %2677 = vmatprep.subr.mxu0 0.0
    %2678 = vmatpush2.msra.mxu0 0.0
    %2679 = vmatprep.subr.mxu0 0.0
    %2680 = vmatpush2.msra.mxu0 0.0
    %2681 = vmatprep.subr.mxu0 0.0
    %2682 = vmatpush2.msra.mxu0 0.0
    %2683 = vmatprep.subr.mxu0 0.0
    %2684 = vmatpush2.msra.mxu0 0.0
    %2685 = vmatprep.mubr.f32.mxu0 0.0
    %2686 = vmatmul.mubr.f32.gmra.mxu0 %v1556
    %v2687 = vpop.f32.mrf.mxu0
    %v2688 = vadd.f32 0.0, %v2687
    %v2689 = vpop.f32.mrf.mxu0
    %2690 = vdwg.mxu0
    %2691 = vmatprep.subr.mxu0 0.0
    %2692 = vmatpush1.msra.mxu0 %v940
    %2693 = vmatprep.subr.mxu0 0.0
    %2694 = vmatpush1.msra.mxu0 %v939
    %2695 = vmatprep.subr.mxu0 0.0
    %2696 = vmatpush1.msra.mxu0 %v938
    %2697 = vmatprep.subr.mxu0 0.0
    %2698 = vmatpush1.msra.mxu0 %v937
    %2699 = vmatprep.subr.mxu0 0.0
    %2700 = vmatpush1.msra.mxu0 %v936
    %2701 = vmatprep.subr.mxu0 0.0
    %2702 = vmatpush1.msra.mxu0 %v935
    %2703 = vmatprep.subr.mxu0 0.0
    %2704 = vmatpush1.msra.mxu0 %v934
    %2705 = vmatprep.subr.mxu0 0.0
    %2706 = vmatpush1.msra.mxu0 %v933
    %2707 = vmatprep.subr.mxu0 0.0
    %2708 = vmatpush1.msra.mxu0 %v932
    %2709 = vmatprep.subr.mxu0 0.0
    %2710 = vmatpush1.msra.mxu0 %v931
    %2711 = vmatprep.subr.mxu0 0.0
    %2712 = vmatpush1.msra.mxu0 %v930
    %2713 = vmatprep.subr.mxu0 0.0
    %2714 = vmatpush1.msra.mxu0 %v929
    %2715 = vmatprep.subr.mxu0 0.0
    %2716 = vmatpush1.msra.mxu0 %v928
    %2717 = vmatprep.subr.mxu0 0.0
    %2718 = vmatpush1.msra.mxu0 %v927
    %2719 = vmatprep.subr.mxu0 0.0
    %2720 = vmatpush1.msra.mxu0 %v926
    %2721 = vmatprep.subr.mxu0 0.0
    %2722 = vmatpush1.msra.mxu0 %v925
    %2723 = vmatprep.subr.mxu0 0.0
    %2724 = vmatpush2.msra.mxu0 0.0
    %2725 = vmatprep.subr.mxu0 0.0
    %2726 = vmatpush2.msra.mxu0 0.0
    %2727 = vmatprep.subr.mxu0 0.0
    %2728 = vmatpush2.msra.mxu0 0.0
    %2729 = vmatprep.subr.mxu0 0.0
    %2730 = vmatpush2.msra.mxu0 0.0
    %2731 = vmatprep.subr.mxu0 0.0
    %2732 = vmatpush2.msra.mxu0 0.0
    %2733 = vmatprep.subr.mxu0 0.0
    %2734 = vmatpush2.msra.mxu0 0.0
    %2735 = vmatprep.subr.mxu0 0.0
    %2736 = vmatpush2.msra.mxu0 0.0
    %2737 = vmatprep.subr.mxu0 0.0
    %2738 = vmatpush2.msra.mxu0 0.0
    %2739 = vmatprep.subr.mxu0 0.0
    %2740 = vmatpush2.msra.mxu0 0.0
    %2741 = vmatprep.subr.mxu0 0.0
    %2742 = vmatpush2.msra.mxu0 0.0
    %2743 = vmatprep.subr.mxu0 0.0
    %2744 = vmatpush2.msra.mxu0 0.0
    %2745 = vmatprep.subr.mxu0 0.0
    %2746 = vmatpush2.msra.mxu0 0.0
    %2747 = vmatprep.subr.mxu0 0.0
    %2748 = vmatpush2.msra.mxu0 0.0
    %2749 = vmatprep.subr.mxu0 0.0
    %2750 = vmatpush2.msra.mxu0 0.0
    %2751 = vmatprep.subr.mxu0 0.0
    %2752 = vmatpush2.msra.mxu0 0.0
    %2753 = vmatprep.subr.mxu0 0.0
    %2754 = vmatpush2.msra.mxu0 0.0
    %2755 = vmatprep.mubr.f32.mxu0 0.0
    %2756 = vmatmul.mubr.f32.gmra.mxu0 %v1557
    %v2757 = vpop.f32.mrf.mxu0
    %v2758 = vadd.f32 0.0, %v2757
    %v2759 = vpop.f32.mrf.mxu0
    %2760 = vdwg.mxu0
    %v2766 = vrot.slane %v2104, 6
    %v2767 = vrot.slane %v2180, 6
    %v2768 = vrot.slane %v2256, 6
    %v2769 = vrot.slane %v2332, 6
    %v2770 = vrot.slane %v2408, 6
    %v2776 = vsel %vm399, %v2020, %v2766
    %v2777 = vsel %vm399, %v2021, %v2767
    %v2778 = vsel %vm399, %v2022, %v2768
    %v2779 = vsel %vm399, %v2023, %v2769
    %v2780 = vsel %vm399, %v2024, %v2770
    %2781 = vmatprep.subr.mxu0 0.0
    %2782 = vmatpush1.msra.mxu0 %v956
    %2783 = vmatprep.subr.mxu0 0.0
    %2784 = vmatpush1.msra.mxu0 %v955
    %2785 = vmatprep.subr.mxu0 0.0
    %2786 = vmatpush1.msra.mxu0 %v954
    %2787 = vmatprep.subr.mxu0 0.0
    %2788 = vmatpush1.msra.mxu0 %v953
    %2789 = vmatprep.subr.mxu0 0.0
    %2790 = vmatpush1.msra.mxu0 %v952
    %2791 = vmatprep.subr.mxu0 0.0
    %2792 = vmatpush1.msra.mxu0 %v951
    %2793 = vmatprep.subr.mxu0 0.0
    %2794 = vmatpush1.msra.mxu0 %v950
    %2795 = vmatprep.subr.mxu0 0.0
    %2796 = vmatpush1.msra.mxu0 %v949
    %2797 = vmatprep.subr.mxu0 0.0
    %2798 = vmatpush1.msra.mxu0 %v948
    %2799 = vmatprep.subr.mxu0 0.0
    %2800 = vmatpush1.msra.mxu0 %v947
    %2801 = vmatprep.subr.mxu0 0.0
    %2802 = vmatpush1.msra.mxu0 %v946
    %2803 = vmatprep.subr.mxu0 0.0
    %2804 = vmatpush1.msra.mxu0 %v945
    %2805 = vmatprep.subr.mxu0 0.0
    %2806 = vmatpush1.msra.mxu0 %v944
    %2807 = vmatprep.subr.mxu0 0.0
    %2808 = vmatpush1.msra.mxu0 %v943
    %2809 = vmatprep.subr.mxu0 0.0
    %2810 = vmatpush1.msra.mxu0 %v942
    %2811 = vmatprep.subr.mxu0 0.0
    %2812 = vmatpush1.msra.mxu0 %v941
    %2813 = vmatprep.subr.mxu0 0.0
    %2814 = vmatpush2.msra.mxu0 0.0
    %2815 = vmatprep.subr.mxu0 0.0
    %2816 = vmatpush2.msra.mxu0 0.0
    %2817 = vmatprep.subr.mxu0 0.0
    %2818 = vmatpush2.msra.mxu0 0.0
    %2819 = vmatprep.subr.mxu0 0.0
    %2820 = vmatpush2.msra.mxu0 0.0
    %2821 = vmatprep.subr.mxu0 0.0
    %2822 = vmatpush2.msra.mxu0 0.0
    %2823 = vmatprep.subr.mxu0 0.0
    %2824 = vmatpush2.msra.mxu0 0.0
    %2825 = vmatprep.subr.mxu0 0.0
    %2826 = vmatpush2.msra.mxu0 0.0
    %2827 = vmatprep.subr.mxu0 0.0
    %2828 = vmatpush2.msra.mxu0 0.0
    %2829 = vmatprep.subr.mxu0 0.0
    %2830 = vmatpush2.msra.mxu0 0.0
    %2831 = vmatprep.subr.mxu0 0.0
    %2832 = vmatpush2.msra.mxu0 0.0
    %2833 = vmatprep.subr.mxu0 0.0
    %2834 = vmatpush2.msra.mxu0 0.0
    %2835 = vmatprep.subr.mxu0 0.0
    %2836 = vmatpush2.msra.mxu0 0.0
    %2837 = vmatprep.subr.mxu0 0.0
    %2838 = vmatpush2.msra.mxu0 0.0
    %2839 = vmatprep.subr.mxu0 0.0
    %2840 = vmatpush2.msra.mxu0 0.0
    %2841 = vmatprep.subr.mxu0 0.0
    %2842 = vmatpush2.msra.mxu0 0.0
    %2843 = vmatprep.subr.mxu0 0.0
    %2844 = vmatpush2.msra.mxu0 0.0
    %2845 = vmatprep.mubr.f32.mxu0 0.0
    %2846 = vmatmul.mubr.f32.gmra.mxu0 %v2776
    %v2847 = vpop.f32.mrf.mxu0
    %v2848 = vadd.f32 0.0, %v2847
    %v2849 = vpop.f32.mrf.mxu0
    %2850 = vdwg.mxu0
    %2851 = vmatprep.subr.mxu0 0.0
    %2852 = vmatpush1.msra.mxu0 %v972
    %2853 = vmatprep.subr.mxu0 0.0
    %2854 = vmatpush1.msra.mxu0 %v971
    %2855 = vmatprep.subr.mxu0 0.0
    %2856 = vmatpush1.msra.mxu0 %v970
    %2857 = vmatprep.subr.mxu0 0.0
    %2858 = vmatpush1.msra.mxu0 %v969
    %2859 = vmatprep.subr.mxu0 0.0
    %2860 = vmatpush1.msra.mxu0 %v968
    %2861 = vmatprep.subr.mxu0 0.0
    %2862 = vmatpush1.msra.mxu0 %v967
    %2863 = vmatprep.subr.mxu0 0.0
    %2864 = vmatpush1.msra.mxu0 %v966
    %2865 = vmatprep.subr.mxu0 0.0
    %2866 = vmatpush1.msra.mxu0 %v965
    %2867 = vmatprep.subr.mxu0 0.0
    %2868 = vmatpush1.msra.mxu0 %v964
    %2869 = vmatprep.subr.mxu0 0.0
    %2870 = vmatpush1.msra.mxu0 %v963
    %2871 = vmatprep.subr.mxu0 0.0
    %2872 = vmatpush1.msra.mxu0 %v962
    %2873 = vmatprep.subr.mxu0 0.0
    %2874 = vmatpush1.msra.mxu0 %v961
    %2875 = vmatprep.subr.mxu0 0.0
    %2876 = vmatpush1.msra.mxu0 %v960
    %2877 = vmatprep.subr.mxu0 0.0
    %2878 = vmatpush1.msra.mxu0 %v959
    %2879 = vmatprep.subr.mxu0 0.0
    %2880 = vmatpush1.msra.mxu0 %v958
    %2881 = vmatprep.subr.mxu0 0.0
    %2882 = vmatpush1.msra.mxu0 %v957
    %2883 = vmatprep.subr.mxu0 0.0
    %2884 = vmatpush2.msra.mxu0 0.0
    %2885 = vmatprep.subr.mxu0 0.0
    %2886 = vmatpush2.msra.mxu0 0.0
    %2887 = vmatprep.subr.mxu0 0.0
    %2888 = vmatpush2.msra.mxu0 0.0
    %2889 = vmatprep.subr.mxu0 0.0
    %2890 = vmatpush2.msra.mxu0 0.0
    %2891 = vmatprep.subr.mxu0 0.0
    %2892 = vmatpush2.msra.mxu0 0.0
    %2893 = vmatprep.subr.mxu0 0.0
    %2894 = vmatpush2.msra.mxu0 0.0
    %2895 = vmatprep.subr.mxu0 0.0
    %2896 = vmatpush2.msra.mxu0 0.0
    %2897 = vmatprep.subr.mxu0 0.0
    %2898 = vmatpush2.msra.mxu0 0.0
    %2899 = vmatprep.subr.mxu0 0.0
    %2900 = vmatpush2.msra.mxu0 0.0
    %2901 = vmatprep.subr.mxu0 0.0
    %2902 = vmatpush2.msra.mxu0 0.0
    %2903 = vmatprep.subr.mxu0 0.0
    %2904 = vmatpush2.msra.mxu0 0.0
    %2905 = vmatprep.subr.mxu0 0.0
    %2906 = vmatpush2.msra.mxu0 0.0
    %2907 = vmatprep.subr.mxu0 0.0
    %2908 = vmatpush2.msra.mxu0 0.0
    %2909 = vmatprep.subr.mxu0 0.0
    %2910 = vmatpush2.msra.mxu0 0.0
    %2911 = vmatprep.subr.mxu0 0.0
    %2912 = vmatpush2.msra.mxu0 0.0
    %2913 = vmatprep.subr.mxu0 0.0
    %2914 = vmatpush2.msra.mxu0 0.0
    %2915 = vmatprep.mubr.f32.mxu0 0.0
    %2916 = vmatmul.mubr.f32.gmra.mxu0 %v2777
    %v2917 = vpop.f32.mrf.mxu0
    %v2918 = vadd.f32 0.0, %v2917
    %v2919 = vpop.f32.mrf.mxu0
    %2920 = vdwg.mxu0
    %2921 = vmatprep.subr.mxu0 0.0
    %2922 = vmatpush1.msra.mxu0 %v988
    %2923 = vmatprep.subr.mxu0 0.0
    %2924 = vmatpush1.msra.mxu0 %v987
    %2925 = vmatprep.subr.mxu0 0.0
    %2926 = vmatpush1.msra.mxu0 %v986
    %2927 = vmatprep.subr.mxu0 0.0
    %2928 = vmatpush1.msra.mxu0 %v985
    %2929 = vmatprep.subr.mxu0 0.0
    %2930 = vmatpush1.msra.mxu0 %v984
    %2931 = vmatprep.subr.mxu0 0.0
    %2932 = vmatpush1.msra.mxu0 %v983
    %2933 = vmatprep.subr.mxu0 0.0
    %2934 = vmatpush1.msra.mxu0 %v982
    %2935 = vmatprep.subr.mxu0 0.0
    %2936 = vmatpush1.msra.mxu0 %v981
    %2937 = vmatprep.subr.mxu0 0.0
    %2938 = vmatpush1.msra.mxu0 %v980
    %2939 = vmatprep.subr.mxu0 0.0
    %2940 = vmatpush1.msra.mxu0 %v979
    %2941 = vmatprep.subr.mxu0 0.0
    %2942 = vmatpush1.msra.mxu0 %v978
    %2943 = vmatprep.subr.mxu0 0.0
    %2944 = vmatpush1.msra.mxu0 %v977
    %2945 = vmatprep.subr.mxu0 0.0
    %2946 = vmatpush1.msra.mxu0 %v976
    %2947 = vmatprep.subr.mxu0 0.0
    %2948 = vmatpush1.msra.mxu0 %v975
    %2949 = vmatprep.subr.mxu0 0.0
    %2950 = vmatpush1.msra.mxu0 %v974
    %2951 = vmatprep.subr.mxu0 0.0
    %2952 = vmatpush1.msra.mxu0 %v973
    %2953 = vmatprep.subr.mxu0 0.0
    %2954 = vmatpush2.msra.mxu0 0.0
    %2955 = vmatprep.subr.mxu0 0.0
    %2956 = vmatpush2.msra.mxu0 0.0
    %2957 = vmatprep.subr.mxu0 0.0
    %2958 = vmatpush2.msra.mxu0 0.0
    %2959 = vmatprep.subr.mxu0 0.0
    %2960 = vmatpush2.msra.mxu0 0.0
    %2961 = vmatprep.subr.mxu0 0.0
    %2962 = vmatpush2.msra.mxu0 0.0
    %2963 = vmatprep.subr.mxu0 0.0
    %2964 = vmatpush2.msra.mxu0 0.0
    %2965 = vmatprep.subr.mxu0 0.0
    %2966 = vmatpush2.msra.mxu0 0.0
    %2967 = vmatprep.subr.mxu0 0.0
    %2968 = vmatpush2.msra.mxu0 0.0
    %2969 = vmatprep.subr.mxu0 0.0
    %2970 = vmatpush2.msra.mxu0 0.0
    %2971 = vmatprep.subr.mxu0 0.0
    %2972 = vmatpush2.msra.mxu0 0.0
    %2973 = vmatprep.subr.mxu0 0.0
    %2974 = vmatpush2.msra.mxu0 0.0
    %2975 = vmatprep.subr.mxu0 0.0
    %2976 = vmatpush2.msra.mxu0 0.0
    %2977 = vmatprep.subr.mxu0 0.0
    %2978 = vmatpush2.msra.mxu0 0.0
    %2979 = vmatprep.subr.mxu0 0.0
    %2980 = vmatpush2.msra.mxu0 0.0
    %2981 = vmatprep.subr.mxu0 0.0
    %2982 = vmatpush2.msra.mxu0 0.0
    %2983 = vmatprep.subr.mxu0 0.0
    %2984 = vmatpush2.msra.mxu0 0.0
    %2985 = vmatprep.mubr.f32.mxu0 0.0
    %2986 = vmatmul.mubr.f32.gmra.mxu0 %v2778
    %v2987 = vpop.f32.mrf.mxu0
    %v2988 = vadd.f32 0.0, %v2987
    %v2989 = vpop.f32.mrf.mxu0
    %2990 = vdwg.mxu0
    %2991 = vmatprep.subr.mxu0 0.0
    %2992 = vmatpush1.msra.mxu0 %v1004
    %2993 = vmatprep.subr.mxu0 0.0
    %2994 = vmatpush1.msra.mxu0 %v1003
    %2995 = vmatprep.subr.mxu0 0.0
    %2996 = vmatpush1.msra.mxu0 %v1002
    %2997 = vmatprep.subr.mxu0 0.0
    %2998 = vmatpush1.msra.mxu0 %v1001
    %2999 = vmatprep.subr.mxu0 0.0
    %3000 = vmatpush1.msra.mxu0 %v1000
    %3001 = vmatprep.subr.mxu0 0.0
    %3002 = vmatpush1.msra.mxu0 %v999
    %3003 = vmatprep.subr.mxu0 0.0
    %3004 = vmatpush1.msra.mxu0 %v998
    %3005 = vmatprep.subr.mxu0 0.0
    %3006 = vmatpush1.msra.mxu0 %v997
    %3007 = vmatprep.subr.mxu0 0.0
    %3008 = vmatpush1.msra.mxu0 %v996
    %3009 = vmatprep.subr.mxu0 0.0
    %3010 = vmatpush1.msra.mxu0 %v995
    %3011 = vmatprep.subr.mxu0 0.0
    %3012 = vmatpush1.msra.mxu0 %v994
    %3013 = vmatprep.subr.mxu0 0.0
    %3014 = vmatpush1.msra.mxu0 %v993
    %3015 = vmatprep.subr.mxu0 0.0
    %3016 = vmatpush1.msra.mxu0 %v992
    %3017 = vmatprep.subr.mxu0 0.0
    %3018 = vmatpush1.msra.mxu0 %v991
    %3019 = vmatprep.subr.mxu0 0.0
    %3020 = vmatpush1.msra.mxu0 %v990
    %3021 = vmatprep.subr.mxu0 0.0
    %3022 = vmatpush1.msra.mxu0 %v989
    %3023 = vmatprep.subr.mxu0 0.0
    %3024 = vmatpush2.msra.mxu0 0.0
    %3025 = vmatprep.subr.mxu0 0.0
    %3026 = vmatpush2.msra.mxu0 0.0
    %3027 = vmatprep.subr.mxu0 0.0
    %3028 = vmatpush2.msra.mxu0 0.0
    %3029 = vmatprep.subr.mxu0 0.0
    %3030 = vmatpush2.msra.mxu0 0.0
    %3031 = vmatprep.subr.mxu0 0.0
    %3032 = vmatpush2.msra.mxu0 0.0
    %3033 = vmatprep.subr.mxu0 0.0
    %3034 = vmatpush2.msra.mxu0 0.0
    %3035 = vmatprep.subr.mxu0 0.0
    %3036 = vmatpush2.msra.mxu0 0.0
    %3037 = vmatprep.subr.mxu0 0.0
    %3038 = vmatpush2.msra.mxu0 0.0
    %3039 = vmatprep.subr.mxu0 0.0
    %3040 = vmatpush2.msra.mxu0 0.0
    %3041 = vmatprep.subr.mxu0 0.0
    %3042 = vmatpush2.msra.mxu0 0.0
    %3043 = vmatprep.subr.mxu0 0.0
    %3044 = vmatpush2.msra.mxu0 0.0
    %3045 = vmatprep.subr.mxu0 0.0
    %3046 = vmatpush2.msra.mxu0 0.0
    %3047 = vmatprep.subr.mxu0 0.0
    %3048 = vmatpush2.msra.mxu0 0.0
    %3049 = vmatprep.subr.mxu0 0.0
    %3050 = vmatpush2.msra.mxu0 0.0
    %3051 = vmatprep.subr.mxu0 0.0
    %3052 = vmatpush2.msra.mxu0 0.0
    %3053 = vmatprep.subr.mxu0 0.0
    %3054 = vmatpush2.msra.mxu0 0.0
    %3055 = vmatprep.mubr.f32.mxu0 0.0
    %3056 = vmatmul.mubr.f32.gmra.mxu0 %v2779
    %v3057 = vpop.f32.mrf.mxu0
    %v3058 = vadd.f32 0.0, %v3057
    %v3059 = vpop.f32.mrf.mxu0
    %3060 = vdwg.mxu0
    %3061 = vmatprep.subr.mxu0 0.0
    %3062 = vmatpush1.msra.mxu0 %v1020
    %3063 = vmatprep.subr.mxu0 0.0
    %3064 = vmatpush1.msra.mxu0 %v1019
    %3065 = vmatprep.subr.mxu0 0.0
    %3066 = vmatpush1.msra.mxu0 %v1018
    %3067 = vmatprep.subr.mxu0 0.0
    %3068 = vmatpush1.msra.mxu0 %v1017
    %3069 = vmatprep.subr.mxu0 0.0
    %3070 = vmatpush1.msra.mxu0 %v1016
    %3071 = vmatprep.subr.mxu0 0.0
    %3072 = vmatpush1.msra.mxu0 %v1015
    %3073 = vmatprep.subr.mxu0 0.0
    %3074 = vmatpush1.msra.mxu0 %v1014
    %3075 = vmatprep.subr.mxu0 0.0
    %3076 = vmatpush1.msra.mxu0 %v1013
    %3077 = vmatprep.subr.mxu0 0.0
    %3078 = vmatpush1.msra.mxu0 %v1012
    %3079 = vmatprep.subr.mxu0 0.0
    %3080 = vmatpush1.msra.mxu0 %v1011
    %3081 = vmatprep.subr.mxu0 0.0
    %3082 = vmatpush1.msra.mxu0 %v1010
    %3083 = vmatprep.subr.mxu0 0.0
    %3084 = vmatpush1.msra.mxu0 %v1009
    %3085 = vmatprep.subr.mxu0 0.0
    %3086 = vmatpush1.msra.mxu0 %v1008
    %3087 = vmatprep.subr.mxu0 0.0
    %3088 = vmatpush1.msra.mxu0 %v1007
    %3089 = vmatprep.subr.mxu0 0.0
    %3090 = vmatpush1.msra.mxu0 %v1006
    %3091 = vmatprep.subr.mxu0 0.0
    %3092 = vmatpush1.msra.mxu0 %v1005
    %3093 = vmatprep.subr.mxu0 0.0
    %3094 = vmatpush2.msra.mxu0 0.0
    %3095 = vmatprep.subr.mxu0 0.0
    %3096 = vmatpush2.msra.mxu0 0.0
    %3097 = vmatprep.subr.mxu0 0.0
    %3098 = vmatpush2.msra.mxu0 0.0
    %3099 = vmatprep.subr.mxu0 0.0
    %3100 = vmatpush2.msra.mxu0 0.0
    %3101 = vmatprep.subr.mxu0 0.0
    %3102 = vmatpush2.msra.mxu0 0.0
    %3103 = vmatprep.subr.mxu0 0.0
    %3104 = vmatpush2.msra.mxu0 0.0
    %3105 = vmatprep.subr.mxu0 0.0
    %3106 = vmatpush2.msra.mxu0 0.0
    %3107 = vmatprep.subr.mxu0 0.0
    %3108 = vmatpush2.msra.mxu0 0.0
    %3109 = vmatprep.subr.mxu0 0.0
    %3110 = vmatpush2.msra.mxu0 0.0
    %3111 = vmatprep.subr.mxu0 0.0
    %3112 = vmatpush2.msra.mxu0 0.0
    %3113 = vmatprep.subr.mxu0 0.0
    %3114 = vmatpush2.msra.mxu0 0.0
    %3115 = vmatprep.subr.mxu0 0.0
    %3116 = vmatpush2.msra.mxu0 0.0
    %3117 = vmatprep.subr.mxu0 0.0
    %3118 = vmatpush2.msra.mxu0 0.0
    %3119 = vmatprep.subr.mxu0 0.0
    %3120 = vmatpush2.msra.mxu0 0.0
    %3121 = vmatprep.subr.mxu0 0.0
    %3122 = vmatpush2.msra.mxu0 0.0
    %3123 = vmatprep.subr.mxu0 0.0
    %3124 = vmatpush2.msra.mxu0 0.0
    %3125 = vmatprep.mubr.f32.mxu0 0.0
    %3126 = vmatmul.mubr.f32.gmra.mxu0 %v2780
    %v3127 = vpop.f32.mrf.mxu0
    %v3128 = vadd.f32 0.0, %v3127
    %v3129 = vpop.f32.mrf.mxu0
    %3130 = vdwg.mxu0
    %v3136 = vrot.slane %v2478, 6
    %v3137 = vrot.slane %v2548, 6
    %v3138 = vrot.slane %v2618, 6
    %v3139 = vrot.slane %v2688, 6
    %v3140 = vrot.slane %v2758, 6
    %v3146 = vsel %vm399, %v2478, %v3136
    %v3147 = vsel %vm399, %v2548, %v3137
    %v3148 = vsel %vm399, %v2618, %v3138
    %v3149 = vsel %vm399, %v2688, %v3139
    %v3150 = vsel %vm399, %v2758, %v3140
    %v3151 = vadd.f32 %v3146, %v2848
    %v3152 = vadd.f32 %v3147, %v2918
    %v3153 = vadd.f32 %v3148, %v2988
    %v3154 = vadd.f32 %v3149, %v3058
    %v3155 = vadd.f32 %v3150, %v3128
    %v3161 = vlaneseq
    %v3162 = vshrl.u32 %v3161, 7
    %v3163 = vsub.s32 0, %v3162
    %v3164 = vrot.slane %v801, %v3163
    %v3165 = vlaneseq
    %v3166 = vshrl.u32 %v3165, 7
    %v3167 = vsub.s32 0, %v3166
    %v3168 = vrot.slane %v802, %v3167
    %v3169 = vlaneseq
    %v3170 = vshrl.u32 %v3169, 7
    %v3171 = vsub.s32 0, %v3170
    %v3172 = vrot.slane %v803, %v3171
    %v3173 = vlaneseq
    %v3174 = vshrl.u32 %v3173, 7
    %v3175 = vsub.s32 0, %v3174
    %v3176 = vrot.slane %v804, %v3175
    %v3177 = vlaneseq
    %v3178 = vshrl.u32 %v3177, 7
    %v3179 = vsub.s32 0, %v3178
    %v3180 = vrot.slane %v805, %v3179
    %v3186 = vadd.f32 %v3151, %v3164
    %v3187 = vadd.f32 %v3152, %v3168
    %v3188 = vadd.f32 %v3153, %v3172
    %v3189 = vadd.f32 %v3154, %v3176
    %v3190 = vadd.f32 %v3155, %v3180
    %vm3191 = vcmask 1043456
    %v3192 = vsel %vm3191, %v3186, 0.0
    %3193 = vadd.xlane.f32.xlu0 %v3192
    %v3194 = vpop.xlane.xlu0 %3193
    %v3195 = vsel %vm3191, %v3187, 0.0
    %3196 = vadd.xlane.f32.xlu0 %v3195
    %v3197 = vpop.xlane.xlu0 %3196
    %v3198 = vsel %vm3191, %v3188, 0.0
    %3199 = vadd.xlane.f32.xlu0 %v3198
    %v3200 = vpop.xlane.xlu0 %3199
    %v3201 = vsel %vm3191, %v3189, 0.0
    %3202 = vadd.xlane.f32.xlu0 %v3201
    %v3203 = vpop.xlane.xlu0 %3202
    %v3204 = vsel %vm3191, %v3190, 0.0
    %3205 = vadd.xlane.f32.xlu0 %v3204
    %v3206 = vpop.xlane.xlu0 %3205
    %v3207 = vmul.f32 %v3194, %v1437
    %v3208 = vmul.f32 %v3197, %v1437
    %v3209 = vmul.f32 %v3200, %v1437
    %v3210 = vmul.f32 %v3203, %v1437
    %v3211 = vmul.f32 %v3206, %v1437
    %v3212 = vsub.f32 %v3186, %v3207
    %v3213 = vsub.f32 %v3187, %v3208
    %v3214 = vsub.f32 %v3188, %v3209
    %v3215 = vsub.f32 %v3189, %v3210
    %v3216 = vsub.f32 %v3190, %v3211
    %v3217 = vmul.f32 %v3212, %v3212
    %v3218 = vmul.f32 %v3213, %v3213
    %v3219 = vmul.f32 %v3214, %v3214
    %v3220 = vmul.f32 %v3215, %v3215
    %v3221 = vmul.f32 %v3216, %v3216
    %v3222 = vsel %vm3191, %v3217, 0.0
    %3223 = vadd.xlane.f32.xlu0 %v3222
    %v3224 = vpop.xlane.xlu0 %3223
    %v3225 = vsel %vm3191, %v3218, 0.0
    %3226 = vadd.xlane.f32.xlu0 %v3225
    %v3227 = vpop.xlane.xlu0 %3226
    %v3228 = vsel %vm3191, %v3219, 0.0
    %3229 = vadd.xlane.f32.xlu0 %v3228
    %v3230 = vpop.xlane.xlu0 %3229
    %v3231 = vsel %vm3191, %v3220, 0.0
    %3232 = vadd.xlane.f32.xlu0 %v3231
    %v3233 = vpop.xlane.xlu0 %3232
    %v3234 = vsel %vm3191, %v3221, 0.0
    %3235 = vadd.xlane.f32.xlu0 %v3234
    %v3236 = vpop.xlane.xlu0 %3235
    %v3237 = vmul.f32 %v3224, %v1437
    %v3238 = vmul.f32 %v3227, %v1437
    %v3239 = vmul.f32 %v3230, %v1437
    %v3240 = vmul.f32 %v3233, %v1437
    %v3241 = vmul.f32 %v3236, %v1437
    %v3242 = vadd.f32 %v3237, 1e-05
    %v3243 = vadd.f32 %v3238, 1e-05
    %v3244 = vadd.f32 %v3239, 1e-05
    %v3245 = vadd.f32 %v3240, 1e-05
    %v3246 = vadd.f32 %v3241, 1e-05
    %v3247 = vrsqrt.pop %v3242
    %v3248 = vrsqrt.pop %v3243
    %v3249 = vrsqrt.pop %v3244
    %v3250 = vrsqrt.pop %v3245
    %v3251 = vrsqrt.pop %v3246
    %v3252 = vmul.f32 %v3212, %v3247
    %v3253 = vmul.f32 %v3213, %v3248
    %v3254 = vmul.f32 %v3214, %v3249
    %v3255 = vmul.f32 %v3215, %v3250
    %v3256 = vmul.f32 %v3216, %v3251
    %v3262 = vlaneseq
    %v3263 = vshrl.u32 %v3262, 7
    %v3264 = vsub.s32 0, %v3263
    %v3265 = vrot.slane %v806, %v3264
    %v3266 = vlaneseq
    %v3267 = vshrl.u32 %v3266, 7
    %v3268 = vsub.s32 0, %v3267
    %v3269 = vrot.slane %v807, %v3268
    %v3270 = vlaneseq
    %v3271 = vshrl.u32 %v3270, 7
    %v3272 = vsub.s32 0, %v3271
    %v3273 = vrot.slane %v808, %v3272
    %v3274 = vlaneseq
    %v3275 = vshrl.u32 %v3274, 7
    %v3276 = vsub.s32 0, %v3275
    %v3277 = vrot.slane %v809, %v3276
    %v3278 = vlaneseq
    %v3279 = vshrl.u32 %v3278, 7
    %v3280 = vsub.s32 0, %v3279
    %v3281 = vrot.slane %v810, %v3280
    %v3287 = vmul.f32 %v3252, %v3265
    %v3288 = vmul.f32 %v3253, %v3269
    %v3289 = vmul.f32 %v3254, %v3273
    %v3290 = vmul.f32 %v3255, %v3277
    %v3291 = vmul.f32 %v3256, %v3281
    %v3297 = vlaneseq
    %v3298 = vshrl.u32 %v3297, 7
    %v3299 = vsub.s32 0, %v3298
    %v3300 = vrot.slane %v811, %v3299
    %v3301 = vlaneseq
    %v3302 = vshrl.u32 %v3301, 7
    %v3303 = vsub.s32 0, %v3302
    %v3304 = vrot.slane %v812, %v3303
    %v3305 = vlaneseq
    %v3306 = vshrl.u32 %v3305, 7
    %v3307 = vsub.s32 0, %v3306
    %v3308 = vrot.slane %v813, %v3307
    %v3309 = vlaneseq
    %v3310 = vshrl.u32 %v3309, 7
    %v3311 = vsub.s32 0, %v3310
    %v3312 = vrot.slane %v814, %v3311
    %v3313 = vlaneseq
    %v3314 = vshrl.u32 %v3313, 7
    %v3315 = vsub.s32 0, %v3314
    %v3316 = vrot.slane %v815, %v3315
    %v3322 = vadd.f32 %v3287, %v3300
    %v3323 = vadd.f32 %v3288, %v3304
    %v3324 = vadd.f32 %v3289, %v3308
    %v3325 = vadd.f32 %v3290, %v3312
    %v3326 = vadd.f32 %v3291, %v3316
    %v3327 = vxor.u32 %v3322, 2147483648
    %v3328 = vxor.u32 %v3323, 2147483648
    %v3329 = vxor.u32 %v3324, 2147483648
    %v3330 = vxor.u32 %v3325, 2147483648
    %v3331 = vxor.u32 %v3326, 2147483648
    %v3332 = vmul.f32 %v3327, 1.442695
    %v3333 = vpow.pop %v3332
    %v3334 = vmul.f32 %v3328, 1.442695
    %v3335 = vpow.pop %v3334
    %v3336 = vmul.f32 %v3329, 1.442695
    %v3337 = vpow.pop %v3336
    %v3338 = vmul.f32 %v3330, 1.442695
    %v3339 = vpow.pop %v3338
    %v3340 = vmul.f32 %v3331, 1.442695
    %v3341 = vpow.pop %v3340
    %v3342 = vadd.f32 %v3333, 1.0
    %v3343 = vadd.f32 %v3335, 1.0
    %v3344 = vadd.f32 %v3337, 1.0
    %v3345 = vadd.f32 %v3339, 1.0
    %v3346 = vadd.f32 %v3341, 1.0
    %v3347 = vrcp.pop %v3342
    %v3348 = vmul.f32 1.0, %v3347
    %v3349 = vrcp.pop %v3343
    %v3350 = vmul.f32 1.0, %v3349
    %v3351 = vrcp.pop %v3344
    %v3352 = vmul.f32 1.0, %v3351
    %v3353 = vrcp.pop %v3345
    %v3354 = vmul.f32 1.0, %v3353
    %v3355 = vrcp.pop %v3346
    %v3356 = vmul.f32 1.0, %v3355
    %v3357 = vmul.f32 %v3322, %v3348
    %v3358 = vmul.f32 %v3323, %v3350
    %v3359 = vmul.f32 %v3324, %v3352
    %v3360 = vmul.f32 %v3325, %v3354
    %v3361 = vmul.f32 %v3326, %v3356
    %v3367 = vlaneseq
    %v3368 = vshrl.u32 %v3367, 7
    %v3369 = vsub.s32 0, %v3368
    %v3370 = vrot.slane %v816, %v3369
    %v3371 = vlaneseq
    %v3372 = vshrl.u32 %v3371, 7
    %v3373 = vsub.s32 0, %v3372
    %v3374 = vrot.slane %v817, %v3373
    %v3375 = vlaneseq
    %v3376 = vshrl.u32 %v3375, 7
    %v3377 = vsub.s32 0, %v3376
    %v3378 = vrot.slane %v818, %v3377
    %v3379 = vlaneseq
    %v3380 = vshrl.u32 %v3379, 7
    %v3381 = vsub.s32 0, %v3380
    %v3382 = vrot.slane %v819, %v3381
    %v3383 = vlaneseq
    %v3384 = vshrl.u32 %v3383, 7
    %v3385 = vsub.s32 0, %v3384
    %v3386 = vrot.slane %v820, %v3385
    %v3392 = vmul.f32 %v3357, %v3370
    %v3393 = vmul.f32 %v3358, %v3374
    %v3394 = vmul.f32 %v3359, %v3378
    %v3395 = vmul.f32 %v3360, %v3382
    %v3396 = vmul.f32 %v3361, %v3386
    %v3397 = vsel %vm3191, %v3392, 0.0
    %3398 = vadd.xlane.f32.xlu0 %v3397
    %v3399 = vpop.xlane.xlu0 %3398
    %v3400 = vsel %vm3191, %v3393, 0.0
    %3401 = vadd.xlane.f32.xlu0 %v3400
    %v3402 = vpop.xlane.xlu0 %3401
    %v3403 = vsel %vm3191, %v3394, 0.0
    %3404 = vadd.xlane.f32.xlu0 %v3403
    %v3405 = vpop.xlane.xlu0 %3404
    %v3406 = vsel %vm3191, %v3395, 0.0
    %3407 = vadd.xlane.f32.xlu0 %v3406
    %v3408 = vpop.xlane.xlu0 %3407
    %v3409 = vsel %vm3191, %v3396, 0.0
    %3410 = vadd.xlane.f32.xlu0 %v3409
    %v3411 = vpop.xlane.xlu0 %3410
    %v3417 = vlaneseq
    %v3418 = vshrl.u32 %v3417, 7
    %v3419 = vsub.s32 0, %v3418
    %v3420 = vrot.slane %v1021, %v3419
    %v3421 = vlaneseq
    %v3422 = vshrl.u32 %v3421, 7
    %v3423 = vsub.s32 0, %v3422
    %v3424 = vrot.slane %v1022, %v3423
    %v3425 = vlaneseq
    %v3426 = vshrl.u32 %v3425, 7
    %v3427 = vsub.s32 0, %v3426
    %v3428 = vrot.slane %v1023, %v3427
    %v3429 = vlaneseq
    %v3430 = vshrl.u32 %v3429, 7
    %v3431 = vsub.s32 0, %v3430
    %v3432 = vrot.slane %v1024, %v3431
    %v3433 = vlaneseq
    %v3434 = vshrl.u32 %v3433, 7
    %v3435 = vsub.s32 0, %v3434
    %v3436 = vrot.slane %v1025, %v3435
    %v3442 = vadd.f32 %v3399, %v3420
    %v3443 = vadd.f32 %v3402, %v3424
    %v3444 = vadd.f32 %v3405, %v3428
    %v3445 = vadd.f32 %v3408, %v3432
    %v3446 = vadd.f32 %v3411, %v3436
    %vm3447 = vcmask 1024
    %v3448 = vsel %vm3447, %v3442, 0.0
    %v3449 = vrot.slane %v3448, 4
    %v3450 = vadd.f32 %v3448, %v3449
    %v3451 = vrot.slane %v3450, 2
    %v3452 = vadd.f32 %v3450, %v3451
    %v3453 = vrot.slane %v3452, 1
    %v3454 = vadd.f32 %v3452, %v3453
    %v3455 = vsel %vm3447, %v3443, 0.0
    %v3456 = vrot.slane %v3455, 4
    %v3457 = vadd.f32 %v3455, %v3456
    %v3458 = vrot.slane %v3457, 2
    %v3459 = vadd.f32 %v3457, %v3458
    %v3460 = vrot.slane %v3459, 1
    %v3461 = vadd.f32 %v3459, %v3460
    %v3462 = vsel %vm3447, %v3444, 0.0
    %v3463 = vrot.slane %v3462, 4
    %v3464 = vadd.f32 %v3462, %v3463
    %v3465 = vrot.slane %v3464, 2
    %v3466 = vadd.f32 %v3464, %v3465
    %v3467 = vrot.slane %v3466, 1
    %v3468 = vadd.f32 %v3466, %v3467
    %v3469 = vsel %vm3447, %v3445, 0.0
    %v3470 = vrot.slane %v3469, 4
    %v3471 = vadd.f32 %v3469, %v3470
    %v3472 = vrot.slane %v3471, 2
    %v3473 = vadd.f32 %v3471, %v3472
    %v3474 = vrot.slane %v3473, 1
    %v3475 = vadd.f32 %v3473, %v3474
    %v3476 = vsel %vm3447, %v3446, 0.0
    %v3477 = vrot.slane %v3476, 4
    %v3478 = vadd.f32 %v3476, %v3477
    %v3479 = vrot.slane %v3478, 2
    %v3480 = vadd.f32 %v3478, %v3479
    %v3481 = vrot.slane %v3480, 1
    %v3482 = vadd.f32 %v3480, %v3481
    %v3483 = vmul.f32 %v3454, %v407
    %v3484 = vmul.f32 %v3461, %v407
    %v3485 = vmul.f32 %v3468, %v407
    %v3486 = vmul.f32 %v3475, %v407
    %v3487 = vmul.f32 %v3482, %v407
    %vm3488 = vcmask 3074
    %v3489 = vsel %vm3488, %v3442, -inf
    %v3490 = vrot.slane %v3489, 4
    %v3491 = vmax.f32 %v3489, %v3490
    %v3492 = vrot.slane %v3491, 2
    %v3493 = vmax.f32 %v3491, %v3492
    %v3494 = vrot.slane %v3493, 1
    %v3495 = vmax.f32 %v3493, %v3494
    %v3496 = vsel %vm3488, %v3443, -inf
    %v3497 = vrot.slane %v3496, 4
    %v3498 = vmax.f32 %v3496, %v3497
    %v3499 = vrot.slane %v3498, 2
    %v3500 = vmax.f32 %v3498, %v3499
    %v3501 = vrot.slane %v3500, 1
    %v3502 = vmax.f32 %v3500, %v3501
    %v3503 = vsel %vm3488, %v3444, -inf
    %v3504 = vrot.slane %v3503, 4
    %v3505 = vmax.f32 %v3503, %v3504
    %v3506 = vrot.slane %v3505, 2
    %v3507 = vmax.f32 %v3505, %v3506
    %v3508 = vrot.slane %v3507, 1
    %v3509 = vmax.f32 %v3507, %v3508
    %v3510 = vsel %vm3488, %v3445, -inf
    %v3511 = vrot.slane %v3510, 4
    %v3512 = vmax.f32 %v3510, %v3511
    %v3513 = vrot.slane %v3512, 2
    %v3514 = vmax.f32 %v3512, %v3513
    %v3515 = vrot.slane %v3514, 1
    %v3516 = vmax.f32 %v3514, %v3515
    %v3517 = vsel %vm3488, %v3446, -inf
    %v3518 = vrot.slane %v3517, 4
    %v3519 = vmax.f32 %v3517, %v3518
    %v3520 = vrot.slane %v3519, 2
    %v3521 = vmax.f32 %v3519, %v3520
    %v3522 = vrot.slane %v3521, 1
    %v3523 = vmax.f32 %v3521, %v3522
    %v3524 = vsub.f32 %v3442, %v3495
    %v3525 = vsub.f32 %v3443, %v3502
    %v3526 = vsub.f32 %v3444, %v3509
    %v3527 = vsub.f32 %v3445, %v3516
    %v3528 = vsub.f32 %v3446, %v3523
    %v3529 = vmul.f32 %v3524, 1.442695
    %v3530 = vpow.pop %v3529
    %v3531 = vmul.f32 %v3525, 1.442695
    %v3532 = vpow.pop %v3531
    %v3533 = vmul.f32 %v3526, 1.442695
    %v3534 = vpow.pop %v3533
    %v3535 = vmul.f32 %v3527, 1.442695
    %v3536 = vpow.pop %v3535
    %v3537 = vmul.f32 %v3528, 1.442695
    %v3538 = vpow.pop %v3537
    %v3544 = vrot.slane %v3530, 2
    %v3545 = vrot.slane %v3532, 2
    %v3546 = vrot.slane %v3534, 2
    %v3547 = vrot.slane %v3536, 2
    %v3548 = vrot.slane %v3538, 2
    %v3554 = vsel %vm3447, %v3544, 0.0
    %v3555 = vrot.slane %v3554, 4
    %v3556 = vadd.f32 %v3554, %v3555
    %v3557 = vrot.slane %v3556, 2
    %v3558 = vadd.f32 %v3556, %v3557
    %v3559 = vrot.slane %v3558, 1
    %v3560 = vadd.f32 %v3558, %v3559
    %v3561 = vsel %vm3447, %v3545, 0.0
    %v3562 = vrot.slane %v3561, 4
    %v3563 = vadd.f32 %v3561, %v3562
    %v3564 = vrot.slane %v3563, 2
    %v3565 = vadd.f32 %v3563, %v3564
    %v3566 = vrot.slane %v3565, 1
    %v3567 = vadd.f32 %v3565, %v3566
    %v3568 = vsel %vm3447, %v3546, 0.0
    %v3569 = vrot.slane %v3568, 4
    %v3570 = vadd.f32 %v3568, %v3569
    %v3571 = vrot.slane %v3570, 2
    %v3572 = vadd.f32 %v3570, %v3571
    %v3573 = vrot.slane %v3572, 1
    %v3574 = vadd.f32 %v3572, %v3573
    %v3575 = vsel %vm3447, %v3547, 0.0
    %v3576 = vrot.slane %v3575, 4
    %v3577 = vadd.f32 %v3575, %v3576
    %v3578 = vrot.slane %v3577, 2
    %v3579 = vadd.f32 %v3577, %v3578
    %v3580 = vrot.slane %v3579, 1
    %v3581 = vadd.f32 %v3579, %v3580
    %v3582 = vsel %vm3447, %v3548, 0.0
    %v3583 = vrot.slane %v3582, 4
    %v3584 = vadd.f32 %v3582, %v3583
    %v3585 = vrot.slane %v3584, 2
    %v3586 = vadd.f32 %v3584, %v3585
    %v3587 = vrot.slane %v3586, 1
    %v3588 = vadd.f32 %v3586, %v3587
    %v3589 = vlog2.pop %v3560
    %v3590 = vmul.f32 %v3589, 0.6931472
    %v3591 = vlog2.pop %v3567
    %v3592 = vmul.f32 %v3591, 0.6931472
    %v3593 = vlog2.pop %v3574
    %v3594 = vmul.f32 %v3593, 0.6931472
    %v3595 = vlog2.pop %v3581
    %v3596 = vmul.f32 %v3595, 0.6931472
    %v3597 = vlog2.pop %v3588
    %v3598 = vmul.f32 %v3597, 0.6931472
    %v3599 = vadd.f32 %v3495, %v3590
    %v3600 = vadd.f32 %v3502, %v3592
    %v3601 = vadd.f32 %v3509, %v3594
    %v3602 = vadd.f32 %v3516, %v3596
    %v3603 = vadd.f32 %v3523, %v3598
    %v3604 = vsub.f32 %v3483, %v3599
    %v3605 = vsub.f32 %v3484, %v3600
    %v3606 = vsub.f32 %v3485, %v3601
    %v3607 = vsub.f32 %v3486, %v3602
    %v3608 = vsub.f32 %v3487, %v3603
    %v3609 = vadd.f32 %v3604, 0.6931472
    %v3610 = vadd.f32 %v3605, 0.6931472
    %v3611 = vadd.f32 %v3606, 0.6931472
    %v3612 = vadd.f32 %v3607, 0.6931472
    %v3613 = vadd.f32 %v3608, 0.6931472
    %v3614 = vld [vmem:[#allocation7] sm:$0x1]
    %v3615 = vld [vmem:[#allocation7 + $0x1] sm:$0x1]
    %v3616 = vld [vmem:[#allocation7 + $0x2] sm:$0x1]
    %v3617 = vld [vmem:[#allocation7 + $0x3] sm:$0x1]
    %v3618 = vld [vmem:[#allocation7 + $0x4] sm:$0x1]
    %v3619 = vld [vmem:[#allocation7 + $0x5] sm:$0x1]
    %v3620 = vld [vmem:[#allocation7 + $0x6] sm:$0x1]
    %v3621 = vld [vmem:[#allocation7 + $0x7] sm:$0x1]
    %v3622 = vld [vmem:[%s14] sm:$0xff]
    %v3623 = vld [vmem:[%s14 + $0x8] sm:$0xff]
    %v3624 = vld [vmem:[%s14 + $0x10] sm:$0xff]
    %v3625 = vld [vmem:[%s14 + $0x18] sm:$0xff]
    %v3626 = vld [vmem:[%s14 + $0x20] sm:$0xff]
    %v3627 = vld [vmem:[%s14 + $0x28] sm:$0xff]
    %v3628 = vld [vmem:[%s14 + $0x30] sm:$0xff]
    %v3629 = vld [vmem:[%s14 + $0x38] sm:$0xff]
    %v3630 = vld [vmem:[%s15] sm:$0xff]
    %v3631 = vld [vmem:[%s15 + $0x8] sm:$0xff]
    %v3632 = vld [vmem:[%s15 + $0x10] sm:$0xff]
    %v3633 = vld [vmem:[%s15 + $0x18] sm:$0xff]
    %v3634 = vld [vmem:[%s15 + $0x20] sm:$0xff]
    %v3635 = vld [vmem:[%s15 + $0x28] sm:$0xff]
    %v3636 = vld [vmem:[%s15 + $0x30] sm:$0xff]
    %v3637 = vld [vmem:[%s15 + $0x38] sm:$0xff]
    %v3638 = vld [vmem:[%s16] sm:$0xff]
    %v3639 = vld [vmem:[%s16 + $0x8] sm:$0xff]
    %v3640 = vld [vmem:[%s16 + $0x10] sm:$0xff]
    %v3641 = vld [vmem:[%s16 + $0x18] sm:$0xff]
    %v3642 = vld [vmem:[%s16 + $0x20] sm:$0xff]
    %v3643 = vld [vmem:[%s16 + $0x28] sm:$0xff]
    %v3644 = vld [vmem:[%s16 + $0x30] sm:$0xff]
    %v3645 = vld [vmem:[%s16 + $0x38] sm:$0xff]
    %v3646 = vld [vmem:[%s17] sm:$0x1]
    %v3647 = vld [vmem:[%s17 + $0x1] sm:$0x1]
    %v3648 = vld [vmem:[%s17 + $0x2] sm:$0x1]
    %v3649 = vld [vmem:[%s17 + $0x3] sm:$0x1]
    %v3650 = vld [vmem:[%s17 + $0x4] sm:$0x1]
    %v3651 = vld [vmem:[%s17 + $0x5] sm:$0x1]
    %v3652 = vld [vmem:[%s17 + $0x6] sm:$0x1]
    %v3653 = vld [vmem:[%s17 + $0x7] sm:$0x1]
    %v3654 = vld [vmem:[%s17 + $0x8] sm:$0x1]
    %v3655 = vld [vmem:[%s17 + $0x9] sm:$0x1]
    %v3656 = vld [vmem:[%s17 + $0xa] sm:$0x1]
    %v3657 = vld [vmem:[%s17 + $0xb] sm:$0x1]
    %v3659 = vlaneseq
    %v3660 = vshrl.u32 %v3659, 7
    %v3661 = vsub.s32 0, %v3660
    %v3662 = vrot.slane %v3646, %v3661
    %v3665 = vsel %vm190, %v658, 0
    %v3668 = vsel %vm190, %v663, 0
    %3670 = vmatprep.subr.mxu0 0.0
    %3671 = vmatpush1.msra.mxu0 0.0
    %3672 = vmatprep.subr.mxu0 0.0
    %3673 = vmatpush1.msra.mxu0 0.0
    %3674 = vmatprep.subr.mxu0 0.0
    %3675 = vmatpush1.msra.mxu0 0.0
    %3676 = vmatprep.subr.mxu0 0.0
    %3677 = vmatpush1.msra.mxu0 0.0
    %3678 = vmatprep.subr.mxu0 0.0
    %3679 = vmatpush1.msra.mxu0 0.0
    %3680 = vmatprep.subr.mxu0 0.0
    %3681 = vmatpush1.msra.mxu0 0.0
    %3682 = vmatprep.subr.mxu0 0.0
    %3683 = vmatpush1.msra.mxu0 0.0
    %3684 = vmatprep.subr.mxu0 0.0
    %3685 = vmatpush1.msra.mxu0 0.0
    %3686 = vmatprep.subr.mxu0 0.0
    %3687 = vmatpush1.msra.mxu0 0.0
    %3688 = vmatprep.subr.mxu0 0.0
    %3689 = vmatpush1.msra.mxu0 0.0
    %3690 = vmatprep.subr.mxu0 0.0
    %3691 = vmatpush1.msra.mxu0 0.0
    %3692 = vmatprep.subr.mxu0 0.0
    %3693 = vmatpush1.msra.mxu0 0.0
    %3694 = vmatprep.subr.mxu0 0.0
    %3695 = vmatpush1.msra.mxu0 %v3625
    %3696 = vmatprep.subr.mxu0 0.0
    %3697 = vmatpush1.msra.mxu0 %v3624
    %3698 = vmatprep.subr.mxu0 0.0
    %3699 = vmatpush1.msra.mxu0 %v3623
    %3700 = vmatprep.subr.mxu0 0.0
    %3701 = vmatpush1.msra.mxu0 %v3622
    %3702 = vmatprep.subr.mxu0 0.0
    %3703 = vmatpush2.msra.mxu0 0.0
    %3704 = vmatprep.subr.mxu0 0.0
    %3705 = vmatpush2.msra.mxu0 0.0
    %3706 = vmatprep.subr.mxu0 0.0
    %3707 = vmatpush2.msra.mxu0 0.0
    %3708 = vmatprep.subr.mxu0 0.0
    %3709 = vmatpush2.msra.mxu0 0.0
    %3710 = vmatprep.subr.mxu0 0.0
    %3711 = vmatpush2.msra.mxu0 0.0
    %3712 = vmatprep.subr.mxu0 0.0
    %3713 = vmatpush2.msra.mxu0 0.0
    %3714 = vmatprep.subr.mxu0 0.0
    %3715 = vmatpush2.msra.mxu0 0.0
    %3716 = vmatprep.subr.mxu0 0.0
    %3717 = vmatpush2.msra.mxu0 0.0
    %3718 = vmatprep.subr.mxu0 0.0
    %3719 = vmatpush2.msra.mxu0 0.0
    %3720 = vmatprep.subr.mxu0 0.0
    %3721 = vmatpush2.msra.mxu0 0.0
    %3722 = vmatprep.subr.mxu0 0.0
    %3723 = vmatpush2.msra.mxu0 0.0
    %3724 = vmatprep.subr.mxu0 0.0
    %3725 = vmatpush2.msra.mxu0 0.0
    %3726 = vmatprep.subr.mxu0 0.0
    %3727 = vmatpush2.msra.mxu0 0.0
    %3728 = vmatprep.subr.mxu0 0.0
    %3729 = vmatpush2.msra.mxu0 0.0
    %3730 = vmatprep.subr.mxu0 0.0
    %3731 = vmatpush2.msra.mxu0 0.0
    %3732 = vmatprep.subr.mxu0 0.0
    %3733 = vmatpush2.msra.mxu0 0.0
    %3734 = vmatprep.mubr.f32.mxu0 0.0
    %3735 = vmatmul.mubr.f32.gmra.mxu0 %v3665
    %v3736 = vpop.f32.mrf.mxu0
    %v3737 = vadd.f32 %v3662, %v3736
    %v3738 = vpop.f32.mrf.mxu0
    %3739 = vmatprep.mubr.f32.mxu0 0.0
    %3740 = vmatmul.mubr.f32.gmra.mxu0 %v3668
    %v3741 = vpop.f32.mrf.mxu0
    %v3742 = vadd.f32 %v3662, %v3741
    %v3743 = vpop.f32.mrf.mxu0
    %3744 = vdwg.mxu0
    %3745 = vmatprep.subr.mxu0 0.0
    %3746 = vmatpush1.msra.mxu0 0.0
    %3747 = vmatprep.subr.mxu0 0.0
    %3748 = vmatpush1.msra.mxu0 0.0
    %3749 = vmatprep.subr.mxu0 0.0
    %3750 = vmatpush1.msra.mxu0 0.0
    %3751 = vmatprep.subr.mxu0 0.0
    %3752 = vmatpush1.msra.mxu0 0.0
    %3753 = vmatprep.subr.mxu0 0.0
    %3754 = vmatpush1.msra.mxu0 0.0
    %3755 = vmatprep.subr.mxu0 0.0
    %3756 = vmatpush1.msra.mxu0 0.0
    %3757 = vmatprep.subr.mxu0 0.0
    %3758 = vmatpush1.msra.mxu0 0.0
    %3759 = vmatprep.subr.mxu0 0.0
    %3760 = vmatpush1.msra.mxu0 0.0
    %3761 = vmatprep.subr.mxu0 0.0
    %3762 = vmatpush1.msra.mxu0 0.0
    %3763 = vmatprep.subr.mxu0 0.0
    %3764 = vmatpush1.msra.mxu0 0.0
    %3765 = vmatprep.subr.mxu0 0.0
    %3766 = vmatpush1.msra.mxu0 0.0
    %3767 = vmatprep.subr.mxu0 0.0
    %3768 = vmatpush1.msra.mxu0 0.0
    %3769 = vmatprep.subr.mxu0 0.0
    %3770 = vmatpush1.msra.mxu0 %v3633
    %3771 = vmatprep.subr.mxu0 0.0
    %3772 = vmatpush1.msra.mxu0 %v3632
    %3773 = vmatprep.subr.mxu0 0.0
    %3774 = vmatpush1.msra.mxu0 %v3631
    %3775 = vmatprep.subr.mxu0 0.0
    %3776 = vmatpush1.msra.mxu0 %v3630
    %3777 = vmatprep.subr.mxu0 0.0
    %3778 = vmatpush2.msra.mxu0 0.0
    %3779 = vmatprep.subr.mxu0 0.0
    %3780 = vmatpush2.msra.mxu0 0.0
    %3781 = vmatprep.subr.mxu0 0.0
    %3782 = vmatpush2.msra.mxu0 0.0
    %3783 = vmatprep.subr.mxu0 0.0
    %3784 = vmatpush2.msra.mxu0 0.0
    %3785 = vmatprep.subr.mxu0 0.0
    %3786 = vmatpush2.msra.mxu0 0.0
    %3787 = vmatprep.subr.mxu0 0.0
    %3788 = vmatpush2.msra.mxu0 0.0
    %3789 = vmatprep.subr.mxu0 0.0
    %3790 = vmatpush2.msra.mxu0 0.0
    %3791 = vmatprep.subr.mxu0 0.0
    %3792 = vmatpush2.msra.mxu0 0.0
    %3793 = vmatprep.subr.mxu0 0.0
    %3794 = vmatpush2.msra.mxu0 0.0
    %3795 = vmatprep.subr.mxu0 0.0
    %3796 = vmatpush2.msra.mxu0 0.0
    %3797 = vmatprep.subr.mxu0 0.0
    %3798 = vmatpush2.msra.mxu0 0.0
    %3799 = vmatprep.subr.mxu0 0.0
    %3800 = vmatpush2.msra.mxu0 0.0
    %3801 = vmatprep.subr.mxu0 0.0
    %3802 = vmatpush2.msra.mxu0 0.0
    %3803 = vmatprep.subr.mxu0 0.0
    %3804 = vmatpush2.msra.mxu0 0.0
    %3805 = vmatprep.subr.mxu0 0.0
    %3806 = vmatpush2.msra.mxu0 0.0
    %3807 = vmatprep.subr.mxu0 0.0
    %3808 = vmatpush2.msra.mxu0 0.0
    %3809 = vmatprep.mubr.f32.mxu0 0.0
    %3810 = vmatmul.mubr.f32.gmra.mxu0 %v3665
    %v3811 = vpop.f32.mrf.mxu0
    %v3812 = vadd.f32 0.0, %v3811
    %v3813 = vpop.f32.mrf.mxu0
    %3814 = vmatprep.mubr.f32.mxu0 0.0
    %3815 = vmatmul.mubr.f32.gmra.mxu0 %v3668
    %v3816 = vpop.f32.mrf.mxu0
    %v3817 = vadd.f32 0.0, %v3816
    %v3818 = vpop.f32.mrf.mxu0
    %3819 = vdwg.mxu0
    %v3821 = vlaneseq
    %v3822 = vshrl.u32 %v3821, 7
    %v3823 = vsub.s32 0, %v3822
    %v3824 = vrot.slane %v3647, %v3823
    %v3826 = vadd.f32 %v3812, %v3824
    %v3827 = vadd.f32 %v3817, %v3824
    %v3829 = vlaneseq
    %v3830 = vshrl.u32 %v3829, 7
    %v3831 = vsub.s32 0, %v3830
    %v3832 = vrot.slane %v3648, %v3831
    %3833 = vrot.lane.b32.xlu0 %v3832, 32
    %v3834 = vpop.permute.xlu0 %3833
    %v3836 = vadd.f32 %v3812, %v3834
    %v3837 = vadd.f32 %v3817, %v3834
    %v3846 = vlaneseq
    %v3847 = vshrl.u32 %v3846, 7
    %v3848 = vsub.s32 0, %v3847
    %v3849 = vrot.slane %v3614, %v3848
    %v3850 = vlaneseq
    %v3851 = vshrl.u32 %v3850, 7
    %v3852 = vsub.s32 0, %v3851
    %v3853 = vrot.slane %v3615, %v3852
    %v3854 = vlaneseq
    %v3855 = vshrl.u32 %v3854, 7
    %v3856 = vsub.s32 0, %v3855
    %v3857 = vrot.slane %v3616, %v3856
    %v3858 = vlaneseq
    %v3859 = vshrl.u32 %v3858, 7
    %v3860 = vsub.s32 0, %v3859
    %v3861 = vrot.slane %v3617, %v3860
    %v3862 = vlaneseq
    %v3863 = vshrl.u32 %v3862, 7
    %v3864 = vsub.s32 0, %v3863
    %v3865 = vrot.slane %v3618, %v3864
    %v3866 = vlaneseq
    %v3867 = vshrl.u32 %v3866, 7
    %v3868 = vsub.s32 0, %v3867
    %v3869 = vrot.slane %v3619, %v3868
    %v3870 = vlaneseq
    %v3871 = vshrl.u32 %v3870, 7
    %v3872 = vsub.s32 0, %v3871
    %v3873 = vrot.slane %v3620, %v3872
    %v3874 = vlaneseq
    %v3875 = vshrl.u32 %v3874, 7
    %v3876 = vsub.s32 0, %v3875
    %v3877 = vrot.slane %v3621, %v3876
    %v3886 = vmul.f32 %v3737, %v3849
    %v3887 = vmul.f32 %v3737, %v3853
    %v3888 = vmul.f32 %v3737, %v3857
    %v3889 = vmul.f32 %v3737, %v3861
    %v3890 = vmul.f32 %v3737, %v3865
    %v3891 = vmul.f32 %v3737, %v3869
    %v3892 = vmul.f32 %v3737, %v3873
    %v3893 = vmul.f32 %v3737, %v3877
    %v3894 = vmul.f32 %v3742, %v3849
    %v3895 = vmul.f32 %v3742, %v3853
    %v3896 = vmul.f32 %v3742, %v3857
    %v3897 = vmul.f32 %v3742, %v3861
    %v3898 = vmul.f32 %v3742, %v3865
    %v3899 = vmul.f32 %v3742, %v3869
    %v3900 = vmul.f32 %v3742, %v3873
    %v3901 = vmul.f32 %v3742, %v3877
    %v3903 = vsel %vm190, %v3886, 0
    %v3906 = vsel %vm190, %v3887, 0
    %v3909 = vsel %vm190, %v3888, 0
    %v3912 = vsel %vm190, %v3889, 0
    %v3915 = vsel %vm190, %v3890, 0
    %v3918 = vsel %vm190, %v3891, 0
    %v3921 = vsel %vm190, %v3892, 0
    %v3924 = vsel %vm190, %v3893, 0
    %v3927 = vsel %vm190, %v3826, 0
    %3929 = vmatprep.subr.mxu0 0.0
    %3930 = vmatpush1.xpose.msra.mxu0 0.0
    %3931 = vmatprep.subr.mxu0 0.0
    %3932 = vmatpush1.xpose.msra.mxu0 0.0
    %3933 = vmatprep.subr.mxu0 0.0
    %3934 = vmatpush1.xpose.msra.mxu0 0.0
    %3935 = vmatprep.subr.mxu0 0.0
    %3936 = vmatpush1.xpose.msra.mxu0 0.0
    %3937 = vmatprep.subr.mxu0 0.0
    %3938 = vmatpush1.xpose.msra.mxu0 0.0
    %3939 = vmatprep.subr.mxu0 0.0
    %3940 = vmatpush1.xpose.msra.mxu0 0.0
    %3941 = vmatprep.subr.mxu0 0.0
    %3942 = vmatpush1.xpose.msra.mxu0 0.0
    %3943 = vmatprep.subr.mxu0 0.0
    %3944 = vmatpush1.xpose.msra.mxu0 0.0
    %3945 = vmatprep.subr.mxu0 0.0
    %3946 = vmatpush1.xpose.msra.mxu0 0.0
    %3947 = vmatprep.subr.mxu0 0.0
    %3948 = vmatpush1.xpose.msra.mxu0 0.0
    %3949 = vmatprep.subr.mxu0 0.0
    %3950 = vmatpush1.xpose.msra.mxu0 0.0
    %3951 = vmatprep.subr.mxu0 0.0
    %3952 = vmatpush1.xpose.msra.mxu0 0.0
    %3953 = vmatprep.subr.mxu0 0.0
    %3954 = vmatpush1.xpose.msra.mxu0 0.0
    %3955 = vmatprep.subr.mxu0 0.0
    %3956 = vmatpush1.xpose.msra.mxu0 0.0
    %3957 = vmatprep.subr.mxu0 0.0
    %3958 = vmatpush1.xpose.msra.mxu0 0.0
    %3959 = vmatprep.subr.mxu0 0.0
    %3960 = vmatpush1.xpose.msra.mxu0 %v3927
    %3961 = vmatprep.subr.mxu0 0.0
    %3962 = vmatpush2.xpose.msra.mxu0 0.0
    %3963 = vmatprep.subr.mxu0 0.0
    %3964 = vmatpush2.xpose.msra.mxu0 0.0
    %3965 = vmatprep.subr.mxu0 0.0
    %3966 = vmatpush2.xpose.msra.mxu0 0.0
    %3967 = vmatprep.subr.mxu0 0.0
    %3968 = vmatpush2.xpose.msra.mxu0 0.0
    %3969 = vmatprep.subr.mxu0 0.0
    %3970 = vmatpush2.xpose.msra.mxu0 0.0
    %3971 = vmatprep.subr.mxu0 0.0
    %3972 = vmatpush2.xpose.msra.mxu0 0.0
    %3973 = vmatprep.subr.mxu0 0.0
    %3974 = vmatpush2.xpose.msra.mxu0 0.0
    %3975 = vmatprep.subr.mxu0 0.0
    %3976 = vmatpush2.xpose.msra.mxu0 0.0
    %3977 = vmatprep.subr.mxu0 0.0
    %3978 = vmatpush2.xpose.msra.mxu0 0.0
    %3979 = vmatprep.subr.mxu0 0.0
    %3980 = vmatpush2.xpose.msra.mxu0 0.0
    %3981 = vmatprep.subr.mxu0 0.0
    %3982 = vmatpush2.xpose.msra.mxu0 0.0
    %3983 = vmatprep.subr.mxu0 0.0
    %3984 = vmatpush2.xpose.msra.mxu0 0.0
    %3985 = vmatprep.subr.mxu0 0.0
    %3986 = vmatpush2.xpose.msra.mxu0 0.0
    %3987 = vmatprep.subr.mxu0 0.0
    %3988 = vmatpush2.xpose.msra.mxu0 0.0
    %3989 = vmatprep.subr.mxu0 0.0
    %3990 = vmatpush2.xpose.msra.mxu0 0.0
    %3991 = vmatprep.subr.mxu0 0.0
    %3992 = vmatpush2.xpose.msra.mxu0 0.0
    %3993 = vmatprep.mubr.f32.mxu0 0.0
    %3994 = vmatmul.mubr.f32.gmra.mxu0 %v3903
    %v3995 = vpop.f32.mrf.mxu0
    %v3996 = vadd.f32 0.0, %v3995
    %v3997 = vpop.f32.mrf.mxu0
    %3998 = vmatprep.mubr.f32.mxu0 0.0
    %3999 = vmatmul.mubr.f32.gmra.mxu0 %v3906
    %v4000 = vpop.f32.mrf.mxu0
    %v4001 = vadd.f32 0.0, %v4000
    %v4002 = vpop.f32.mrf.mxu0
    %4003 = vmatprep.mubr.f32.mxu0 0.0
    %4004 = vmatmul.mubr.f32.gmra.mxu0 %v3909
    %v4005 = vpop.f32.mrf.mxu0
    %v4006 = vadd.f32 0.0, %v4005
    %v4007 = vpop.f32.mrf.mxu0
    %4008 = vmatprep.mubr.f32.mxu0 0.0
    %4009 = vmatmul.mubr.f32.gmra.mxu0 %v3912
    %v4010 = vpop.f32.mrf.mxu0
    %v4011 = vadd.f32 0.0, %v4010
    %v4012 = vpop.f32.mrf.mxu0
    %4013 = vmatprep.mubr.f32.mxu0 0.0
    %4014 = vmatmul.mubr.f32.gmra.mxu0 %v3915
    %v4015 = vpop.f32.mrf.mxu0
    %v4016 = vadd.f32 0.0, %v4015
    %v4017 = vpop.f32.mrf.mxu0
    %4018 = vmatprep.mubr.f32.mxu0 0.0
    %4019 = vmatmul.mubr.f32.gmra.mxu0 %v3918
    %v4020 = vpop.f32.mrf.mxu0
    %v4021 = vadd.f32 0.0, %v4020
    %v4022 = vpop.f32.mrf.mxu0
    %4023 = vmatprep.mubr.f32.mxu0 0.0
    %4024 = vmatmul.mubr.f32.gmra.mxu0 %v3921
    %v4025 = vpop.f32.mrf.mxu0
    %v4026 = vadd.f32 0.0, %v4025
    %v4027 = vpop.f32.mrf.mxu0
    %4028 = vmatprep.mubr.f32.mxu0 0.0
    %4029 = vmatmul.mubr.f32.gmra.mxu0 %v3924
    %v4030 = vpop.f32.mrf.mxu0
    %v4031 = vadd.f32 0.0, %v4030
    %v4032 = vpop.f32.mrf.mxu0
    %4033 = vdwg.mxu0
    %v4035 = vsel %vm190, %v3894, 0
    %v4038 = vsel %vm190, %v3895, 0
    %v4041 = vsel %vm190, %v3896, 0
    %v4044 = vsel %vm190, %v3897, 0
    %v4047 = vsel %vm190, %v3898, 0
    %v4050 = vsel %vm190, %v3899, 0
    %v4053 = vsel %vm190, %v3900, 0
    %v4056 = vsel %vm190, %v3901, 0
    %v4059 = vsel %vm190, %v3827, 0
    %4061 = vmatprep.subr.mxu0 0.0
    %4062 = vmatpush1.xpose.msra.mxu0 0.0
    %4063 = vmatprep.subr.mxu0 0.0
    %4064 = vmatpush1.xpose.msra.mxu0 0.0
    %4065 = vmatprep.subr.mxu0 0.0
    %4066 = vmatpush1.xpose.msra.mxu0 0.0
    %4067 = vmatprep.subr.mxu0 0.0
    %4068 = vmatpush1.xpose.msra.mxu0 0.0
    %4069 = vmatprep.subr.mxu0 0.0
    %4070 = vmatpush1.xpose.msra.mxu0 0.0
    %4071 = vmatprep.subr.mxu0 0.0
    %4072 = vmatpush1.xpose.msra.mxu0 0.0
    %4073 = vmatprep.subr.mxu0 0.0
    %4074 = vmatpush1.xpose.msra.mxu0 0.0
    %4075 = vmatprep.subr.mxu0 0.0
    %4076 = vmatpush1.xpose.msra.mxu0 0.0
    %4077 = vmatprep.subr.mxu0 0.0
    %4078 = vmatpush1.xpose.msra.mxu0 0.0
    %4079 = vmatprep.subr.mxu0 0.0
    %4080 = vmatpush1.xpose.msra.mxu0 0.0
    %4081 = vmatprep.subr.mxu0 0.0
    %4082 = vmatpush1.xpose.msra.mxu0 0.0
    %4083 = vmatprep.subr.mxu0 0.0
    %4084 = vmatpush1.xpose.msra.mxu0 0.0
    %4085 = vmatprep.subr.mxu0 0.0
    %4086 = vmatpush1.xpose.msra.mxu0 0.0
    %4087 = vmatprep.subr.mxu0 0.0
    %4088 = vmatpush1.xpose.msra.mxu0 0.0
    %4089 = vmatprep.subr.mxu0 0.0
    %4090 = vmatpush1.xpose.msra.mxu0 0.0
    %4091 = vmatprep.subr.mxu0 0.0
    %4092 = vmatpush1.xpose.msra.mxu0 %v4059
    %4093 = vmatprep.subr.mxu0 0.0
    %4094 = vmatpush2.xpose.msra.mxu0 0.0
    %4095 = vmatprep.subr.mxu0 0.0
    %4096 = vmatpush2.xpose.msra.mxu0 0.0
    %4097 = vmatprep.subr.mxu0 0.0
    %4098 = vmatpush2.xpose.msra.mxu0 0.0
    %4099 = vmatprep.subr.mxu0 0.0
    %4100 = vmatpush2.xpose.msra.mxu0 0.0
    %4101 = vmatprep.subr.mxu0 0.0
    %4102 = vmatpush2.xpose.msra.mxu0 0.0
    %4103 = vmatprep.subr.mxu0 0.0
    %4104 = vmatpush2.xpose.msra.mxu0 0.0
    %4105 = vmatprep.subr.mxu0 0.0
    %4106 = vmatpush2.xpose.msra.mxu0 0.0
    %4107 = vmatprep.subr.mxu0 0.0
    %4108 = vmatpush2.xpose.msra.mxu0 0.0
    %4109 = vmatprep.subr.mxu0 0.0
    %4110 = vmatpush2.xpose.msra.mxu0 0.0
    %4111 = vmatprep.subr.mxu0 0.0
    %4112 = vmatpush2.xpose.msra.mxu0 0.0
    %4113 = vmatprep.subr.mxu0 0.0
    %4114 = vmatpush2.xpose.msra.mxu0 0.0
    %4115 = vmatprep.subr.mxu0 0.0
    %4116 = vmatpush2.xpose.msra.mxu0 0.0
    %4117 = vmatprep.subr.mxu0 0.0
    %4118 = vmatpush2.xpose.msra.mxu0 0.0
    %4119 = vmatprep.subr.mxu0 0.0
    %4120 = vmatpush2.xpose.msra.mxu0 0.0
    %4121 = vmatprep.subr.mxu0 0.0
    %4122 = vmatpush2.xpose.msra.mxu0 0.0
    %4123 = vmatprep.subr.mxu0 0.0
    %4124 = vmatpush2.xpose.msra.mxu0 0.0
    %4125 = vmatprep.mubr.f32.mxu0 0.0
    %4126 = vmatmul.mubr.f32.gmra.mxu0 %v4035
    %v4127 = vpop.f32.mrf.mxu0
    %v4128 = vadd.f32 0.0, %v4127
    %v4129 = vpop.f32.mrf.mxu0
    %4130 = vmatprep.mubr.f32.mxu0 0.0
    %4131 = vmatmul.mubr.f32.gmra.mxu0 %v4038
    %v4132 = vpop.f32.mrf.mxu0
    %v4133 = vadd.f32 0.0, %v4132
    %v4134 = vpop.f32.mrf.mxu0
    %4135 = vmatprep.mubr.f32.mxu0 0.0
    %4136 = vmatmul.mubr.f32.gmra.mxu0 %v4041
    %v4137 = vpop.f32.mrf.mxu0
    %v4138 = vadd.f32 0.0, %v4137
    %v4139 = vpop.f32.mrf.mxu0
    %4140 = vmatprep.mubr.f32.mxu0 0.0
    %4141 = vmatmul.mubr.f32.gmra.mxu0 %v4044
    %v4142 = vpop.f32.mrf.mxu0
    %v4143 = vadd.f32 0.0, %v4142
    %v4144 = vpop.f32.mrf.mxu0
    %4145 = vmatprep.mubr.f32.mxu0 0.0
    %4146 = vmatmul.mubr.f32.gmra.mxu0 %v4047
    %v4147 = vpop.f32.mrf.mxu0
    %v4148 = vadd.f32 0.0, %v4147
    %v4149 = vpop.f32.mrf.mxu0
    %4150 = vmatprep.mubr.f32.mxu0 0.0
    %4151 = vmatmul.mubr.f32.gmra.mxu0 %v4050
    %v4152 = vpop.f32.mrf.mxu0
    %v4153 = vadd.f32 0.0, %v4152
    %v4154 = vpop.f32.mrf.mxu0
    %4155 = vmatprep.mubr.f32.mxu0 0.0
    %4156 = vmatmul.mubr.f32.gmra.mxu0 %v4053
    %v4157 = vpop.f32.mrf.mxu0
    %v4158 = vadd.f32 0.0, %v4157
    %v4159 = vpop.f32.mrf.mxu0
    %4160 = vmatprep.mubr.f32.mxu0 0.0
    %4161 = vmatmul.mubr.f32.gmra.mxu0 %v4056
    %v4162 = vpop.f32.mrf.mxu0
    %v4163 = vadd.f32 0.0, %v4162
    %v4164 = vpop.f32.mrf.mxu0
    %4165 = vdwg.mxu0
    %v4166 = vmul.f32 %v3996, 0.5
    %v4167 = vmul.f32 %v4001, 0.5
    %v4168 = vmul.f32 %v4006, 0.5
    %v4169 = vmul.f32 %v4011, 0.5
    %v4170 = vmul.f32 %v4016, 0.5
    %v4171 = vmul.f32 %v4021, 0.5
    %v4172 = vmul.f32 %v4026, 0.5
    %v4173 = vmul.f32 %v4031, 0.5
    %v4174 = vmul.f32 %v4128, 0.5
    %v4175 = vmul.f32 %v4133, 0.5
    %v4176 = vmul.f32 %v4138, 0.5
    %v4177 = vmul.f32 %v4143, 0.5
    %v4178 = vmul.f32 %v4148, 0.5
    %v4179 = vmul.f32 %v4153, 0.5
    %v4180 = vmul.f32 %v4158, 0.5
    %v4181 = vmul.f32 %v4163, 0.5
    %vm4182 = vcmask 64512
    %v4183 = vsel %vm4182, %v4166, -inf
    %4184 = vmax.xlane.f32.xlu0 %v4183
    %v4185 = vpop.xlane.xlu0 %4184
    %v4186 = vsel %vm4182, %v4167, -inf
    %4187 = vmax.xlane.f32.xlu0 %v4186
    %v4188 = vpop.xlane.xlu0 %4187
    %v4189 = vsel %vm4182, %v4168, -inf
    %4190 = vmax.xlane.f32.xlu0 %v4189
    %v4191 = vpop.xlane.xlu0 %4190
    %v4192 = vsel %vm4182, %v4169, -inf
    %4193 = vmax.xlane.f32.xlu0 %v4192
    %v4194 = vpop.xlane.xlu0 %4193
    %v4195 = vsel %vm4182, %v4170, -inf
    %4196 = vmax.xlane.f32.xlu0 %v4195
    %v4197 = vpop.xlane.xlu0 %4196
    %v4198 = vsel %vm4182, %v4171, -inf
    %4199 = vmax.xlane.f32.xlu0 %v4198
    %v4200 = vpop.xlane.xlu0 %4199
    %v4201 = vsel %vm4182, %v4172, -inf
    %4202 = vmax.xlane.f32.xlu0 %v4201
    %v4203 = vpop.xlane.xlu0 %4202
    %v4204 = vsel %vm4182, %v4173, -inf
    %4205 = vmax.xlane.f32.xlu0 %v4204
    %v4206 = vpop.xlane.xlu0 %4205
    %v4207 = vsel %vm4182, %v4174, -inf
    %4208 = vmax.xlane.f32.xlu0 %v4207
    %v4209 = vpop.xlane.xlu0 %4208
    %v4210 = vsel %vm4182, %v4175, -inf
    %4211 = vmax.xlane.f32.xlu0 %v4210
    %v4212 = vpop.xlane.xlu0 %4211
    %v4213 = vsel %vm4182, %v4176, -inf
    %4214 = vmax.xlane.f32.xlu0 %v4213
    %v4215 = vpop.xlane.xlu0 %4214
    %v4216 = vsel %vm4182, %v4177, -inf
    %4217 = vmax.xlane.f32.xlu0 %v4216
    %v4218 = vpop.xlane.xlu0 %4217
    %v4219 = vsel %vm4182, %v4178, -inf
    %4220 = vmax.xlane.f32.xlu0 %v4219
    %v4221 = vpop.xlane.xlu0 %4220
    %v4222 = vsel %vm4182, %v4179, -inf
    %4223 = vmax.xlane.f32.xlu0 %v4222
    %v4224 = vpop.xlane.xlu0 %4223
    %v4225 = vsel %vm4182, %v4180, -inf
    %4226 = vmax.xlane.f32.xlu0 %v4225
    %v4227 = vpop.xlane.xlu0 %4226
    %v4228 = vsel %vm4182, %v4181, -inf
    %4229 = vmax.xlane.f32.xlu0 %v4228
    %v4230 = vpop.xlane.xlu0 %4229
    %v4231 = vsub.f32 %v4166, %v4185
    %v4232 = vsub.f32 %v4167, %v4188
    %v4233 = vsub.f32 %v4168, %v4191
    %v4234 = vsub.f32 %v4169, %v4194
    %v4235 = vsub.f32 %v4170, %v4197
    %v4236 = vsub.f32 %v4171, %v4200
    %v4237 = vsub.f32 %v4172, %v4203
    %v4238 = vsub.f32 %v4173, %v4206
    %v4239 = vsub.f32 %v4174, %v4209
    %v4240 = vsub.f32 %v4175, %v4212
    %v4241 = vsub.f32 %v4176, %v4215
    %v4242 = vsub.f32 %v4177, %v4218
    %v4243 = vsub.f32 %v4178, %v4221
    %v4244 = vsub.f32 %v4179, %v4224
    %v4245 = vsub.f32 %v4180, %v4227
    %v4246 = vsub.f32 %v4181, %v4230
    %v4247 = vmul.f32 %v4231, 1.442695
    %v4248 = vpow.pop %v4247
    %v4249 = vmul.f32 %v4232, 1.442695
    %v4250 = vpow.pop %v4249
    %v4251 = vmul.f32 %v4233, 1.442695
    %v4252 = vpow.pop %v4251
    %v4253 = vmul.f32 %v4234, 1.442695
    %v4254 = vpow.pop %v4253
    %v4255 = vmul.f32 %v4235, 1.442695
    %v4256 = vpow.pop %v4255
    %v4257 = vmul.f32 %v4236, 1.442695
    %v4258 = vpow.pop %v4257
    %v4259 = vmul.f32 %v4237, 1.442695
    %v4260 = vpow.pop %v4259
    %v4261 = vmul.f32 %v4238, 1.442695
    %v4262 = vpow.pop %v4261
    %v4263 = vmul.f32 %v4239, 1.442695
    %v4264 = vpow.pop %v4263
    %v4265 = vmul.f32 %v4240, 1.442695
    %v4266 = vpow.pop %v4265
    %v4267 = vmul.f32 %v4241, 1.442695
    %v4268 = vpow.pop %v4267
    %v4269 = vmul.f32 %v4242, 1.442695
    %v4270 = vpow.pop %v4269
    %v4271 = vmul.f32 %v4243, 1.442695
    %v4272 = vpow.pop %v4271
    %v4273 = vmul.f32 %v4244, 1.442695
    %v4274 = vpow.pop %v4273
    %v4275 = vmul.f32 %v4245, 1.442695
    %v4276 = vpow.pop %v4275
    %v4277 = vmul.f32 %v4246, 1.442695
    %v4278 = vpow.pop %v4277
    %v4279 = vsel %vm4182, %v4248, 0.0
    %4280 = vadd.xlane.f32.xlu0 %v4279
    %v4281 = vpop.xlane.xlu0 %4280
    %v4282 = vsel %vm4182, %v4250, 0.0
    %4283 = vadd.xlane.f32.xlu0 %v4282
    %v4284 = vpop.xlane.xlu0 %4283
    %v4285 = vsel %vm4182, %v4252, 0.0
    %4286 = vadd.xlane.f32.xlu0 %v4285
    %v4287 = vpop.xlane.xlu0 %4286
    %v4288 = vsel %vm4182, %v4254, 0.0
    %4289 = vadd.xlane.f32.xlu0 %v4288
    %v4290 = vpop.xlane.xlu0 %4289
    %v4291 = vsel %vm4182, %v4256, 0.0
    %4292 = vadd.xlane.f32.xlu0 %v4291
    %v4293 = vpop.xlane.xlu0 %4292
    %v4294 = vsel %vm4182, %v4258, 0.0
    %4295 = vadd.xlane.f32.xlu0 %v4294
    %v4296 = vpop.xlane.xlu0 %4295
    %v4297 = vsel %vm4182, %v4260, 0.0
    %4298 = vadd.xlane.f32.xlu0 %v4297
    %v4299 = vpop.xlane.xlu0 %4298
    %v4300 = vsel %vm4182, %v4262, 0.0
    %4301 = vadd.xlane.f32.xlu0 %v4300
    %v4302 = vpop.xlane.xlu0 %4301
    %v4303 = vsel %vm4182, %v4264, 0.0
    %4304 = vadd.xlane.f32.xlu0 %v4303
    %v4305 = vpop.xlane.xlu0 %4304
    %v4306 = vsel %vm4182, %v4266, 0.0
    %4307 = vadd.xlane.f32.xlu0 %v4306
    %v4308 = vpop.xlane.xlu0 %4307
    %v4309 = vsel %vm4182, %v4268, 0.0
    %4310 = vadd.xlane.f32.xlu0 %v4309
    %v4311 = vpop.xlane.xlu0 %4310
    %v4312 = vsel %vm4182, %v4270, 0.0
    %4313 = vadd.xlane.f32.xlu0 %v4312
    %v4314 = vpop.xlane.xlu0 %4313
    %v4315 = vsel %vm4182, %v4272, 0.0
    %4316 = vadd.xlane.f32.xlu0 %v4315
    %v4317 = vpop.xlane.xlu0 %4316
    %v4318 = vsel %vm4182, %v4274, 0.0
    %4319 = vadd.xlane.f32.xlu0 %v4318
    %v4320 = vpop.xlane.xlu0 %4319
    %v4321 = vsel %vm4182, %v4276, 0.0
    %4322 = vadd.xlane.f32.xlu0 %v4321
    %v4323 = vpop.xlane.xlu0 %4322
    %v4324 = vsel %vm4182, %v4278, 0.0
    %4325 = vadd.xlane.f32.xlu0 %v4324
    %v4326 = vpop.xlane.xlu0 %4325
    %v4327 = vrcp.pop %v4281
    %v4328 = vrcp.pop %v4284
    %v4329 = vrcp.pop %v4287
    %v4330 = vrcp.pop %v4290
    %v4331 = vrcp.pop %v4293
    %v4332 = vrcp.pop %v4296
    %v4333 = vrcp.pop %v4299
    %v4334 = vrcp.pop %v4302
    %v4335 = vrcp.pop %v4305
    %v4336 = vrcp.pop %v4308
    %v4337 = vrcp.pop %v4311
    %v4338 = vrcp.pop %v4314
    %v4339 = vrcp.pop %v4317
    %v4340 = vrcp.pop %v4320
    %v4341 = vrcp.pop %v4323
    %v4342 = vrcp.pop %v4326
    %v4343 = vmul.f32 %v4248, %v4327
    %v4344 = vmul.f32 %v4250, %v4328
    %v4345 = vmul.f32 %v4252, %v4329
    %v4346 = vmul.f32 %v4254, %v4330
    %v4347 = vmul.f32 %v4256, %v4331
    %v4348 = vmul.f32 %v4258, %v4332
    %v4349 = vmul.f32 %v4260, %v4333
    %v4350 = vmul.f32 %v4262, %v4334
    %v4351 = vmul.f32 %v4264, %v4335
    %v4352 = vmul.f32 %v4266, %v4336
    %v4353 = vmul.f32 %v4268, %v4337
    %v4354 = vmul.f32 %v4270, %v4338
    %v4355 = vmul.f32 %v4272, %v4339
    %v4356 = vmul.f32 %v4274, %v4340
    %v4357 = vmul.f32 %v4276, %v4341
    %v4358 = vmul.f32 %v4278, %v4342
    %4360 = vrot.lane.b32.xlu0 %v3836, 96
    %v4361 = vpop.permute.xlu0 %4360
    %v4364 = vsel %vm4182, %v4343, 0
    %v4367 = vsel %vm4182, %v4344, 0
    %v4370 = vsel %vm4182, %v4345, 0
    %v4373 = vsel %vm4182, %v4346, 0
    %v4376 = vsel %vm4182, %v4347, 0
    %v4379 = vsel %vm4182, %v4348, 0
    %v4382 = vsel %vm4182, %v4349, 0
    %v4385 = vsel %vm4182, %v4350, 0
    %4387 = vmatprep.subr.mxu0 0.0
    %4388 = vmatpush1.msra.mxu0 0.0
    %4389 = vmatprep.subr.mxu0 0.0
    %4390 = vmatpush1.msra.mxu0 0.0
    %4391 = vmatprep.subr.mxu0 0.0
    %4392 = vmatpush1.msra.mxu0 0.0
    %4393 = vmatprep.subr.mxu0 0.0
    %4394 = vmatpush1.msra.mxu0 0.0
    %4395 = vmatprep.subr.mxu0 0.0
    %4396 = vmatpush1.msra.mxu0 0.0
    %4397 = vmatprep.subr.mxu0 0.0
    %4398 = vmatpush1.msra.mxu0 0.0
    %4399 = vmatprep.subr.mxu0 0.0
    %4400 = vmatpush1.msra.mxu0 0.0
    %4401 = vmatprep.subr.mxu0 0.0
    %4402 = vmatpush1.msra.mxu0 0.0
    %4403 = vmatprep.subr.mxu0 0.0
    %4404 = vmatpush1.msra.mxu0 0.0
    %4405 = vmatprep.subr.mxu0 0.0
    %4406 = vmatpush1.msra.mxu0 0.0
    %4407 = vmatprep.subr.mxu0 0.0
    %4408 = vmatpush1.msra.mxu0 0.0
    %4409 = vmatprep.subr.mxu0 0.0
    %4410 = vmatpush1.msra.mxu0 0.0
    %4411 = vmatprep.subr.mxu0 0.0
    %4412 = vmatpush1.msra.mxu0 0.0
    %4413 = vmatprep.subr.mxu0 0.0
    %4414 = vmatpush1.msra.mxu0 0.0
    %4415 = vmatprep.subr.mxu0 0.0
    %4416 = vmatpush1.msra.mxu0 0.0
    %4417 = vmatprep.subr.mxu0 0.0
    %4418 = vmatpush1.msra.mxu0 %v4361
    %4419 = vmatprep.subr.mxu0 0.0
    %4420 = vmatpush2.msra.mxu0 0.0
    %4421 = vmatprep.subr.mxu0 0.0
    %4422 = vmatpush2.msra.mxu0 0.0
    %4423 = vmatprep.subr.mxu0 0.0
    %4424 = vmatpush2.msra.mxu0 0.0
    %4425 = vmatprep.subr.mxu0 0.0
    %4426 = vmatpush2.msra.mxu0 0.0
    %4427 = vmatprep.subr.mxu0 0.0
    %4428 = vmatpush2.msra.mxu0 0.0
    %4429 = vmatprep.subr.mxu0 0.0
    %4430 = vmatpush2.msra.mxu0 0.0
    %4431 = vmatprep.subr.mxu0 0.0
    %4432 = vmatpush2.msra.mxu0 0.0
    %4433 = vmatprep.subr.mxu0 0.0
    %4434 = vmatpush2.msra.mxu0 0.0
    %4435 = vmatprep.subr.mxu0 0.0
    %4436 = vmatpush2.msra.mxu0 0.0
    %4437 = vmatprep.subr.mxu0 0.0
    %4438 = vmatpush2.msra.mxu0 0.0
    %4439 = vmatprep.subr.mxu0 0.0
    %4440 = vmatpush2.msra.mxu0 0.0
    %4441 = vmatprep.subr.mxu0 0.0
    %4442 = vmatpush2.msra.mxu0 0.0
    %4443 = vmatprep.subr.mxu0 0.0
    %4444 = vmatpush2.msra.mxu0 0.0
    %4445 = vmatprep.subr.mxu0 0.0
    %4446 = vmatpush2.msra.mxu0 0.0
    %4447 = vmatprep.subr.mxu0 0.0
    %4448 = vmatpush2.msra.mxu0 0.0
    %4449 = vmatprep.subr.mxu0 0.0
    %4450 = vmatpush2.msra.mxu0 0.0
    %4451 = vmatprep.mubr.f32.mxu0 0.0
    %4452 = vmatmul.mubr.f32.gmra.mxu0 %v4364
    %v4453 = vpop.f32.mrf.mxu0
    %v4454 = vadd.f32 0.0, %v4453
    %v4455 = vpop.f32.mrf.mxu0
    %4456 = vmatprep.mubr.f32.mxu0 0.0
    %4457 = vmatmul.mubr.f32.gmra.mxu0 %v4367
    %v4458 = vpop.f32.mrf.mxu0
    %v4459 = vadd.f32 0.0, %v4458
    %v4460 = vpop.f32.mrf.mxu0
    %4461 = vmatprep.mubr.f32.mxu0 0.0
    %4462 = vmatmul.mubr.f32.gmra.mxu0 %v4370
    %v4463 = vpop.f32.mrf.mxu0
    %v4464 = vadd.f32 0.0, %v4463
    %v4465 = vpop.f32.mrf.mxu0
    %4466 = vmatprep.mubr.f32.mxu0 0.0
    %4467 = vmatmul.mubr.f32.gmra.mxu0 %v4373
    %v4468 = vpop.f32.mrf.mxu0
    %v4469 = vadd.f32 0.0, %v4468
    %v4470 = vpop.f32.mrf.mxu0
    %4471 = vmatprep.mubr.f32.mxu0 0.0
    %4472 = vmatmul.mubr.f32.gmra.mxu0 %v4376
    %v4473 = vpop.f32.mrf.mxu0
    %v4474 = vadd.f32 0.0, %v4473
    %v4475 = vpop.f32.mrf.mxu0
    %4476 = vmatprep.mubr.f32.mxu0 0.0
    %4477 = vmatmul.mubr.f32.gmra.mxu0 %v4379
    %v4478 = vpop.f32.mrf.mxu0
    %v4479 = vadd.f32 0.0, %v4478
    %v4480 = vpop.f32.mrf.mxu0
    %4481 = vmatprep.mubr.f32.mxu0 0.0
    %4482 = vmatmul.mubr.f32.gmra.mxu0 %v4382
    %v4483 = vpop.f32.mrf.mxu0
    %v4484 = vadd.f32 0.0, %v4483
    %v4485 = vpop.f32.mrf.mxu0
    %4486 = vmatprep.mubr.f32.mxu0 0.0
    %4487 = vmatmul.mubr.f32.gmra.mxu0 %v4385
    %v4488 = vpop.f32.mrf.mxu0
    %v4489 = vadd.f32 0.0, %v4488
    %v4490 = vpop.f32.mrf.mxu0
    %4491 = vdwg.mxu0
    %4493 = vrot.lane.b32.xlu0 %v3837, 96
    %v4494 = vpop.permute.xlu0 %4493
    %v4497 = vsel %vm4182, %v4351, 0
    %v4500 = vsel %vm4182, %v4352, 0
    %v4503 = vsel %vm4182, %v4353, 0
    %v4506 = vsel %vm4182, %v4354, 0
    %v4509 = vsel %vm4182, %v4355, 0
    %v4512 = vsel %vm4182, %v4356, 0
    %v4515 = vsel %vm4182, %v4357, 0
    %v4518 = vsel %vm4182, %v4358, 0
    %4520 = vmatprep.subr.mxu0 0.0
    %4521 = vmatpush1.msra.mxu0 0.0
    %4522 = vmatprep.subr.mxu0 0.0
    %4523 = vmatpush1.msra.mxu0 0.0
    %4524 = vmatprep.subr.mxu0 0.0
    %4525 = vmatpush1.msra.mxu0 0.0
    %4526 = vmatprep.subr.mxu0 0.0
    %4527 = vmatpush1.msra.mxu0 0.0
    %4528 = vmatprep.subr.mxu0 0.0
    %4529 = vmatpush1.msra.mxu0 0.0
    %4530 = vmatprep.subr.mxu0 0.0
    %4531 = vmatpush1.msra.mxu0 0.0
    %4532 = vmatprep.subr.mxu0 0.0
    %4533 = vmatpush1.msra.mxu0 0.0
    %4534 = vmatprep.subr.mxu0 0.0
    %4535 = vmatpush1.msra.mxu0 0.0
    %4536 = vmatprep.subr.mxu0 0.0
    %4537 = vmatpush1.msra.mxu0 0.0
    %4538 = vmatprep.subr.mxu0 0.0
    %4539 = vmatpush1.msra.mxu0 0.0
    %4540 = vmatprep.subr.mxu0 0.0
    %4541 = vmatpush1.msra.mxu0 0.0
    %4542 = vmatprep.subr.mxu0 0.0
    %4543 = vmatpush1.msra.mxu0 0.0
    %4544 = vmatprep.subr.mxu0 0.0
    %4545 = vmatpush1.msra.mxu0 0.0
    %4546 = vmatprep.subr.mxu0 0.0
    %4547 = vmatpush1.msra.mxu0 0.0
    %4548 = vmatprep.subr.mxu0 0.0
    %4549 = vmatpush1.msra.mxu0 0.0
    %4550 = vmatprep.subr.mxu0 0.0
    %4551 = vmatpush1.msra.mxu0 %v4494
    %4552 = vmatprep.subr.mxu0 0.0
    %4553 = vmatpush2.msra.mxu0 0.0
    %4554 = vmatprep.subr.mxu0 0.0
    %4555 = vmatpush2.msra.mxu0 0.0
    %4556 = vmatprep.subr.mxu0 0.0
    %4557 = vmatpush2.msra.mxu0 0.0
    %4558 = vmatprep.subr.mxu0 0.0
    %4559 = vmatpush2.msra.mxu0 0.0
    %4560 = vmatprep.subr.mxu0 0.0
    %4561 = vmatpush2.msra.mxu0 0.0
    %4562 = vmatprep.subr.mxu0 0.0
    %4563 = vmatpush2.msra.mxu0 0.0
    %4564 = vmatprep.subr.mxu0 0.0
    %4565 = vmatpush2.msra.mxu0 0.0
    %4566 = vmatprep.subr.mxu0 0.0
    %4567 = vmatpush2.msra.mxu0 0.0
    %4568 = vmatprep.subr.mxu0 0.0
    %4569 = vmatpush2.msra.mxu0 0.0
    %4570 = vmatprep.subr.mxu0 0.0
    %4571 = vmatpush2.msra.mxu0 0.0
    %4572 = vmatprep.subr.mxu0 0.0
    %4573 = vmatpush2.msra.mxu0 0.0
    %4574 = vmatprep.subr.mxu0 0.0
    %4575 = vmatpush2.msra.mxu0 0.0
    %4576 = vmatprep.subr.mxu0 0.0
    %4577 = vmatpush2.msra.mxu0 0.0
    %4578 = vmatprep.subr.mxu0 0.0
    %4579 = vmatpush2.msra.mxu0 0.0
    %4580 = vmatprep.subr.mxu0 0.0
    %4581 = vmatpush2.msra.mxu0 0.0
    %4582 = vmatprep.subr.mxu0 0.0
    %4583 = vmatpush2.msra.mxu0 0.0
    %4584 = vmatprep.mubr.f32.mxu0 0.0
    %4585 = vmatmul.mubr.f32.gmra.mxu0 %v4497
    %v4586 = vpop.f32.mrf.mxu0
    %v4587 = vadd.f32 0.0, %v4586
    %v4588 = vpop.f32.mrf.mxu0
    %4589 = vmatprep.mubr.f32.mxu0 0.0
    %4590 = vmatmul.mubr.f32.gmra.mxu0 %v4500
    %v4591 = vpop.f32.mrf.mxu0
    %v4592 = vadd.f32 0.0, %v4591
    %v4593 = vpop.f32.mrf.mxu0
    %4594 = vmatprep.mubr.f32.mxu0 0.0
    %4595 = vmatmul.mubr.f32.gmra.mxu0 %v4503
    %v4596 = vpop.f32.mrf.mxu0
    %v4597 = vadd.f32 0.0, %v4596
    %v4598 = vpop.f32.mrf.mxu0
    %4599 = vmatprep.mubr.f32.mxu0 0.0
    %4600 = vmatmul.mubr.f32.gmra.mxu0 %v4506
    %v4601 = vpop.f32.mrf.mxu0
    %v4602 = vadd.f32 0.0, %v4601
    %v4603 = vpop.f32.mrf.mxu0
    %4604 = vmatprep.mubr.f32.mxu0 0.0
    %4605 = vmatmul.mubr.f32.gmra.mxu0 %v4509
    %v4606 = vpop.f32.mrf.mxu0
    %v4607 = vadd.f32 0.0, %v4606
    %v4608 = vpop.f32.mrf.mxu0
    %4609 = vmatprep.mubr.f32.mxu0 0.0
    %4610 = vmatmul.mubr.f32.gmra.mxu0 %v4512
    %v4611 = vpop.f32.mrf.mxu0
    %v4612 = vadd.f32 0.0, %v4611
    %v4613 = vpop.f32.mrf.mxu0
    %4614 = vmatprep.mubr.f32.mxu0 0.0
    %4615 = vmatmul.mubr.f32.gmra.mxu0 %v4515
    %v4616 = vpop.f32.mrf.mxu0
    %v4617 = vadd.f32 0.0, %v4616
    %v4618 = vpop.f32.mrf.mxu0
    %4619 = vmatprep.mubr.f32.mxu0 0.0
    %4620 = vmatmul.mubr.f32.gmra.mxu0 %v4518
    %v4621 = vpop.f32.mrf.mxu0
    %v4622 = vadd.f32 0.0, %v4621
    %v4623 = vpop.f32.mrf.mxu0
    %4624 = vdwg.mxu0
    %v4625 = vmul.f32 %v4454, %v3849
    %v4626 = vmul.f32 %v4459, %v3853
    %v4627 = vmul.f32 %v4464, %v3857
    %v4628 = vmul.f32 %v4469, %v3861
    %v4629 = vmul.f32 %v4474, %v3865
    %v4630 = vmul.f32 %v4479, %v3869
    %v4631 = vmul.f32 %v4484, %v3873
    %v4632 = vmul.f32 %v4489, %v3877
    %v4633 = vmul.f32 %v4587, %v3849
    %v4634 = vmul.f32 %v4592, %v3853
    %v4635 = vmul.f32 %v4597, %v3857
    %v4636 = vmul.f32 %v4602, %v3861
    %v4637 = vmul.f32 %v4607, %v3865
    %v4638 = vmul.f32 %v4612, %v3869
    %v4639 = vmul.f32 %v4617, %v3873
    %v4640 = vmul.f32 %v4622, %v3877
    %v4641 = vsel %vm190, %v4625, 0.0
    %v4642 = vsel %vm190, %v4626, 0.0
    %v4643 = vadd.f32 %v4641, %v4642
    %v4644 = vsel %vm190, %v4627, 0.0
    %v4645 = vadd.f32 %v4643, %v4644
    %v4646 = vsel %vm190, %v4628, 0.0
    %v4647 = vadd.f32 %v4645, %v4646
    %v4648 = vsel %vm190, %v4629, 0.0
    %v4649 = vadd.f32 %v4647, %v4648
    %v4650 = vsel %vm190, %v4630, 0.0
    %v4651 = vadd.f32 %v4649, %v4650
    %v4652 = vsel %vm190, %v4631, 0.0
    %v4653 = vadd.f32 %v4651, %v4652
    %v4654 = vsel %vm190, %v4632, 0.0
    %v4655 = vadd.f32 %v4653, %v4654
    %v4656 = vsel %vm190, %v4633, 0.0
    %v4657 = vsel %vm190, %v4634, 0.0
    %v4658 = vadd.f32 %v4656, %v4657
    %v4659 = vsel %vm190, %v4635, 0.0
    %v4660 = vadd.f32 %v4658, %v4659
    %v4661 = vsel %vm190, %v4636, 0.0
    %v4662 = vadd.f32 %v4660, %v4661
    %v4663 = vsel %vm190, %v4637, 0.0
    %v4664 = vadd.f32 %v4662, %v4663
    %v4665 = vsel %vm190, %v4638, 0.0
    %v4666 = vadd.f32 %v4664, %v4665
    %v4667 = vsel %vm190, %v4639, 0.0
    %v4668 = vadd.f32 %v4666, %v4667
    %v4669 = vsel %vm190, %v4640, 0.0
    %v4670 = vadd.f32 %v4668, %v4669
    %v4672 = vlaneseq
    %v4673 = vshrl.u32 %v4672, 7
    %v4674 = vsub.s32 0, %v4673
    %v4675 = vrot.slane %v3649, %v4674
    %v4678 = vsel %vm190, %v4655, 0
    %v4681 = vsel %vm190, %v4670, 0
    %4683 = vmatprep.subr.mxu0 0.0
    %4684 = vmatpush1.msra.mxu0 0.0
    %4685 = vmatprep.subr.mxu0 0.0
    %4686 = vmatpush1.msra.mxu0 0.0
    %4687 = vmatprep.subr.mxu0 0.0
    %4688 = vmatpush1.msra.mxu0 0.0
    %4689 = vmatprep.subr.mxu0 0.0
    %4690 = vmatpush1.msra.mxu0 0.0
    %4691 = vmatprep.subr.mxu0 0.0
    %4692 = vmatpush1.msra.mxu0 0.0
    %4693 = vmatprep.subr.mxu0 0.0
    %4694 = vmatpush1.msra.mxu0 0.0
    %4695 = vmatprep.subr.mxu0 0.0
    %4696 = vmatpush1.msra.mxu0 0.0
    %4697 = vmatprep.subr.mxu0 0.0
    %4698 = vmatpush1.msra.mxu0 0.0
    %4699 = vmatprep.subr.mxu0 0.0
    %4700 = vmatpush1.msra.mxu0 0.0
    %4701 = vmatprep.subr.mxu0 0.0
    %4702 = vmatpush1.msra.mxu0 0.0
    %4703 = vmatprep.subr.mxu0 0.0
    %4704 = vmatpush1.msra.mxu0 0.0
    %4705 = vmatprep.subr.mxu0 0.0
    %4706 = vmatpush1.msra.mxu0 0.0
    %4707 = vmatprep.subr.mxu0 0.0
    %4708 = vmatpush1.msra.mxu0 %v3641
    %4709 = vmatprep.subr.mxu0 0.0
    %4710 = vmatpush1.msra.mxu0 %v3640
    %4711 = vmatprep.subr.mxu0 0.0
    %4712 = vmatpush1.msra.mxu0 %v3639
    %4713 = vmatprep.subr.mxu0 0.0
    %4714 = vmatpush1.msra.mxu0 %v3638
    %4715 = vmatprep.subr.mxu0 0.0
    %4716 = vmatpush2.msra.mxu0 0.0
    %4717 = vmatprep.subr.mxu0 0.0
    %4718 = vmatpush2.msra.mxu0 0.0
    %4719 = vmatprep.subr.mxu0 0.0
    %4720 = vmatpush2.msra.mxu0 0.0
    %4721 = vmatprep.subr.mxu0 0.0
    %4722 = vmatpush2.msra.mxu0 0.0
    %4723 = vmatprep.subr.mxu0 0.0
    %4724 = vmatpush2.msra.mxu0 0.0
    %4725 = vmatprep.subr.mxu0 0.0
    %4726 = vmatpush2.msra.mxu0 0.0
    %4727 = vmatprep.subr.mxu0 0.0
    %4728 = vmatpush2.msra.mxu0 0.0
    %4729 = vmatprep.subr.mxu0 0.0
    %4730 = vmatpush2.msra.mxu0 0.0
    %4731 = vmatprep.subr.mxu0 0.0
    %4732 = vmatpush2.msra.mxu0 0.0
    %4733 = vmatprep.subr.mxu0 0.0
    %4734 = vmatpush2.msra.mxu0 0.0
    %4735 = vmatprep.subr.mxu0 0.0
    %4736 = vmatpush2.msra.mxu0 0.0
    %4737 = vmatprep.subr.mxu0 0.0
    %4738 = vmatpush2.msra.mxu0 0.0
    %4739 = vmatprep.subr.mxu0 0.0
    %4740 = vmatpush2.msra.mxu0 0.0
    %4741 = vmatprep.subr.mxu0 0.0
    %4742 = vmatpush2.msra.mxu0 0.0
    %4743 = vmatprep.subr.mxu0 0.0
    %4744 = vmatpush2.msra.mxu0 0.0
    %4745 = vmatprep.subr.mxu0 0.0
    %4746 = vmatpush2.msra.mxu0 0.0
    %4747 = vmatprep.mubr.f32.mxu0 0.0
    %4748 = vmatmul.mubr.f32.gmra.mxu0 %v4678
    %v4749 = vpop.f32.mrf.mxu0
    %v4750 = vadd.f32 %v4675, %v4749
    %v4751 = vpop.f32.mrf.mxu0
    %4752 = vmatprep.mubr.f32.mxu0 0.0
    %4753 = vmatmul.mubr.f32.gmra.mxu0 %v4681
    %v4754 = vpop.f32.mrf.mxu0
    %v4755 = vadd.f32 %v4675, %v4754
    %v4756 = vpop.f32.mrf.mxu0
    %4757 = vdwg.mxu0
    %v4758 = vadd.f32 %v4750, %v658
    %v4759 = vadd.f32 %v4755, %v663
    %v4760 = vsel %vm190, %v4758, 0.0
    %4761 = vadd.xlane.f32.xlu0 %v4760
    %v4762 = vpop.xlane.xlu0 %4761
    %v4763 = vsel %vm190, %v4759, 0.0
    %4764 = vadd.xlane.f32.xlu0 %v4763
    %v4765 = vpop.xlane.xlu0 %4764
    %v4766 = vmul.f32 %v4762, %v197
    %v4767 = vmul.f32 %v4765, %v197
    %v4768 = vsub.f32 %v4758, %v4766
    %v4769 = vsub.f32 %v4759, %v4767
    %v4770 = vmul.f32 %v4768, %v4768
    %v4771 = vmul.f32 %v4769, %v4769
    %v4772 = vsel %vm190, %v4770, 0.0
    %4773 = vadd.xlane.f32.xlu0 %v4772
    %v4774 = vpop.xlane.xlu0 %4773
    %v4775 = vsel %vm190, %v4771, 0.0
    %4776 = vadd.xlane.f32.xlu0 %v4775
    %v4777 = vpop.xlane.xlu0 %4776
    %v4778 = vmul.f32 %v4774, %v197
    %v4779 = vmul.f32 %v4777, %v197
    %v4780 = vadd.f32 %v4778, 1e-05
    %v4781 = vadd.f32 %v4779, 1e-05
    %v4782 = vrsqrt.pop %v4780
    %v4783 = vrsqrt.pop %v4781
    %v4784 = vmul.f32 %v4768, %v4782
    %v4785 = vmul.f32 %v4769, %v4783
    %v4787 = vlaneseq
    %v4788 = vshrl.u32 %v4787, 7
    %v4789 = vsub.s32 0, %v4788
    %v4790 = vrot.slane %v3650, %v4789
    %v4792 = vmul.f32 %v4784, %v4790
    %v4793 = vmul.f32 %v4785, %v4790
    %v4795 = vlaneseq
    %v4796 = vshrl.u32 %v4795, 7
    %v4797 = vsub.s32 0, %v4796
    %v4798 = vrot.slane %v3651, %v4797
    %v4800 = vadd.f32 %v4792, %v4798
    %v4801 = vadd.f32 %v4793, %v4798
    %v4803 = vlaneseq
    %v4804 = vshrl.u32 %v4803, 7
    %v4805 = vsub.s32 0, %v4804
    %v4806 = vrot.slane %v3652, %v4805
    %v4809 = vsel %vm190, %v4800, 0
    %v4812 = vsel %vm190, %v4801, 0
    %4814 = vmatprep.subr.mxu0 0.0
    %4815 = vmatpush1.msra.mxu0 0.0
    %4816 = vmatprep.subr.mxu0 0.0
    %4817 = vmatpush1.msra.mxu0 0.0
    %4818 = vmatprep.subr.mxu0 0.0
    %4819 = vmatpush1.msra.mxu0 0.0
    %4820 = vmatprep.subr.mxu0 0.0
    %4821 = vmatpush1.msra.mxu0 0.0
    %4822 = vmatprep.subr.mxu0 0.0
    %4823 = vmatpush1.msra.mxu0 0.0
    %4824 = vmatprep.subr.mxu0 0.0
    %4825 = vmatpush1.msra.mxu0 0.0
    %4826 = vmatprep.subr.mxu0 0.0
    %4827 = vmatpush1.msra.mxu0 0.0
    %4828 = vmatprep.subr.mxu0 0.0
    %4829 = vmatpush1.msra.mxu0 0.0
    %4830 = vmatprep.subr.mxu0 0.0
    %4831 = vmatpush1.msra.mxu0 0.0
    %4832 = vmatprep.subr.mxu0 0.0
    %4833 = vmatpush1.msra.mxu0 0.0
    %4834 = vmatprep.subr.mxu0 0.0
    %4835 = vmatpush1.msra.mxu0 0.0
    %4836 = vmatprep.subr.mxu0 0.0
    %4837 = vmatpush1.msra.mxu0 0.0
    %4838 = vmatprep.subr.mxu0 0.0
    %4839 = vmatpush1.msra.mxu0 %v3629
    %4840 = vmatprep.subr.mxu0 0.0
    %4841 = vmatpush1.msra.mxu0 %v3628
    %4842 = vmatprep.subr.mxu0 0.0
    %4843 = vmatpush1.msra.mxu0 %v3627
    %4844 = vmatprep.subr.mxu0 0.0
    %4845 = vmatpush1.msra.mxu0 %v3626
    %4846 = vmatprep.subr.mxu0 0.0
    %4847 = vmatpush2.msra.mxu0 0.0
    %4848 = vmatprep.subr.mxu0 0.0
    %4849 = vmatpush2.msra.mxu0 0.0
    %4850 = vmatprep.subr.mxu0 0.0
    %4851 = vmatpush2.msra.mxu0 0.0
    %4852 = vmatprep.subr.mxu0 0.0
    %4853 = vmatpush2.msra.mxu0 0.0
    %4854 = vmatprep.subr.mxu0 0.0
    %4855 = vmatpush2.msra.mxu0 0.0
    %4856 = vmatprep.subr.mxu0 0.0
    %4857 = vmatpush2.msra.mxu0 0.0
    %4858 = vmatprep.subr.mxu0 0.0
    %4859 = vmatpush2.msra.mxu0 0.0
    %4860 = vmatprep.subr.mxu0 0.0
    %4861 = vmatpush2.msra.mxu0 0.0
    %4862 = vmatprep.subr.mxu0 0.0
    %4863 = vmatpush2.msra.mxu0 0.0
    %4864 = vmatprep.subr.mxu0 0.0
    %4865 = vmatpush2.msra.mxu0 0.0
    %4866 = vmatprep.subr.mxu0 0.0
    %4867 = vmatpush2.msra.mxu0 0.0
    %4868 = vmatprep.subr.mxu0 0.0
    %4869 = vmatpush2.msra.mxu0 0.0
    %4870 = vmatprep.subr.mxu0 0.0
    %4871 = vmatpush2.msra.mxu0 0.0
    %4872 = vmatprep.subr.mxu0 0.0
    %4873 = vmatpush2.msra.mxu0 0.0
    %4874 = vmatprep.subr.mxu0 0.0
    %4875 = vmatpush2.msra.mxu0 0.0
    %4876 = vmatprep.subr.mxu0 0.0
    %4877 = vmatpush2.msra.mxu0 0.0
    %4878 = vmatprep.mubr.f32.mxu0 0.0
    %4879 = vmatmul.mubr.f32.gmra.mxu0 %v4809
    %v4880 = vpop.f32.mrf.mxu0
    %v4881 = vadd.f32 %v4806, %v4880
    %v4882 = vpop.f32.mrf.mxu0
    %4883 = vmatprep.mubr.f32.mxu0 0.0
    %4884 = vmatmul.mubr.f32.gmra.mxu0 %v4812
    %v4885 = vpop.f32.mrf.mxu0
    %v4886 = vadd.f32 %v4806, %v4885
    %v4887 = vpop.f32.mrf.mxu0
    %4888 = vdwg.mxu0
    %v4890 = vsel %vm190, %v232, 0
    %v4893 = vsel %vm190, %v233, 0
    %4895 = vmatprep.subr.mxu0 0.0
    %4896 = vmatpush1.msra.mxu0 0.0
    %4897 = vmatprep.subr.mxu0 0.0
    %4898 = vmatpush1.msra.mxu0 0.0
    %4899 = vmatprep.subr.mxu0 0.0
    %4900 = vmatpush1.msra.mxu0 0.0
    %4901 = vmatprep.subr.mxu0 0.0
    %4902 = vmatpush1.msra.mxu0 0.0
    %4903 = vmatprep.subr.mxu0 0.0
    %4904 = vmatpush1.msra.mxu0 0.0
    %4905 = vmatprep.subr.mxu0 0.0
    %4906 = vmatpush1.msra.mxu0 0.0
    %4907 = vmatprep.subr.mxu0 0.0
    %4908 = vmatpush1.msra.mxu0 0.0
    %4909 = vmatprep.subr.mxu0 0.0
    %4910 = vmatpush1.msra.mxu0 0.0
    %4911 = vmatprep.subr.mxu0 0.0
    %4912 = vmatpush1.msra.mxu0 0.0
    %4913 = vmatprep.subr.mxu0 0.0
    %4914 = vmatpush1.msra.mxu0 0.0
    %4915 = vmatprep.subr.mxu0 0.0
    %4916 = vmatpush1.msra.mxu0 0.0
    %4917 = vmatprep.subr.mxu0 0.0
    %4918 = vmatpush1.msra.mxu0 0.0
    %4919 = vmatprep.subr.mxu0 0.0
    %4920 = vmatpush1.msra.mxu0 %v3637
    %4921 = vmatprep.subr.mxu0 0.0
    %4922 = vmatpush1.msra.mxu0 %v3636
    %4923 = vmatprep.subr.mxu0 0.0
    %4924 = vmatpush1.msra.mxu0 %v3635
    %4925 = vmatprep.subr.mxu0 0.0
    %4926 = vmatpush1.msra.mxu0 %v3634
    %4927 = vmatprep.subr.mxu0 0.0
    %4928 = vmatpush2.msra.mxu0 0.0
    %4929 = vmatprep.subr.mxu0 0.0
    %4930 = vmatpush2.msra.mxu0 0.0
    %4931 = vmatprep.subr.mxu0 0.0
    %4932 = vmatpush2.msra.mxu0 0.0
    %4933 = vmatprep.subr.mxu0 0.0
    %4934 = vmatpush2.msra.mxu0 0.0
    %4935 = vmatprep.subr.mxu0 0.0
    %4936 = vmatpush2.msra.mxu0 0.0
    %4937 = vmatprep.subr.mxu0 0.0
    %4938 = vmatpush2.msra.mxu0 0.0
    %4939 = vmatprep.subr.mxu0 0.0
    %4940 = vmatpush2.msra.mxu0 0.0
    %4941 = vmatprep.subr.mxu0 0.0
    %4942 = vmatpush2.msra.mxu0 0.0
    %4943 = vmatprep.subr.mxu0 0.0
    %4944 = vmatpush2.msra.mxu0 0.0
    %4945 = vmatprep.subr.mxu0 0.0
    %4946 = vmatpush2.msra.mxu0 0.0
    %4947 = vmatprep.subr.mxu0 0.0
    %4948 = vmatpush2.msra.mxu0 0.0
    %4949 = vmatprep.subr.mxu0 0.0
    %4950 = vmatpush2.msra.mxu0 0.0
    %4951 = vmatprep.subr.mxu0 0.0
    %4952 = vmatpush2.msra.mxu0 0.0
    %4953 = vmatprep.subr.mxu0 0.0
    %4954 = vmatpush2.msra.mxu0 0.0
    %4955 = vmatprep.subr.mxu0 0.0
    %4956 = vmatpush2.msra.mxu0 0.0
    %4957 = vmatprep.subr.mxu0 0.0
    %4958 = vmatpush2.msra.mxu0 0.0
    %4959 = vmatprep.mubr.f32.mxu0 0.0
    %4960 = vmatmul.mubr.f32.gmra.mxu0 %v4890
    %v4961 = vpop.f32.mrf.mxu0
    %v4962 = vadd.f32 0.0, %v4961
    %v4963 = vpop.f32.mrf.mxu0
    %4964 = vmatprep.mubr.f32.mxu0 0.0
    %4965 = vmatmul.mubr.f32.gmra.mxu0 %v4893
    %v4966 = vpop.f32.mrf.mxu0
    %v4967 = vadd.f32 0.0, %v4966
    %v4968 = vpop.f32.mrf.mxu0
    %4969 = vdwg.mxu0
    %v4971 = vlaneseq
    %v4972 = vshrl.u32 %v4971, 7
    %v4973 = vsub.s32 0, %v4972
    %v4974 = vrot.slane %v3653, %v4973
    %v4976 = vadd.f32 %v4962, %v4974
    %v4977 = vadd.f32 %v4967, %v4974
    %v4979 = vlaneseq
    %v4980 = vshrl.u32 %v4979, 7
    %v4981 = vsub.s32 0, %v4980
    %v4982 = vrot.slane %v3654, %v4981
    %4983 = vrot.lane.b32.xlu0 %v4982, 32
    %v4984 = vpop.permute.xlu0 %4983
    %v4986 = vadd.f32 %v4962, %v4984
    %v4987 = vadd.f32 %v4967, %v4984
    %v4988 = vmul.f32 %v4881, %v3849
    %v4989 = vmul.f32 %v4881, %v3853
    %v4990 = vmul.f32 %v4881, %v3857
    %v4991 = vmul.f32 %v4881, %v3861
    %v4992 = vmul.f32 %v4881, %v3865
    %v4993 = vmul.f32 %v4881, %v3869
    %v4994 = vmul.f32 %v4881, %v3873
    %v4995 = vmul.f32 %v4881, %v3877
    %v4996 = vmul.f32 %v4886, %v3849
    %v4997 = vmul.f32 %v4886, %v3853
    %v4998 = vmul.f32 %v4886, %v3857
    %v4999 = vmul.f32 %v4886, %v3861
    %v5000 = vmul.f32 %v4886, %v3865
    %v5001 = vmul.f32 %v4886, %v3869
    %v5002 = vmul.f32 %v4886, %v3873
    %v5003 = vmul.f32 %v4886, %v3877
    %v5005 = vsel %vm190, %v4988, 0
    %v5008 = vsel %vm190, %v4989, 0
    %v5011 = vsel %vm190, %v4990, 0
    %v5014 = vsel %vm190, %v4991, 0
    %v5017 = vsel %vm190, %v4992, 0
    %v5020 = vsel %vm190, %v4993, 0
    %v5023 = vsel %vm190, %v4994, 0
    %v5026 = vsel %vm190, %v4995, 0
    %v5029 = vsel %vm190, %v4976, 0
    %5031 = vmatprep.subr.mxu0 0.0
    %5032 = vmatpush1.xpose.msra.mxu0 0.0
    %5033 = vmatprep.subr.mxu0 0.0
    %5034 = vmatpush1.xpose.msra.mxu0 0.0
    %5035 = vmatprep.subr.mxu0 0.0
    %5036 = vmatpush1.xpose.msra.mxu0 0.0
    %5037 = vmatprep.subr.mxu0 0.0
    %5038 = vmatpush1.xpose.msra.mxu0 0.0
    %5039 = vmatprep.subr.mxu0 0.0
    %5040 = vmatpush1.xpose.msra.mxu0 0.0
    %5041 = vmatprep.subr.mxu0 0.0
    %5042 = vmatpush1.xpose.msra.mxu0 0.0
    %5043 = vmatprep.subr.mxu0 0.0
    %5044 = vmatpush1.xpose.msra.mxu0 0.0
    %5045 = vmatprep.subr.mxu0 0.0
    %5046 = vmatpush1.xpose.msra.mxu0 0.0
    %5047 = vmatprep.subr.mxu0 0.0
    %5048 = vmatpush1.xpose.msra.mxu0 0.0
    %5049 = vmatprep.subr.mxu0 0.0
    %5050 = vmatpush1.xpose.msra.mxu0 0.0
    %5051 = vmatprep.subr.mxu0 0.0
    %5052 = vmatpush1.xpose.msra.mxu0 0.0
    %5053 = vmatprep.subr.mxu0 0.0
    %5054 = vmatpush1.xpose.msra.mxu0 0.0
    %5055 = vmatprep.subr.mxu0 0.0
    %5056 = vmatpush1.xpose.msra.mxu0 0.0
    %5057 = vmatprep.subr.mxu0 0.0
    %5058 = vmatpush1.xpose.msra.mxu0 0.0
    %5059 = vmatprep.subr.mxu0 0.0
    %5060 = vmatpush1.xpose.msra.mxu0 0.0
    %5061 = vmatprep.subr.mxu0 0.0
    %5062 = vmatpush1.xpose.msra.mxu0 %v5029
    %5063 = vmatprep.subr.mxu0 0.0
    %5064 = vmatpush2.xpose.msra.mxu0 0.0
    %5065 = vmatprep.subr.mxu0 0.0
    %5066 = vmatpush2.xpose.msra.mxu0 0.0
    %5067 = vmatprep.subr.mxu0 0.0
    %5068 = vmatpush2.xpose.msra.mxu0 0.0
    %5069 = vmatprep.subr.mxu0 0.0
    %5070 = vmatpush2.xpose.msra.mxu0 0.0
    %5071 = vmatprep.subr.mxu0 0.0
    %5072 = vmatpush2.xpose.msra.mxu0 0.0
    %5073 = vmatprep.subr.mxu0 0.0
    %5074 = vmatpush2.xpose.msra.mxu0 0.0
    %5075 = vmatprep.subr.mxu0 0.0
    %5076 = vmatpush2.xpose.msra.mxu0 0.0
    %5077 = vmatprep.subr.mxu0 0.0
    %5078 = vmatpush2.xpose.msra.mxu0 0.0
    %5079 = vmatprep.subr.mxu0 0.0
    %5080 = vmatpush2.xpose.msra.mxu0 0.0
    %5081 = vmatprep.subr.mxu0 0.0
    %5082 = vmatpush2.xpose.msra.mxu0 0.0
    %5083 = vmatprep.subr.mxu0 0.0
    %5084 = vmatpush2.xpose.msra.mxu0 0.0
    %5085 = vmatprep.subr.mxu0 0.0
    %5086 = vmatpush2.xpose.msra.mxu0 0.0
    %5087 = vmatprep.subr.mxu0 0.0
    %5088 = vmatpush2.xpose.msra.mxu0 0.0
    %5089 = vmatprep.subr.mxu0 0.0
    %5090 = vmatpush2.xpose.msra.mxu0 0.0
    %5091 = vmatprep.subr.mxu0 0.0
    %5092 = vmatpush2.xpose.msra.mxu0 0.0
    %5093 = vmatprep.subr.mxu0 0.0
    %5094 = vmatpush2.xpose.msra.mxu0 0.0
    %5095 = vmatprep.mubr.f32.mxu0 0.0
    %5096 = vmatmul.mubr.f32.gmra.mxu0 %v5005
    %v5097 = vpop.f32.mrf.mxu0
    %v5098 = vadd.f32 0.0, %v5097
    %v5099 = vpop.f32.mrf.mxu0
    %5100 = vmatprep.mubr.f32.mxu0 0.0
    %5101 = vmatmul.mubr.f32.gmra.mxu0 %v5008
    %v5102 = vpop.f32.mrf.mxu0
    %v5103 = vadd.f32 0.0, %v5102
    %v5104 = vpop.f32.mrf.mxu0
    %5105 = vmatprep.mubr.f32.mxu0 0.0
    %5106 = vmatmul.mubr.f32.gmra.mxu0 %v5011
    %v5107 = vpop.f32.mrf.mxu0
    %v5108 = vadd.f32 0.0, %v5107
    %v5109 = vpop.f32.mrf.mxu0
    %5110 = vmatprep.mubr.f32.mxu0 0.0
    %5111 = vmatmul.mubr.f32.gmra.mxu0 %v5014
    %v5112 = vpop.f32.mrf.mxu0
    %v5113 = vadd.f32 0.0, %v5112
    %v5114 = vpop.f32.mrf.mxu0
    %5115 = vmatprep.mubr.f32.mxu0 0.0
    %5116 = vmatmul.mubr.f32.gmra.mxu0 %v5017
    %v5117 = vpop.f32.mrf.mxu0
    %v5118 = vadd.f32 0.0, %v5117
    %v5119 = vpop.f32.mrf.mxu0
    %5120 = vmatprep.mubr.f32.mxu0 0.0
    %5121 = vmatmul.mubr.f32.gmra.mxu0 %v5020
    %v5122 = vpop.f32.mrf.mxu0
    %v5123 = vadd.f32 0.0, %v5122
    %v5124 = vpop.f32.mrf.mxu0
    %5125 = vmatprep.mubr.f32.mxu0 0.0
    %5126 = vmatmul.mubr.f32.gmra.mxu0 %v5023
    %v5127 = vpop.f32.mrf.mxu0
    %v5128 = vadd.f32 0.0, %v5127
    %v5129 = vpop.f32.mrf.mxu0
    %5130 = vmatprep.mubr.f32.mxu0 0.0
    %5131 = vmatmul.mubr.f32.gmra.mxu0 %v5026
    %v5132 = vpop.f32.mrf.mxu0
    %v5133 = vadd.f32 0.0, %v5132
    %v5134 = vpop.f32.mrf.mxu0
    %5135 = vdwg.mxu0
    %v5137 = vsel %vm190, %v4996, 0
    %v5140 = vsel %vm190, %v4997, 0
    %v5143 = vsel %vm190, %v4998, 0
    %v5146 = vsel %vm190, %v4999, 0
    %v5149 = vsel %vm190, %v5000, 0
    %v5152 = vsel %vm190, %v5001, 0
    %v5155 = vsel %vm190, %v5002, 0
    %v5158 = vsel %vm190, %v5003, 0
    %v5161 = vsel %vm190, %v4977, 0
    %5163 = vmatprep.subr.mxu0 0.0
    %5164 = vmatpush1.xpose.msra.mxu0 0.0
    %5165 = vmatprep.subr.mxu0 0.0
    %5166 = vmatpush1.xpose.msra.mxu0 0.0
    %5167 = vmatprep.subr.mxu0 0.0
    %5168 = vmatpush1.xpose.msra.mxu0 0.0
    %5169 = vmatprep.subr.mxu0 0.0
    %5170 = vmatpush1.xpose.msra.mxu0 0.0
    %5171 = vmatprep.subr.mxu0 0.0
    %5172 = vmatpush1.xpose.msra.mxu0 0.0
    %5173 = vmatprep.subr.mxu0 0.0
    %5174 = vmatpush1.xpose.msra.mxu0 0.0
    %5175 = vmatprep.subr.mxu0 0.0
    %5176 = vmatpush1.xpose.msra.mxu0 0.0
    %5177 = vmatprep.subr.mxu0 0.0
    %5178 = vmatpush1.xpose.msra.mxu0 0.0
    %5179 = vmatprep.subr.mxu0 0.0
    %5180 = vmatpush1.xpose.msra.mxu0 0.0
    %5181 = vmatprep.subr.mxu0 0.0
    %5182 = vmatpush1.xpose.msra.mxu0 0.0
    %5183 = vmatprep.subr.mxu0 0.0
    %5184 = vmatpush1.xpose.msra.mxu0 0.0
    %5185 = vmatprep.subr.mxu0 0.0
    %5186 = vmatpush1.xpose.msra.mxu0 0.0
    %5187 = vmatprep.subr.mxu0 0.0
    %5188 = vmatpush1.xpose.msra.mxu0 0.0
    %5189 = vmatprep.subr.mxu0 0.0
    %5190 = vmatpush1.xpose.msra.mxu0 0.0
    %5191 = vmatprep.subr.mxu0 0.0
    %5192 = vmatpush1.xpose.msra.mxu0 0.0
    %5193 = vmatprep.subr.mxu0 0.0
    %5194 = vmatpush1.xpose.msra.mxu0 %v5161
    %5195 = vmatprep.subr.mxu0 0.0
    %5196 = vmatpush2.xpose.msra.mxu0 0.0
    %5197 = vmatprep.subr.mxu0 0.0
    %5198 = vmatpush2.xpose.msra.mxu0 0.0
    %5199 = vmatprep.subr.mxu0 0.0
    %5200 = vmatpush2.xpose.msra.mxu0 0.0
    %5201 = vmatprep.subr.mxu0 0.0
    %5202 = vmatpush2.xpose.msra.mxu0 0.0
    %5203 = vmatprep.subr.mxu0 0.0
    %5204 = vmatpush2.xpose.msra.mxu0 0.0
    %5205 = vmatprep.subr.mxu0 0.0
    %5206 = vmatpush2.xpose.msra.mxu0 0.0
    %5207 = vmatprep.subr.mxu0 0.0
    %5208 = vmatpush2.xpose.msra.mxu0 0.0
    %5209 = vmatprep.subr.mxu0 0.0
    %5210 = vmatpush2.xpose.msra.mxu0 0.0
    %5211 = vmatprep.subr.mxu0 0.0
    %5212 = vmatpush2.xpose.msra.mxu0 0.0
    %5213 = vmatprep.subr.mxu0 0.0
    %5214 = vmatpush2.xpose.msra.mxu0 0.0
    %5215 = vmatprep.subr.mxu0 0.0
    %5216 = vmatpush2.xpose.msra.mxu0 0.0
    %5217 = vmatprep.subr.mxu0 0.0
    %5218 = vmatpush2.xpose.msra.mxu0 0.0
    %5219 = vmatprep.subr.mxu0 0.0
    %5220 = vmatpush2.xpose.msra.mxu0 0.0
    %5221 = vmatprep.subr.mxu0 0.0
    %5222 = vmatpush2.xpose.msra.mxu0 0.0
    %5223 = vmatprep.subr.mxu0 0.0
    %5224 = vmatpush2.xpose.msra.mxu0 0.0
    %5225 = vmatprep.subr.mxu0 0.0
    %5226 = vmatpush2.xpose.msra.mxu0 0.0
    %5227 = vmatprep.mubr.f32.mxu0 0.0
    %5228 = vmatmul.mubr.f32.gmra.mxu0 %v5137
    %v5229 = vpop.f32.mrf.mxu0
    %v5230 = vadd.f32 0.0, %v5229
    %v5231 = vpop.f32.mrf.mxu0
    %5232 = vmatprep.mubr.f32.mxu0 0.0
    %5233 = vmatmul.mubr.f32.gmra.mxu0 %v5140
    %v5234 = vpop.f32.mrf.mxu0
    %v5235 = vadd.f32 0.0, %v5234
    %v5236 = vpop.f32.mrf.mxu0
    %5237 = vmatprep.mubr.f32.mxu0 0.0
    %5238 = vmatmul.mubr.f32.gmra.mxu0 %v5143
    %v5239 = vpop.f32.mrf.mxu0
    %v5240 = vadd.f32 0.0, %v5239
    %v5241 = vpop.f32.mrf.mxu0
    %5242 = vmatprep.mubr.f32.mxu0 0.0
    %5243 = vmatmul.mubr.f32.gmra.mxu0 %v5146
    %v5244 = vpop.f32.mrf.mxu0
    %v5245 = vadd.f32 0.0, %v5244
    %v5246 = vpop.f32.mrf.mxu0
    %5247 = vmatprep.mubr.f32.mxu0 0.0
    %5248 = vmatmul.mubr.f32.gmra.mxu0 %v5149
    %v5249 = vpop.f32.mrf.mxu0
    %v5250 = vadd.f32 0.0, %v5249
    %v5251 = vpop.f32.mrf.mxu0
    %5252 = vmatprep.mubr.f32.mxu0 0.0
    %5253 = vmatmul.mubr.f32.gmra.mxu0 %v5152
    %v5254 = vpop.f32.mrf.mxu0
    %v5255 = vadd.f32 0.0, %v5254
    %v5256 = vpop.f32.mrf.mxu0
    %5257 = vmatprep.mubr.f32.mxu0 0.0
    %5258 = vmatmul.mubr.f32.gmra.mxu0 %v5155
    %v5259 = vpop.f32.mrf.mxu0
    %v5260 = vadd.f32 0.0, %v5259
    %v5261 = vpop.f32.mrf.mxu0
    %5262 = vmatprep.mubr.f32.mxu0 0.0
    %5263 = vmatmul.mubr.f32.gmra.mxu0 %v5158
    %v5264 = vpop.f32.mrf.mxu0
    %v5265 = vadd.f32 0.0, %v5264
    %v5266 = vpop.f32.mrf.mxu0
    %5267 = vdwg.mxu0
    %v5268 = vmul.f32 %v5098, 0.5
    %v5269 = vmul.f32 %v5103, 0.5
    %v5270 = vmul.f32 %v5108, 0.5
    %v5271 = vmul.f32 %v5113, 0.5
    %v5272 = vmul.f32 %v5118, 0.5
    %v5273 = vmul.f32 %v5123, 0.5
    %v5274 = vmul.f32 %v5128, 0.5
    %v5275 = vmul.f32 %v5133, 0.5
    %v5276 = vmul.f32 %v5230, 0.5
    %v5277 = vmul.f32 %v5235, 0.5
    %v5278 = vmul.f32 %v5240, 0.5
    %v5279 = vmul.f32 %v5245, 0.5
    %v5280 = vmul.f32 %v5250, 0.5
    %v5281 = vmul.f32 %v5255, 0.5
    %v5282 = vmul.f32 %v5260, 0.5
    %v5283 = vmul.f32 %v5265, 0.5
    %v5284 = vsel %vm4182, %v5268, -inf
    %5285 = vmax.xlane.f32.xlu0 %v5284
    %v5286 = vpop.xlane.xlu0 %5285
    %v5287 = vsel %vm4182, %v5269, -inf
    %5288 = vmax.xlane.f32.xlu0 %v5287
    %v5289 = vpop.xlane.xlu0 %5288
    %v5290 = vsel %vm4182, %v5270, -inf
    %5291 = vmax.xlane.f32.xlu0 %v5290
    %v5292 = vpop.xlane.xlu0 %5291
    %v5293 = vsel %vm4182, %v5271, -inf
    %5294 = vmax.xlane.f32.xlu0 %v5293
    %v5295 = vpop.xlane.xlu0 %5294
    %v5296 = vsel %vm4182, %v5272, -inf
    %5297 = vmax.xlane.f32.xlu0 %v5296
    %v5298 = vpop.xlane.xlu0 %5297
    %v5299 = vsel %vm4182, %v5273, -inf
    %5300 = vmax.xlane.f32.xlu0 %v5299
    %v5301 = vpop.xlane.xlu0 %5300
    %v5302 = vsel %vm4182, %v5274, -inf
    %5303 = vmax.xlane.f32.xlu0 %v5302
    %v5304 = vpop.xlane.xlu0 %5303
    %v5305 = vsel %vm4182, %v5275, -inf
    %5306 = vmax.xlane.f32.xlu0 %v5305
    %v5307 = vpop.xlane.xlu0 %5306
    %v5308 = vsel %vm4182, %v5276, -inf
    %5309 = vmax.xlane.f32.xlu0 %v5308
    %v5310 = vpop.xlane.xlu0 %5309
    %v5311 = vsel %vm4182, %v5277, -inf
    %5312 = vmax.xlane.f32.xlu0 %v5311
    %v5313 = vpop.xlane.xlu0 %5312
    %v5314 = vsel %vm4182, %v5278, -inf
    %5315 = vmax.xlane.f32.xlu0 %v5314
    %v5316 = vpop.xlane.xlu0 %5315
    %v5317 = vsel %vm4182, %v5279, -inf
    %5318 = vmax.xlane.f32.xlu0 %v5317
    %v5319 = vpop.xlane.xlu0 %5318
    %v5320 = vsel %vm4182, %v5280, -inf
    %5321 = vmax.xlane.f32.xlu0 %v5320
    %v5322 = vpop.xlane.xlu0 %5321
    %v5323 = vsel %vm4182, %v5281, -inf
    %5324 = vmax.xlane.f32.xlu0 %v5323
    %v5325 = vpop.xlane.xlu0 %5324
    %v5326 = vsel %vm4182, %v5282, -inf
    %5327 = vmax.xlane.f32.xlu0 %v5326
    %v5328 = vpop.xlane.xlu0 %5327
    %v5329 = vsel %vm4182, %v5283, -inf
    %5330 = vmax.xlane.f32.xlu0 %v5329
    %v5331 = vpop.xlane.xlu0 %5330
    %v5332 = vsub.f32 %v5268, %v5286
    %v5333 = vsub.f32 %v5269, %v5289
    %v5334 = vsub.f32 %v5270, %v5292
    %v5335 = vsub.f32 %v5271, %v5295
    %v5336 = vsub.f32 %v5272, %v5298
    %v5337 = vsub.f32 %v5273, %v5301
    %v5338 = vsub.f32 %v5274, %v5304
    %v5339 = vsub.f32 %v5275, %v5307
    %v5340 = vsub.f32 %v5276, %v5310
    %v5341 = vsub.f32 %v5277, %v5313
    %v5342 = vsub.f32 %v5278, %v5316
    %v5343 = vsub.f32 %v5279, %v5319
    %v5344 = vsub.f32 %v5280, %v5322
    %v5345 = vsub.f32 %v5281, %v5325
    %v5346 = vsub.f32 %v5282, %v5328
    %v5347 = vsub.f32 %v5283, %v5331
    %v5348 = vmul.f32 %v5332, 1.442695
    %v5349 = vpow.pop %v5348
    %v5350 = vmul.f32 %v5333, 1.442695
    %v5351 = vpow.pop %v5350
    %v5352 = vmul.f32 %v5334, 1.442695
    %v5353 = vpow.pop %v5352
    %v5354 = vmul.f32 %v5335, 1.442695
    %v5355 = vpow.pop %v5354
    %v5356 = vmul.f32 %v5336, 1.442695
    %v5357 = vpow.pop %v5356
    %v5358 = vmul.f32 %v5337, 1.442695
    %v5359 = vpow.pop %v5358
    %v5360 = vmul.f32 %v5338, 1.442695
    %v5361 = vpow.pop %v5360
    %v5362 = vmul.f32 %v5339, 1.442695
    %v5363 = vpow.pop %v5362
    %v5364 = vmul.f32 %v5340, 1.442695
    %v5365 = vpow.pop %v5364
    %v5366 = vmul.f32 %v5341, 1.442695
    %v5367 = vpow.pop %v5366
    %v5368 = vmul.f32 %v5342, 1.442695
    %v5369 = vpow.pop %v5368
    %v5370 = vmul.f32 %v5343, 1.442695
    %v5371 = vpow.pop %v5370
    %v5372 = vmul.f32 %v5344, 1.442695
    %v5373 = vpow.pop %v5372
    %v5374 = vmul.f32 %v5345, 1.442695
    %v5375 = vpow.pop %v5374
    %v5376 = vmul.f32 %v5346, 1.442695
    %v5377 = vpow.pop %v5376
    %v5378 = vmul.f32 %v5347, 1.442695
    %v5379 = vpow.pop %v5378
    %v5380 = vsel %vm4182, %v5349, 0.0
    %5381 = vadd.xlane.f32.xlu0 %v5380
    %v5382 = vpop.xlane.xlu0 %5381
    %v5383 = vsel %vm4182, %v5351, 0.0
    %5384 = vadd.xlane.f32.xlu0 %v5383
    %v5385 = vpop.xlane.xlu0 %5384
    %v5386 = vsel %vm4182, %v5353, 0.0
    %5387 = vadd.xlane.f32.xlu0 %v5386
    %v5388 = vpop.xlane.xlu0 %5387
    %v5389 = vsel %vm4182, %v5355, 0.0
    %5390 = vadd.xlane.f32.xlu0 %v5389
    %v5391 = vpop.xlane.xlu0 %5390
    %v5392 = vsel %vm4182, %v5357, 0.0
    %5393 = vadd.xlane.f32.xlu0 %v5392
    %v5394 = vpop.xlane.xlu0 %5393
    %v5395 = vsel %vm4182, %v5359, 0.0
    %5396 = vadd.xlane.f32.xlu0 %v5395
    %v5397 = vpop.xlane.xlu0 %5396
    %v5398 = vsel %vm4182, %v5361, 0.0
    %5399 = vadd.xlane.f32.xlu0 %v5398
    %v5400 = vpop.xlane.xlu0 %5399
    %v5401 = vsel %vm4182, %v5363, 0.0
    %5402 = vadd.xlane.f32.xlu0 %v5401
    %v5403 = vpop.xlane.xlu0 %5402
    %v5404 = vsel %vm4182, %v5365, 0.0
    %5405 = vadd.xlane.f32.xlu0 %v5404
    %v5406 = vpop.xlane.xlu0 %5405
    %v5407 = vsel %vm4182, %v5367, 0.0
    %5408 = vadd.xlane.f32.xlu0 %v5407
    %v5409 = vpop.xlane.xlu0 %5408
    %v5410 = vsel %vm4182, %v5369, 0.0
    %5411 = vadd.xlane.f32.xlu0 %v5410
    %v5412 = vpop.xlane.xlu0 %5411
    %v5413 = vsel %vm4182, %v5371, 0.0
    %5414 = vadd.xlane.f32.xlu0 %v5413
    %v5415 = vpop.xlane.xlu0 %5414
    %v5416 = vsel %vm4182, %v5373, 0.0
    %5417 = vadd.xlane.f32.xlu0 %v5416
    %v5418 = vpop.xlane.xlu0 %5417
    %v5419 = vsel %vm4182, %v5375, 0.0
    %5420 = vadd.xlane.f32.xlu0 %v5419
    %v5421 = vpop.xlane.xlu0 %5420
    %v5422 = vsel %vm4182, %v5377, 0.0
    %5423 = vadd.xlane.f32.xlu0 %v5422
    %v5424 = vpop.xlane.xlu0 %5423
    %v5425 = vsel %vm4182, %v5379, 0.0
    %5426 = vadd.xlane.f32.xlu0 %v5425
    %v5427 = vpop.xlane.xlu0 %5426
    %v5428 = vrcp.pop %v5382
    %v5429 = vrcp.pop %v5385
    %v5430 = vrcp.pop %v5388
    %v5431 = vrcp.pop %v5391
    %v5432 = vrcp.pop %v5394
    %v5433 = vrcp.pop %v5397
    %v5434 = vrcp.pop %v5400
    %v5435 = vrcp.pop %v5403
    %v5436 = vrcp.pop %v5406
    %v5437 = vrcp.pop %v5409
    %v5438 = vrcp.pop %v5412
    %v5439 = vrcp.pop %v5415
    %v5440 = vrcp.pop %v5418
    %v5441 = vrcp.pop %v5421
    %v5442 = vrcp.pop %v5424
    %v5443 = vrcp.pop %v5427
    %v5444 = vmul.f32 %v5349, %v5428
    %v5445 = vmul.f32 %v5351, %v5429
    %v5446 = vmul.f32 %v5353, %v5430
    %v5447 = vmul.f32 %v5355, %v5431
    %v5448 = vmul.f32 %v5357, %v5432
    %v5449 = vmul.f32 %v5359, %v5433
    %v5450 = vmul.f32 %v5361, %v5434
    %v5451 = vmul.f32 %v5363, %v5435
    %v5452 = vmul.f32 %v5365, %v5436
    %v5453 = vmul.f32 %v5367, %v5437
    %v5454 = vmul.f32 %v5369, %v5438
    %v5455 = vmul.f32 %v5371, %v5439
    %v5456 = vmul.f32 %v5373, %v5440
    %v5457 = vmul.f32 %v5375, %v5441
    %v5458 = vmul.f32 %v5377, %v5442
    %v5459 = vmul.f32 %v5379, %v5443
    %5461 = vrot.lane.b32.xlu0 %v4986, 96
    %v5462 = vpop.permute.xlu0 %5461
    %v5465 = vsel %vm4182, %v5444, 0
    %v5468 = vsel %vm4182, %v5445, 0
    %v5471 = vsel %vm4182, %v5446, 0
    %v5474 = vsel %vm4182, %v5447, 0
    %v5477 = vsel %vm4182, %v5448, 0
    %v5480 = vsel %vm4182, %v5449, 0
    %v5483 = vsel %vm4182, %v5450, 0
    %v5486 = vsel %vm4182, %v5451, 0
    %5488 = vmatprep.subr.mxu0 0.0
    %5489 = vmatpush1.msra.mxu0 0.0
    %5490 = vmatprep.subr.mxu0 0.0
    %5491 = vmatpush1.msra.mxu0 0.0
    %5492 = vmatprep.subr.mxu0 0.0
    %5493 = vmatpush1.msra.mxu0 0.0
    %5494 = vmatprep.subr.mxu0 0.0
    %5495 = vmatpush1.msra.mxu0 0.0
    %5496 = vmatprep.subr.mxu0 0.0
    %5497 = vmatpush1.msra.mxu0 0.0
    %5498 = vmatprep.subr.mxu0 0.0
    %5499 = vmatpush1.msra.mxu0 0.0
    %5500 = vmatprep.subr.mxu0 0.0
    %5501 = vmatpush1.msra.mxu0 0.0
    %5502 = vmatprep.subr.mxu0 0.0
    %5503 = vmatpush1.msra.mxu0 0.0
    %5504 = vmatprep.subr.mxu0 0.0
    %5505 = vmatpush1.msra.mxu0 0.0
    %5506 = vmatprep.subr.mxu0 0.0
    %5507 = vmatpush1.msra.mxu0 0.0
    %5508 = vmatprep.subr.mxu0 0.0
    %5509 = vmatpush1.msra.mxu0 0.0
    %5510 = vmatprep.subr.mxu0 0.0
    %5511 = vmatpush1.msra.mxu0 0.0
    %5512 = vmatprep.subr.mxu0 0.0
    %5513 = vmatpush1.msra.mxu0 0.0
    %5514 = vmatprep.subr.mxu0 0.0
    %5515 = vmatpush1.msra.mxu0 0.0
    %5516 = vmatprep.subr.mxu0 0.0
    %5517 = vmatpush1.msra.mxu0 0.0
    %5518 = vmatprep.subr.mxu0 0.0
    %5519 = vmatpush1.msra.mxu0 %v5462
    %5520 = vmatprep.subr.mxu0 0.0
    %5521 = vmatpush2.msra.mxu0 0.0
    %5522 = vmatprep.subr.mxu0 0.0
    %5523 = vmatpush2.msra.mxu0 0.0
    %5524 = vmatprep.subr.mxu0 0.0
    %5525 = vmatpush2.msra.mxu0 0.0
    %5526 = vmatprep.subr.mxu0 0.0
    %5527 = vmatpush2.msra.mxu0 0.0
    %5528 = vmatprep.subr.mxu0 0.0
    %5529 = vmatpush2.msra.mxu0 0.0
    %5530 = vmatprep.subr.mxu0 0.0
    %5531 = vmatpush2.msra.mxu0 0.0
    %5532 = vmatprep.subr.mxu0 0.0
    %5533 = vmatpush2.msra.mxu0 0.0
    %5534 = vmatprep.subr.mxu0 0.0
    %5535 = vmatpush2.msra.mxu0 0.0
    %5536 = vmatprep.subr.mxu0 0.0
    %5537 = vmatpush2.msra.mxu0 0.0
    %5538 = vmatprep.subr.mxu0 0.0
    %5539 = vmatpush2.msra.mxu0 0.0
    %5540 = vmatprep.subr.mxu0 0.0
    %5541 = vmatpush2.msra.mxu0 0.0
    %5542 = vmatprep.subr.mxu0 0.0
    %5543 = vmatpush2.msra.mxu0 0.0
    %5544 = vmatprep.subr.mxu0 0.0
    %5545 = vmatpush2.msra.mxu0 0.0
    %5546 = vmatprep.subr.mxu0 0.0
    %5547 = vmatpush2.msra.mxu0 0.0
    %5548 = vmatprep.subr.mxu0 0.0
    %5549 = vmatpush2.msra.mxu0 0.0
    %5550 = vmatprep.subr.mxu0 0.0
    %5551 = vmatpush2.msra.mxu0 0.0
    %5552 = vmatprep.mubr.f32.mxu0 0.0
    %5553 = vmatmul.mubr.f32.gmra.mxu0 %v5465
    %v5554 = vpop.f32.mrf.mxu0
    %v5555 = vadd.f32 0.0, %v5554
    %v5556 = vpop.f32.mrf.mxu0
    %5557 = vmatprep.mubr.f32.mxu0 0.0
    %5558 = vmatmul.mubr.f32.gmra.mxu0 %v5468
    %v5559 = vpop.f32.mrf.mxu0
    %v5560 = vadd.f32 0.0, %v5559
    %v5561 = vpop.f32.mrf.mxu0
    %5562 = vmatprep.mubr.f32.mxu0 0.0
    %5563 = vmatmul.mubr.f32.gmra.mxu0 %v5471
    %v5564 = vpop.f32.mrf.mxu0
    %v5565 = vadd.f32 0.0, %v5564
    %v5566 = vpop.f32.mrf.mxu0
    %5567 = vmatprep.mubr.f32.mxu0 0.0
    %5568 = vmatmul.mubr.f32.gmra.mxu0 %v5474
    %v5569 = vpop.f32.mrf.mxu0
    %v5570 = vadd.f32 0.0, %v5569
    %v5571 = vpop.f32.mrf.mxu0
    %5572 = vmatprep.mubr.f32.mxu0 0.0
    %5573 = vmatmul.mubr.f32.gmra.mxu0 %v5477
    %v5574 = vpop.f32.mrf.mxu0
    %v5575 = vadd.f32 0.0, %v5574
    %v5576 = vpop.f32.mrf.mxu0
    %5577 = vmatprep.mubr.f32.mxu0 0.0
    %5578 = vmatmul.mubr.f32.gmra.mxu0 %v5480
    %v5579 = vpop.f32.mrf.mxu0
    %v5580 = vadd.f32 0.0, %v5579
    %v5581 = vpop.f32.mrf.mxu0
    %5582 = vmatprep.mubr.f32.mxu0 0.0
    %5583 = vmatmul.mubr.f32.gmra.mxu0 %v5483
    %v5584 = vpop.f32.mrf.mxu0
    %v5585 = vadd.f32 0.0, %v5584
    %v5586 = vpop.f32.mrf.mxu0
    %5587 = vmatprep.mubr.f32.mxu0 0.0
    %5588 = vmatmul.mubr.f32.gmra.mxu0 %v5486
    %v5589 = vpop.f32.mrf.mxu0
    %v5590 = vadd.f32 0.0, %v5589
    %v5591 = vpop.f32.mrf.mxu0
    %5592 = vdwg.mxu0
    %5594 = vrot.lane.b32.xlu0 %v4987, 96
    %v5595 = vpop.permute.xlu0 %5594
    %v5598 = vsel %vm4182, %v5452, 0
    %v5601 = vsel %vm4182, %v5453, 0
    %v5604 = vsel %vm4182, %v5454, 0
    %v5607 = vsel %vm4182, %v5455, 0
    %v5610 = vsel %vm4182, %v5456, 0
    %v5613 = vsel %vm4182, %v5457, 0
    %v5616 = vsel %vm4182, %v5458, 0
    %v5619 = vsel %vm4182, %v5459, 0
    %5621 = vmatprep.subr.mxu0 0.0
    %5622 = vmatpush1.msra.mxu0 0.0
    %5623 = vmatprep.subr.mxu0 0.0
    %5624 = vmatpush1.msra.mxu0 0.0
    %5625 = vmatprep.subr.mxu0 0.0
    %5626 = vmatpush1.msra.mxu0 0.0
    %5627 = vmatprep.subr.mxu0 0.0
    %5628 = vmatpush1.msra.mxu0 0.0
    %5629 = vmatprep.subr.mxu0 0.0
    %5630 = vmatpush1.msra.mxu0 0.0
    %5631 = vmatprep.subr.mxu0 0.0
    %5632 = vmatpush1.msra.mxu0 0.0
    %5633 = vmatprep.subr.mxu0 0.0
    %5634 = vmatpush1.msra.mxu0 0.0
    %5635 = vmatprep.subr.mxu0 0.0
    %5636 = vmatpush1.msra.mxu0 0.0
    %5637 = vmatprep.subr.mxu0 0.0
    %5638 = vmatpush1.msra.mxu0 0.0
    %5639 = vmatprep.subr.mxu0 0.0
    %5640 = vmatpush1.msra.mxu0 0.0
    %5641 = vmatprep.subr.mxu0 0.0
    %5642 = vmatpush1.msra.mxu0 0.0
    %5643 = vmatprep.subr.mxu0 0.0
    %5644 = vmatpush1.msra.mxu0 0.0
    %5645 = vmatprep.subr.mxu0 0.0
    %5646 = vmatpush1.msra.mxu0 0.0
    %5647 = vmatprep.subr.mxu0 0.0
    %5648 = vmatpush1.msra.mxu0 0.0
    %5649 = vmatprep.subr.mxu0 0.0
    %5650 = vmatpush1.msra.mxu0 0.0
    %5651 = vmatprep.subr.mxu0 0.0
    %5652 = vmatpush1.msra.mxu0 %v5595
    %5653 = vmatprep.subr.mxu0 0.0
    %5654 = vmatpush2.msra.mxu0 0.0
    %5655 = vmatprep.subr.mxu0 0.0
    %5656 = vmatpush2.msra.mxu0 0.0
    %5657 = vmatprep.subr.mxu0 0.0
    %5658 = vmatpush2.msra.mxu0 0.0
    %5659 = vmatprep.subr.mxu0 0.0
    %5660 = vmatpush2.msra.mxu0 0.0
    %5661 = vmatprep.subr.mxu0 0.0
    %5662 = vmatpush2.msra.mxu0 0.0
    %5663 = vmatprep.subr.mxu0 0.0
    %5664 = vmatpush2.msra.mxu0 0.0
    %5665 = vmatprep.subr.mxu0 0.0
    %5666 = vmatpush2.msra.mxu0 0.0
    %5667 = vmatprep.subr.mxu0 0.0
    %5668 = vmatpush2.msra.mxu0 0.0
    %5669 = vmatprep.subr.mxu0 0.0
    %5670 = vmatpush2.msra.mxu0 0.0
    %5671 = vmatprep.subr.mxu0 0.0
    %5672 = vmatpush2.msra.mxu0 0.0
    %5673 = vmatprep.subr.mxu0 0.0
    %5674 = vmatpush2.msra.mxu0 0.0
    %5675 = vmatprep.subr.mxu0 0.0
    %5676 = vmatpush2.msra.mxu0 0.0
    %5677 = vmatprep.subr.mxu0 0.0
    %5678 = vmatpush2.msra.mxu0 0.0
    %5679 = vmatprep.subr.mxu0 0.0
    %5680 = vmatpush2.msra.mxu0 0.0
    %5681 = vmatprep.subr.mxu0 0.0
    %5682 = vmatpush2.msra.mxu0 0.0
    %5683 = vmatprep.subr.mxu0 0.0
    %5684 = vmatpush2.msra.mxu0 0.0
    %5685 = vmatprep.mubr.f32.mxu0 0.0
    %5686 = vmatmul.mubr.f32.gmra.mxu0 %v5598
    %v5687 = vpop.f32.mrf.mxu0
    %v5688 = vadd.f32 0.0, %v5687
    %v5689 = vpop.f32.mrf.mxu0
    %5690 = vmatprep.mubr.f32.mxu0 0.0
    %5691 = vmatmul.mubr.f32.gmra.mxu0 %v5601
    %v5692 = vpop.f32.mrf.mxu0
    %v5693 = vadd.f32 0.0, %v5692
    %v5694 = vpop.f32.mrf.mxu0
    %5695 = vmatprep.mubr.f32.mxu0 0.0
    %5696 = vmatmul.mubr.f32.gmra.mxu0 %v5604
    %v5697 = vpop.f32.mrf.mxu0
    %v5698 = vadd.f32 0.0, %v5697
    %v5699 = vpop.f32.mrf.mxu0
    %5700 = vmatprep.mubr.f32.mxu0 0.0
    %5701 = vmatmul.mubr.f32.gmra.mxu0 %v5607
    %v5702 = vpop.f32.mrf.mxu0
    %v5703 = vadd.f32 0.0, %v5702
    %v5704 = vpop.f32.mrf.mxu0
    %5705 = vmatprep.mubr.f32.mxu0 0.0
    %5706 = vmatmul.mubr.f32.gmra.mxu0 %v5610
    %v5707 = vpop.f32.mrf.mxu0
    %v5708 = vadd.f32 0.0, %v5707
    %v5709 = vpop.f32.mrf.mxu0
    %5710 = vmatprep.mubr.f32.mxu0 0.0
    %5711 = vmatmul.mubr.f32.gmra.mxu0 %v5613
    %v5712 = vpop.f32.mrf.mxu0
    %v5713 = vadd.f32 0.0, %v5712
    %v5714 = vpop.f32.mrf.mxu0
    %5715 = vmatprep.mubr.f32.mxu0 0.0
    %5716 = vmatmul.mubr.f32.gmra.mxu0 %v5616
    %v5717 = vpop.f32.mrf.mxu0
    %v5718 = vadd.f32 0.0, %v5717
    %v5719 = vpop.f32.mrf.mxu0
    %5720 = vmatprep.mubr.f32.mxu0 0.0
    %5721 = vmatmul.mubr.f32.gmra.mxu0 %v5619
    %v5722 = vpop.f32.mrf.mxu0
    %v5723 = vadd.f32 0.0, %v5722
    %v5724 = vpop.f32.mrf.mxu0
    %5725 = vdwg.mxu0
    %v5726 = vmul.f32 %v5555, %v3849
    %v5727 = vmul.f32 %v5560, %v3853
    %v5728 = vmul.f32 %v5565, %v3857
    %v5729 = vmul.f32 %v5570, %v3861
    %v5730 = vmul.f32 %v5575, %v3865
    %v5731 = vmul.f32 %v5580, %v3869
    %v5732 = vmul.f32 %v5585, %v3873
    %v5733 = vmul.f32 %v5590, %v3877
    %v5734 = vmul.f32 %v5688, %v3849
    %v5735 = vmul.f32 %v5693, %v3853
    %v5736 = vmul.f32 %v5698, %v3857
    %v5737 = vmul.f32 %v5703, %v3861
    %v5738 = vmul.f32 %v5708, %v3865
    %v5739 = vmul.f32 %v5713, %v3869
    %v5740 = vmul.f32 %v5718, %v3873
    %v5741 = vmul.f32 %v5723, %v3877
    %v5742 = vsel %vm190, %v5726, 0.0
    %v5743 = vsel %vm190, %v5727, 0.0
    %v5744 = vadd.f32 %v5742, %v5743
    %v5745 = vsel %vm190, %v5728, 0.0
    %v5746 = vadd.f32 %v5744, %v5745
    %v5747 = vsel %vm190, %v5729, 0.0
    %v5748 = vadd.f32 %v5746, %v5747
    %v5749 = vsel %vm190, %v5730, 0.0
    %v5750 = vadd.f32 %v5748, %v5749
    %v5751 = vsel %vm190, %v5731, 0.0
    %v5752 = vadd.f32 %v5750, %v5751
    %v5753 = vsel %vm190, %v5732, 0.0
    %v5754 = vadd.f32 %v5752, %v5753
    %v5755 = vsel %vm190, %v5733, 0.0
    %v5756 = vadd.f32 %v5754, %v5755
    %v5757 = vsel %vm190, %v5734, 0.0
    %v5758 = vsel %vm190, %v5735, 0.0
    %v5759 = vadd.f32 %v5757, %v5758
    %v5760 = vsel %vm190, %v5736, 0.0
    %v5761 = vadd.f32 %v5759, %v5760
    %v5762 = vsel %vm190, %v5737, 0.0
    %v5763 = vadd.f32 %v5761, %v5762
    %v5764 = vsel %vm190, %v5738, 0.0
    %v5765 = vadd.f32 %v5763, %v5764
    %v5766 = vsel %vm190, %v5739, 0.0
    %v5767 = vadd.f32 %v5765, %v5766
    %v5768 = vsel %vm190, %v5740, 0.0
    %v5769 = vadd.f32 %v5767, %v5768
    %v5770 = vsel %vm190, %v5741, 0.0
    %v5771 = vadd.f32 %v5769, %v5770
    %v5773 = vlaneseq
    %v5774 = vshrl.u32 %v5773, 7
    %v5775 = vsub.s32 0, %v5774
    %v5776 = vrot.slane %v3655, %v5775
    %v5779 = vsel %vm190, %v5756, 0
    %v5782 = vsel %vm190, %v5771, 0
    %5784 = vmatprep.subr.mxu0 0.0
    %5785 = vmatpush1.msra.mxu0 0.0
    %5786 = vmatprep.subr.mxu0 0.0
    %5787 = vmatpush1.msra.mxu0 0.0
    %5788 = vmatprep.subr.mxu0 0.0
    %5789 = vmatpush1.msra.mxu0 0.0
    %5790 = vmatprep.subr.mxu0 0.0
    %5791 = vmatpush1.msra.mxu0 0.0
    %5792 = vmatprep.subr.mxu0 0.0
    %5793 = vmatpush1.msra.mxu0 0.0
    %5794 = vmatprep.subr.mxu0 0.0
    %5795 = vmatpush1.msra.mxu0 0.0
    %5796 = vmatprep.subr.mxu0 0.0
    %5797 = vmatpush1.msra.mxu0 0.0
    %5798 = vmatprep.subr.mxu0 0.0
    %5799 = vmatpush1.msra.mxu0 0.0
    %5800 = vmatprep.subr.mxu0 0.0
    %5801 = vmatpush1.msra.mxu0 0.0
    %5802 = vmatprep.subr.mxu0 0.0
    %5803 = vmatpush1.msra.mxu0 0.0
    %5804 = vmatprep.subr.mxu0 0.0
    %5805 = vmatpush1.msra.mxu0 0.0
    %5806 = vmatprep.subr.mxu0 0.0
    %5807 = vmatpush1.msra.mxu0 0.0
    %5808 = vmatprep.subr.mxu0 0.0
    %5809 = vmatpush1.msra.mxu0 %v3645
    %5810 = vmatprep.subr.mxu0 0.0
    %5811 = vmatpush1.msra.mxu0 %v3644
    %5812 = vmatprep.subr.mxu0 0.0
    %5813 = vmatpush1.msra.mxu0 %v3643
    %5814 = vmatprep.subr.mxu0 0.0
    %5815 = vmatpush1.msra.mxu0 %v3642
    %5816 = vmatprep.subr.mxu0 0.0
    %5817 = vmatpush2.msra.mxu0 0.0
    %5818 = vmatprep.subr.mxu0 0.0
    %5819 = vmatpush2.msra.mxu0 0.0
    %5820 = vmatprep.subr.mxu0 0.0
    %5821 = vmatpush2.msra.mxu0 0.0
    %5822 = vmatprep.subr.mxu0 0.0
    %5823 = vmatpush2.msra.mxu0 0.0
    %5824 = vmatprep.subr.mxu0 0.0
    %5825 = vmatpush2.msra.mxu0 0.0
    %5826 = vmatprep.subr.mxu0 0.0
    %5827 = vmatpush2.msra.mxu0 0.0
    %5828 = vmatprep.subr.mxu0 0.0
    %5829 = vmatpush2.msra.mxu0 0.0
    %5830 = vmatprep.subr.mxu0 0.0
    %5831 = vmatpush2.msra.mxu0 0.0
    %5832 = vmatprep.subr.mxu0 0.0
    %5833 = vmatpush2.msra.mxu0 0.0
    %5834 = vmatprep.subr.mxu0 0.0
    %5835 = vmatpush2.msra.mxu0 0.0
    %5836 = vmatprep.subr.mxu0 0.0
    %5837 = vmatpush2.msra.mxu0 0.0
    %5838 = vmatprep.subr.mxu0 0.0
    %5839 = vmatpush2.msra.mxu0 0.0
    %5840 = vmatprep.subr.mxu0 0.0
    %5841 = vmatpush2.msra.mxu0 0.0
    %5842 = vmatprep.subr.mxu0 0.0
    %5843 = vmatpush2.msra.mxu0 0.0
    %5844 = vmatprep.subr.mxu0 0.0
    %5845 = vmatpush2.msra.mxu0 0.0
    %5846 = vmatprep.subr.mxu0 0.0
    %5847 = vmatpush2.msra.mxu0 0.0
    %5848 = vmatprep.mubr.f32.mxu0 0.0
    %5849 = vmatmul.mubr.f32.gmra.mxu0 %v5779
    %v5850 = vpop.f32.mrf.mxu0
    %v5851 = vadd.f32 %v5776, %v5850
    %v5852 = vpop.f32.mrf.mxu0
    %5853 = vmatprep.mubr.f32.mxu0 0.0
    %5854 = vmatmul.mubr.f32.gmra.mxu0 %v5782
    %v5855 = vpop.f32.mrf.mxu0
    %v5856 = vadd.f32 %v5776, %v5855
    %v5857 = vpop.f32.mrf.mxu0
    %5858 = vdwg.mxu0
    %v5859 = vadd.f32 %v5851, %v4800
    %v5860 = vadd.f32 %v5856, %v4801
    %v5861 = vsel %vm190, %v5859, 0.0
    %5862 = vadd.xlane.f32.xlu0 %v5861
    %v5863 = vpop.xlane.xlu0 %5862
    %v5864 = vsel %vm190, %v5860, 0.0
    %5865 = vadd.xlane.f32.xlu0 %v5864
    %v5866 = vpop.xlane.xlu0 %5865
    %v5867 = vmul.f32 %v5863, %v197
    %v5868 = vmul.f32 %v5866, %v197
    %v5869 = vsub.f32 %v5859, %v5867
    %v5870 = vsub.f32 %v5860, %v5868
    %v5871 = vmul.f32 %v5869, %v5869
    %v5872 = vmul.f32 %v5870, %v5870
    %v5873 = vsel %vm190, %v5871, 0.0
    %5874 = vadd.xlane.f32.xlu0 %v5873
    %v5875 = vpop.xlane.xlu0 %5874
    %v5876 = vsel %vm190, %v5872, 0.0
    %5877 = vadd.xlane.f32.xlu0 %v5876
    %v5878 = vpop.xlane.xlu0 %5877
    %v5879 = vmul.f32 %v5875, %v197
    %v5880 = vmul.f32 %v5878, %v197
    %v5881 = vadd.f32 %v5879, 1e-05
    %v5882 = vadd.f32 %v5880, 1e-05
    %v5883 = vrsqrt.pop %v5881
    %v5884 = vrsqrt.pop %v5882
    %v5885 = vmul.f32 %v5869, %v5883
    %v5886 = vmul.f32 %v5870, %v5884
    %v5888 = vlaneseq
    %v5889 = vshrl.u32 %v5888, 7
    %v5890 = vsub.s32 0, %v5889
    %v5891 = vrot.slane %v3656, %v5890
    %v5893 = vmul.f32 %v5885, %v5891
    %v5894 = vmul.f32 %v5886, %v5891
    %v5896 = vlaneseq
    %v5897 = vshrl.u32 %v5896, 7
    %v5898 = vsub.s32 0, %v5897
    %v5899 = vrot.slane %v3657, %v5898
    %v5901 = vadd.f32 %v5893, %v5899
    %v5902 = vadd.f32 %v5894, %v5899
    %5903 = vst.msk [vmem:[#allocation17] sm:$0xff] %vm190, %v5901
    %5904 = vst.msk [vmem:[#allocation17 + $0x8] sm:$0xff] %vm190, %v5902
    %5906 = vset.pattern.permute.xlu0 0
    %5907 = vperm.xlu0 %5906, %v3609
    %v5908 = vpop.permute.xlu0 %5907
    %5910 = vset.pattern.permute.xlu0 0
    %5911 = vperm.xlu0 %5910, %v3610
    %v5912 = vpop.permute.xlu0 %5911
    %5914 = vset.pattern.permute.xlu0 0
    %5915 = vperm.xlu0 %5914, %v3611
    %v5916 = vpop.permute.xlu0 %5915
    %5918 = vset.pattern.permute.xlu0 0
    %5919 = vperm.xlu0 %5918, %v3612
    %v5920 = vpop.permute.xlu0 %5919
    %5922 = vset.pattern.permute.xlu0 0
    %5923 = vperm.xlu0 %5922, %v3613
    %v5924 = vpop.permute.xlu0 %5923
    %v5925 = vsel %vm349, %v5912, %v5908
    %vm5926 = vcmask 1042434
    %v5927 = vsel %vm5926, %v5916, %v5925
    %vm5928 = vcmask 1043459
    %v5929 = vsel %vm5928, %v5920, %v5927
    %vm5930 = vcmask 1044484
    %v5931 = vsel %vm5930, %v5924, %v5929
    %vm5933 = vcmask 1044480
    %v5934 = vsel %vm5933, %v5931, %v408
    %vm5935 = vcmask 1045504
    %v5936 = vsel %vm5935, %v5934, 0.0
    %5937 = vst [vmem:[%s20] sm:$0xff] %v5936
    // Predicated region
    $region110: #{hfs_forward.3} parent=1 // pred_check
      _
    $region111: #{hfs_forward.3} parent=1 // pred_check_branch
      %5939 = sbr.rel (0) target = $region113
    $region112: #{hfs_forward.3} parent=1 // pred_region
      %s5941 = ssub.s32 256, 256
      %5942 = vsyncadd [#allocation4], %s5941
      %s5943 = sshll.u32 [#allocation17], 4
      %s5944 = int_to_ptr.vmem [resolvable:$true] %s5943
      %5949 = dma.vmem_to_hbm [thread:$0]  %s5944, 256, %s18, [#allocation4], 128, 128, 8
    $region113: #{hfs_forward.3} parent=1 // pred_fallthru
      _
    // Predicated region
    $region114: #{hfs_forward.3} parent=1 // pred_check
      _
    $region115: #{hfs_forward.3} parent=1 // pred_check_branch
      %5951 = sbr.rel (0) target = $region117
    $region116: #{hfs_forward.3} parent=1 // pred_region
      %s5953 = ssub.s32 256, 256
      %5954 = vsyncadd [#allocation19], %s5953
      %s5955 = sshll.u32 [#allocation18], 4
      %s5956 = int_to_ptr.vmem [resolvable:$true] %s5955
      %5961 = dma.vmem_to_hbm [thread:$0]  %s5956, 256, %s19, [#allocation19], 128, 128, 8
    $region117: #{hfs_forward.3} parent=1 // pred_fallthru
      _
    // Predicated region
    $region118: #{hfs_forward.3} parent=1 // pred_check
      _
    $region119: #{hfs_forward.3} parent=1 // pred_check_branch
      %5963 = sbr.rel (0) target = $region121
    $region120: #{hfs_forward.3} parent=1 // pred_region
      _
    $region121: #{hfs_forward.3} parent=1 // pred_fallthru
      _
    // Predicated region
    $region122: #{hfs_forward.3} parent=1 // pred_check
      _
    $region123: #{hfs_forward.3} parent=1 // pred_check_branch
      %5965 = sbr.rel (0) target = $region125
    $region124: #{hfs_forward.3} parent=1 // pred_region
      %5966 = dma.done [#allocation4], 256
    $region125: #{hfs_forward.3} parent=1 // pred_fallthru
      _
    // Predicated region
    $region126: #{hfs_forward.3} parent=1 // pred_check
      _
    $region127: #{hfs_forward.3} parent=1 // pred_check_branch
      %5968 = sbr.rel (0) target = $region129
    $region128: #{hfs_forward.3} parent=1 // pred_region
      %5969 = dma.done [#allocation19], 256
    $region129: #{hfs_forward.3} parent=1 // pred_fallthru
      _
    // Predicated region
    $region130: #{hfs_forward.3} parent=1 // pred_check
      _
    $region131: #{hfs_forward.3} parent=1 // pred_check_branch
      %5971 = sbr.rel (0) target = $region133
    $region132: #{hfs_forward.3} parent=1 // pred_region
      _
    $region133: #{hfs_forward.3} parent=1 // pred_fallthru
      _
    %5972 = vsyncpa [#allocation3], 1
    %5973 = vsyncpa [#allocation6], 1
    %5974 = vsyncpa [#allocation9], 1
    %5975 = vsyncpa [#allocation12], 1
    %5976 = vsyncpa [#allocation15], 1
    %5977 = vsyncpa [#allocation4], 1
    %5978 = vsyncpa [#allocation19], 1

</llo_original>
